<compile_context>
chip_gen: v7x
topology: tpu7x:2x2x1
jax: 0.10.0
libtpu: 0.0.40
codegen_flags: <defaults>
</compile_context>

<pallas_src>
import math

import jax
import jax.numpy as jnp
from jax.experimental import pallas as pl
from jax.experimental.pallas import tpu as pltpu

INPUT_DIM = 512       # LSTMCell input size (forced by torch.reshape(vector, (1, 512)))
MEMORY_DEPTH = 512    # hidden size (module default memory_depth=512)


# ----------------------------- Pallas kernel -------------------------------------------------
def _lstm_predictor_kernel(x_ref, ctx_ref, w_ih_ref, w_hh_hbm, b_ref,
                           h_out_ref, w_hh_vmem, dma_sem):
    """Whole-sequence LSTMCell recurrence, fused in one kernel invocation.

    x_ref    : (T, 512)    bf16  input vectors (one per timestep), VMEM
    ctx_ref  : (T-1, 512)  bf16  likes_context (feeds the next step's recurrent matmul), VMEM
    w_ih_ref : (512, 4H)   bf16  input->gates weight (contraction-major), VMEM
    w_hh_hbm : (512, 4H)   bf16  hidden->gates weight, raw HBM ref (manual DMA, overlapped)
    b_ref    : (1, 4H)     f32   combined bias (b_ih + b_hh), VMEM
    h_out    : (1, H)      f32   final hidden state (module return value)
    w_hh_vmem: (512, 4H)   bf16  VMEM staging buffer for w_hh
    dma_sem  :                   DMA completion semaphore
    """
    T = x_ref.shape[0]
    H = h_out_ref.shape[-1]

    # Start the 2 MiB w_hh HBM->VMEM DMA; it is hidden behind the batched input projection.
    w_hh_copy = pltpu.make_async_copy(w_hh_hbm, w_hh_vmem, dma_sem)
    w_hh_copy.start()

    # Recurrence-independent projection, one batched M=T MXU op (f32 accumulation).
    gates_x = jnp.dot(x_ref[...], w_ih_ref[...],
                      preferred_element_type=jnp.float32)            # (T, 4H) f32

    w_hh_copy.wait()
    w_hh = w_hh_vmem[...]                                             # (512, 4H) bf16, VMEM

    # likes_context only ever feeds the *next* step's recurrent matmul (never the output):
    # (h + ctx) @ W_hh == h @ W_hh + ctx @ W_hh, so precompute ctx @ W_hh batched (M = T-1).
    gates_ctx = jnp.dot(ctx_ref[...], w_hh,
                        preferred_element_type=jnp.float32)           # (T-1, 4H) f32

    b = b_ref[...]                                                    # (1, 4H) f32

    def gate_act(g):
        # PyTorch LSTMCell gate order: input, forget, cell(g), output.
        # sigmoid(x) = 0.5 * tanh(0.5 x) + 0.5  (single EUP op, no divide / inf intermediate)
        i_g = 0.5 * jnp.tanh(0.5 * g[:, 0 * H:1 * H]) + 0.5
        f_g = 0.5 * jnp.tanh(0.5 * g[:, 1 * H:2 * H]) + 0.5
        g_g = jnp.tanh(g[:, 2 * H:3 * H])
        o_g = 0.5 * jnp.tanh(0.5 * g[:, 3 * H:4 * H]) + 0.5
        return i_g, f_g, g_g, o_g

    # t = 0: h == c == 0  ->  skip the recurrent matmul and the f*c term entirely.
    i_g, f_g, g_g, o_g = gate_act(gates_x[0:1, :] + b)
    c = i_g * g_g
    h = o_g * jnp.tanh(c)

    # Remaining steps: only the (1,512)@(512,2048) recurrent matmul + gates are serial.
    for t in range(1, T):                       # static, tiny trip count -> fully unrolled
        g_bias = gates_x[t:t + 1, :] + gates_ctx[t - 1:t, :] + b      # precomputed, off-chain
        gates = jnp.dot(h.astype(jnp.bfloat16), w_hh,
                        preferred_element_type=jnp.float32) + g_bias  # (1, 4H) f32
        i_g, f_g, g_g, o_g = gate_act(gates)
        c = f_g * c + i_g * g_g
        h = o_g * jnp.tanh(c)
        # NOTE: the reference breaks before adding likes_context on the last iteration, and
        # the context contribution for earlier iterations is already folded into g_bias.

    h_out_ref[...] = h.astype(h_out_ref.dtype)


# ----------------------------- wrapper --------------------------------------------------------
@jax.jit
def lstm_predictor_forward(x, likes_context, params):
    """x: (T, 512) sequence of vectors; likes_context: (>=T-1, 512). Returns h_0: (1, 512)."""
    T = x.shape[0]
    H = MEMORY_DEPTH

    x_b = x.reshape(T, INPUT_DIM).astype(jnp.bfloat16)                # cast ONCE, half the DMA
    if T > 1:
        ctx_b = likes_context.reshape(-1, H)[: T - 1].astype(jnp.bfloat16)
    else:
        ctx_b = jnp.zeros((1, H), jnp.bfloat16)                       # never read when T == 1

    flops = (2 * T * INPUT_DIM * 4 * H                # x @ w_ih (batched)
             + 2 * max(T - 1, 1) * INPUT_DIM * 4 * H  # ctx @ w_hh (batched)
             + 2 * (T - 1) * INPUT_DIM * 4 * H)       # per-step h @ w_hh
    bytes_accessed = (2 * INPUT_DIM * 4 * H * 2       # w_ih + w_hh (bf16)
                      + 4 * 4 * H                     # bias (f32)
                      + 2 * T * INPUT_DIM             # x (bf16)
                      + 2 * max(T - 1, 1) * H         # ctx (bf16)
                      + 4 * H)                        # output (f32)
    cost = pl.CostEstimate(flops=flops,
                           transcendentals=5 * T * H,
                           bytes_accessed=bytes_accessed)

    return pl.pallas_call(
        _lstm_predictor_kernel,
        out_shape=jax.ShapeDtypeStruct((1, H), jnp.float32),
        # No grid: every operand is a single whole-array block; weights are DMA'd exactly once.
        in_specs=[
            pl.BlockSpec(memory_space=pltpu.MemorySpace.VMEM),   # x
            pl.BlockSpec(memory_space=pltpu.MemorySpace.VMEM),   # likes_context
            pl.BlockSpec(memory_space=pltpu.MemorySpace.VMEM),   # w_ih_t
            pl.BlockSpec(memory_space=pl.ANY),                   # w_hh_t: raw HBM, manual DMA
            pl.BlockSpec(memory_space=pltpu.MemorySpace.VMEM),   # bias
        ],
        out_specs=pl.BlockSpec(memory_space=pltpu.MemorySpace.VMEM),
        scratch_shapes=[
            pltpu.VMEM((INPUT_DIM, 4 * H), jnp.bfloat16),        # w_hh staging buffer
            pltpu.SemaphoreType.DMA,                             # its completion semaphore
        ],
        cost_estimate=cost,
        compiler_params=pltpu.CompilerParams(vmem_limit_bytes=16 * 1024 * 1024),
    )(x_b, ctx_b, params["w_ih_t"], params["w_hh_t"], params["b"])


# ----------------------------- parameter init (matches nn.LSTMCell defaults) ------------------
def init_params(key):
    H, D = MEMORY_DEPTH, INPUT_DIM
    k = 1.0 / math.sqrt(H)
    k1, k2, k3, k4 = jax.random.split(key, 4)
    w_ih = jax.random.uniform(k1, (4 * H, D), jnp.float32, -k, k)   # PyTorch layout (4H, D)
    w_hh = jax.random.uniform(k2, (4 * H, H), jnp.float32, -k, k)   # (4H, H)
    b_ih = jax.random.uniform(k3, (4 * H,), jnp.float32, -k, k)
    b_hh = jax.random.uniform(k4, (4 * H,), jnp.float32, -k, k)
    return {
        # f32 originals (PyTorch layout) -- kept for the exact-semantics reference check
        "w_ih": w_ih, "w_hh": w_hh, "b_ih": b_ih, "b_hh": b_hh,
        # kernel layout: transposed (contraction-major) + bf16 (these live in VMEM, ~2 MiB each)
        "w_ih_t": w_ih.T.astype(jnp.bfloat16),                       # (512, 4H)
        "w_hh_t": w_hh.T.astype(jnp.bfloat16),                       # (H, 4H)
        "b": (b_ih + b_hh).reshape(1, 4 * H).astype(jnp.float32),    # (1, 4H)
    }


# ----------------------------- references ------------------------------------------------------
def _reference_f32(x, likes_context, params):
    """Exact PyTorch-semantics f32 reference (original weight layout, true sigmoid)."""
    T = x.shape[0]
    H = MEMORY_DEPTH
    w_ih, w_hh = params["w_ih"], params["w_hh"]
    b = (params["b_ih"] + params["b_hh"]).reshape(1, 4 * H)
    h = jnp.zeros((1, H), jnp.float32)
    c = jnp.zeros((1, H), jnp.float32)
    for t in range(T):
        x_t = x[t].reshape(1, INPUT_DIM)
        gates = x_t @ w_ih.T + h @ w_hh.T + b
        i_g = jax.nn.sigmoid(gates[:, 0 * H:1 * H])
        f_g = jax.nn.sigmoid(gates[:, 1 * H:2 * H])
        g_g = jnp.tanh(gates[:, 2 * H:3 * H])
        o_g = jax.nn.sigmoid(gates[:, 3 * H:4 * H])
        c = f_g * c + i_g * g_g
        h = o_g * jnp.tanh(c)
        if t == T - 1:
            return h                              # break before adding context on the last step
        h = h + likes_context[t:t + 1]
    return h


def _reference_kernel_math(x, likes_context, params):
    """Pure-JAX mirror of the kernel math (bf16 weights/inputs, hoisted/split matmuls)."""
    T = x.shape[0]
    H = MEMORY_DEPTH
    w_ih_t, w_hh_t, b = params["w_ih_t"], params["w_hh_t"], params["b"]
    gates_x = jnp.dot(x.astype(jnp.bfloat16), w_ih_t, preferred_element_type=jnp.float32)
    gates_ctx = jnp.dot(likes_context.astype(jnp.bfloat16), w_hh_t,
                        preferred_element_type=jnp.float32)

    def act(g):
        i_g = 0.5 * jnp.tanh(0.5 * g[:, 0 * H:1 * H]) + 0.5
        f_g = 0.5 * jnp.tanh(0.5 * g[:, 1 * H:2 * H]) + 0.5
        g_g = jnp.tanh(g[:, 2 * H:3 * H])
        o_g = 0.5 * jnp.tanh(0.5 * g[:, 3 * H:4 * H]) + 0.5
        return i_g, f_g, g_g, o_g

    i_g, f_g, g_g, o_g = act(gates_x[0:1] + b)
    c = i_g * g_g
    h = o_g * jnp.tanh(c)
    for t in range(1, T):
        g_bias = gates_x[t:t + 1] + gates_ctx[t - 1:t] + b
        gates = jnp.dot(h.astype(jnp.bfloat16), w_hh_t,
                        preferred_element_type=jnp.float32) + g_bias
        i_g, f_g, g_g, o_g = act(gates)
        c = f_g * c + i_g * g_g
        h = o_g * jnp.tanh(c)
    return h


# ----------------------------- main ------------------------------------------------------------
if __name__ == "__main__":
    T = 8  # sequence length (number of 512-d vectors in x)
    key = jax.random.PRNGKey(0)
    kx, kc, kp = jax.random.split(key, 3)
    x = jax.random.normal(kx, (T, INPUT_DIM), dtype=jnp.float32)
    likes_context = jax.random.normal(kc, (T - 1, MEMORY_DEPTH), dtype=jnp.float32)
    params = init_params(kp)

    out = jax.block_until_ready(lstm_predictor_forward(x, likes_context, params))

    assert out.shape == (1, MEMORY_DEPTH), out.shape
    assert bool(jnp.all(jnp.isfinite(out)))

    # Tight check vs. a pure-JAX mirror of the kernel math (bf16 weights, split matmuls).
    ref_k = _reference_kernel_math(x, likes_context, params)
    assert bool(jnp.allclose(out, ref_k, atol=5e-3, rtol=5e-3)), \
        float(jnp.max(jnp.abs(out - ref_k)))

    # Semantics check vs. the exact f32 PyTorch-style reference (bf16-weight tolerance).
    ref_f = _reference_f32(x, likes_context, params)
    assert bool(jnp.allclose(out, ref_f, atol=5e-2, rtol=5e-2)), \
        float(jnp.max(jnp.abs(out - ref_f)))

    print("KERNEL_OK")
</pallas_src>

<mosaic_0001>
module attributes {stable_mosaic.version = 11 : i64} {
  func.func @_lstm_predictor_kernel(%arg0: memref<8x512xbf16, #tpu.memory_space<vmem>>, %arg1: memref<7x512xbf16, #tpu.memory_space<vmem>>, %arg2: memref<512x2048xbf16, #tpu.memory_space<vmem>>, %arg3: memref<512x2048xbf16, #tpu.memory_space<any>>, %arg4: memref<1x2048xf32, #tpu.memory_space<vmem>>, %arg5: memref<1x512xf32, #tpu.memory_space<vmem>>, %arg6: memref<512x2048xbf16, #tpu.memory_space<vmem>>, %arg7: memref<!tpu.dma_semaphore, #tpu.memory_space<semaphore_mem>>) attributes {dimension_semantics = [], scalar_prefetch = 0 : i64, scratch_operands = 2 : i64, tpu.core_type = #tpu.core_type<tc>} {
    tpu.enqueue_dma source(%arg3 : memref<512x2048xbf16, #tpu.memory_space<any>>) target(%arg6 : memref<512x2048xbf16, #tpu.memory_space<vmem>>) target_semaphore(%arg7 : memref<!tpu.dma_semaphore, #tpu.memory_space<semaphore_mem>>)
    %c0 = arith.constant 0 : index
    %c0_0 = arith.constant 0 : index
    %0 = vector.load %arg0[%c0, %c0_0] : memref<8x512xbf16, #tpu.memory_space<vmem>>, vector<8x512xbf16>
    %c0_1 = arith.constant 0 : index
    %c0_2 = arith.constant 0 : index
    %1 = vector.load %arg2[%c0_1, %c0_2] : memref<512x2048xbf16, #tpu.memory_space<vmem>>, vector<512x2048xbf16>
    %cst = arith.constant dense<0.000000e+00> : vector<8x2048xf32>
    %2 = tpu.matmul %0, %1, %cst {dimension_numbers = #tpu.dot_dimension_numbers<[1], [0], [0], [1], [0, 0, 1, 1], [], []>} : vector<8x512xbf16>, vector<512x2048xbf16>, vector<8x2048xf32> -> vector<8x2048xf32>
    tpu.wait_dma2 semaphore(%arg7 : memref<!tpu.dma_semaphore, #tpu.memory_space<semaphore_mem>>) src(%arg3 : memref<512x2048xbf16, #tpu.memory_space<any>>) dst(%arg6 : memref<512x2048xbf16, #tpu.memory_space<vmem>>)
    %c0_3 = arith.constant 0 : index
    %c0_4 = arith.constant 0 : index
    %3 = vector.load %arg6[%c0_3, %c0_4] : memref<512x2048xbf16, #tpu.memory_space<vmem>>, vector<512x2048xbf16>
    %c0_5 = arith.constant 0 : index
    %c0_6 = arith.constant 0 : index
    %4 = vector.load %arg1[%c0_5, %c0_6] : memref<7x512xbf16, #tpu.memory_space<vmem>>, vector<7x512xbf16>
    %cst_7 = arith.constant dense<0.000000e+00> : vector<7x2048xf32>
    %5 = tpu.matmul %4, %3, %cst_7 {dimension_numbers = #tpu.dot_dimension_numbers<[1], [0], [0], [1], [0, 0, 1, 1], [], []>} : vector<7x512xbf16>, vector<512x2048xbf16>, vector<7x2048xf32> -> vector<7x2048xf32>
    %c0_8 = arith.constant 0 : index
    %c0_9 = arith.constant 0 : index
    %6 = vector.load %arg4[%c0_8, %c0_9] : memref<1x2048xf32, #tpu.memory_space<vmem>>, vector<1x2048xf32>
    %7 = vector.extract_strided_slice %2 {offsets = [0, 0], sizes = [1, 2048], strides = [1, 1]} : vector<8x2048xf32> to vector<1x2048xf32>
    %8 = arith.addf %7, %6 : vector<1x2048xf32>
    %9 = vector.extract_strided_slice %8 {offsets = [0, 0], sizes = [1, 512], strides = [1, 1]} : vector<1x2048xf32> to vector<1x512xf32>
    %cst_10 = arith.constant 5.000000e-01 : f32
    %10 = vector.broadcast %cst_10 : f32 to vector<1x512xf32>
    %11 = arith.mulf %10, %9 : vector<1x512xf32>
    %12 = math.tanh %11 : vector<1x512xf32>
    %cst_11 = arith.constant 5.000000e-01 : f32
    %13 = vector.broadcast %cst_11 : f32 to vector<1x512xf32>
    %14 = arith.mulf %13, %12 : vector<1x512xf32>
    %cst_12 = arith.constant 5.000000e-01 : f32
    %15 = vector.broadcast %cst_12 : f32 to vector<1x512xf32>
    %16 = arith.addf %14, %15 : vector<1x512xf32>
    %17 = vector.extract_strided_slice %8 {offsets = [0, 1024], sizes = [1, 512], strides = [1, 1]} : vector<1x2048xf32> to vector<1x512xf32>
    %18 = math.tanh %17 : vector<1x512xf32>
    %19 = vector.extract_strided_slice %8 {offsets = [0, 1536], sizes = [1, 512], strides = [1, 1]} : vector<1x2048xf32> to vector<1x512xf32>
    %cst_13 = arith.constant 5.000000e-01 : f32
    %20 = vector.broadcast %cst_13 : f32 to vector<1x512xf32>
    %21 = arith.mulf %20, %19 : vector<1x512xf32>
    %22 = math.tanh %21 : vector<1x512xf32>
    %cst_14 = arith.constant 5.000000e-01 : f32
    %23 = vector.broadcast %cst_14 : f32 to vector<1x512xf32>
    %24 = arith.mulf %23, %22 : vector<1x512xf32>
    %cst_15 = arith.constant 5.000000e-01 : f32
    %25 = vector.broadcast %cst_15 : f32 to vector<1x512xf32>
    %26 = arith.addf %24, %25 : vector<1x512xf32>
    %27 = arith.mulf %16, %18 : vector<1x512xf32>
    %28 = math.tanh %27 : vector<1x512xf32>
    %29 = arith.mulf %26, %28 : vector<1x512xf32>
    %30 = vector.extract_strided_slice %2 {offsets = [1, 0], sizes = [1, 2048], strides = [1, 1]} : vector<8x2048xf32> to vector<1x2048xf32>
    %31 = vector.extract_strided_slice %5 {offsets = [0, 0], sizes = [1, 2048], strides = [1, 1]} : vector<7x2048xf32> to vector<1x2048xf32>
    %32 = arith.addf %30, %31 : vector<1x2048xf32>
    %33 = arith.addf %32, %6 : vector<1x2048xf32>
    %34 = arith.truncf %29 : vector<1x512xf32> to vector<1x512xbf16>
    %cst_16 = arith.constant dense<0.000000e+00> : vector<1x2048xf32>
    %35 = tpu.matmul %34, %3, %cst_16 {dimension_numbers = #tpu.dot_dimension_numbers<[1], [0], [0], [1], [0, 0, 1, 1], [], []>} : vector<1x512xbf16>, vector<512x2048xbf16>, vector<1x2048xf32> -> vector<1x2048xf32>
    %36 = arith.addf %35, %33 : vector<1x2048xf32>
    %37 = vector.extract_strided_slice %36 {offsets = [0, 0], sizes = [1, 512], strides = [1, 1]} : vector<1x2048xf32> to vector<1x512xf32>
    %cst_17 = arith.constant 5.000000e-01 : f32
    %38 = vector.broadcast %cst_17 : f32 to vector<1x512xf32>
    %39 = arith.mulf %38, %37 : vector<1x512xf32>
    %40 = math.tanh %39 : vector<1x512xf32>
    %cst_18 = arith.constant 5.000000e-01 : f32
    %41 = vector.broadcast %cst_18 : f32 to vector<1x512xf32>
    %42 = arith.mulf %41, %40 : vector<1x512xf32>
    %cst_19 = arith.constant 5.000000e-01 : f32
    %43 = vector.broadcast %cst_19 : f32 to vector<1x512xf32>
    %44 = arith.addf %42, %43 : vector<1x512xf32>
    %45 = vector.extract_strided_slice %36 {offsets = [0, 512], sizes = [1, 512], strides = [1, 1]} : vector<1x2048xf32> to vector<1x512xf32>
    %cst_20 = arith.constant 5.000000e-01 : f32
    %46 = vector.broadcast %cst_20 : f32 to vector<1x512xf32>
    %47 = arith.mulf %46, %45 : vector<1x512xf32>
    %48 = math.tanh %47 : vector<1x512xf32>
    %cst_21 = arith.constant 5.000000e-01 : f32
    %49 = vector.broadcast %cst_21 : f32 to vector<1x512xf32>
    %50 = arith.mulf %49, %48 : vector<1x512xf32>
    %cst_22 = arith.constant 5.000000e-01 : f32
    %51 = vector.broadcast %cst_22 : f32 to vector<1x512xf32>
    %52 = arith.addf %50, %51 : vector<1x512xf32>
    %53 = vector.extract_strided_slice %36 {offsets = [0, 1024], sizes = [1, 512], strides = [1, 1]} : vector<1x2048xf32> to vector<1x512xf32>
    %54 = math.tanh %53 : vector<1x512xf32>
    %55 = vector.extract_strided_slice %36 {offsets = [0, 1536], sizes = [1, 512], strides = [1, 1]} : vector<1x2048xf32> to vector<1x512xf32>
    %cst_23 = arith.constant 5.000000e-01 : f32
    %56 = vector.broadcast %cst_23 : f32 to vector<1x512xf32>
    %57 = arith.mulf %56, %55 : vector<1x512xf32>
    %58 = math.tanh %57 : vector<1x512xf32>
    %cst_24 = arith.constant 5.000000e-01 : f32
    %59 = vector.broadcast %cst_24 : f32 to vector<1x512xf32>
    %60 = arith.mulf %59, %58 : vector<1x512xf32>
    %cst_25 = arith.constant 5.000000e-01 : f32
    %61 = vector.broadcast %cst_25 : f32 to vector<1x512xf32>
    %62 = arith.addf %60, %61 : vector<1x512xf32>
    %63 = arith.mulf %52, %27 : vector<1x512xf32>
    %64 = arith.mulf %44, %54 : vector<1x512xf32>
    %65 = arith.addf %63, %64 : vector<1x512xf32>
    %66 = math.tanh %65 : vector<1x512xf32>
    %67 = arith.mulf %62, %66 : vector<1x512xf32>
    %68 = vector.extract_strided_slice %2 {offsets = [2, 0], sizes = [1, 2048], strides = [1, 1]} : vector<8x2048xf32> to vector<1x2048xf32>
    %69 = vector.extract_strided_slice %5 {offsets = [1, 0], sizes = [1, 2048], strides = [1, 1]} : vector<7x2048xf32> to vector<1x2048xf32>
    %70 = arith.addf %68, %69 : vector<1x2048xf32>
    %71 = arith.addf %70, %6 : vector<1x2048xf32>
    %72 = arith.truncf %67 : vector<1x512xf32> to vector<1x512xbf16>
    %cst_26 = arith.constant dense<0.000000e+00> : vector<1x2048xf32>
    %73 = tpu.matmul %72, %3, %cst_26 {dimension_numbers = #tpu.dot_dimension_numbers<[1], [0], [0], [1], [0, 0, 1, 1], [], []>} : vector<1x512xbf16>, vector<512x2048xbf16>, vector<1x2048xf32> -> vector<1x2048xf32>
    %74 = arith.addf %73, %71 : vector<1x2048xf32>
    %75 = vector.extract_strided_slice %74 {offsets = [0, 0], sizes = [1, 512], strides = [1, 1]} : vector<1x2048xf32> to vector<1x512xf32>
    %cst_27 = arith.constant 5.000000e-01 : f32
    %76 = vector.broadcast %cst_27 : f32 to vector<1x512xf32>
    %77 = arith.mulf %76, %75 : vector<1x512xf32>
    %78 = math.tanh %77 : vector<1x512xf32>
    %cst_28 = arith.constant 5.000000e-01 : f32
    %79 = vector.broadcast %cst_28 : f32 to vector<1x512xf32>
    %80 = arith.mulf %79, %78 : vector<1x512xf32>
    %cst_29 = arith.constant 5.000000e-01 : f32
    %81 = vector.broadcast %cst_29 : f32 to vector<1x512xf32>
    %82 = arith.addf %80, %81 : vector<1x512xf32>
    %83 = vector.extract_strided_slice %74 {offsets = [0, 512], sizes = [1, 512], strides = [1, 1]} : vector<1x2048xf32> to vector<1x512xf32>
    %cst_30 = arith.constant 5.000000e-01 : f32
    %84 = vector.broadcast %cst_30 : f32 to vector<1x512xf32>
    %85 = arith.mulf %84, %83 : vector<1x512xf32>
    %86 = math.tanh %85 : vector<1x512xf32>
    %cst_31 = arith.constant 5.000000e-01 : f32
    %87 = vector.broadcast %cst_31 : f32 to vector<1x512xf32>
    %88 = arith.mulf %87, %86 : vector<1x512xf32>
    %cst_32 = arith.constant 5.000000e-01 : f32
    %89 = vector.broadcast %cst_32 : f32 to vector<1x512xf32>
    %90 = arith.addf %88, %89 : vector<1x512xf32>
    %91 = vector.extract_strided_slice %74 {offsets = [0, 1024], sizes = [1, 512], strides = [1, 1]} : vector<1x2048xf32> to vector<1x512xf32>
    %92 = math.tanh %91 : vector<1x512xf32>
    %93 = vector.extract_strided_slice %74 {offsets = [0, 1536], sizes = [1, 512], strides = [1, 1]} : vector<1x2048xf32> to vector<1x512xf32>
    %cst_33 = arith.constant 5.000000e-01 : f32
    %94 = vector.broadcast %cst_33 : f32 to vector<1x512xf32>
    %95 = arith.mulf %94, %93 : vector<1x512xf32>
    %96 = math.tanh %95 : vector<1x512xf32>
    %cst_34 = arith.constant 5.000000e-01 : f32
    %97 = vector.broadcast %cst_34 : f32 to vector<1x512xf32>
    %98 = arith.mulf %97, %96 : vector<1x512xf32>
    %cst_35 = arith.constant 5.000000e-01 : f32
    %99 = vector.broadcast %cst_35 : f32 to vector<1x512xf32>
    %100 = arith.addf %98, %99 : vector<1x512xf32>
    %101 = arith.mulf %90, %65 : vector<1x512xf32>
    %102 = arith.mulf %82, %92 : vector<1x512xf32>
    %103 = arith.addf %101, %102 : vector<1x512xf32>
    %104 = math.tanh %103 : vector<1x512xf32>
    %105 = arith.mulf %100, %104 : vector<1x512xf32>
    %106 = vector.extract_strided_slice %2 {offsets = [3, 0], sizes = [1, 2048], strides = [1, 1]} : vector<8x2048xf32> to vector<1x2048xf32>
    %107 = vector.extract_strided_slice %5 {offsets = [2, 0], sizes = [1, 2048], strides = [1, 1]} : vector<7x2048xf32> to vector<1x2048xf32>
    %108 = arith.addf %106, %107 : vector<1x2048xf32>
    %109 = arith.addf %108, %6 : vector<1x2048xf32>
    %110 = arith.truncf %105 : vector<1x512xf32> to vector<1x512xbf16>
    %cst_36 = arith.constant dense<0.000000e+00> : vector<1x2048xf32>
    %111 = tpu.matmul %110, %3, %cst_36 {dimension_numbers = #tpu.dot_dimension_numbers<[1], [0], [0], [1], [0, 0, 1, 1], [], []>} : vector<1x512xbf16>, vector<512x2048xbf16>, vector<1x2048xf32> -> vector<1x2048xf32>
    %112 = arith.addf %111, %109 : vector<1x2048xf32>
    %113 = vector.extract_strided_slice %112 {offsets = [0, 0], sizes = [1, 512], strides = [1, 1]} : vector<1x2048xf32> to vector<1x512xf32>
    %cst_37 = arith.constant 5.000000e-01 : f32
    %114 = vector.broadcast %cst_37 : f32 to vector<1x512xf32>
    %115 = arith.mulf %114, %113 : vector<1x512xf32>
    %116 = math.tanh %115 : vector<1x512xf32>
    %cst_38 = arith.constant 5.000000e-01 : f32
    %117 = vector.broadcast %cst_38 : f32 to vector<1x512xf32>
    %118 = arith.mulf %117, %116 : vector<1x512xf32>
    %cst_39 = arith.constant 5.000000e-01 : f32
    %119 = vector.broadcast %cst_39 : f32 to vector<1x512xf32>
    %120 = arith.addf %118, %119 : vector<1x512xf32>
    %121 = vector.extract_strided_slice %112 {offsets = [0, 512], sizes = [1, 512], strides = [1, 1]} : vector<1x2048xf32> to vector<1x512xf32>
    %cst_40 = arith.constant 5.000000e-01 : f32
    %122 = vector.broadcast %cst_40 : f32 to vector<1x512xf32>
    %123 = arith.mulf %122, %121 : vector<1x512xf32>
    %124 = math.tanh %123 : vector<1x512xf32>
    %cst_41 = arith.constant 5.000000e-01 : f32
    %125 = vector.broadcast %cst_41 : f32 to vector<1x512xf32>
    %126 = arith.mulf %125, %124 : vector<1x512xf32>
    %cst_42 = arith.constant 5.000000e-01 : f32
    %127 = vector.broadcast %cst_42 : f32 to vector<1x512xf32>
    %128 = arith.addf %126, %127 : vector<1x512xf32>
    %129 = vector.extract_strided_slice %112 {offsets = [0, 1024], sizes = [1, 512], strides = [1, 1]} : vector<1x2048xf32> to vector<1x512xf32>
    %130 = math.tanh %129 : vector<1x512xf32>
    %131 = vector.extract_strided_slice %112 {offsets = [0, 1536], sizes = [1, 512], strides = [1, 1]} : vector<1x2048xf32> to vector<1x512xf32>
    %cst_43 = arith.constant 5.000000e-01 : f32
    %132 = vector.broadcast %cst_43 : f32 to vector<1x512xf32>
    %133 = arith.mulf %132, %131 : vector<1x512xf32>
    %134 = math.tanh %133 : vector<1x512xf32>
    %cst_44 = arith.constant 5.000000e-01 : f32
    %135 = vector.broadcast %cst_44 : f32 to vector<1x512xf32>
    %136 = arith.mulf %135, %134 : vector<1x512xf32>
    %cst_45 = arith.constant 5.000000e-01 : f32
    %137 = vector.broadcast %cst_45 : f32 to vector<1x512xf32>
    %138 = arith.addf %136, %137 : vector<1x512xf32>
    %139 = arith.mulf %128, %103 : vector<1x512xf32>
    %140 = arith.mulf %120, %130 : vector<1x512xf32>
    %141 = arith.addf %139, %140 : vector<1x512xf32>
    %142 = math.tanh %141 : vector<1x512xf32>
    %143 = arith.mulf %138, %142 : vector<1x512xf32>
    %144 = vector.extract_strided_slice %2 {offsets = [4, 0], sizes = [1, 2048], strides = [1, 1]} : vector<8x2048xf32> to vector<1x2048xf32>
    %145 = vector.extract_strided_slice %5 {offsets = [3, 0], sizes = [1, 2048], strides = [1, 1]} : vector<7x2048xf32> to vector<1x2048xf32>
    %146 = arith.addf %144, %145 : vector<1x2048xf32>
    %147 = arith.addf %146, %6 : vector<1x2048xf32>
    %148 = arith.truncf %143 : vector<1x512xf32> to vector<1x512xbf16>
    %cst_46 = arith.constant dense<0.000000e+00> : vector<1x2048xf32>
    %149 = tpu.matmul %148, %3, %cst_46 {dimension_numbers = #tpu.dot_dimension_numbers<[1], [0], [0], [1], [0, 0, 1, 1], [], []>} : vector<1x512xbf16>, vector<512x2048xbf16>, vector<1x2048xf32> -> vector<1x2048xf32>
    %150 = arith.addf %149, %147 : vector<1x2048xf32>
    %151 = vector.extract_strided_slice %150 {offsets = [0, 0], sizes = [1, 512], strides = [1, 1]} : vector<1x2048xf32> to vector<1x512xf32>
    %cst_47 = arith.constant 5.000000e-01 : f32
    %152 = vector.broadcast %cst_47 : f32 to vector<1x512xf32>
    %153 = arith.mulf %152, %151 : vector<1x512xf32>
    %154 = math.tanh %153 : vector<1x512xf32>
    %cst_48 = arith.constant 5.000000e-01 : f32
    %155 = vector.broadcast %cst_48 : f32 to vector<1x512xf32>
    %156 = arith.mulf %155, %154 : vector<1x512xf32>
    %cst_49 = arith.constant 5.000000e-01 : f32
    %157 = vector.broadcast %cst_49 : f32 to vector<1x512xf32>
    %158 = arith.addf %156, %157 : vector<1x512xf32>
    %159 = vector.extract_strided_slice %150 {offsets = [0, 512], sizes = [1, 512], strides = [1, 1]} : vector<1x2048xf32> to vector<1x512xf32>
    %cst_50 = arith.constant 5.000000e-01 : f32
    %160 = vector.broadcast %cst_50 : f32 to vector<1x512xf32>
    %161 = arith.mulf %160, %159 : vector<1x512xf32>
    %162 = math.tanh %161 : vector<1x512xf32>
    %cst_51 = arith.constant 5.000000e-01 : f32
    %163 = vector.broadcast %cst_51 : f32 to vector<1x512xf32>
    %164 = arith.mulf %163, %162 : vector<1x512xf32>
    %cst_52 = arith.constant 5.000000e-01 : f32
    %165 = vector.broadcast %cst_52 : f32 to vector<1x512xf32>
    %166 = arith.addf %164, %165 : vector<1x512xf32>
    %167 = vector.extract_strided_slice %150 {offsets = [0, 1024], sizes = [1, 512], strides = [1, 1]} : vector<1x2048xf32> to vector<1x512xf32>
    %168 = math.tanh %167 : vector<1x512xf32>
    %169 = vector.extract_strided_slice %150 {offsets = [0, 1536], sizes = [1, 512], strides = [1, 1]} : vector<1x2048xf32> to vector<1x512xf32>
    %cst_53 = arith.constant 5.000000e-01 : f32
    %170 = vector.broadcast %cst_53 : f32 to vector<1x512xf32>
    %171 = arith.mulf %170, %169 : vector<1x512xf32>
    %172 = math.tanh %171 : vector<1x512xf32>
    %cst_54 = arith.constant 5.000000e-01 : f32
    %173 = vector.broadcast %cst_54 : f32 to vector<1x512xf32>
    %174 = arith.mulf %173, %172 : vector<1x512xf32>
    %cst_55 = arith.constant 5.000000e-01 : f32
    %175 = vector.broadcast %cst_55 : f32 to vector<1x512xf32>
    %176 = arith.addf %174, %175 : vector<1x512xf32>
    %177 = arith.mulf %166, %141 : vector<1x512xf32>
    %178 = arith.mulf %158, %168 : vector<1x512xf32>
    %179 = arith.addf %177, %178 : vector<1x512xf32>
    %180 = math.tanh %179 : vector<1x512xf32>
    %181 = arith.mulf %176, %180 : vector<1x512xf32>
    %182 = vector.extract_strided_slice %2 {offsets = [5, 0], sizes = [1, 2048], strides = [1, 1]} : vector<8x2048xf32> to vector<1x2048xf32>
    %183 = vector.extract_strided_slice %5 {offsets = [4, 0], sizes = [1, 2048], strides = [1, 1]} : vector<7x2048xf32> to vector<1x2048xf32>
    %184 = arith.addf %182, %183 : vector<1x2048xf32>
    %185 = arith.addf %184, %6 : vector<1x2048xf32>
    %186 = arith.truncf %181 : vector<1x512xf32> to vector<1x512xbf16>
    %cst_56 = arith.constant dense<0.000000e+00> : vector<1x2048xf32>
    %187 = tpu.matmul %186, %3, %cst_56 {dimension_numbers = #tpu.dot_dimension_numbers<[1], [0], [0], [1], [0, 0, 1, 1], [], []>} : vector<1x512xbf16>, vector<512x2048xbf16>, vector<1x2048xf32> -> vector<1x2048xf32>
    %188 = arith.addf %187, %185 : vector<1x2048xf32>
    %189 = vector.extract_strided_slice %188 {offsets = [0, 0], sizes = [1, 512], strides = [1, 1]} : vector<1x2048xf32> to vector<1x512xf32>
    %cst_57 = arith.constant 5.000000e-01 : f32
    %190 = vector.broadcast %cst_57 : f32 to vector<1x512xf32>
    %191 = arith.mulf %190, %189 : vector<1x512xf32>
    %192 = math.tanh %191 : vector<1x512xf32>
    %cst_58 = arith.constant 5.000000e-01 : f32
    %193 = vector.broadcast %cst_58 : f32 to vector<1x512xf32>
    %194 = arith.mulf %193, %192 : vector<1x512xf32>
    %cst_59 = arith.constant 5.000000e-01 : f32
    %195 = vector.broadcast %cst_59 : f32 to vector<1x512xf32>
    %196 = arith.addf %194, %195 : vector<1x512xf32>
    %197 = vector.extract_strided_slice %188 {offsets = [0, 512], sizes = [1, 512], strides = [1, 1]} : vector<1x2048xf32> to vector<1x512xf32>
    %cst_60 = arith.constant 5.000000e-01 : f32
    %198 = vector.broadcast %cst_60 : f32 to vector<1x512xf32>
    %199 = arith.mulf %198, %197 : vector<1x512xf32>
    %200 = math.tanh %199 : vector<1x512xf32>
    %cst_61 = arith.constant 5.000000e-01 : f32
    %201 = vector.broadcast %cst_61 : f32 to vector<1x512xf32>
    %202 = arith.mulf %201, %200 : vector<1x512xf32>
    %cst_62 = arith.constant 5.000000e-01 : f32
    %203 = vector.broadcast %cst_62 : f32 to vector<1x512xf32>
    %204 = arith.addf %202, %203 : vector<1x512xf32>
    %205 = vector.extract_strided_slice %188 {offsets = [0, 1024], sizes = [1, 512], strides = [1, 1]} : vector<1x2048xf32> to vector<1x512xf32>
    %206 = math.tanh %205 : vector<1x512xf32>
    %207 = vector.extract_strided_slice %188 {offsets = [0, 1536], sizes = [1, 512], strides = [1, 1]} : vector<1x2048xf32> to vector<1x512xf32>
    %cst_63 = arith.constant 5.000000e-01 : f32
    %208 = vector.broadcast %cst_63 : f32 to vector<1x512xf32>
    %209 = arith.mulf %208, %207 : vector<1x512xf32>
    %210 = math.tanh %209 : vector<1x512xf32>
    %cst_64 = arith.constant 5.000000e-01 : f32
    %211 = vector.broadcast %cst_64 : f32 to vector<1x512xf32>
    %212 = arith.mulf %211, %210 : vector<1x512xf32>
    %cst_65 = arith.constant 5.000000e-01 : f32
    %213 = vector.broadcast %cst_65 : f32 to vector<1x512xf32>
    %214 = arith.addf %212, %213 : vector<1x512xf32>
    %215 = arith.mulf %204, %179 : vector<1x512xf32>
    %216 = arith.mulf %196, %206 : vector<1x512xf32>
    %217 = arith.addf %215, %216 : vector<1x512xf32>
    %218 = math.tanh %217 : vector<1x512xf32>
    %219 = arith.mulf %214, %218 : vector<1x512xf32>
    %220 = vector.extract_strided_slice %2 {offsets = [6, 0], sizes = [1, 2048], strides = [1, 1]} : vector<8x2048xf32> to vector<1x2048xf32>
    %221 = vector.extract_strided_slice %5 {offsets = [5, 0], sizes = [1, 2048], strides = [1, 1]} : vector<7x2048xf32> to vector<1x2048xf32>
    %222 = arith.addf %220, %221 : vector<1x2048xf32>
    %223 = arith.addf %222, %6 : vector<1x2048xf32>
    %224 = arith.truncf %219 : vector<1x512xf32> to vector<1x512xbf16>
    %cst_66 = arith.constant dense<0.000000e+00> : vector<1x2048xf32>
    %225 = tpu.matmul %224, %3, %cst_66 {dimension_numbers = #tpu.dot_dimension_numbers<[1], [0], [0], [1], [0, 0, 1, 1], [], []>} : vector<1x512xbf16>, vector<512x2048xbf16>, vector<1x2048xf32> -> vector<1x2048xf32>
    %226 = arith.addf %225, %223 : vector<1x2048xf32>
    %227 = vector.extract_strided_slice %226 {offsets = [0, 0], sizes = [1, 512], strides = [1, 1]} : vector<1x2048xf32> to vector<1x512xf32>
    %cst_67 = arith.constant 5.000000e-01 : f32
    %228 = vector.broadcast %cst_67 : f32 to vector<1x512xf32>
    %229 = arith.mulf %228, %227 : vector<1x512xf32>
    %230 = math.tanh %229 : vector<1x512xf32>
    %cst_68 = arith.constant 5.000000e-01 : f32
    %231 = vector.broadcast %cst_68 : f32 to vector<1x512xf32>
    %232 = arith.mulf %231, %230 : vector<1x512xf32>
    %cst_69 = arith.constant 5.000000e-01 : f32
    %233 = vector.broadcast %cst_69 : f32 to vector<1x512xf32>
    %234 = arith.addf %232, %233 : vector<1x512xf32>
    %235 = vector.extract_strided_slice %226 {offsets = [0, 512], sizes = [1, 512], strides = [1, 1]} : vector<1x2048xf32> to vector<1x512xf32>
    %cst_70 = arith.constant 5.000000e-01 : f32
    %236 = vector.broadcast %cst_70 : f32 to vector<1x512xf32>
    %237 = arith.mulf %236, %235 : vector<1x512xf32>
    %238 = math.tanh %237 : vector<1x512xf32>
    %cst_71 = arith.constant 5.000000e-01 : f32
    %239 = vector.broadcast %cst_71 : f32 to vector<1x512xf32>
    %240 = arith.mulf %239, %238 : vector<1x512xf32>
    %cst_72 = arith.constant 5.000000e-01 : f32
    %241 = vector.broadcast %cst_72 : f32 to vector<1x512xf32>
    %242 = arith.addf %240, %241 : vector<1x512xf32>
    %243 = vector.extract_strided_slice %226 {offsets = [0, 1024], sizes = [1, 512], strides = [1, 1]} : vector<1x2048xf32> to vector<1x512xf32>
    %244 = math.tanh %243 : vector<1x512xf32>
    %245 = vector.extract_strided_slice %226 {offsets = [0, 1536], sizes = [1, 512], strides = [1, 1]} : vector<1x2048xf32> to vector<1x512xf32>
    %cst_73 = arith.constant 5.000000e-01 : f32
    %246 = vector.broadcast %cst_73 : f32 to vector<1x512xf32>
    %247 = arith.mulf %246, %245 : vector<1x512xf32>
    %248 = math.tanh %247 : vector<1x512xf32>
    %cst_74 = arith.constant 5.000000e-01 : f32
    %249 = vector.broadcast %cst_74 : f32 to vector<1x512xf32>
    %250 = arith.mulf %249, %248 : vector<1x512xf32>
    %cst_75 = arith.constant 5.000000e-01 : f32
    %251 = vector.broadcast %cst_75 : f32 to vector<1x512xf32>
    %252 = arith.addf %250, %251 : vector<1x512xf32>
    %253 = arith.mulf %242, %217 : vector<1x512xf32>
    %254 = arith.mulf %234, %244 : vector<1x512xf32>
    %255 = arith.addf %253, %254 : vector<1x512xf32>
    %256 = math.tanh %255 : vector<1x512xf32>
    %257 = arith.mulf %252, %256 : vector<1x512xf32>
    %258 = vector.extract_strided_slice %2 {offsets = [7, 0], sizes = [1, 2048], strides = [1, 1]} : vector<8x2048xf32> to vector<1x2048xf32>
    %259 = vector.extract_strided_slice %5 {offsets = [6, 0], sizes = [1, 2048], strides = [1, 1]} : vector<7x2048xf32> to vector<1x2048xf32>
    %260 = arith.addf %258, %259 : vector<1x2048xf32>
    %261 = arith.addf %260, %6 : vector<1x2048xf32>
    %262 = arith.truncf %257 : vector<1x512xf32> to vector<1x512xbf16>
    %cst_76 = arith.constant dense<0.000000e+00> : vector<1x2048xf32>
    %263 = tpu.matmul %262, %3, %cst_76 {dimension_numbers = #tpu.dot_dimension_numbers<[1], [0], [0], [1], [0, 0, 1, 1], [], []>} : vector<1x512xbf16>, vector<512x2048xbf16>, vector<1x2048xf32> -> vector<1x2048xf32>
    %264 = arith.addf %263, %261 : vector<1x2048xf32>
    %265 = vector.extract_strided_slice %264 {offsets = [0, 0], sizes = [1, 512], strides = [1, 1]} : vector<1x2048xf32> to vector<1x512xf32>
    %cst_77 = arith.constant 5.000000e-01 : f32
    %266 = vector.broadcast %cst_77 : f32 to vector<1x512xf32>
    %267 = arith.mulf %266, %265 : vector<1x512xf32>
    %268 = math.tanh %267 : vector<1x512xf32>
    %cst_78 = arith.constant 5.000000e-01 : f32
    %269 = vector.broadcast %cst_78 : f32 to vector<1x512xf32>
    %270 = arith.mulf %269, %268 : vector<1x512xf32>
    %cst_79 = arith.constant 5.000000e-01 : f32
    %271 = vector.broadcast %cst_79 : f32 to vector<1x512xf32>
    %272 = arith.addf %270, %271 : vector<1x512xf32>
    %273 = vector.extract_strided_slice %264 {offsets = [0, 512], sizes = [1, 512], strides = [1, 1]} : vector<1x2048xf32> to vector<1x512xf32>
    %cst_80 = arith.constant 5.000000e-01 : f32
    %274 = vector.broadcast %cst_80 : f32 to vector<1x512xf32>
    %275 = arith.mulf %274, %273 : vector<1x512xf32>
    %276 = math.tanh %275 : vector<1x512xf32>
    %cst_81 = arith.constant 5.000000e-01 : f32
    %277 = vector.broadcast %cst_81 : f32 to vector<1x512xf32>
    %278 = arith.mulf %277, %276 : vector<1x512xf32>
    %cst_82 = arith.constant 5.000000e-01 : f32
    %279 = vector.broadcast %cst_82 : f32 to vector<1x512xf32>
    %280 = arith.addf %278, %279 : vector<1x512xf32>
    %281 = vector.extract_strided_slice %264 {offsets = [0, 1024], sizes = [1, 512], strides = [1, 1]} : vector<1x2048xf32> to vector<1x512xf32>
    %282 = math.tanh %281 : vector<1x512xf32>
    %283 = vector.extract_strided_slice %264 {offsets = [0, 1536], sizes = [1, 512], strides = [1, 1]} : vector<1x2048xf32> to vector<1x512xf32>
    %cst_83 = arith.constant 5.000000e-01 : f32
    %284 = vector.broadcast %cst_83 : f32 to vector<1x512xf32>
    %285 = arith.mulf %284, %283 : vector<1x512xf32>
    %286 = math.tanh %285 : vector<1x512xf32>
    %cst_84 = arith.constant 5.000000e-01 : f32
    %287 = vector.broadcast %cst_84 : f32 to vector<1x512xf32>
    %288 = arith.mulf %287, %286 : vector<1x512xf32>
    %cst_85 = arith.constant 5.000000e-01 : f32
    %289 = vector.broadcast %cst_85 : f32 to vector<1x512xf32>
    %290 = arith.addf %288, %289 : vector<1x512xf32>
    %291 = arith.mulf %280, %255 : vector<1x512xf32>
    %292 = arith.mulf %272, %282 : vector<1x512xf32>
    %293 = arith.addf %291, %292 : vector<1x512xf32>
    %294 = math.tanh %293 : vector<1x512xf32>
    %295 = arith.mulf %290, %294 : vector<1x512xf32>
    %c0_86 = arith.constant 0 : index
    %c0_87 = arith.constant 0 : index
    %296 = vector.load %arg5[%c0_86, %c0_87] : memref<1x512xf32, #tpu.memory_space<vmem>>, vector<1x512xf32>
    tpu.vector_store %arg5[%c0_86, %c0_87], %295 {strides = array<i32>} : memref<1x512xf32, #tpu.memory_space<vmem>>, vector<1x512xf32>,
    return
  }
}

</mosaic_0001>

<llo_original>
// kernel: lstm_predictor_forward.1
$region0: #{lstm_predictor_forward.1}
  #allocation0 [shape = 'u32[]', space=smem, size = 0x4, offset = 0x4, fixed_abs, tag = 'smem constant byte address 0x4 - core index']
  #allocation1 [shape = 'u32[144,128]{1,0:T(1,128)}', space=vmem, size = 0x12000, scoped, tag = 'internal scratch']
  #allocation2 [shape = 'bf16[512,2048]{1,0:T(16,128)(2,1)}', space=vmem, size = 0x200000, scoped, tag = 'scratch operand']
  #allocation3 [shape = 's32[1]{0}', space=sflag, size = 0x4, scoped, tag = 'scratch operand']
  #allocation10 [shape = 's32[]', space=sflag, size = 0x4, offset = 0, fixed_abs, tag = 'sflag constant byte address 0x0 - dummy sync flag']
  %s0 = inlined_call_operand.vmem [shape: bf16[8,512], index: 0, kind: input, shape index: {}]
  %s1 = inlined_call_operand.vmem [shape: bf16[7,512], index: 1, kind: input, shape index: {}]
  %s2 = inlined_call_operand.hbm [shape: bf16[512,2048], index: 2, kind: input, shape index: {}]
  %s3 = inlined_call_operand.hbm [shape: bf16[512,2048], index: 3, kind: input, shape index: {}]
  %s4 = inlined_call_operand.hbm [shape: f32[1,2048], index: 4, kind: input, shape index: {}]
  %s5 = inlined_call_operand.hbm [shape: f32[1,512], index: 5, kind: output, shape index: {}]
  %s6 = sld [smem:[#allocation0]]
  $region34: #{lstm_predictor_forward.1} parent=0
    _
  %s8 = ssub.s32 1, %s6
  %s9 = scalar_select 0, %s8, %s6
  $region1: #{lstm_predictor_forward.1} parent=0
    #allocation4 [shape = 'u8[2097152]{0}', space=vmem, size = 0x200000, scoped, tag = 'input window, operand 2, single buffered']
    #allocation5 [shape = 's32[1]{0}', space=sflag, size = 0x4, scoped, tag = 'scoped memory for lstm_predictor_forward.1']
    #allocation6 [shape = 's32[1]{0}', space=sflag, size = 0x4, scoped, tag = 'scoped memory for lstm_predictor_forward.1']
    #allocation7 [shape = 'u8[8192]{0}', space=vmem, size = 0x2000, scoped, tag = 'input window, operand 4, single buffered']
    #allocation8 [shape = 's32[1]{0}', space=sflag, size = 0x4, scoped, tag = 'scoped memory for lstm_predictor_forward.1']
    #allocation9 [shape = 'u8[2048]{0}', space=vmem, size = 0x800, scoped, tag = 'output window, operand 0, single buffered']
    #allocation11 [shape = 'u32[9]{0}', space=smem, size = 0x24, scoped, tag = 'DMA stride descriptor']
    %10 = vsyncpa [#allocation5], 0
    %11 = vsyncpa [#allocation8], 0
    %12 = vsyncpa [#allocation6], 0
    // Predicated region
    $region2: #{lstm_predictor_forward.1} parent=1 // pred_check
      _
    $region3: #{lstm_predictor_forward.1} parent=1 // pred_check_branch
      %14 = sbr.rel (0) target = $region5
    $region4: #{lstm_predictor_forward.1} parent=1 // pred_region
      _
    $region5: #{lstm_predictor_forward.1} parent=1 // pred_fallthru
      _
    // Predicated region
    $region6: #{lstm_predictor_forward.1} parent=1 // pred_check
      _
    $region7: #{lstm_predictor_forward.1} parent=1 // pred_check_branch
      %16 = sbr.rel (0) target = $region9
    $region8: #{lstm_predictor_forward.1} parent=1 // pred_region
      _
    $region9: #{lstm_predictor_forward.1} parent=1 // pred_fallthru
      _
    // Predicated region
    $region10: #{lstm_predictor_forward.1} parent=1 // pred_check
      _
    $region11: #{lstm_predictor_forward.1} parent=1 // pred_check_branch
      %18 = sbr.rel (0) target = $region13
    $region12: #{lstm_predictor_forward.1} parent=1 // pred_region
      %s20 = ssub.s32 65536, 65536
      %21 = vsyncadd [#allocation5], %s20
      %s22 = sshll.u32 [#allocation4], 4
      %s23 = int_to_ptr.vmem [resolvable:$true] %s22
      %28 = dma.hbm_to_vmem [thread:$0]  %s2, 65536, %s23, [#allocation5], 1024, 1024, 64
    $region13: #{lstm_predictor_forward.1} parent=1 // pred_fallthru
      _
    // Predicated region
    $region14: #{lstm_predictor_forward.1} parent=1 // pred_check
      _
    $region15: #{lstm_predictor_forward.1} parent=1 // pred_check_branch
      %30 = sbr.rel (0) target = $region17
    $region16: #{lstm_predictor_forward.1} parent=1 // pred_region
      %s32 = ssub.s32 256, 256
      %33 = vsyncadd [#allocation8], %s32
      %s35 = sshll.u32 [#allocation7], 4
      %s36 = int_to_ptr.vmem [resolvable:$true] %s35
      %38 = dma.hbm_to_vmem [thread:$0]  %s4, 256, %s36, [#allocation8]
    $region17: #{lstm_predictor_forward.1} parent=1 // pred_fallthru
      _
    // Predicated region
    $region18: #{lstm_predictor_forward.1} parent=1 // pred_check
      _
    $region19: #{lstm_predictor_forward.1} parent=1 // pred_check_branch
      %40 = sbr.rel (0) target = $region21
    $region20: #{lstm_predictor_forward.1} parent=1 // pred_region
      %41 = dma.done [#allocation5], 65536
    $region21: #{lstm_predictor_forward.1} parent=1 // pred_fallthru
      _
    // Predicated region
    $region22: #{lstm_predictor_forward.1} parent=1 // pred_check
      _
    $region23: #{lstm_predictor_forward.1} parent=1 // pred_check_branch
      %43 = sbr.rel (0) target = $region25
    $region24: #{lstm_predictor_forward.1} parent=1 // pred_region
      %44 = dma.done [#allocation8], 256
    $region25: #{lstm_predictor_forward.1} parent=1 // pred_fallthru
      _
    %s46 = sshll.u32 1, 14
    %s47 = sxor.u32 4294967295, %s46
    %s49 = sld [smem:[#allocation0]]
    %s50 = sadd.s32 2, %s49
    %s52 = sshll.u32 7, 26
    %s53 = sxor.u32 4294967295, %s52
    %s54 = sand.u32 0, %s53
    %s55 = sshll.u32 %s50, 26
    %s56 = sor.u32 %s54, %s55
    %s57 = sshll.u32 [#allocation2], 4
    %s58 = int_to_ptr.vmem [resolvable:$true] %s57
    %61 = sst [smem:[#allocation11]] 2048
    %s62 = scalar_lea.smem [#allocation11], 1
    %63 = sst [smem:[%s62]] 2048
    %s64 = scalar_lea.smem [#allocation11], 2
    %65 = sst [smem:[%s64]] 16
    %s66 = scalar_lea.smem [#allocation11], 3
    %67 = sst [smem:[%s66]] 64
    %s68 = scalar_lea.smem [#allocation11], 4
    %69 = sst [smem:[%s68]] 128
    %s70 = scalar_lea.smem [#allocation11], 5
    %71 = sst [smem:[%s70]] 2
    %s72 = scalar_lea.smem [#allocation11], 6
    %73 = sst [smem:[%s72]] 1024
    %s74 = scalar_lea.smem [#allocation11], 7
    %75 = sst [smem:[%s74]] 64
    %s76 = scalar_lea.smem [#allocation11], 8
    %77 = sst [smem:[%s76]] 4
    %79 = dma.general %s3, 65536, %s58, [#allocation3], [#allocation10], [#allocation11], %s56, 0
    %v80 = vld [vmem:[%s0] sm:$0xff]
    %v81 = vld [vmem:[%s0 + $0x8] sm:$0xff]
    %v82 = vld [vmem:[#allocation4] sm:$0xff]
    %v83 = vld [vmem:[#allocation4 + $0x8] sm:$0xff]
    %v84 = vld [vmem:[#allocation4 + $0x10] sm:$0xff]
    %v85 = vld [vmem:[#allocation4 + $0x18] sm:$0xff]
    %v86 = vld [vmem:[#allocation4 + $0x20] sm:$0xff]
    %v87 = vld [vmem:[#allocation4 + $0x28] sm:$0xff]
    %v88 = vld [vmem:[#allocation4 + $0x30] sm:$0xff]
    %v89 = vld [vmem:[#allocation4 + $0x38] sm:$0xff]
    %v90 = vld [vmem:[#allocation4 + $0x40] sm:$0xff]
    %v91 = vld [vmem:[#allocation4 + $0x48] sm:$0xff]
    %v92 = vld [vmem:[#allocation4 + $0x50] sm:$0xff]
    %v93 = vld [vmem:[#allocation4 + $0x58] sm:$0xff]
    %v94 = vld [vmem:[#allocation4 + $0x60] sm:$0xff]
    %v95 = vld [vmem:[#allocation4 + $0x68] sm:$0xff]
    %v96 = vld [vmem:[#allocation4 + $0x70] sm:$0xff]
    %v97 = vld [vmem:[#allocation4 + $0x78] sm:$0xff]
    %v98 = vld [vmem:[#allocation4 + $0x80] sm:$0xff]
    %v99 = vld [vmem:[#allocation4 + $0x88] sm:$0xff]
    %v100 = vld [vmem:[#allocation4 + $0x90] sm:$0xff]
    %v101 = vld [vmem:[#allocation4 + $0x98] sm:$0xff]
    %v102 = vld [vmem:[#allocation4 + $0xa0] sm:$0xff]
    %v103 = vld [vmem:[#allocation4 + $0xa8] sm:$0xff]
    %v104 = vld [vmem:[#allocation4 + $0xb0] sm:$0xff]
    %v105 = vld [vmem:[#allocation4 + $0xb8] sm:$0xff]
    %v106 = vld [vmem:[#allocation4 + $0xc0] sm:$0xff]
    %v107 = vld [vmem:[#allocation4 + $0xc8] sm:$0xff]
    %v108 = vld [vmem:[#allocation4 + $0xd0] sm:$0xff]
    %v109 = vld [vmem:[#allocation4 + $0xd8] sm:$0xff]
    %v110 = vld [vmem:[#allocation4 + $0xe0] sm:$0xff]
    %v111 = vld [vmem:[#allocation4 + $0xe8] sm:$0xff]
    %v112 = vld [vmem:[#allocation4 + $0xf0] sm:$0xff]
    %v113 = vld [vmem:[#allocation4 + $0xf8] sm:$0xff]
    %v114 = vld [vmem:[#allocation4 + $0x100] sm:$0xff]
    %v115 = vld [vmem:[#allocation4 + $0x108] sm:$0xff]
    %v116 = vld [vmem:[#allocation4 + $0x110] sm:$0xff]
    %v117 = vld [vmem:[#allocation4 + $0x118] sm:$0xff]
    %v118 = vld [vmem:[#allocation4 + $0x120] sm:$0xff]
    %v119 = vld [vmem:[#allocation4 + $0x128] sm:$0xff]
    %v120 = vld [vmem:[#allocation4 + $0x130] sm:$0xff]
    %v121 = vld [vmem:[#allocation4 + $0x138] sm:$0xff]
    %v122 = vld [vmem:[#allocation4 + $0x140] sm:$0xff]
    %v123 = vld [vmem:[#allocation4 + $0x148] sm:$0xff]
    %v124 = vld [vmem:[#allocation4 + $0x150] sm:$0xff]
    %v125 = vld [vmem:[#allocation4 + $0x158] sm:$0xff]
    %v126 = vld [vmem:[#allocation4 + $0x160] sm:$0xff]
    %v127 = vld [vmem:[#allocation4 + $0x168] sm:$0xff]
    %v128 = vld [vmem:[#allocation4 + $0x170] sm:$0xff]
    %v129 = vld [vmem:[#allocation4 + $0x178] sm:$0xff]
    %v130 = vld [vmem:[#allocation4 + $0x180] sm:$0xff]
    %v131 = vld [vmem:[#allocation4 + $0x188] sm:$0xff]
    %v132 = vld [vmem:[#allocation4 + $0x190] sm:$0xff]
    %v133 = vld [vmem:[#allocation4 + $0x198] sm:$0xff]
    %v134 = vld [vmem:[#allocation4 + $0x1a0] sm:$0xff]
    %v135 = vld [vmem:[#allocation4 + $0x1a8] sm:$0xff]
    %v136 = vld [vmem:[#allocation4 + $0x1b0] sm:$0xff]
    %v137 = vld [vmem:[#allocation4 + $0x1b8] sm:$0xff]
    %v138 = vld [vmem:[#allocation4 + $0x1c0] sm:$0xff]
    %v139 = vld [vmem:[#allocation4 + $0x1c8] sm:$0xff]
    %v140 = vld [vmem:[#allocation4 + $0x1d0] sm:$0xff]
    %v141 = vld [vmem:[#allocation4 + $0x1d8] sm:$0xff]
    %v142 = vld [vmem:[#allocation4 + $0x1e0] sm:$0xff]
    %v143 = vld [vmem:[#allocation4 + $0x1e8] sm:$0xff]
    %v144 = vld [vmem:[#allocation4 + $0x1f0] sm:$0xff]
    %v145 = vld [vmem:[#allocation4 + $0x1f8] sm:$0xff]
    %v146 = vld [vmem:[#allocation4 + $0x200] sm:$0xff]
    %v147 = vld [vmem:[#allocation4 + $0x208] sm:$0xff]
    %v148 = vld [vmem:[#allocation4 + $0x210] sm:$0xff]
    %v149 = vld [vmem:[#allocation4 + $0x218] sm:$0xff]
    %v150 = vld [vmem:[#allocation4 + $0x220] sm:$0xff]
    %v151 = vld [vmem:[#allocation4 + $0x228] sm:$0xff]
    %v152 = vld [vmem:[#allocation4 + $0x230] sm:$0xff]
    %v153 = vld [vmem:[#allocation4 + $0x238] sm:$0xff]
    %v154 = vld [vmem:[#allocation4 + $0x240] sm:$0xff]
    %v155 = vld [vmem:[#allocation4 + $0x248] sm:$0xff]
    %v156 = vld [vmem:[#allocation4 + $0x250] sm:$0xff]
    %v157 = vld [vmem:[#allocation4 + $0x258] sm:$0xff]
    %v158 = vld [vmem:[#allocation4 + $0x260] sm:$0xff]
    %v159 = vld [vmem:[#allocation4 + $0x268] sm:$0xff]
    %v160 = vld [vmem:[#allocation4 + $0x270] sm:$0xff]
    %v161 = vld [vmem:[#allocation4 + $0x278] sm:$0xff]
    %v162 = vld [vmem:[#allocation4 + $0x280] sm:$0xff]
    %v163 = vld [vmem:[#allocation4 + $0x288] sm:$0xff]
    %v164 = vld [vmem:[#allocation4 + $0x290] sm:$0xff]
    %v165 = vld [vmem:[#allocation4 + $0x298] sm:$0xff]
    %v166 = vld [vmem:[#allocation4 + $0x2a0] sm:$0xff]
    %v167 = vld [vmem:[#allocation4 + $0x2a8] sm:$0xff]
    %v168 = vld [vmem:[#allocation4 + $0x2b0] sm:$0xff]
    %v169 = vld [vmem:[#allocation4 + $0x2b8] sm:$0xff]
    %v170 = vld [vmem:[#allocation4 + $0x2c0] sm:$0xff]
    %v171 = vld [vmem:[#allocation4 + $0x2c8] sm:$0xff]
    %v172 = vld [vmem:[#allocation4 + $0x2d0] sm:$0xff]
    %v173 = vld [vmem:[#allocation4 + $0x2d8] sm:$0xff]
    %v174 = vld [vmem:[#allocation4 + $0x2e0] sm:$0xff]
    %v175 = vld [vmem:[#allocation4 + $0x2e8] sm:$0xff]
    %v176 = vld [vmem:[#allocation4 + $0x2f0] sm:$0xff]
    %v177 = vld [vmem:[#allocation4 + $0x2f8] sm:$0xff]
    %v178 = vld [vmem:[#allocation4 + $0x300] sm:$0xff]
    %v179 = vld [vmem:[#allocation4 + $0x308] sm:$0xff]
    %v180 = vld [vmem:[#allocation4 + $0x310] sm:$0xff]
    %v181 = vld [vmem:[#allocation4 + $0x318] sm:$0xff]
    %v182 = vld [vmem:[#allocation4 + $0x320] sm:$0xff]
    %v183 = vld [vmem:[#allocation4 + $0x328] sm:$0xff]
    %v184 = vld [vmem:[#allocation4 + $0x330] sm:$0xff]
    %v185 = vld [vmem:[#allocation4 + $0x338] sm:$0xff]
    %v186 = vld [vmem:[#allocation4 + $0x340] sm:$0xff]
    %v187 = vld [vmem:[#allocation4 + $0x348] sm:$0xff]
    %v188 = vld [vmem:[#allocation4 + $0x350] sm:$0xff]
    %v189 = vld [vmem:[#allocation4 + $0x358] sm:$0xff]
    %v190 = vld [vmem:[#allocation4 + $0x360] sm:$0xff]
    %v191 = vld [vmem:[#allocation4 + $0x368] sm:$0xff]
    %v192 = vld [vmem:[#allocation4 + $0x370] sm:$0xff]
    %v193 = vld [vmem:[#allocation4 + $0x378] sm:$0xff]
    %v194 = vld [vmem:[#allocation4 + $0x380] sm:$0xff]
    %v195 = vld [vmem:[#allocation4 + $0x388] sm:$0xff]
    %v196 = vld [vmem:[#allocation4 + $0x390] sm:$0xff]
    %v197 = vld [vmem:[#allocation4 + $0x398] sm:$0xff]
    %v198 = vld [vmem:[#allocation4 + $0x3a0] sm:$0xff]
    %v199 = vld [vmem:[#allocation4 + $0x3a8] sm:$0xff]
    %v200 = vld [vmem:[#allocation4 + $0x3b0] sm:$0xff]
    %v201 = vld [vmem:[#allocation4 + $0x3b8] sm:$0xff]
    %v202 = vld [vmem:[#allocation4 + $0x3c0] sm:$0xff]
    %v203 = vld [vmem:[#allocation4 + $0x3c8] sm:$0xff]
    %v204 = vld [vmem:[#allocation4 + $0x3d0] sm:$0xff]
    %v205 = vld [vmem:[#allocation4 + $0x3d8] sm:$0xff]
    %v206 = vld [vmem:[#allocation4 + $0x3e0] sm:$0xff]
    %v207 = vld [vmem:[#allocation4 + $0x3e8] sm:$0xff]
    %v208 = vld [vmem:[#allocation4 + $0x3f0] sm:$0xff]
    %v209 = vld [vmem:[#allocation4 + $0x3f8] sm:$0xff]
    %v210 = vld [vmem:[#allocation4 + $0x400] sm:$0xff]
    %v211 = vld [vmem:[#allocation4 + $0x408] sm:$0xff]
    %v212 = vld [vmem:[#allocation4 + $0x410] sm:$0xff]
    %v213 = vld [vmem:[#allocation4 + $0x418] sm:$0xff]
    %v214 = vld [vmem:[#allocation4 + $0x420] sm:$0xff]
    %v215 = vld [vmem:[#allocation4 + $0x428] sm:$0xff]
    %v216 = vld [vmem:[#allocation4 + $0x430] sm:$0xff]
    %v217 = vld [vmem:[#allocation4 + $0x438] sm:$0xff]
    %v218 = vld [vmem:[#allocation4 + $0x440] sm:$0xff]
    %v219 = vld [vmem:[#allocation4 + $0x448] sm:$0xff]
    %v220 = vld [vmem:[#allocation4 + $0x450] sm:$0xff]
    %v221 = vld [vmem:[#allocation4 + $0x458] sm:$0xff]
    %v222 = vld [vmem:[#allocation4 + $0x460] sm:$0xff]
    %v223 = vld [vmem:[#allocation4 + $0x468] sm:$0xff]
    %v224 = vld [vmem:[#allocation4 + $0x470] sm:$0xff]
    %v225 = vld [vmem:[#allocation4 + $0x478] sm:$0xff]
    %v226 = vld [vmem:[#allocation4 + $0x480] sm:$0xff]
    %v227 = vld [vmem:[#allocation4 + $0x488] sm:$0xff]
    %v228 = vld [vmem:[#allocation4 + $0x490] sm:$0xff]
    %v229 = vld [vmem:[#allocation4 + $0x498] sm:$0xff]
    %v230 = vld [vmem:[#allocation4 + $0x4a0] sm:$0xff]
    %v231 = vld [vmem:[#allocation4 + $0x4a8] sm:$0xff]
    %v232 = vld [vmem:[#allocation4 + $0x4b0] sm:$0xff]
    %v233 = vld [vmem:[#allocation4 + $0x4b8] sm:$0xff]
    %v234 = vld [vmem:[#allocation4 + $0x4c0] sm:$0xff]
    %v235 = vld [vmem:[#allocation4 + $0x4c8] sm:$0xff]
    %v236 = vld [vmem:[#allocation4 + $0x4d0] sm:$0xff]
    %v237 = vld [vmem:[#allocation4 + $0x4d8] sm:$0xff]
    %v238 = vld [vmem:[#allocation4 + $0x4e0] sm:$0xff]
    %v239 = vld [vmem:[#allocation4 + $0x4e8] sm:$0xff]
    %v240 = vld [vmem:[#allocation4 + $0x4f0] sm:$0xff]
    %v241 = vld [vmem:[#allocation4 + $0x4f8] sm:$0xff]
    %v242 = vld [vmem:[#allocation4 + $0x500] sm:$0xff]
    %v243 = vld [vmem:[#allocation4 + $0x508] sm:$0xff]
    %v244 = vld [vmem:[#allocation4 + $0x510] sm:$0xff]
    %v245 = vld [vmem:[#allocation4 + $0x518] sm:$0xff]
    %v246 = vld [vmem:[#allocation4 + $0x520] sm:$0xff]
    %v247 = vld [vmem:[#allocation4 + $0x528] sm:$0xff]
    %v248 = vld [vmem:[#allocation4 + $0x530] sm:$0xff]
    %v249 = vld [vmem:[#allocation4 + $0x538] sm:$0xff]
    %v250 = vld [vmem:[#allocation4 + $0x540] sm:$0xff]
    %v251 = vld [vmem:[#allocation4 + $0x548] sm:$0xff]
    %v252 = vld [vmem:[#allocation4 + $0x550] sm:$0xff]
    %v253 = vld [vmem:[#allocation4 + $0x558] sm:$0xff]
    %v254 = vld [vmem:[#allocation4 + $0x560] sm:$0xff]
    %v255 = vld [vmem:[#allocation4 + $0x568] sm:$0xff]
    %v256 = vld [vmem:[#allocation4 + $0x570] sm:$0xff]
    %v257 = vld [vmem:[#allocation4 + $0x578] sm:$0xff]
    %v258 = vld [vmem:[#allocation4 + $0x580] sm:$0xff]
    %v259 = vld [vmem:[#allocation4 + $0x588] sm:$0xff]
    %v260 = vld [vmem:[#allocation4 + $0x590] sm:$0xff]
    %v261 = vld [vmem:[#allocation4 + $0x598] sm:$0xff]
    %v262 = vld [vmem:[#allocation4 + $0x5a0] sm:$0xff]
    %v263 = vld [vmem:[#allocation4 + $0x5a8] sm:$0xff]
    %v264 = vld [vmem:[#allocation4 + $0x5b0] sm:$0xff]
    %v265 = vld [vmem:[#allocation4 + $0x5b8] sm:$0xff]
    %v266 = vld [vmem:[#allocation4 + $0x5c0] sm:$0xff]
    %v267 = vld [vmem:[#allocation4 + $0x5c8] sm:$0xff]
    %v268 = vld [vmem:[#allocation4 + $0x5d0] sm:$0xff]
    %v269 = vld [vmem:[#allocation4 + $0x5d8] sm:$0xff]
    %v270 = vld [vmem:[#allocation4 + $0x5e0] sm:$0xff]
    %v271 = vld [vmem:[#allocation4 + $0x5e8] sm:$0xff]
    %v272 = vld [vmem:[#allocation4 + $0x5f0] sm:$0xff]
    %v273 = vld [vmem:[#allocation4 + $0x5f8] sm:$0xff]
    %v274 = vld [vmem:[#allocation4 + $0x600] sm:$0xff]
    %v275 = vld [vmem:[#allocation4 + $0x608] sm:$0xff]
    %v276 = vld [vmem:[#allocation4 + $0x610] sm:$0xff]
    %v277 = vld [vmem:[#allocation4 + $0x618] sm:$0xff]
    %v278 = vld [vmem:[#allocation4 + $0x620] sm:$0xff]
    %v279 = vld [vmem:[#allocation4 + $0x628] sm:$0xff]
    %v280 = vld [vmem:[#allocation4 + $0x630] sm:$0xff]
    %v281 = vld [vmem:[#allocation4 + $0x638] sm:$0xff]
    %v282 = vld [vmem:[#allocation4 + $0x640] sm:$0xff]
    %v283 = vld [vmem:[#allocation4 + $0x648] sm:$0xff]
    %v284 = vld [vmem:[#allocation4 + $0x650] sm:$0xff]
    %v285 = vld [vmem:[#allocation4 + $0x658] sm:$0xff]
    %v286 = vld [vmem:[#allocation4 + $0x660] sm:$0xff]
    %v287 = vld [vmem:[#allocation4 + $0x668] sm:$0xff]
    %v288 = vld [vmem:[#allocation4 + $0x670] sm:$0xff]
    %v289 = vld [vmem:[#allocation4 + $0x678] sm:$0xff]
    %v290 = vld [vmem:[#allocation4 + $0x680] sm:$0xff]
    %v291 = vld [vmem:[#allocation4 + $0x688] sm:$0xff]
    %v292 = vld [vmem:[#allocation4 + $0x690] sm:$0xff]
    %v293 = vld [vmem:[#allocation4 + $0x698] sm:$0xff]
    %v294 = vld [vmem:[#allocation4 + $0x6a0] sm:$0xff]
    %v295 = vld [vmem:[#allocation4 + $0x6a8] sm:$0xff]
    %v296 = vld [vmem:[#allocation4 + $0x6b0] sm:$0xff]
    %v297 = vld [vmem:[#allocation4 + $0x6b8] sm:$0xff]
    %v298 = vld [vmem:[#allocation4 + $0x6c0] sm:$0xff]
    %v299 = vld [vmem:[#allocation4 + $0x6c8] sm:$0xff]
    %v300 = vld [vmem:[#allocation4 + $0x6d0] sm:$0xff]
    %v301 = vld [vmem:[#allocation4 + $0x6d8] sm:$0xff]
    %v302 = vld [vmem:[#allocation4 + $0x6e0] sm:$0xff]
    %v303 = vld [vmem:[#allocation4 + $0x6e8] sm:$0xff]
    %v304 = vld [vmem:[#allocation4 + $0x6f0] sm:$0xff]
    %v305 = vld [vmem:[#allocation4 + $0x6f8] sm:$0xff]
    %v306 = vld [vmem:[#allocation4 + $0x700] sm:$0xff]
    %v307 = vld [vmem:[#allocation4 + $0x708] sm:$0xff]
    %v308 = vld [vmem:[#allocation4 + $0x710] sm:$0xff]
    %v309 = vld [vmem:[#allocation4 + $0x718] sm:$0xff]
    %v310 = vld [vmem:[#allocation4 + $0x720] sm:$0xff]
    %v311 = vld [vmem:[#allocation4 + $0x728] sm:$0xff]
    %v312 = vld [vmem:[#allocation4 + $0x730] sm:$0xff]
    %v313 = vld [vmem:[#allocation4 + $0x738] sm:$0xff]
    %v314 = vld [vmem:[#allocation4 + $0x740] sm:$0xff]
    %v315 = vld [vmem:[#allocation4 + $0x748] sm:$0xff]
    %v316 = vld [vmem:[#allocation4 + $0x750] sm:$0xff]
    %v317 = vld [vmem:[#allocation4 + $0x758] sm:$0xff]
    %v318 = vld [vmem:[#allocation4 + $0x760] sm:$0xff]
    %v319 = vld [vmem:[#allocation4 + $0x768] sm:$0xff]
    %v320 = vld [vmem:[#allocation4 + $0x770] sm:$0xff]
    %v321 = vld [vmem:[#allocation4 + $0x778] sm:$0xff]
    %v322 = vld [vmem:[#allocation4 + $0x780] sm:$0xff]
    %v323 = vld [vmem:[#allocation4 + $0x788] sm:$0xff]
    %v324 = vld [vmem:[#allocation4 + $0x790] sm:$0xff]
    %v325 = vld [vmem:[#allocation4 + $0x798] sm:$0xff]
    %v326 = vld [vmem:[#allocation4 + $0x7a0] sm:$0xff]
    %v327 = vld [vmem:[#allocation4 + $0x7a8] sm:$0xff]
    %v328 = vld [vmem:[#allocation4 + $0x7b0] sm:$0xff]
    %v329 = vld [vmem:[#allocation4 + $0x7b8] sm:$0xff]
    %v330 = vld [vmem:[#allocation4 + $0x7c0] sm:$0xff]
    %v331 = vld [vmem:[#allocation4 + $0x7c8] sm:$0xff]
    %v332 = vld [vmem:[#allocation4 + $0x7d0] sm:$0xff]
    %v333 = vld [vmem:[#allocation4 + $0x7d8] sm:$0xff]
    %v334 = vld [vmem:[#allocation4 + $0x7e0] sm:$0xff]
    %v335 = vld [vmem:[#allocation4 + $0x7e8] sm:$0xff]
    %v336 = vld [vmem:[#allocation4 + $0x7f0] sm:$0xff]
    %v337 = vld [vmem:[#allocation4 + $0x7f8] sm:$0xff]
    %v338 = vld [vmem:[#allocation4 + $0x800] sm:$0xff]
    %v339 = vld [vmem:[#allocation4 + $0x808] sm:$0xff]
    %v340 = vld [vmem:[#allocation4 + $0x810] sm:$0xff]
    %v341 = vld [vmem:[#allocation4 + $0x818] sm:$0xff]
    %v342 = vld [vmem:[#allocation4 + $0x820] sm:$0xff]
    %v343 = vld [vmem:[#allocation4 + $0x828] sm:$0xff]
    %v344 = vld [vmem:[#allocation4 + $0x830] sm:$0xff]
    %v345 = vld [vmem:[#allocation4 + $0x838] sm:$0xff]
    %v346 = vld [vmem:[#allocation4 + $0x840] sm:$0xff]
    %v347 = vld [vmem:[#allocation4 + $0x848] sm:$0xff]
    %v348 = vld [vmem:[#allocation4 + $0x850] sm:$0xff]
    %v349 = vld [vmem:[#allocation4 + $0x858] sm:$0xff]
    %v350 = vld [vmem:[#allocation4 + $0x860] sm:$0xff]
    %v351 = vld [vmem:[#allocation4 + $0x868] sm:$0xff]
    %v352 = vld [vmem:[#allocation4 + $0x870] sm:$0xff]
    %v353 = vld [vmem:[#allocation4 + $0x878] sm:$0xff]
    %v354 = vld [vmem:[#allocation4 + $0x880] sm:$0xff]
    %v355 = vld [vmem:[#allocation4 + $0x888] sm:$0xff]
    %v356 = vld [vmem:[#allocation4 + $0x890] sm:$0xff]
    %v357 = vld [vmem:[#allocation4 + $0x898] sm:$0xff]
    %v358 = vld [vmem:[#allocation4 + $0x8a0] sm:$0xff]
    %v359 = vld [vmem:[#allocation4 + $0x8a8] sm:$0xff]
    %v360 = vld [vmem:[#allocation4 + $0x8b0] sm:$0xff]
    %v361 = vld [vmem:[#allocation4 + $0x8b8] sm:$0xff]
    %v362 = vld [vmem:[#allocation4 + $0x8c0] sm:$0xff]
    %v363 = vld [vmem:[#allocation4 + $0x8c8] sm:$0xff]
    %v364 = vld [vmem:[#allocation4 + $0x8d0] sm:$0xff]
    %v365 = vld [vmem:[#allocation4 + $0x8d8] sm:$0xff]
    %v366 = vld [vmem:[#allocation4 + $0x8e0] sm:$0xff]
    %v367 = vld [vmem:[#allocation4 + $0x8e8] sm:$0xff]
    %v368 = vld [vmem:[#allocation4 + $0x8f0] sm:$0xff]
    %v369 = vld [vmem:[#allocation4 + $0x8f8] sm:$0xff]
    %v370 = vld [vmem:[#allocation4 + $0x900] sm:$0xff]
    %v371 = vld [vmem:[#allocation4 + $0x908] sm:$0xff]
    %v372 = vld [vmem:[#allocation4 + $0x910] sm:$0xff]
    %v373 = vld [vmem:[#allocation4 + $0x918] sm:$0xff]
    %v374 = vld [vmem:[#allocation4 + $0x920] sm:$0xff]
    %v375 = vld [vmem:[#allocation4 + $0x928] sm:$0xff]
    %v376 = vld [vmem:[#allocation4 + $0x930] sm:$0xff]
    %v377 = vld [vmem:[#allocation4 + $0x938] sm:$0xff]
    %v378 = vld [vmem:[#allocation4 + $0x940] sm:$0xff]
    %v379 = vld [vmem:[#allocation4 + $0x948] sm:$0xff]
    %v380 = vld [vmem:[#allocation4 + $0x950] sm:$0xff]
    %v381 = vld [vmem:[#allocation4 + $0x958] sm:$0xff]
    %v382 = vld [vmem:[#allocation4 + $0x960] sm:$0xff]
    %v383 = vld [vmem:[#allocation4 + $0x968] sm:$0xff]
    %v384 = vld [vmem:[#allocation4 + $0x970] sm:$0xff]
    %v385 = vld [vmem:[#allocation4 + $0x978] sm:$0xff]
    %v386 = vld [vmem:[#allocation4 + $0x980] sm:$0xff]
    %v387 = vld [vmem:[#allocation4 + $0x988] sm:$0xff]
    %v388 = vld [vmem:[#allocation4 + $0x990] sm:$0xff]
    %v389 = vld [vmem:[#allocation4 + $0x998] sm:$0xff]
    %v390 = vld [vmem:[#allocation4 + $0x9a0] sm:$0xff]
    %v391 = vld [vmem:[#allocation4 + $0x9a8] sm:$0xff]
    %v392 = vld [vmem:[#allocation4 + $0x9b0] sm:$0xff]
    %v393 = vld [vmem:[#allocation4 + $0x9b8] sm:$0xff]
    %v394 = vld [vmem:[#allocation4 + $0x9c0] sm:$0xff]
    %v395 = vld [vmem:[#allocation4 + $0x9c8] sm:$0xff]
    %v396 = vld [vmem:[#allocation4 + $0x9d0] sm:$0xff]
    %v397 = vld [vmem:[#allocation4 + $0x9d8] sm:$0xff]
    %v398 = vld [vmem:[#allocation4 + $0x9e0] sm:$0xff]
    %v399 = vld [vmem:[#allocation4 + $0x9e8] sm:$0xff]
    %v400 = vld [vmem:[#allocation4 + $0x9f0] sm:$0xff]
    %v401 = vld [vmem:[#allocation4 + $0x9f8] sm:$0xff]
    %v402 = vld [vmem:[#allocation4 + $0xa00] sm:$0xff]
    %v403 = vld [vmem:[#allocation4 + $0xa08] sm:$0xff]
    %v404 = vld [vmem:[#allocation4 + $0xa10] sm:$0xff]
    %v405 = vld [vmem:[#allocation4 + $0xa18] sm:$0xff]
    %v406 = vld [vmem:[#allocation4 + $0xa20] sm:$0xff]
    %v407 = vld [vmem:[#allocation4 + $0xa28] sm:$0xff]
    %v408 = vld [vmem:[#allocation4 + $0xa30] sm:$0xff]
    %v409 = vld [vmem:[#allocation4 + $0xa38] sm:$0xff]
    %v410 = vld [vmem:[#allocation4 + $0xa40] sm:$0xff]
    %v411 = vld [vmem:[#allocation4 + $0xa48] sm:$0xff]
    %v412 = vld [vmem:[#allocation4 + $0xa50] sm:$0xff]
    %v413 = vld [vmem:[#allocation4 + $0xa58] sm:$0xff]
    %v414 = vld [vmem:[#allocation4 + $0xa60] sm:$0xff]
    %v415 = vld [vmem:[#allocation4 + $0xa68] sm:$0xff]
    %v416 = vld [vmem:[#allocation4 + $0xa70] sm:$0xff]
    %v417 = vld [vmem:[#allocation4 + $0xa78] sm:$0xff]
    %v418 = vld [vmem:[#allocation4 + $0xa80] sm:$0xff]
    %v419 = vld [vmem:[#allocation4 + $0xa88] sm:$0xff]
    %v420 = vld [vmem:[#allocation4 + $0xa90] sm:$0xff]
    %v421 = vld [vmem:[#allocation4 + $0xa98] sm:$0xff]
    %v422 = vld [vmem:[#allocation4 + $0xaa0] sm:$0xff]
    %v423 = vld [vmem:[#allocation4 + $0xaa8] sm:$0xff]
    %v424 = vld [vmem:[#allocation4 + $0xab0] sm:$0xff]
    %v425 = vld [vmem:[#allocation4 + $0xab8] sm:$0xff]
    %v426 = vld [vmem:[#allocation4 + $0xac0] sm:$0xff]
    %v427 = vld [vmem:[#allocation4 + $0xac8] sm:$0xff]
    %v428 = vld [vmem:[#allocation4 + $0xad0] sm:$0xff]
    %v429 = vld [vmem:[#allocation4 + $0xad8] sm:$0xff]
    %v430 = vld [vmem:[#allocation4 + $0xae0] sm:$0xff]
    %v431 = vld [vmem:[#allocation4 + $0xae8] sm:$0xff]
    %v432 = vld [vmem:[#allocation4 + $0xaf0] sm:$0xff]
    %v433 = vld [vmem:[#allocation4 + $0xaf8] sm:$0xff]
    %v434 = vld [vmem:[#allocation4 + $0xb00] sm:$0xff]
    %v435 = vld [vmem:[#allocation4 + $0xb08] sm:$0xff]
    %v436 = vld [vmem:[#allocation4 + $0xb10] sm:$0xff]
    %v437 = vld [vmem:[#allocation4 + $0xb18] sm:$0xff]
    %v438 = vld [vmem:[#allocation4 + $0xb20] sm:$0xff]
    %v439 = vld [vmem:[#allocation4 + $0xb28] sm:$0xff]
    %v440 = vld [vmem:[#allocation4 + $0xb30] sm:$0xff]
    %v441 = vld [vmem:[#allocation4 + $0xb38] sm:$0xff]
    %v442 = vld [vmem:[#allocation4 + $0xb40] sm:$0xff]
    %v443 = vld [vmem:[#allocation4 + $0xb48] sm:$0xff]
    %v444 = vld [vmem:[#allocation4 + $0xb50] sm:$0xff]
    %v445 = vld [vmem:[#allocation4 + $0xb58] sm:$0xff]
    %v446 = vld [vmem:[#allocation4 + $0xb60] sm:$0xff]
    %v447 = vld [vmem:[#allocation4 + $0xb68] sm:$0xff]
    %v448 = vld [vmem:[#allocation4 + $0xb70] sm:$0xff]
    %v449 = vld [vmem:[#allocation4 + $0xb78] sm:$0xff]
    %v450 = vld [vmem:[#allocation4 + $0xb80] sm:$0xff]
    %v451 = vld [vmem:[#allocation4 + $0xb88] sm:$0xff]
    %v452 = vld [vmem:[#allocation4 + $0xb90] sm:$0xff]
    %v453 = vld [vmem:[#allocation4 + $0xb98] sm:$0xff]
    %v454 = vld [vmem:[#allocation4 + $0xba0] sm:$0xff]
    %v455 = vld [vmem:[#allocation4 + $0xba8] sm:$0xff]
    %v456 = vld [vmem:[#allocation4 + $0xbb0] sm:$0xff]
    %v457 = vld [vmem:[#allocation4 + $0xbb8] sm:$0xff]
    %v458 = vld [vmem:[#allocation4 + $0xbc0] sm:$0xff]
    %v459 = vld [vmem:[#allocation4 + $0xbc8] sm:$0xff]
    %v460 = vld [vmem:[#allocation4 + $0xbd0] sm:$0xff]
    %v461 = vld [vmem:[#allocation4 + $0xbd8] sm:$0xff]
    %v462 = vld [vmem:[#allocation4 + $0xbe0] sm:$0xff]
    %v463 = vld [vmem:[#allocation4 + $0xbe8] sm:$0xff]
    %v464 = vld [vmem:[#allocation4 + $0xbf0] sm:$0xff]
    %v465 = vld [vmem:[#allocation4 + $0xbf8] sm:$0xff]
    %v466 = vld [vmem:[#allocation4 + $0xc00] sm:$0xff]
    %v467 = vld [vmem:[#allocation4 + $0xc08] sm:$0xff]
    %v468 = vld [vmem:[#allocation4 + $0xc10] sm:$0xff]
    %v469 = vld [vmem:[#allocation4 + $0xc18] sm:$0xff]
    %v470 = vld [vmem:[#allocation4 + $0xc20] sm:$0xff]
    %v471 = vld [vmem:[#allocation4 + $0xc28] sm:$0xff]
    %v472 = vld [vmem:[#allocation4 + $0xc30] sm:$0xff]
    %v473 = vld [vmem:[#allocation4 + $0xc38] sm:$0xff]
    %v474 = vld [vmem:[#allocation4 + $0xc40] sm:$0xff]
    %v475 = vld [vmem:[#allocation4 + $0xc48] sm:$0xff]
    %v476 = vld [vmem:[#allocation4 + $0xc50] sm:$0xff]
    %v477 = vld [vmem:[#allocation4 + $0xc58] sm:$0xff]
    %v478 = vld [vmem:[#allocation4 + $0xc60] sm:$0xff]
    %v479 = vld [vmem:[#allocation4 + $0xc68] sm:$0xff]
    %v480 = vld [vmem:[#allocation4 + $0xc70] sm:$0xff]
    %v481 = vld [vmem:[#allocation4 + $0xc78] sm:$0xff]
    %v482 = vld [vmem:[#allocation4 + $0xc80] sm:$0xff]
    %v483 = vld [vmem:[#allocation4 + $0xc88] sm:$0xff]
    %v484 = vld [vmem:[#allocation4 + $0xc90] sm:$0xff]
    %v485 = vld [vmem:[#allocation4 + $0xc98] sm:$0xff]
    %v486 = vld [vmem:[#allocation4 + $0xca0] sm:$0xff]
    %v487 = vld [vmem:[#allocation4 + $0xca8] sm:$0xff]
    %v488 = vld [vmem:[#allocation4 + $0xcb0] sm:$0xff]
    %v489 = vld [vmem:[#allocation4 + $0xcb8] sm:$0xff]
    %v490 = vld [vmem:[#allocation4 + $0xcc0] sm:$0xff]
    %v491 = vld [vmem:[#allocation4 + $0xcc8] sm:$0xff]
    %v492 = vld [vmem:[#allocation4 + $0xcd0] sm:$0xff]
    %v493 = vld [vmem:[#allocation4 + $0xcd8] sm:$0xff]
    %v494 = vld [vmem:[#allocation4 + $0xce0] sm:$0xff]
    %v495 = vld [vmem:[#allocation4 + $0xce8] sm:$0xff]
    %v496 = vld [vmem:[#allocation4 + $0xcf0] sm:$0xff]
    %v497 = vld [vmem:[#allocation4 + $0xcf8] sm:$0xff]
    %v498 = vld [vmem:[#allocation4 + $0xd00] sm:$0xff]
    %v499 = vld [vmem:[#allocation4 + $0xd08] sm:$0xff]
    %v500 = vld [vmem:[#allocation4 + $0xd10] sm:$0xff]
    %v501 = vld [vmem:[#allocation4 + $0xd18] sm:$0xff]
    %v502 = vld [vmem:[#allocation4 + $0xd20] sm:$0xff]
    %v503 = vld [vmem:[#allocation4 + $0xd28] sm:$0xff]
    %v504 = vld [vmem:[#allocation4 + $0xd30] sm:$0xff]
    %v505 = vld [vmem:[#allocation4 + $0xd38] sm:$0xff]
    %v506 = vld [vmem:[#allocation4 + $0xd40] sm:$0xff]
    %v507 = vld [vmem:[#allocation4 + $0xd48] sm:$0xff]
    %v508 = vld [vmem:[#allocation4 + $0xd50] sm:$0xff]
    %v509 = vld [vmem:[#allocation4 + $0xd58] sm:$0xff]
    %v510 = vld [vmem:[#allocation4 + $0xd60] sm:$0xff]
    %v511 = vld [vmem:[#allocation4 + $0xd68] sm:$0xff]
    %v512 = vld [vmem:[#allocation4 + $0xd70] sm:$0xff]
    %v513 = vld [vmem:[#allocation4 + $0xd78] sm:$0xff]
    %v514 = vld [vmem:[#allocation4 + $0xd80] sm:$0xff]
    %v515 = vld [vmem:[#allocation4 + $0xd88] sm:$0xff]
    %v516 = vld [vmem:[#allocation4 + $0xd90] sm:$0xff]
    %v517 = vld [vmem:[#allocation4 + $0xd98] sm:$0xff]
    %v518 = vld [vmem:[#allocation4 + $0xda0] sm:$0xff]
    %v519 = vld [vmem:[#allocation4 + $0xda8] sm:$0xff]
    %v520 = vld [vmem:[#allocation4 + $0xdb0] sm:$0xff]
    %v521 = vld [vmem:[#allocation4 + $0xdb8] sm:$0xff]
    %v522 = vld [vmem:[#allocation4 + $0xdc0] sm:$0xff]
    %v523 = vld [vmem:[#allocation4 + $0xdc8] sm:$0xff]
    %v524 = vld [vmem:[#allocation4 + $0xdd0] sm:$0xff]
    %v525 = vld [vmem:[#allocation4 + $0xdd8] sm:$0xff]
    %v526 = vld [vmem:[#allocation4 + $0xde0] sm:$0xff]
    %v527 = vld [vmem:[#allocation4 + $0xde8] sm:$0xff]
    %v528 = vld [vmem:[#allocation4 + $0xdf0] sm:$0xff]
    %v529 = vld [vmem:[#allocation4 + $0xdf8] sm:$0xff]
    %v530 = vld [vmem:[#allocation4 + $0xe00] sm:$0xff]
    %v531 = vld [vmem:[#allocation4 + $0xe08] sm:$0xff]
    %v532 = vld [vmem:[#allocation4 + $0xe10] sm:$0xff]
    %v533 = vld [vmem:[#allocation4 + $0xe18] sm:$0xff]
    %v534 = vld [vmem:[#allocation4 + $0xe20] sm:$0xff]
    %v535 = vld [vmem:[#allocation4 + $0xe28] sm:$0xff]
    %v536 = vld [vmem:[#allocation4 + $0xe30] sm:$0xff]
    %v537 = vld [vmem:[#allocation4 + $0xe38] sm:$0xff]
    %v538 = vld [vmem:[#allocation4 + $0xe40] sm:$0xff]
    %v539 = vld [vmem:[#allocation4 + $0xe48] sm:$0xff]
    %v540 = vld [vmem:[#allocation4 + $0xe50] sm:$0xff]
    %v541 = vld [vmem:[#allocation4 + $0xe58] sm:$0xff]
    %v542 = vld [vmem:[#allocation4 + $0xe60] sm:$0xff]
    %v543 = vld [vmem:[#allocation4 + $0xe68] sm:$0xff]
    %v544 = vld [vmem:[#allocation4 + $0xe70] sm:$0xff]
    %v545 = vld [vmem:[#allocation4 + $0xe78] sm:$0xff]
    %v546 = vld [vmem:[#allocation4 + $0xe80] sm:$0xff]
    %v547 = vld [vmem:[#allocation4 + $0xe88] sm:$0xff]
    %v548 = vld [vmem:[#allocation4 + $0xe90] sm:$0xff]
    %v549 = vld [vmem:[#allocation4 + $0xe98] sm:$0xff]
    %v550 = vld [vmem:[#allocation4 + $0xea0] sm:$0xff]
    %v551 = vld [vmem:[#allocation4 + $0xea8] sm:$0xff]
    %v552 = vld [vmem:[#allocation4 + $0xeb0] sm:$0xff]
    %v553 = vld [vmem:[#allocation4 + $0xeb8] sm:$0xff]
    %v554 = vld [vmem:[#allocation4 + $0xec0] sm:$0xff]
    %v555 = vld [vmem:[#allocation4 + $0xec8] sm:$0xff]
    %v556 = vld [vmem:[#allocation4 + $0xed0] sm:$0xff]
    %v557 = vld [vmem:[#allocation4 + $0xed8] sm:$0xff]
    %v558 = vld [vmem:[#allocation4 + $0xee0] sm:$0xff]
    %v559 = vld [vmem:[#allocation4 + $0xee8] sm:$0xff]
    %v560 = vld [vmem:[#allocation4 + $0xef0] sm:$0xff]
    %v561 = vld [vmem:[#allocation4 + $0xef8] sm:$0xff]
    %v562 = vld [vmem:[#allocation4 + $0xf00] sm:$0xff]
    %v563 = vld [vmem:[#allocation4 + $0xf08] sm:$0xff]
    %v564 = vld [vmem:[#allocation4 + $0xf10] sm:$0xff]
    %v565 = vld [vmem:[#allocation4 + $0xf18] sm:$0xff]
    %v566 = vld [vmem:[#allocation4 + $0xf20] sm:$0xff]
    %v567 = vld [vmem:[#allocation4 + $0xf28] sm:$0xff]
    %v568 = vld [vmem:[#allocation4 + $0xf30] sm:$0xff]
    %v569 = vld [vmem:[#allocation4 + $0xf38] sm:$0xff]
    %v570 = vld [vmem:[#allocation4 + $0xf40] sm:$0xff]
    %v571 = vld [vmem:[#allocation4 + $0xf48] sm:$0xff]
    %v572 = vld [vmem:[#allocation4 + $0xf50] sm:$0xff]
    %v573 = vld [vmem:[#allocation4 + $0xf58] sm:$0xff]
    %v574 = vld [vmem:[#allocation4 + $0xf60] sm:$0xff]
    %v575 = vld [vmem:[#allocation4 + $0xf68] sm:$0xff]
    %v576 = vld [vmem:[#allocation4 + $0xf70] sm:$0xff]
    %v577 = vld [vmem:[#allocation4 + $0xf78] sm:$0xff]
    %v578 = vld [vmem:[#allocation4 + $0xf80] sm:$0xff]
    %v579 = vld [vmem:[#allocation4 + $0xf88] sm:$0xff]
    %v580 = vld [vmem:[#allocation4 + $0xf90] sm:$0xff]
    %v581 = vld [vmem:[#allocation4 + $0xf98] sm:$0xff]
    %v582 = vld [vmem:[#allocation4 + $0xfa0] sm:$0xff]
    %v583 = vld [vmem:[#allocation4 + $0xfa8] sm:$0xff]
    %v584 = vld [vmem:[#allocation4 + $0xfb0] sm:$0xff]
    %v585 = vld [vmem:[#allocation4 + $0xfb8] sm:$0xff]
    %v586 = vld [vmem:[#allocation4 + $0xfc0] sm:$0xff]
    %v587 = vld [vmem:[#allocation4 + $0xfc8] sm:$0xff]
    %v588 = vld [vmem:[#allocation4 + $0xfd0] sm:$0xff]
    %v589 = vld [vmem:[#allocation4 + $0xfd8] sm:$0xff]
    %v590 = vld [vmem:[#allocation4 + $0xfe0] sm:$0xff]
    %v591 = vld [vmem:[#allocation4 + $0xfe8] sm:$0xff]
    %v592 = vld [vmem:[#allocation4 + $0xff0] sm:$0xff]
    %v593 = vld [vmem:[#allocation4 + $0xff8] sm:$0xff]
    %v596 = vunpack.c.l.b16 %v80
    %v597 = vunpack.c.h.b16 %v80
    %v598 = vunpack.c.l.b16 %v81
    %v599 = vunpack.c.h.b16 %v81
    %v600 = vpack.c.b16 %v596, %v596
    %v601 = vpack.c.b16 %v597, %v597
    %v602 = vpack.c.b16 %v598, %v598
    %v603 = vpack.c.b16 %v599, %v599
    %v1120 = vunpack.c.l.b16 %v82
    %v1121 = vunpack.c.h.b16 %v82
    %v1122 = vunpack.c.l.b16 %v83
    %v1123 = vunpack.c.h.b16 %v83
    %v1124 = vunpack.c.l.b16 %v84
    %v1125 = vunpack.c.h.b16 %v84
    %v1126 = vunpack.c.l.b16 %v85
    %v1127 = vunpack.c.h.b16 %v85
    %v1128 = vunpack.c.l.b16 %v86
    %v1129 = vunpack.c.h.b16 %v86
    %v1130 = vunpack.c.l.b16 %v87
    %v1131 = vunpack.c.h.b16 %v87
    %v1132 = vunpack.c.l.b16 %v88
    %v1133 = vunpack.c.h.b16 %v88
    %v1134 = vunpack.c.l.b16 %v89
    %v1135 = vunpack.c.h.b16 %v89
    %v1136 = vunpack.c.l.b16 %v90
    %v1137 = vunpack.c.h.b16 %v90
    %v1138 = vunpack.c.l.b16 %v91
    %v1139 = vunpack.c.h.b16 %v91
    %v1140 = vunpack.c.l.b16 %v92
    %v1141 = vunpack.c.h.b16 %v92
    %v1142 = vunpack.c.l.b16 %v93
    %v1143 = vunpack.c.h.b16 %v93
    %v1144 = vunpack.c.l.b16 %v94
    %v1145 = vunpack.c.h.b16 %v94
    %v1146 = vunpack.c.l.b16 %v95
    %v1147 = vunpack.c.h.b16 %v95
    %v1148 = vunpack.c.l.b16 %v96
    %v1149 = vunpack.c.h.b16 %v96
    %v1150 = vunpack.c.l.b16 %v97
    %v1151 = vunpack.c.h.b16 %v97
    %v1152 = vunpack.c.l.b16 %v98
    %v1153 = vunpack.c.h.b16 %v98
    %v1154 = vunpack.c.l.b16 %v99
    %v1155 = vunpack.c.h.b16 %v99
    %v1156 = vunpack.c.l.b16 %v100
    %v1157 = vunpack.c.h.b16 %v100
    %v1158 = vunpack.c.l.b16 %v101
    %v1159 = vunpack.c.h.b16 %v101
    %v1160 = vunpack.c.l.b16 %v102
    %v1161 = vunpack.c.h.b16 %v102
    %v1162 = vunpack.c.l.b16 %v103
    %v1163 = vunpack.c.h.b16 %v103
    %v1164 = vunpack.c.l.b16 %v104
    %v1165 = vunpack.c.h.b16 %v104
    %v1166 = vunpack.c.l.b16 %v105
    %v1167 = vunpack.c.h.b16 %v105
    %v1168 = vunpack.c.l.b16 %v106
    %v1169 = vunpack.c.h.b16 %v106
    %v1170 = vunpack.c.l.b16 %v107
    %v1171 = vunpack.c.h.b16 %v107
    %v1172 = vunpack.c.l.b16 %v108
    %v1173 = vunpack.c.h.b16 %v108
    %v1174 = vunpack.c.l.b16 %v109
    %v1175 = vunpack.c.h.b16 %v109
    %v1176 = vunpack.c.l.b16 %v110
    %v1177 = vunpack.c.h.b16 %v110
    %v1178 = vunpack.c.l.b16 %v111
    %v1179 = vunpack.c.h.b16 %v111
    %v1180 = vunpack.c.l.b16 %v112
    %v1181 = vunpack.c.h.b16 %v112
    %v1182 = vunpack.c.l.b16 %v113
    %v1183 = vunpack.c.h.b16 %v113
    %v1184 = vunpack.c.l.b16 %v114
    %v1185 = vunpack.c.h.b16 %v114
    %v1186 = vunpack.c.l.b16 %v115
    %v1187 = vunpack.c.h.b16 %v115
    %v1188 = vunpack.c.l.b16 %v116
    %v1189 = vunpack.c.h.b16 %v116
    %v1190 = vunpack.c.l.b16 %v117
    %v1191 = vunpack.c.h.b16 %v117
    %v1192 = vunpack.c.l.b16 %v118
    %v1193 = vunpack.c.h.b16 %v118
    %v1194 = vunpack.c.l.b16 %v119
    %v1195 = vunpack.c.h.b16 %v119
    %v1196 = vunpack.c.l.b16 %v120
    %v1197 = vunpack.c.h.b16 %v120
    %v1198 = vunpack.c.l.b16 %v121
    %v1199 = vunpack.c.h.b16 %v121
    %v1200 = vunpack.c.l.b16 %v122
    %v1201 = vunpack.c.h.b16 %v122
    %v1202 = vunpack.c.l.b16 %v123
    %v1203 = vunpack.c.h.b16 %v123
    %v1204 = vunpack.c.l.b16 %v124
    %v1205 = vunpack.c.h.b16 %v124
    %v1206 = vunpack.c.l.b16 %v125
    %v1207 = vunpack.c.h.b16 %v125
    %v1208 = vunpack.c.l.b16 %v126
    %v1209 = vunpack.c.h.b16 %v126
    %v1210 = vunpack.c.l.b16 %v127
    %v1211 = vunpack.c.h.b16 %v127
    %v1212 = vunpack.c.l.b16 %v128
    %v1213 = vunpack.c.h.b16 %v128
    %v1214 = vunpack.c.l.b16 %v129
    %v1215 = vunpack.c.h.b16 %v129
    %v1216 = vunpack.c.l.b16 %v130
    %v1217 = vunpack.c.h.b16 %v130
    %v1218 = vunpack.c.l.b16 %v131
    %v1219 = vunpack.c.h.b16 %v131
    %v1220 = vunpack.c.l.b16 %v132
    %v1221 = vunpack.c.h.b16 %v132
    %v1222 = vunpack.c.l.b16 %v133
    %v1223 = vunpack.c.h.b16 %v133
    %v1224 = vunpack.c.l.b16 %v134
    %v1225 = vunpack.c.h.b16 %v134
    %v1226 = vunpack.c.l.b16 %v135
    %v1227 = vunpack.c.h.b16 %v135
    %v1228 = vunpack.c.l.b16 %v136
    %v1229 = vunpack.c.h.b16 %v136
    %v1230 = vunpack.c.l.b16 %v137
    %v1231 = vunpack.c.h.b16 %v137
    %v1232 = vunpack.c.l.b16 %v138
    %v1233 = vunpack.c.h.b16 %v138
    %v1234 = vunpack.c.l.b16 %v139
    %v1235 = vunpack.c.h.b16 %v139
    %v1236 = vunpack.c.l.b16 %v140
    %v1237 = vunpack.c.h.b16 %v140
    %v1238 = vunpack.c.l.b16 %v141
    %v1239 = vunpack.c.h.b16 %v141
    %v1240 = vunpack.c.l.b16 %v142
    %v1241 = vunpack.c.h.b16 %v142
    %v1242 = vunpack.c.l.b16 %v143
    %v1243 = vunpack.c.h.b16 %v143
    %v1244 = vunpack.c.l.b16 %v144
    %v1245 = vunpack.c.h.b16 %v144
    %v1246 = vunpack.c.l.b16 %v145
    %v1247 = vunpack.c.h.b16 %v145
    %v1248 = vunpack.c.l.b16 %v146
    %v1249 = vunpack.c.h.b16 %v146
    %v1250 = vunpack.c.l.b16 %v147
    %v1251 = vunpack.c.h.b16 %v147
    %v1252 = vunpack.c.l.b16 %v148
    %v1253 = vunpack.c.h.b16 %v148
    %v1254 = vunpack.c.l.b16 %v149
    %v1255 = vunpack.c.h.b16 %v149
    %v1256 = vunpack.c.l.b16 %v150
    %v1257 = vunpack.c.h.b16 %v150
    %v1258 = vunpack.c.l.b16 %v151
    %v1259 = vunpack.c.h.b16 %v151
    %v1260 = vunpack.c.l.b16 %v152
    %v1261 = vunpack.c.h.b16 %v152
    %v1262 = vunpack.c.l.b16 %v153
    %v1263 = vunpack.c.h.b16 %v153
    %v1264 = vunpack.c.l.b16 %v154
    %v1265 = vunpack.c.h.b16 %v154
    %v1266 = vunpack.c.l.b16 %v155
    %v1267 = vunpack.c.h.b16 %v155
    %v1268 = vunpack.c.l.b16 %v156
    %v1269 = vunpack.c.h.b16 %v156
    %v1270 = vunpack.c.l.b16 %v157
    %v1271 = vunpack.c.h.b16 %v157
    %v1272 = vunpack.c.l.b16 %v158
    %v1273 = vunpack.c.h.b16 %v158
    %v1274 = vunpack.c.l.b16 %v159
    %v1275 = vunpack.c.h.b16 %v159
    %v1276 = vunpack.c.l.b16 %v160
    %v1277 = vunpack.c.h.b16 %v160
    %v1278 = vunpack.c.l.b16 %v161
    %v1279 = vunpack.c.h.b16 %v161
    %v1280 = vunpack.c.l.b16 %v162
    %v1281 = vunpack.c.h.b16 %v162
    %v1282 = vunpack.c.l.b16 %v163
    %v1283 = vunpack.c.h.b16 %v163
    %v1284 = vunpack.c.l.b16 %v164
    %v1285 = vunpack.c.h.b16 %v164
    %v1286 = vunpack.c.l.b16 %v165
    %v1287 = vunpack.c.h.b16 %v165
    %v1288 = vunpack.c.l.b16 %v166
    %v1289 = vunpack.c.h.b16 %v166
    %v1290 = vunpack.c.l.b16 %v167
    %v1291 = vunpack.c.h.b16 %v167
    %v1292 = vunpack.c.l.b16 %v168
    %v1293 = vunpack.c.h.b16 %v168
    %v1294 = vunpack.c.l.b16 %v169
    %v1295 = vunpack.c.h.b16 %v169
    %v1296 = vunpack.c.l.b16 %v170
    %v1297 = vunpack.c.h.b16 %v170
    %v1298 = vunpack.c.l.b16 %v171
    %v1299 = vunpack.c.h.b16 %v171
    %v1300 = vunpack.c.l.b16 %v172
    %v1301 = vunpack.c.h.b16 %v172
    %v1302 = vunpack.c.l.b16 %v173
    %v1303 = vunpack.c.h.b16 %v173
    %v1304 = vunpack.c.l.b16 %v174
    %v1305 = vunpack.c.h.b16 %v174
    %v1306 = vunpack.c.l.b16 %v175
    %v1307 = vunpack.c.h.b16 %v175
    %v1308 = vunpack.c.l.b16 %v176
    %v1309 = vunpack.c.h.b16 %v176
    %v1310 = vunpack.c.l.b16 %v177
    %v1311 = vunpack.c.h.b16 %v177
    %v1312 = vunpack.c.l.b16 %v178
    %v1313 = vunpack.c.h.b16 %v178
    %v1314 = vunpack.c.l.b16 %v179
    %v1315 = vunpack.c.h.b16 %v179
    %v1316 = vunpack.c.l.b16 %v180
    %v1317 = vunpack.c.h.b16 %v180
    %v1318 = vunpack.c.l.b16 %v181
    %v1319 = vunpack.c.h.b16 %v181
    %v1320 = vunpack.c.l.b16 %v182
    %v1321 = vunpack.c.h.b16 %v182
    %v1322 = vunpack.c.l.b16 %v183
    %v1323 = vunpack.c.h.b16 %v183
    %v1324 = vunpack.c.l.b16 %v184
    %v1325 = vunpack.c.h.b16 %v184
    %v1326 = vunpack.c.l.b16 %v185
    %v1327 = vunpack.c.h.b16 %v185
    %v1328 = vunpack.c.l.b16 %v186
    %v1329 = vunpack.c.h.b16 %v186
    %v1330 = vunpack.c.l.b16 %v187
    %v1331 = vunpack.c.h.b16 %v187
    %v1332 = vunpack.c.l.b16 %v188
    %v1333 = vunpack.c.h.b16 %v188
    %v1334 = vunpack.c.l.b16 %v189
    %v1335 = vunpack.c.h.b16 %v189
    %v1336 = vunpack.c.l.b16 %v190
    %v1337 = vunpack.c.h.b16 %v190
    %v1338 = vunpack.c.l.b16 %v191
    %v1339 = vunpack.c.h.b16 %v191
    %v1340 = vunpack.c.l.b16 %v192
    %v1341 = vunpack.c.h.b16 %v192
    %v1342 = vunpack.c.l.b16 %v193
    %v1343 = vunpack.c.h.b16 %v193
    %v1344 = vunpack.c.l.b16 %v194
    %v1345 = vunpack.c.h.b16 %v194
    %v1346 = vunpack.c.l.b16 %v195
    %v1347 = vunpack.c.h.b16 %v195
    %v1348 = vunpack.c.l.b16 %v196
    %v1349 = vunpack.c.h.b16 %v196
    %v1350 = vunpack.c.l.b16 %v197
    %v1351 = vunpack.c.h.b16 %v197
    %v1352 = vunpack.c.l.b16 %v198
    %v1353 = vunpack.c.h.b16 %v198
    %v1354 = vunpack.c.l.b16 %v199
    %v1355 = vunpack.c.h.b16 %v199
    %v1356 = vunpack.c.l.b16 %v200
    %v1357 = vunpack.c.h.b16 %v200
    %v1358 = vunpack.c.l.b16 %v201
    %v1359 = vunpack.c.h.b16 %v201
    %v1360 = vunpack.c.l.b16 %v202
    %v1361 = vunpack.c.h.b16 %v202
    %v1362 = vunpack.c.l.b16 %v203
    %v1363 = vunpack.c.h.b16 %v203
    %v1364 = vunpack.c.l.b16 %v204
    %v1365 = vunpack.c.h.b16 %v204
    %v1366 = vunpack.c.l.b16 %v205
    %v1367 = vunpack.c.h.b16 %v205
    %v1368 = vunpack.c.l.b16 %v206
    %v1369 = vunpack.c.h.b16 %v206
    %v1370 = vunpack.c.l.b16 %v207
    %v1371 = vunpack.c.h.b16 %v207
    %v1372 = vunpack.c.l.b16 %v208
    %v1373 = vunpack.c.h.b16 %v208
    %v1374 = vunpack.c.l.b16 %v209
    %v1375 = vunpack.c.h.b16 %v209
    %v1376 = vunpack.c.l.b16 %v210
    %v1377 = vunpack.c.h.b16 %v210
    %v1378 = vunpack.c.l.b16 %v211
    %v1379 = vunpack.c.h.b16 %v211
    %v1380 = vunpack.c.l.b16 %v212
    %v1381 = vunpack.c.h.b16 %v212
    %v1382 = vunpack.c.l.b16 %v213
    %v1383 = vunpack.c.h.b16 %v213
    %v1384 = vunpack.c.l.b16 %v214
    %v1385 = vunpack.c.h.b16 %v214
    %v1386 = vunpack.c.l.b16 %v215
    %v1387 = vunpack.c.h.b16 %v215
    %v1388 = vunpack.c.l.b16 %v216
    %v1389 = vunpack.c.h.b16 %v216
    %v1390 = vunpack.c.l.b16 %v217
    %v1391 = vunpack.c.h.b16 %v217
    %v1392 = vunpack.c.l.b16 %v218
    %v1393 = vunpack.c.h.b16 %v218
    %v1394 = vunpack.c.l.b16 %v219
    %v1395 = vunpack.c.h.b16 %v219
    %v1396 = vunpack.c.l.b16 %v220
    %v1397 = vunpack.c.h.b16 %v220
    %v1398 = vunpack.c.l.b16 %v221
    %v1399 = vunpack.c.h.b16 %v221
    %v1400 = vunpack.c.l.b16 %v222
    %v1401 = vunpack.c.h.b16 %v222
    %v1402 = vunpack.c.l.b16 %v223
    %v1403 = vunpack.c.h.b16 %v223
    %v1404 = vunpack.c.l.b16 %v224
    %v1405 = vunpack.c.h.b16 %v224
    %v1406 = vunpack.c.l.b16 %v225
    %v1407 = vunpack.c.h.b16 %v225
    %v1408 = vunpack.c.l.b16 %v226
    %v1409 = vunpack.c.h.b16 %v226
    %v1410 = vunpack.c.l.b16 %v227
    %v1411 = vunpack.c.h.b16 %v227
    %v1412 = vunpack.c.l.b16 %v228
    %v1413 = vunpack.c.h.b16 %v228
    %v1414 = vunpack.c.l.b16 %v229
    %v1415 = vunpack.c.h.b16 %v229
    %v1416 = vunpack.c.l.b16 %v230
    %v1417 = vunpack.c.h.b16 %v230
    %v1418 = vunpack.c.l.b16 %v231
    %v1419 = vunpack.c.h.b16 %v231
    %v1420 = vunpack.c.l.b16 %v232
    %v1421 = vunpack.c.h.b16 %v232
    %v1422 = vunpack.c.l.b16 %v233
    %v1423 = vunpack.c.h.b16 %v233
    %v1424 = vunpack.c.l.b16 %v234
    %v1425 = vunpack.c.h.b16 %v234
    %v1426 = vunpack.c.l.b16 %v235
    %v1427 = vunpack.c.h.b16 %v235
    %v1428 = vunpack.c.l.b16 %v236
    %v1429 = vunpack.c.h.b16 %v236
    %v1430 = vunpack.c.l.b16 %v237
    %v1431 = vunpack.c.h.b16 %v237
    %v1432 = vunpack.c.l.b16 %v238
    %v1433 = vunpack.c.h.b16 %v238
    %v1434 = vunpack.c.l.b16 %v239
    %v1435 = vunpack.c.h.b16 %v239
    %v1436 = vunpack.c.l.b16 %v240
    %v1437 = vunpack.c.h.b16 %v240
    %v1438 = vunpack.c.l.b16 %v241
    %v1439 = vunpack.c.h.b16 %v241
    %v1440 = vunpack.c.l.b16 %v242
    %v1441 = vunpack.c.h.b16 %v242
    %v1442 = vunpack.c.l.b16 %v243
    %v1443 = vunpack.c.h.b16 %v243
    %v1444 = vunpack.c.l.b16 %v244
    %v1445 = vunpack.c.h.b16 %v244
    %v1446 = vunpack.c.l.b16 %v245
    %v1447 = vunpack.c.h.b16 %v245
    %v1448 = vunpack.c.l.b16 %v246
    %v1449 = vunpack.c.h.b16 %v246
    %v1450 = vunpack.c.l.b16 %v247
    %v1451 = vunpack.c.h.b16 %v247
    %v1452 = vunpack.c.l.b16 %v248
    %v1453 = vunpack.c.h.b16 %v248
    %v1454 = vunpack.c.l.b16 %v249
    %v1455 = vunpack.c.h.b16 %v249
    %v1456 = vunpack.c.l.b16 %v250
    %v1457 = vunpack.c.h.b16 %v250
    %v1458 = vunpack.c.l.b16 %v251
    %v1459 = vunpack.c.h.b16 %v251
    %v1460 = vunpack.c.l.b16 %v252
    %v1461 = vunpack.c.h.b16 %v252
    %v1462 = vunpack.c.l.b16 %v253
    %v1463 = vunpack.c.h.b16 %v253
    %v1464 = vunpack.c.l.b16 %v254
    %v1465 = vunpack.c.h.b16 %v254
    %v1466 = vunpack.c.l.b16 %v255
    %v1467 = vunpack.c.h.b16 %v255
    %v1468 = vunpack.c.l.b16 %v256
    %v1469 = vunpack.c.h.b16 %v256
    %v1470 = vunpack.c.l.b16 %v257
    %v1471 = vunpack.c.h.b16 %v257
    %v1472 = vunpack.c.l.b16 %v258
    %v1473 = vunpack.c.h.b16 %v258
    %v1474 = vunpack.c.l.b16 %v259
    %v1475 = vunpack.c.h.b16 %v259
    %v1476 = vunpack.c.l.b16 %v260
    %v1477 = vunpack.c.h.b16 %v260
    %v1478 = vunpack.c.l.b16 %v261
    %v1479 = vunpack.c.h.b16 %v261
    %v1480 = vunpack.c.l.b16 %v262
    %v1481 = vunpack.c.h.b16 %v262
    %v1482 = vunpack.c.l.b16 %v263
    %v1483 = vunpack.c.h.b16 %v263
    %v1484 = vunpack.c.l.b16 %v264
    %v1485 = vunpack.c.h.b16 %v264
    %v1486 = vunpack.c.l.b16 %v265
    %v1487 = vunpack.c.h.b16 %v265
    %v1488 = vunpack.c.l.b16 %v266
    %v1489 = vunpack.c.h.b16 %v266
    %v1490 = vunpack.c.l.b16 %v267
    %v1491 = vunpack.c.h.b16 %v267
    %v1492 = vunpack.c.l.b16 %v268
    %v1493 = vunpack.c.h.b16 %v268
    %v1494 = vunpack.c.l.b16 %v269
    %v1495 = vunpack.c.h.b16 %v269
    %v1496 = vunpack.c.l.b16 %v270
    %v1497 = vunpack.c.h.b16 %v270
    %v1498 = vunpack.c.l.b16 %v271
    %v1499 = vunpack.c.h.b16 %v271
    %v1500 = vunpack.c.l.b16 %v272
    %v1501 = vunpack.c.h.b16 %v272
    %v1502 = vunpack.c.l.b16 %v273
    %v1503 = vunpack.c.h.b16 %v273
    %v1504 = vunpack.c.l.b16 %v274
    %v1505 = vunpack.c.h.b16 %v274
    %v1506 = vunpack.c.l.b16 %v275
    %v1507 = vunpack.c.h.b16 %v275
    %v1508 = vunpack.c.l.b16 %v276
    %v1509 = vunpack.c.h.b16 %v276
    %v1510 = vunpack.c.l.b16 %v277
    %v1511 = vunpack.c.h.b16 %v277
    %v1512 = vunpack.c.l.b16 %v278
    %v1513 = vunpack.c.h.b16 %v278
    %v1514 = vunpack.c.l.b16 %v279
    %v1515 = vunpack.c.h.b16 %v279
    %v1516 = vunpack.c.l.b16 %v280
    %v1517 = vunpack.c.h.b16 %v280
    %v1518 = vunpack.c.l.b16 %v281
    %v1519 = vunpack.c.h.b16 %v281
    %v1520 = vunpack.c.l.b16 %v282
    %v1521 = vunpack.c.h.b16 %v282
    %v1522 = vunpack.c.l.b16 %v283
    %v1523 = vunpack.c.h.b16 %v283
    %v1524 = vunpack.c.l.b16 %v284
    %v1525 = vunpack.c.h.b16 %v284
    %v1526 = vunpack.c.l.b16 %v285
    %v1527 = vunpack.c.h.b16 %v285
    %v1528 = vunpack.c.l.b16 %v286
    %v1529 = vunpack.c.h.b16 %v286
    %v1530 = vunpack.c.l.b16 %v287
    %v1531 = vunpack.c.h.b16 %v287
    %v1532 = vunpack.c.l.b16 %v288
    %v1533 = vunpack.c.h.b16 %v288
    %v1534 = vunpack.c.l.b16 %v289
    %v1535 = vunpack.c.h.b16 %v289
    %v1536 = vunpack.c.l.b16 %v290
    %v1537 = vunpack.c.h.b16 %v290
    %v1538 = vunpack.c.l.b16 %v291
    %v1539 = vunpack.c.h.b16 %v291
    %v1540 = vunpack.c.l.b16 %v292
    %v1541 = vunpack.c.h.b16 %v292
    %v1542 = vunpack.c.l.b16 %v293
    %v1543 = vunpack.c.h.b16 %v293
    %v1544 = vunpack.c.l.b16 %v294
    %v1545 = vunpack.c.h.b16 %v294
    %v1546 = vunpack.c.l.b16 %v295
    %v1547 = vunpack.c.h.b16 %v295
    %v1548 = vunpack.c.l.b16 %v296
    %v1549 = vunpack.c.h.b16 %v296
    %v1550 = vunpack.c.l.b16 %v297
    %v1551 = vunpack.c.h.b16 %v297
    %v1552 = vunpack.c.l.b16 %v298
    %v1553 = vunpack.c.h.b16 %v298
    %v1554 = vunpack.c.l.b16 %v299
    %v1555 = vunpack.c.h.b16 %v299
    %v1556 = vunpack.c.l.b16 %v300
    %v1557 = vunpack.c.h.b16 %v300
    %v1558 = vunpack.c.l.b16 %v301
    %v1559 = vunpack.c.h.b16 %v301
    %v1560 = vunpack.c.l.b16 %v302
    %v1561 = vunpack.c.h.b16 %v302
    %v1562 = vunpack.c.l.b16 %v303
    %v1563 = vunpack.c.h.b16 %v303
    %v1564 = vunpack.c.l.b16 %v304
    %v1565 = vunpack.c.h.b16 %v304
    %v1566 = vunpack.c.l.b16 %v305
    %v1567 = vunpack.c.h.b16 %v305
    %v1568 = vunpack.c.l.b16 %v306
    %v1569 = vunpack.c.h.b16 %v306
    %v1570 = vunpack.c.l.b16 %v307
    %v1571 = vunpack.c.h.b16 %v307
    %v1572 = vunpack.c.l.b16 %v308
    %v1573 = vunpack.c.h.b16 %v308
    %v1574 = vunpack.c.l.b16 %v309
    %v1575 = vunpack.c.h.b16 %v309
    %v1576 = vunpack.c.l.b16 %v310
    %v1577 = vunpack.c.h.b16 %v310
    %v1578 = vunpack.c.l.b16 %v311
    %v1579 = vunpack.c.h.b16 %v311
    %v1580 = vunpack.c.l.b16 %v312
    %v1581 = vunpack.c.h.b16 %v312
    %v1582 = vunpack.c.l.b16 %v313
    %v1583 = vunpack.c.h.b16 %v313
    %v1584 = vunpack.c.l.b16 %v314
    %v1585 = vunpack.c.h.b16 %v314
    %v1586 = vunpack.c.l.b16 %v315
    %v1587 = vunpack.c.h.b16 %v315
    %v1588 = vunpack.c.l.b16 %v316
    %v1589 = vunpack.c.h.b16 %v316
    %v1590 = vunpack.c.l.b16 %v317
    %v1591 = vunpack.c.h.b16 %v317
    %v1592 = vunpack.c.l.b16 %v318
    %v1593 = vunpack.c.h.b16 %v318
    %v1594 = vunpack.c.l.b16 %v319
    %v1595 = vunpack.c.h.b16 %v319
    %v1596 = vunpack.c.l.b16 %v320
    %v1597 = vunpack.c.h.b16 %v320
    %v1598 = vunpack.c.l.b16 %v321
    %v1599 = vunpack.c.h.b16 %v321
    %v1600 = vunpack.c.l.b16 %v322
    %v1601 = vunpack.c.h.b16 %v322
    %v1602 = vunpack.c.l.b16 %v323
    %v1603 = vunpack.c.h.b16 %v323
    %v1604 = vunpack.c.l.b16 %v324
    %v1605 = vunpack.c.h.b16 %v324
    %v1606 = vunpack.c.l.b16 %v325
    %v1607 = vunpack.c.h.b16 %v325
    %v1608 = vunpack.c.l.b16 %v326
    %v1609 = vunpack.c.h.b16 %v326
    %v1610 = vunpack.c.l.b16 %v327
    %v1611 = vunpack.c.h.b16 %v327
    %v1612 = vunpack.c.l.b16 %v328
    %v1613 = vunpack.c.h.b16 %v328
    %v1614 = vunpack.c.l.b16 %v329
    %v1615 = vunpack.c.h.b16 %v329
    %v1616 = vunpack.c.l.b16 %v330
    %v1617 = vunpack.c.h.b16 %v330
    %v1618 = vunpack.c.l.b16 %v331
    %v1619 = vunpack.c.h.b16 %v331
    %v1620 = vunpack.c.l.b16 %v332
    %v1621 = vunpack.c.h.b16 %v332
    %v1622 = vunpack.c.l.b16 %v333
    %v1623 = vunpack.c.h.b16 %v333
    %v1624 = vunpack.c.l.b16 %v334
    %v1625 = vunpack.c.h.b16 %v334
    %v1626 = vunpack.c.l.b16 %v335
    %v1627 = vunpack.c.h.b16 %v335
    %v1628 = vunpack.c.l.b16 %v336
    %v1629 = vunpack.c.h.b16 %v336
    %v1630 = vunpack.c.l.b16 %v337
    %v1631 = vunpack.c.h.b16 %v337
    %v1632 = vunpack.c.l.b16 %v338
    %v1633 = vunpack.c.h.b16 %v338
    %v1634 = vunpack.c.l.b16 %v339
    %v1635 = vunpack.c.h.b16 %v339
    %v1636 = vunpack.c.l.b16 %v340
    %v1637 = vunpack.c.h.b16 %v340
    %v1638 = vunpack.c.l.b16 %v341
    %v1639 = vunpack.c.h.b16 %v341
    %v1640 = vunpack.c.l.b16 %v342
    %v1641 = vunpack.c.h.b16 %v342
    %v1642 = vunpack.c.l.b16 %v343
    %v1643 = vunpack.c.h.b16 %v343
    %v1644 = vunpack.c.l.b16 %v344
    %v1645 = vunpack.c.h.b16 %v344
    %v1646 = vunpack.c.l.b16 %v345
    %v1647 = vunpack.c.h.b16 %v345
    %v1648 = vunpack.c.l.b16 %v346
    %v1649 = vunpack.c.h.b16 %v346
    %v1650 = vunpack.c.l.b16 %v347
    %v1651 = vunpack.c.h.b16 %v347
    %v1652 = vunpack.c.l.b16 %v348
    %v1653 = vunpack.c.h.b16 %v348
    %v1654 = vunpack.c.l.b16 %v349
    %v1655 = vunpack.c.h.b16 %v349
    %v1656 = vunpack.c.l.b16 %v350
    %v1657 = vunpack.c.h.b16 %v350
    %v1658 = vunpack.c.l.b16 %v351
    %v1659 = vunpack.c.h.b16 %v351
    %v1660 = vunpack.c.l.b16 %v352
    %v1661 = vunpack.c.h.b16 %v352
    %v1662 = vunpack.c.l.b16 %v353
    %v1663 = vunpack.c.h.b16 %v353
    %v1664 = vunpack.c.l.b16 %v354
    %v1665 = vunpack.c.h.b16 %v354
    %v1666 = vunpack.c.l.b16 %v355
    %v1667 = vunpack.c.h.b16 %v355
    %v1668 = vunpack.c.l.b16 %v356
    %v1669 = vunpack.c.h.b16 %v356
    %v1670 = vunpack.c.l.b16 %v357
    %v1671 = vunpack.c.h.b16 %v357
    %v1672 = vunpack.c.l.b16 %v358
    %v1673 = vunpack.c.h.b16 %v358
    %v1674 = vunpack.c.l.b16 %v359
    %v1675 = vunpack.c.h.b16 %v359
    %v1676 = vunpack.c.l.b16 %v360
    %v1677 = vunpack.c.h.b16 %v360
    %v1678 = vunpack.c.l.b16 %v361
    %v1679 = vunpack.c.h.b16 %v361
    %v1680 = vunpack.c.l.b16 %v362
    %v1681 = vunpack.c.h.b16 %v362
    %v1682 = vunpack.c.l.b16 %v363
    %v1683 = vunpack.c.h.b16 %v363
    %v1684 = vunpack.c.l.b16 %v364
    %v1685 = vunpack.c.h.b16 %v364
    %v1686 = vunpack.c.l.b16 %v365
    %v1687 = vunpack.c.h.b16 %v365
    %v1688 = vunpack.c.l.b16 %v366
    %v1689 = vunpack.c.h.b16 %v366
    %v1690 = vunpack.c.l.b16 %v367
    %v1691 = vunpack.c.h.b16 %v367
    %v1692 = vunpack.c.l.b16 %v368
    %v1693 = vunpack.c.h.b16 %v368
    %v1694 = vunpack.c.l.b16 %v369
    %v1695 = vunpack.c.h.b16 %v369
    %v1696 = vunpack.c.l.b16 %v370
    %v1697 = vunpack.c.h.b16 %v370
    %v1698 = vunpack.c.l.b16 %v371
    %v1699 = vunpack.c.h.b16 %v371
    %v1700 = vunpack.c.l.b16 %v372
    %v1701 = vunpack.c.h.b16 %v372
    %v1702 = vunpack.c.l.b16 %v373
    %v1703 = vunpack.c.h.b16 %v373
    %v1704 = vunpack.c.l.b16 %v374
    %v1705 = vunpack.c.h.b16 %v374
    %v1706 = vunpack.c.l.b16 %v375
    %v1707 = vunpack.c.h.b16 %v375
    %v1708 = vunpack.c.l.b16 %v376
    %v1709 = vunpack.c.h.b16 %v376
    %v1710 = vunpack.c.l.b16 %v377
    %v1711 = vunpack.c.h.b16 %v377
    %v1712 = vunpack.c.l.b16 %v378
    %v1713 = vunpack.c.h.b16 %v378
    %v1714 = vunpack.c.l.b16 %v379
    %v1715 = vunpack.c.h.b16 %v379
    %v1716 = vunpack.c.l.b16 %v380
    %v1717 = vunpack.c.h.b16 %v380
    %v1718 = vunpack.c.l.b16 %v381
    %v1719 = vunpack.c.h.b16 %v381
    %v1720 = vunpack.c.l.b16 %v382
    %v1721 = vunpack.c.h.b16 %v382
    %v1722 = vunpack.c.l.b16 %v383
    %v1723 = vunpack.c.h.b16 %v383
    %v1724 = vunpack.c.l.b16 %v384
    %v1725 = vunpack.c.h.b16 %v384
    %v1726 = vunpack.c.l.b16 %v385
    %v1727 = vunpack.c.h.b16 %v385
    %v1728 = vunpack.c.l.b16 %v386
    %v1729 = vunpack.c.h.b16 %v386
    %v1730 = vunpack.c.l.b16 %v387
    %v1731 = vunpack.c.h.b16 %v387
    %v1732 = vunpack.c.l.b16 %v388
    %v1733 = vunpack.c.h.b16 %v388
    %v1734 = vunpack.c.l.b16 %v389
    %v1735 = vunpack.c.h.b16 %v389
    %v1736 = vunpack.c.l.b16 %v390
    %v1737 = vunpack.c.h.b16 %v390
    %v1738 = vunpack.c.l.b16 %v391
    %v1739 = vunpack.c.h.b16 %v391
    %v1740 = vunpack.c.l.b16 %v392
    %v1741 = vunpack.c.h.b16 %v392
    %v1742 = vunpack.c.l.b16 %v393
    %v1743 = vunpack.c.h.b16 %v393
    %v1744 = vunpack.c.l.b16 %v394
    %v1745 = vunpack.c.h.b16 %v394
    %v1746 = vunpack.c.l.b16 %v395
    %v1747 = vunpack.c.h.b16 %v395
    %v1748 = vunpack.c.l.b16 %v396
    %v1749 = vunpack.c.h.b16 %v396
    %v1750 = vunpack.c.l.b16 %v397
    %v1751 = vunpack.c.h.b16 %v397
    %v1752 = vunpack.c.l.b16 %v398
    %v1753 = vunpack.c.h.b16 %v398
    %v1754 = vunpack.c.l.b16 %v399
    %v1755 = vunpack.c.h.b16 %v399
    %v1756 = vunpack.c.l.b16 %v400
    %v1757 = vunpack.c.h.b16 %v400
    %v1758 = vunpack.c.l.b16 %v401
    %v1759 = vunpack.c.h.b16 %v401
    %v1760 = vunpack.c.l.b16 %v402
    %v1761 = vunpack.c.h.b16 %v402
    %v1762 = vunpack.c.l.b16 %v403
    %v1763 = vunpack.c.h.b16 %v403
    %v1764 = vunpack.c.l.b16 %v404
    %v1765 = vunpack.c.h.b16 %v404
    %v1766 = vunpack.c.l.b16 %v405
    %v1767 = vunpack.c.h.b16 %v405
    %v1768 = vunpack.c.l.b16 %v406
    %v1769 = vunpack.c.h.b16 %v406
    %v1770 = vunpack.c.l.b16 %v407
    %v1771 = vunpack.c.h.b16 %v407
    %v1772 = vunpack.c.l.b16 %v408
    %v1773 = vunpack.c.h.b16 %v408
    %v1774 = vunpack.c.l.b16 %v409
    %v1775 = vunpack.c.h.b16 %v409
    %v1776 = vunpack.c.l.b16 %v410
    %v1777 = vunpack.c.h.b16 %v410
    %v1778 = vunpack.c.l.b16 %v411
    %v1779 = vunpack.c.h.b16 %v411
    %v1780 = vunpack.c.l.b16 %v412
    %v1781 = vunpack.c.h.b16 %v412
    %v1782 = vunpack.c.l.b16 %v413
    %v1783 = vunpack.c.h.b16 %v413
    %v1784 = vunpack.c.l.b16 %v414
    %v1785 = vunpack.c.h.b16 %v414
    %v1786 = vunpack.c.l.b16 %v415
    %v1787 = vunpack.c.h.b16 %v415
    %v1788 = vunpack.c.l.b16 %v416
    %v1789 = vunpack.c.h.b16 %v416
    %v1790 = vunpack.c.l.b16 %v417
    %v1791 = vunpack.c.h.b16 %v417
    %v1792 = vunpack.c.l.b16 %v418
    %v1793 = vunpack.c.h.b16 %v418
    %v1794 = vunpack.c.l.b16 %v419
    %v1795 = vunpack.c.h.b16 %v419
    %v1796 = vunpack.c.l.b16 %v420
    %v1797 = vunpack.c.h.b16 %v420
    %v1798 = vunpack.c.l.b16 %v421
    %v1799 = vunpack.c.h.b16 %v421
    %v1800 = vunpack.c.l.b16 %v422
    %v1801 = vunpack.c.h.b16 %v422
    %v1802 = vunpack.c.l.b16 %v423
    %v1803 = vunpack.c.h.b16 %v423
    %v1804 = vunpack.c.l.b16 %v424
    %v1805 = vunpack.c.h.b16 %v424
    %v1806 = vunpack.c.l.b16 %v425
    %v1807 = vunpack.c.h.b16 %v425
    %v1808 = vunpack.c.l.b16 %v426
    %v1809 = vunpack.c.h.b16 %v426
    %v1810 = vunpack.c.l.b16 %v427
    %v1811 = vunpack.c.h.b16 %v427
    %v1812 = vunpack.c.l.b16 %v428
    %v1813 = vunpack.c.h.b16 %v428
    %v1814 = vunpack.c.l.b16 %v429
    %v1815 = vunpack.c.h.b16 %v429
    %v1816 = vunpack.c.l.b16 %v430
    %v1817 = vunpack.c.h.b16 %v430
    %v1818 = vunpack.c.l.b16 %v431
    %v1819 = vunpack.c.h.b16 %v431
    %v1820 = vunpack.c.l.b16 %v432
    %v1821 = vunpack.c.h.b16 %v432
    %v1822 = vunpack.c.l.b16 %v433
    %v1823 = vunpack.c.h.b16 %v433
    %v1824 = vunpack.c.l.b16 %v434
    %v1825 = vunpack.c.h.b16 %v434
    %v1826 = vunpack.c.l.b16 %v435
    %v1827 = vunpack.c.h.b16 %v435
    %v1828 = vunpack.c.l.b16 %v436
    %v1829 = vunpack.c.h.b16 %v436
    %v1830 = vunpack.c.l.b16 %v437
    %v1831 = vunpack.c.h.b16 %v437
    %v1832 = vunpack.c.l.b16 %v438
    %v1833 = vunpack.c.h.b16 %v438
    %v1834 = vunpack.c.l.b16 %v439
    %v1835 = vunpack.c.h.b16 %v439
    %v1836 = vunpack.c.l.b16 %v440
    %v1837 = vunpack.c.h.b16 %v440
    %v1838 = vunpack.c.l.b16 %v441
    %v1839 = vunpack.c.h.b16 %v441
    %v1840 = vunpack.c.l.b16 %v442
    %v1841 = vunpack.c.h.b16 %v442
    %v1842 = vunpack.c.l.b16 %v443
    %v1843 = vunpack.c.h.b16 %v443
    %v1844 = vunpack.c.l.b16 %v444
    %v1845 = vunpack.c.h.b16 %v444
    %v1846 = vunpack.c.l.b16 %v445
    %v1847 = vunpack.c.h.b16 %v445
    %v1848 = vunpack.c.l.b16 %v446
    %v1849 = vunpack.c.h.b16 %v446
    %v1850 = vunpack.c.l.b16 %v447
    %v1851 = vunpack.c.h.b16 %v447
    %v1852 = vunpack.c.l.b16 %v448
    %v1853 = vunpack.c.h.b16 %v448
    %v1854 = vunpack.c.l.b16 %v449
    %v1855 = vunpack.c.h.b16 %v449
    %v1856 = vunpack.c.l.b16 %v450
    %v1857 = vunpack.c.h.b16 %v450
    %v1858 = vunpack.c.l.b16 %v451
    %v1859 = vunpack.c.h.b16 %v451
    %v1860 = vunpack.c.l.b16 %v452
    %v1861 = vunpack.c.h.b16 %v452
    %v1862 = vunpack.c.l.b16 %v453
    %v1863 = vunpack.c.h.b16 %v453
    %v1864 = vunpack.c.l.b16 %v454
    %v1865 = vunpack.c.h.b16 %v454
    %v1866 = vunpack.c.l.b16 %v455
    %v1867 = vunpack.c.h.b16 %v455
    %v1868 = vunpack.c.l.b16 %v456
    %v1869 = vunpack.c.h.b16 %v456
    %v1870 = vunpack.c.l.b16 %v457
    %v1871 = vunpack.c.h.b16 %v457
    %v1872 = vunpack.c.l.b16 %v458
    %v1873 = vunpack.c.h.b16 %v458
    %v1874 = vunpack.c.l.b16 %v459
    %v1875 = vunpack.c.h.b16 %v459
    %v1876 = vunpack.c.l.b16 %v460
    %v1877 = vunpack.c.h.b16 %v460
    %v1878 = vunpack.c.l.b16 %v461
    %v1879 = vunpack.c.h.b16 %v461
    %v1880 = vunpack.c.l.b16 %v462
    %v1881 = vunpack.c.h.b16 %v462
    %v1882 = vunpack.c.l.b16 %v463
    %v1883 = vunpack.c.h.b16 %v463
    %v1884 = vunpack.c.l.b16 %v464
    %v1885 = vunpack.c.h.b16 %v464
    %v1886 = vunpack.c.l.b16 %v465
    %v1887 = vunpack.c.h.b16 %v465
    %v1888 = vunpack.c.l.b16 %v466
    %v1889 = vunpack.c.h.b16 %v466
    %v1890 = vunpack.c.l.b16 %v467
    %v1891 = vunpack.c.h.b16 %v467
    %v1892 = vunpack.c.l.b16 %v468
    %v1893 = vunpack.c.h.b16 %v468
    %v1894 = vunpack.c.l.b16 %v469
    %v1895 = vunpack.c.h.b16 %v469
    %v1896 = vunpack.c.l.b16 %v470
    %v1897 = vunpack.c.h.b16 %v470
    %v1898 = vunpack.c.l.b16 %v471
    %v1899 = vunpack.c.h.b16 %v471
    %v1900 = vunpack.c.l.b16 %v472
    %v1901 = vunpack.c.h.b16 %v472
    %v1902 = vunpack.c.l.b16 %v473
    %v1903 = vunpack.c.h.b16 %v473
    %v1904 = vunpack.c.l.b16 %v474
    %v1905 = vunpack.c.h.b16 %v474
    %v1906 = vunpack.c.l.b16 %v475
    %v1907 = vunpack.c.h.b16 %v475
    %v1908 = vunpack.c.l.b16 %v476
    %v1909 = vunpack.c.h.b16 %v476
    %v1910 = vunpack.c.l.b16 %v477
    %v1911 = vunpack.c.h.b16 %v477
    %v1912 = vunpack.c.l.b16 %v478
    %v1913 = vunpack.c.h.b16 %v478
    %v1914 = vunpack.c.l.b16 %v479
    %v1915 = vunpack.c.h.b16 %v479
    %v1916 = vunpack.c.l.b16 %v480
    %v1917 = vunpack.c.h.b16 %v480
    %v1918 = vunpack.c.l.b16 %v481
    %v1919 = vunpack.c.h.b16 %v481
    %v1920 = vunpack.c.l.b16 %v482
    %v1921 = vunpack.c.h.b16 %v482
    %v1922 = vunpack.c.l.b16 %v483
    %v1923 = vunpack.c.h.b16 %v483
    %v1924 = vunpack.c.l.b16 %v484
    %v1925 = vunpack.c.h.b16 %v484
    %v1926 = vunpack.c.l.b16 %v485
    %v1927 = vunpack.c.h.b16 %v485
    %v1928 = vunpack.c.l.b16 %v486
    %v1929 = vunpack.c.h.b16 %v486
    %v1930 = vunpack.c.l.b16 %v487
    %v1931 = vunpack.c.h.b16 %v487
    %v1932 = vunpack.c.l.b16 %v488
    %v1933 = vunpack.c.h.b16 %v488
    %v1934 = vunpack.c.l.b16 %v489
    %v1935 = vunpack.c.h.b16 %v489
    %v1936 = vunpack.c.l.b16 %v490
    %v1937 = vunpack.c.h.b16 %v490
    %v1938 = vunpack.c.l.b16 %v491
    %v1939 = vunpack.c.h.b16 %v491
    %v1940 = vunpack.c.l.b16 %v492
    %v1941 = vunpack.c.h.b16 %v492
    %v1942 = vunpack.c.l.b16 %v493
    %v1943 = vunpack.c.h.b16 %v493
    %v1944 = vunpack.c.l.b16 %v494
    %v1945 = vunpack.c.h.b16 %v494
    %v1946 = vunpack.c.l.b16 %v495
    %v1947 = vunpack.c.h.b16 %v495
    %v1948 = vunpack.c.l.b16 %v496
    %v1949 = vunpack.c.h.b16 %v496
    %v1950 = vunpack.c.l.b16 %v497
    %v1951 = vunpack.c.h.b16 %v497
    %v1952 = vunpack.c.l.b16 %v498
    %v1953 = vunpack.c.h.b16 %v498
    %v1954 = vunpack.c.l.b16 %v499
    %v1955 = vunpack.c.h.b16 %v499
    %v1956 = vunpack.c.l.b16 %v500
    %v1957 = vunpack.c.h.b16 %v500
    %v1958 = vunpack.c.l.b16 %v501
    %v1959 = vunpack.c.h.b16 %v501
    %v1960 = vunpack.c.l.b16 %v502
    %v1961 = vunpack.c.h.b16 %v502
    %v1962 = vunpack.c.l.b16 %v503
    %v1963 = vunpack.c.h.b16 %v503
    %v1964 = vunpack.c.l.b16 %v504
    %v1965 = vunpack.c.h.b16 %v504
    %v1966 = vunpack.c.l.b16 %v505
    %v1967 = vunpack.c.h.b16 %v505
    %v1968 = vunpack.c.l.b16 %v506
    %v1969 = vunpack.c.h.b16 %v506
    %v1970 = vunpack.c.l.b16 %v507
    %v1971 = vunpack.c.h.b16 %v507
    %v1972 = vunpack.c.l.b16 %v508
    %v1973 = vunpack.c.h.b16 %v508
    %v1974 = vunpack.c.l.b16 %v509
    %v1975 = vunpack.c.h.b16 %v509
    %v1976 = vunpack.c.l.b16 %v510
    %v1977 = vunpack.c.h.b16 %v510
    %v1978 = vunpack.c.l.b16 %v511
    %v1979 = vunpack.c.h.b16 %v511
    %v1980 = vunpack.c.l.b16 %v512
    %v1981 = vunpack.c.h.b16 %v512
    %v1982 = vunpack.c.l.b16 %v513
    %v1983 = vunpack.c.h.b16 %v513
    %v1984 = vunpack.c.l.b16 %v514
    %v1985 = vunpack.c.h.b16 %v514
    %v1986 = vunpack.c.l.b16 %v515
    %v1987 = vunpack.c.h.b16 %v515
    %v1988 = vunpack.c.l.b16 %v516
    %v1989 = vunpack.c.h.b16 %v516
    %v1990 = vunpack.c.l.b16 %v517
    %v1991 = vunpack.c.h.b16 %v517
    %v1992 = vunpack.c.l.b16 %v518
    %v1993 = vunpack.c.h.b16 %v518
    %v1994 = vunpack.c.l.b16 %v519
    %v1995 = vunpack.c.h.b16 %v519
    %v1996 = vunpack.c.l.b16 %v520
    %v1997 = vunpack.c.h.b16 %v520
    %v1998 = vunpack.c.l.b16 %v521
    %v1999 = vunpack.c.h.b16 %v521
    %v2000 = vunpack.c.l.b16 %v522
    %v2001 = vunpack.c.h.b16 %v522
    %v2002 = vunpack.c.l.b16 %v523
    %v2003 = vunpack.c.h.b16 %v523
    %v2004 = vunpack.c.l.b16 %v524
    %v2005 = vunpack.c.h.b16 %v524
    %v2006 = vunpack.c.l.b16 %v525
    %v2007 = vunpack.c.h.b16 %v525
    %v2008 = vunpack.c.l.b16 %v526
    %v2009 = vunpack.c.h.b16 %v526
    %v2010 = vunpack.c.l.b16 %v527
    %v2011 = vunpack.c.h.b16 %v527
    %v2012 = vunpack.c.l.b16 %v528
    %v2013 = vunpack.c.h.b16 %v528
    %v2014 = vunpack.c.l.b16 %v529
    %v2015 = vunpack.c.h.b16 %v529
    %v2016 = vunpack.c.l.b16 %v530
    %v2017 = vunpack.c.h.b16 %v530
    %v2018 = vunpack.c.l.b16 %v531
    %v2019 = vunpack.c.h.b16 %v531
    %v2020 = vunpack.c.l.b16 %v532
    %v2021 = vunpack.c.h.b16 %v532
    %v2022 = vunpack.c.l.b16 %v533
    %v2023 = vunpack.c.h.b16 %v533
    %v2024 = vunpack.c.l.b16 %v534
    %v2025 = vunpack.c.h.b16 %v534
    %v2026 = vunpack.c.l.b16 %v535
    %v2027 = vunpack.c.h.b16 %v535
    %v2028 = vunpack.c.l.b16 %v536
    %v2029 = vunpack.c.h.b16 %v536
    %v2030 = vunpack.c.l.b16 %v537
    %v2031 = vunpack.c.h.b16 %v537
    %v2032 = vunpack.c.l.b16 %v538
    %v2033 = vunpack.c.h.b16 %v538
    %v2034 = vunpack.c.l.b16 %v539
    %v2035 = vunpack.c.h.b16 %v539
    %v2036 = vunpack.c.l.b16 %v540
    %v2037 = vunpack.c.h.b16 %v540
    %v2038 = vunpack.c.l.b16 %v541
    %v2039 = vunpack.c.h.b16 %v541
    %v2040 = vunpack.c.l.b16 %v542
    %v2041 = vunpack.c.h.b16 %v542
    %v2042 = vunpack.c.l.b16 %v543
    %v2043 = vunpack.c.h.b16 %v543
    %v2044 = vunpack.c.l.b16 %v544
    %v2045 = vunpack.c.h.b16 %v544
    %v2046 = vunpack.c.l.b16 %v545
    %v2047 = vunpack.c.h.b16 %v545
    %v2048 = vunpack.c.l.b16 %v546
    %v2049 = vunpack.c.h.b16 %v546
    %v2050 = vunpack.c.l.b16 %v547
    %v2051 = vunpack.c.h.b16 %v547
    %v2052 = vunpack.c.l.b16 %v548
    %v2053 = vunpack.c.h.b16 %v548
    %v2054 = vunpack.c.l.b16 %v549
    %v2055 = vunpack.c.h.b16 %v549
    %v2056 = vunpack.c.l.b16 %v550
    %v2057 = vunpack.c.h.b16 %v550
    %v2058 = vunpack.c.l.b16 %v551
    %v2059 = vunpack.c.h.b16 %v551
    %v2060 = vunpack.c.l.b16 %v552
    %v2061 = vunpack.c.h.b16 %v552
    %v2062 = vunpack.c.l.b16 %v553
    %v2063 = vunpack.c.h.b16 %v553
    %v2064 = vunpack.c.l.b16 %v554
    %v2065 = vunpack.c.h.b16 %v554
    %v2066 = vunpack.c.l.b16 %v555
    %v2067 = vunpack.c.h.b16 %v555
    %v2068 = vunpack.c.l.b16 %v556
    %v2069 = vunpack.c.h.b16 %v556
    %v2070 = vunpack.c.l.b16 %v557
    %v2071 = vunpack.c.h.b16 %v557
    %v2072 = vunpack.c.l.b16 %v558
    %v2073 = vunpack.c.h.b16 %v558
    %v2074 = vunpack.c.l.b16 %v559
    %v2075 = vunpack.c.h.b16 %v559
    %v2076 = vunpack.c.l.b16 %v560
    %v2077 = vunpack.c.h.b16 %v560
    %v2078 = vunpack.c.l.b16 %v561
    %v2079 = vunpack.c.h.b16 %v561
    %v2080 = vunpack.c.l.b16 %v562
    %v2081 = vunpack.c.h.b16 %v562
    %v2082 = vunpack.c.l.b16 %v563
    %v2083 = vunpack.c.h.b16 %v563
    %v2084 = vunpack.c.l.b16 %v564
    %v2085 = vunpack.c.h.b16 %v564
    %v2086 = vunpack.c.l.b16 %v565
    %v2087 = vunpack.c.h.b16 %v565
    %v2088 = vunpack.c.l.b16 %v566
    %v2089 = vunpack.c.h.b16 %v566
    %v2090 = vunpack.c.l.b16 %v567
    %v2091 = vunpack.c.h.b16 %v567
    %v2092 = vunpack.c.l.b16 %v568
    %v2093 = vunpack.c.h.b16 %v568
    %v2094 = vunpack.c.l.b16 %v569
    %v2095 = vunpack.c.h.b16 %v569
    %v2096 = vunpack.c.l.b16 %v570
    %v2097 = vunpack.c.h.b16 %v570
    %v2098 = vunpack.c.l.b16 %v571
    %v2099 = vunpack.c.h.b16 %v571
    %v2100 = vunpack.c.l.b16 %v572
    %v2101 = vunpack.c.h.b16 %v572
    %v2102 = vunpack.c.l.b16 %v573
    %v2103 = vunpack.c.h.b16 %v573
    %v2104 = vunpack.c.l.b16 %v574
    %v2105 = vunpack.c.h.b16 %v574
    %v2106 = vunpack.c.l.b16 %v575
    %v2107 = vunpack.c.h.b16 %v575
    %v2108 = vunpack.c.l.b16 %v576
    %v2109 = vunpack.c.h.b16 %v576
    %v2110 = vunpack.c.l.b16 %v577
    %v2111 = vunpack.c.h.b16 %v577
    %v2112 = vunpack.c.l.b16 %v578
    %v2113 = vunpack.c.h.b16 %v578
    %v2114 = vunpack.c.l.b16 %v579
    %v2115 = vunpack.c.h.b16 %v579
    %v2116 = vunpack.c.l.b16 %v580
    %v2117 = vunpack.c.h.b16 %v580
    %v2118 = vunpack.c.l.b16 %v581
    %v2119 = vunpack.c.h.b16 %v581
    %v2120 = vunpack.c.l.b16 %v582
    %v2121 = vunpack.c.h.b16 %v582
    %v2122 = vunpack.c.l.b16 %v583
    %v2123 = vunpack.c.h.b16 %v583
    %v2124 = vunpack.c.l.b16 %v584
    %v2125 = vunpack.c.h.b16 %v584
    %v2126 = vunpack.c.l.b16 %v585
    %v2127 = vunpack.c.h.b16 %v585
    %v2128 = vunpack.c.l.b16 %v586
    %v2129 = vunpack.c.h.b16 %v586
    %v2130 = vunpack.c.l.b16 %v587
    %v2131 = vunpack.c.h.b16 %v587
    %v2132 = vunpack.c.l.b16 %v588
    %v2133 = vunpack.c.h.b16 %v588
    %v2134 = vunpack.c.l.b16 %v589
    %v2135 = vunpack.c.h.b16 %v589
    %v2136 = vunpack.c.l.b16 %v590
    %v2137 = vunpack.c.h.b16 %v590
    %v2138 = vunpack.c.l.b16 %v591
    %v2139 = vunpack.c.h.b16 %v591
    %v2140 = vunpack.c.l.b16 %v592
    %v2141 = vunpack.c.h.b16 %v592
    %v2142 = vunpack.c.l.b16 %v593
    %v2143 = vunpack.c.h.b16 %v593
    %v2144 = vpack.c.b16 %v1136, %v1120
    %v2145 = vpack.c.b16 %v1137, %v1121
    %v2146 = vpack.c.b16 %v1138, %v1122
    %v2147 = vpack.c.b16 %v1139, %v1123
    %v2148 = vpack.c.b16 %v1140, %v1124
    %v2149 = vpack.c.b16 %v1141, %v1125
    %v2150 = vpack.c.b16 %v1142, %v1126
    %v2151 = vpack.c.b16 %v1143, %v1127
    %v2152 = vpack.c.b16 %v1144, %v1128
    %v2153 = vpack.c.b16 %v1145, %v1129
    %v2154 = vpack.c.b16 %v1146, %v1130
    %v2155 = vpack.c.b16 %v1147, %v1131
    %v2156 = vpack.c.b16 %v1148, %v1132
    %v2157 = vpack.c.b16 %v1149, %v1133
    %v2158 = vpack.c.b16 %v1150, %v1134
    %v2159 = vpack.c.b16 %v1151, %v1135
    %v2160 = vpack.c.b16 %v1168, %v1152
    %v2161 = vpack.c.b16 %v1169, %v1153
    %v2162 = vpack.c.b16 %v1170, %v1154
    %v2163 = vpack.c.b16 %v1171, %v1155
    %v2164 = vpack.c.b16 %v1172, %v1156
    %v2165 = vpack.c.b16 %v1173, %v1157
    %v2166 = vpack.c.b16 %v1174, %v1158
    %v2167 = vpack.c.b16 %v1175, %v1159
    %v2168 = vpack.c.b16 %v1176, %v1160
    %v2169 = vpack.c.b16 %v1177, %v1161
    %v2170 = vpack.c.b16 %v1178, %v1162
    %v2171 = vpack.c.b16 %v1179, %v1163
    %v2172 = vpack.c.b16 %v1180, %v1164
    %v2173 = vpack.c.b16 %v1181, %v1165
    %v2174 = vpack.c.b16 %v1182, %v1166
    %v2175 = vpack.c.b16 %v1183, %v1167
    %v2176 = vpack.c.b16 %v1200, %v1184
    %v2177 = vpack.c.b16 %v1201, %v1185
    %v2178 = vpack.c.b16 %v1202, %v1186
    %v2179 = vpack.c.b16 %v1203, %v1187
    %v2180 = vpack.c.b16 %v1204, %v1188
    %v2181 = vpack.c.b16 %v1205, %v1189
    %v2182 = vpack.c.b16 %v1206, %v1190
    %v2183 = vpack.c.b16 %v1207, %v1191
    %v2184 = vpack.c.b16 %v1208, %v1192
    %v2185 = vpack.c.b16 %v1209, %v1193
    %v2186 = vpack.c.b16 %v1210, %v1194
    %v2187 = vpack.c.b16 %v1211, %v1195
    %v2188 = vpack.c.b16 %v1212, %v1196
    %v2189 = vpack.c.b16 %v1213, %v1197
    %v2190 = vpack.c.b16 %v1214, %v1198
    %v2191 = vpack.c.b16 %v1215, %v1199
    %v2192 = vpack.c.b16 %v1232, %v1216
    %v2193 = vpack.c.b16 %v1233, %v1217
    %v2194 = vpack.c.b16 %v1234, %v1218
    %v2195 = vpack.c.b16 %v1235, %v1219
    %v2196 = vpack.c.b16 %v1236, %v1220
    %v2197 = vpack.c.b16 %v1237, %v1221
    %v2198 = vpack.c.b16 %v1238, %v1222
    %v2199 = vpack.c.b16 %v1239, %v1223
    %v2200 = vpack.c.b16 %v1240, %v1224
    %v2201 = vpack.c.b16 %v1241, %v1225
    %v2202 = vpack.c.b16 %v1242, %v1226
    %v2203 = vpack.c.b16 %v1243, %v1227
    %v2204 = vpack.c.b16 %v1244, %v1228
    %v2205 = vpack.c.b16 %v1245, %v1229
    %v2206 = vpack.c.b16 %v1246, %v1230
    %v2207 = vpack.c.b16 %v1247, %v1231
    %v2208 = vpack.c.b16 %v1264, %v1248
    %v2209 = vpack.c.b16 %v1265, %v1249
    %v2210 = vpack.c.b16 %v1266, %v1250
    %v2211 = vpack.c.b16 %v1267, %v1251
    %v2212 = vpack.c.b16 %v1268, %v1252
    %v2213 = vpack.c.b16 %v1269, %v1253
    %v2214 = vpack.c.b16 %v1270, %v1254
    %v2215 = vpack.c.b16 %v1271, %v1255
    %v2216 = vpack.c.b16 %v1272, %v1256
    %v2217 = vpack.c.b16 %v1273, %v1257
    %v2218 = vpack.c.b16 %v1274, %v1258
    %v2219 = vpack.c.b16 %v1275, %v1259
    %v2220 = vpack.c.b16 %v1276, %v1260
    %v2221 = vpack.c.b16 %v1277, %v1261
    %v2222 = vpack.c.b16 %v1278, %v1262
    %v2223 = vpack.c.b16 %v1279, %v1263
    %v2224 = vpack.c.b16 %v1296, %v1280
    %v2225 = vpack.c.b16 %v1297, %v1281
    %v2226 = vpack.c.b16 %v1298, %v1282
    %v2227 = vpack.c.b16 %v1299, %v1283
    %v2228 = vpack.c.b16 %v1300, %v1284
    %v2229 = vpack.c.b16 %v1301, %v1285
    %v2230 = vpack.c.b16 %v1302, %v1286
    %v2231 = vpack.c.b16 %v1303, %v1287
    %v2232 = vpack.c.b16 %v1304, %v1288
    %v2233 = vpack.c.b16 %v1305, %v1289
    %v2234 = vpack.c.b16 %v1306, %v1290
    %v2235 = vpack.c.b16 %v1307, %v1291
    %v2236 = vpack.c.b16 %v1308, %v1292
    %v2237 = vpack.c.b16 %v1309, %v1293
    %v2238 = vpack.c.b16 %v1310, %v1294
    %v2239 = vpack.c.b16 %v1311, %v1295
    %v2240 = vpack.c.b16 %v1328, %v1312
    %v2241 = vpack.c.b16 %v1329, %v1313
    %v2242 = vpack.c.b16 %v1330, %v1314
    %v2243 = vpack.c.b16 %v1331, %v1315
    %v2244 = vpack.c.b16 %v1332, %v1316
    %v2245 = vpack.c.b16 %v1333, %v1317
    %v2246 = vpack.c.b16 %v1334, %v1318
    %v2247 = vpack.c.b16 %v1335, %v1319
    %v2248 = vpack.c.b16 %v1336, %v1320
    %v2249 = vpack.c.b16 %v1337, %v1321
    %v2250 = vpack.c.b16 %v1338, %v1322
    %v2251 = vpack.c.b16 %v1339, %v1323
    %v2252 = vpack.c.b16 %v1340, %v1324
    %v2253 = vpack.c.b16 %v1341, %v1325
    %v2254 = vpack.c.b16 %v1342, %v1326
    %v2255 = vpack.c.b16 %v1343, %v1327
    %v2256 = vpack.c.b16 %v1360, %v1344
    %v2257 = vpack.c.b16 %v1361, %v1345
    %v2258 = vpack.c.b16 %v1362, %v1346
    %v2259 = vpack.c.b16 %v1363, %v1347
    %v2260 = vpack.c.b16 %v1364, %v1348
    %v2261 = vpack.c.b16 %v1365, %v1349
    %v2262 = vpack.c.b16 %v1366, %v1350
    %v2263 = vpack.c.b16 %v1367, %v1351
    %v2264 = vpack.c.b16 %v1368, %v1352
    %v2265 = vpack.c.b16 %v1369, %v1353
    %v2266 = vpack.c.b16 %v1370, %v1354
    %v2267 = vpack.c.b16 %v1371, %v1355
    %v2268 = vpack.c.b16 %v1372, %v1356
    %v2269 = vpack.c.b16 %v1373, %v1357
    %v2270 = vpack.c.b16 %v1374, %v1358
    %v2271 = vpack.c.b16 %v1375, %v1359
    %v2272 = vpack.c.b16 %v1392, %v1376
    %v2273 = vpack.c.b16 %v1393, %v1377
    %v2274 = vpack.c.b16 %v1394, %v1378
    %v2275 = vpack.c.b16 %v1395, %v1379
    %v2276 = vpack.c.b16 %v1396, %v1380
    %v2277 = vpack.c.b16 %v1397, %v1381
    %v2278 = vpack.c.b16 %v1398, %v1382
    %v2279 = vpack.c.b16 %v1399, %v1383
    %v2280 = vpack.c.b16 %v1400, %v1384
    %v2281 = vpack.c.b16 %v1401, %v1385
    %v2282 = vpack.c.b16 %v1402, %v1386
    %v2283 = vpack.c.b16 %v1403, %v1387
    %v2284 = vpack.c.b16 %v1404, %v1388
    %v2285 = vpack.c.b16 %v1405, %v1389
    %v2286 = vpack.c.b16 %v1406, %v1390
    %v2287 = vpack.c.b16 %v1407, %v1391
    %v2288 = vpack.c.b16 %v1424, %v1408
    %v2289 = vpack.c.b16 %v1425, %v1409
    %v2290 = vpack.c.b16 %v1426, %v1410
    %v2291 = vpack.c.b16 %v1427, %v1411
    %v2292 = vpack.c.b16 %v1428, %v1412
    %v2293 = vpack.c.b16 %v1429, %v1413
    %v2294 = vpack.c.b16 %v1430, %v1414
    %v2295 = vpack.c.b16 %v1431, %v1415
    %v2296 = vpack.c.b16 %v1432, %v1416
    %v2297 = vpack.c.b16 %v1433, %v1417
    %v2298 = vpack.c.b16 %v1434, %v1418
    %v2299 = vpack.c.b16 %v1435, %v1419
    %v2300 = vpack.c.b16 %v1436, %v1420
    %v2301 = vpack.c.b16 %v1437, %v1421
    %v2302 = vpack.c.b16 %v1438, %v1422
    %v2303 = vpack.c.b16 %v1439, %v1423
    %v2304 = vpack.c.b16 %v1456, %v1440
    %v2305 = vpack.c.b16 %v1457, %v1441
    %v2306 = vpack.c.b16 %v1458, %v1442
    %v2307 = vpack.c.b16 %v1459, %v1443
    %v2308 = vpack.c.b16 %v1460, %v1444
    %v2309 = vpack.c.b16 %v1461, %v1445
    %v2310 = vpack.c.b16 %v1462, %v1446
    %v2311 = vpack.c.b16 %v1463, %v1447
    %v2312 = vpack.c.b16 %v1464, %v1448
    %v2313 = vpack.c.b16 %v1465, %v1449
    %v2314 = vpack.c.b16 %v1466, %v1450
    %v2315 = vpack.c.b16 %v1467, %v1451
    %v2316 = vpack.c.b16 %v1468, %v1452
    %v2317 = vpack.c.b16 %v1469, %v1453
    %v2318 = vpack.c.b16 %v1470, %v1454
    %v2319 = vpack.c.b16 %v1471, %v1455
    %v2320 = vpack.c.b16 %v1488, %v1472
    %v2321 = vpack.c.b16 %v1489, %v1473
    %v2322 = vpack.c.b16 %v1490, %v1474
    %v2323 = vpack.c.b16 %v1491, %v1475
    %v2324 = vpack.c.b16 %v1492, %v1476
    %v2325 = vpack.c.b16 %v1493, %v1477
    %v2326 = vpack.c.b16 %v1494, %v1478
    %v2327 = vpack.c.b16 %v1495, %v1479
    %v2328 = vpack.c.b16 %v1496, %v1480
    %v2329 = vpack.c.b16 %v1497, %v1481
    %v2330 = vpack.c.b16 %v1498, %v1482
    %v2331 = vpack.c.b16 %v1499, %v1483
    %v2332 = vpack.c.b16 %v1500, %v1484
    %v2333 = vpack.c.b16 %v1501, %v1485
    %v2334 = vpack.c.b16 %v1502, %v1486
    %v2335 = vpack.c.b16 %v1503, %v1487
    %v2336 = vpack.c.b16 %v1520, %v1504
    %v2337 = vpack.c.b16 %v1521, %v1505
    %v2338 = vpack.c.b16 %v1522, %v1506
    %v2339 = vpack.c.b16 %v1523, %v1507
    %v2340 = vpack.c.b16 %v1524, %v1508
    %v2341 = vpack.c.b16 %v1525, %v1509
    %v2342 = vpack.c.b16 %v1526, %v1510
    %v2343 = vpack.c.b16 %v1527, %v1511
    %v2344 = vpack.c.b16 %v1528, %v1512
    %v2345 = vpack.c.b16 %v1529, %v1513
    %v2346 = vpack.c.b16 %v1530, %v1514
    %v2347 = vpack.c.b16 %v1531, %v1515
    %v2348 = vpack.c.b16 %v1532, %v1516
    %v2349 = vpack.c.b16 %v1533, %v1517
    %v2350 = vpack.c.b16 %v1534, %v1518
    %v2351 = vpack.c.b16 %v1535, %v1519
    %v2352 = vpack.c.b16 %v1552, %v1536
    %v2353 = vpack.c.b16 %v1553, %v1537
    %v2354 = vpack.c.b16 %v1554, %v1538
    %v2355 = vpack.c.b16 %v1555, %v1539
    %v2356 = vpack.c.b16 %v1556, %v1540
    %v2357 = vpack.c.b16 %v1557, %v1541
    %v2358 = vpack.c.b16 %v1558, %v1542
    %v2359 = vpack.c.b16 %v1559, %v1543
    %v2360 = vpack.c.b16 %v1560, %v1544
    %v2361 = vpack.c.b16 %v1561, %v1545
    %v2362 = vpack.c.b16 %v1562, %v1546
    %v2363 = vpack.c.b16 %v1563, %v1547
    %v2364 = vpack.c.b16 %v1564, %v1548
    %v2365 = vpack.c.b16 %v1565, %v1549
    %v2366 = vpack.c.b16 %v1566, %v1550
    %v2367 = vpack.c.b16 %v1567, %v1551
    %v2368 = vpack.c.b16 %v1584, %v1568
    %v2369 = vpack.c.b16 %v1585, %v1569
    %v2370 = vpack.c.b16 %v1586, %v1570
    %v2371 = vpack.c.b16 %v1587, %v1571
    %v2372 = vpack.c.b16 %v1588, %v1572
    %v2373 = vpack.c.b16 %v1589, %v1573
    %v2374 = vpack.c.b16 %v1590, %v1574
    %v2375 = vpack.c.b16 %v1591, %v1575
    %v2376 = vpack.c.b16 %v1592, %v1576
    %v2377 = vpack.c.b16 %v1593, %v1577
    %v2378 = vpack.c.b16 %v1594, %v1578
    %v2379 = vpack.c.b16 %v1595, %v1579
    %v2380 = vpack.c.b16 %v1596, %v1580
    %v2381 = vpack.c.b16 %v1597, %v1581
    %v2382 = vpack.c.b16 %v1598, %v1582
    %v2383 = vpack.c.b16 %v1599, %v1583
    %v2384 = vpack.c.b16 %v1616, %v1600
    %v2385 = vpack.c.b16 %v1617, %v1601
    %v2386 = vpack.c.b16 %v1618, %v1602
    %v2387 = vpack.c.b16 %v1619, %v1603
    %v2388 = vpack.c.b16 %v1620, %v1604
    %v2389 = vpack.c.b16 %v1621, %v1605
    %v2390 = vpack.c.b16 %v1622, %v1606
    %v2391 = vpack.c.b16 %v1623, %v1607
    %v2392 = vpack.c.b16 %v1624, %v1608
    %v2393 = vpack.c.b16 %v1625, %v1609
    %v2394 = vpack.c.b16 %v1626, %v1610
    %v2395 = vpack.c.b16 %v1627, %v1611
    %v2396 = vpack.c.b16 %v1628, %v1612
    %v2397 = vpack.c.b16 %v1629, %v1613
    %v2398 = vpack.c.b16 %v1630, %v1614
    %v2399 = vpack.c.b16 %v1631, %v1615
    %v2400 = vpack.c.b16 %v1648, %v1632
    %v2401 = vpack.c.b16 %v1649, %v1633
    %v2402 = vpack.c.b16 %v1650, %v1634
    %v2403 = vpack.c.b16 %v1651, %v1635
    %v2404 = vpack.c.b16 %v1652, %v1636
    %v2405 = vpack.c.b16 %v1653, %v1637
    %v2406 = vpack.c.b16 %v1654, %v1638
    %v2407 = vpack.c.b16 %v1655, %v1639
    %v2408 = vpack.c.b16 %v1656, %v1640
    %v2409 = vpack.c.b16 %v1657, %v1641
    %v2410 = vpack.c.b16 %v1658, %v1642
    %v2411 = vpack.c.b16 %v1659, %v1643
    %v2412 = vpack.c.b16 %v1660, %v1644
    %v2413 = vpack.c.b16 %v1661, %v1645
    %v2414 = vpack.c.b16 %v1662, %v1646
    %v2415 = vpack.c.b16 %v1663, %v1647
    %v2416 = vpack.c.b16 %v1680, %v1664
    %v2417 = vpack.c.b16 %v1681, %v1665
    %v2418 = vpack.c.b16 %v1682, %v1666
    %v2419 = vpack.c.b16 %v1683, %v1667
    %v2420 = vpack.c.b16 %v1684, %v1668
    %v2421 = vpack.c.b16 %v1685, %v1669
    %v2422 = vpack.c.b16 %v1686, %v1670
    %v2423 = vpack.c.b16 %v1687, %v1671
    %v2424 = vpack.c.b16 %v1688, %v1672
    %v2425 = vpack.c.b16 %v1689, %v1673
    %v2426 = vpack.c.b16 %v1690, %v1674
    %v2427 = vpack.c.b16 %v1691, %v1675
    %v2428 = vpack.c.b16 %v1692, %v1676
    %v2429 = vpack.c.b16 %v1693, %v1677
    %v2430 = vpack.c.b16 %v1694, %v1678
    %v2431 = vpack.c.b16 %v1695, %v1679
    %v2432 = vpack.c.b16 %v1712, %v1696
    %v2433 = vpack.c.b16 %v1713, %v1697
    %v2434 = vpack.c.b16 %v1714, %v1698
    %v2435 = vpack.c.b16 %v1715, %v1699
    %v2436 = vpack.c.b16 %v1716, %v1700
    %v2437 = vpack.c.b16 %v1717, %v1701
    %v2438 = vpack.c.b16 %v1718, %v1702
    %v2439 = vpack.c.b16 %v1719, %v1703
    %v2440 = vpack.c.b16 %v1720, %v1704
    %v2441 = vpack.c.b16 %v1721, %v1705
    %v2442 = vpack.c.b16 %v1722, %v1706
    %v2443 = vpack.c.b16 %v1723, %v1707
    %v2444 = vpack.c.b16 %v1724, %v1708
    %v2445 = vpack.c.b16 %v1725, %v1709
    %v2446 = vpack.c.b16 %v1726, %v1710
    %v2447 = vpack.c.b16 %v1727, %v1711
    %v2448 = vpack.c.b16 %v1744, %v1728
    %v2449 = vpack.c.b16 %v1745, %v1729
    %v2450 = vpack.c.b16 %v1746, %v1730
    %v2451 = vpack.c.b16 %v1747, %v1731
    %v2452 = vpack.c.b16 %v1748, %v1732
    %v2453 = vpack.c.b16 %v1749, %v1733
    %v2454 = vpack.c.b16 %v1750, %v1734
    %v2455 = vpack.c.b16 %v1751, %v1735
    %v2456 = vpack.c.b16 %v1752, %v1736
    %v2457 = vpack.c.b16 %v1753, %v1737
    %v2458 = vpack.c.b16 %v1754, %v1738
    %v2459 = vpack.c.b16 %v1755, %v1739
    %v2460 = vpack.c.b16 %v1756, %v1740
    %v2461 = vpack.c.b16 %v1757, %v1741
    %v2462 = vpack.c.b16 %v1758, %v1742
    %v2463 = vpack.c.b16 %v1759, %v1743
    %v2464 = vpack.c.b16 %v1776, %v1760
    %v2465 = vpack.c.b16 %v1777, %v1761
    %v2466 = vpack.c.b16 %v1778, %v1762
    %v2467 = vpack.c.b16 %v1779, %v1763
    %v2468 = vpack.c.b16 %v1780, %v1764
    %v2469 = vpack.c.b16 %v1781, %v1765
    %v2470 = vpack.c.b16 %v1782, %v1766
    %v2471 = vpack.c.b16 %v1783, %v1767
    %v2472 = vpack.c.b16 %v1784, %v1768
    %v2473 = vpack.c.b16 %v1785, %v1769
    %v2474 = vpack.c.b16 %v1786, %v1770
    %v2475 = vpack.c.b16 %v1787, %v1771
    %v2476 = vpack.c.b16 %v1788, %v1772
    %v2477 = vpack.c.b16 %v1789, %v1773
    %v2478 = vpack.c.b16 %v1790, %v1774
    %v2479 = vpack.c.b16 %v1791, %v1775
    %v2480 = vpack.c.b16 %v1808, %v1792
    %v2481 = vpack.c.b16 %v1809, %v1793
    %v2482 = vpack.c.b16 %v1810, %v1794
    %v2483 = vpack.c.b16 %v1811, %v1795
    %v2484 = vpack.c.b16 %v1812, %v1796
    %v2485 = vpack.c.b16 %v1813, %v1797
    %v2486 = vpack.c.b16 %v1814, %v1798
    %v2487 = vpack.c.b16 %v1815, %v1799
    %v2488 = vpack.c.b16 %v1816, %v1800
    %v2489 = vpack.c.b16 %v1817, %v1801
    %v2490 = vpack.c.b16 %v1818, %v1802
    %v2491 = vpack.c.b16 %v1819, %v1803
    %v2492 = vpack.c.b16 %v1820, %v1804
    %v2493 = vpack.c.b16 %v1821, %v1805
    %v2494 = vpack.c.b16 %v1822, %v1806
    %v2495 = vpack.c.b16 %v1823, %v1807
    %v2496 = vpack.c.b16 %v1840, %v1824
    %v2497 = vpack.c.b16 %v1841, %v1825
    %v2498 = vpack.c.b16 %v1842, %v1826
    %v2499 = vpack.c.b16 %v1843, %v1827
    %v2500 = vpack.c.b16 %v1844, %v1828
    %v2501 = vpack.c.b16 %v1845, %v1829
    %v2502 = vpack.c.b16 %v1846, %v1830
    %v2503 = vpack.c.b16 %v1847, %v1831
    %v2504 = vpack.c.b16 %v1848, %v1832
    %v2505 = vpack.c.b16 %v1849, %v1833
    %v2506 = vpack.c.b16 %v1850, %v1834
    %v2507 = vpack.c.b16 %v1851, %v1835
    %v2508 = vpack.c.b16 %v1852, %v1836
    %v2509 = vpack.c.b16 %v1853, %v1837
    %v2510 = vpack.c.b16 %v1854, %v1838
    %v2511 = vpack.c.b16 %v1855, %v1839
    %v2512 = vpack.c.b16 %v1872, %v1856
    %v2513 = vpack.c.b16 %v1873, %v1857
    %v2514 = vpack.c.b16 %v1874, %v1858
    %v2515 = vpack.c.b16 %v1875, %v1859
    %v2516 = vpack.c.b16 %v1876, %v1860
    %v2517 = vpack.c.b16 %v1877, %v1861
    %v2518 = vpack.c.b16 %v1878, %v1862
    %v2519 = vpack.c.b16 %v1879, %v1863
    %v2520 = vpack.c.b16 %v1880, %v1864
    %v2521 = vpack.c.b16 %v1881, %v1865
    %v2522 = vpack.c.b16 %v1882, %v1866
    %v2523 = vpack.c.b16 %v1883, %v1867
    %v2524 = vpack.c.b16 %v1884, %v1868
    %v2525 = vpack.c.b16 %v1885, %v1869
    %v2526 = vpack.c.b16 %v1886, %v1870
    %v2527 = vpack.c.b16 %v1887, %v1871
    %v2528 = vpack.c.b16 %v1904, %v1888
    %v2529 = vpack.c.b16 %v1905, %v1889
    %v2530 = vpack.c.b16 %v1906, %v1890
    %v2531 = vpack.c.b16 %v1907, %v1891
    %v2532 = vpack.c.b16 %v1908, %v1892
    %v2533 = vpack.c.b16 %v1909, %v1893
    %v2534 = vpack.c.b16 %v1910, %v1894
    %v2535 = vpack.c.b16 %v1911, %v1895
    %v2536 = vpack.c.b16 %v1912, %v1896
    %v2537 = vpack.c.b16 %v1913, %v1897
    %v2538 = vpack.c.b16 %v1914, %v1898
    %v2539 = vpack.c.b16 %v1915, %v1899
    %v2540 = vpack.c.b16 %v1916, %v1900
    %v2541 = vpack.c.b16 %v1917, %v1901
    %v2542 = vpack.c.b16 %v1918, %v1902
    %v2543 = vpack.c.b16 %v1919, %v1903
    %v2544 = vpack.c.b16 %v1936, %v1920
    %v2545 = vpack.c.b16 %v1937, %v1921
    %v2546 = vpack.c.b16 %v1938, %v1922
    %v2547 = vpack.c.b16 %v1939, %v1923
    %v2548 = vpack.c.b16 %v1940, %v1924
    %v2549 = vpack.c.b16 %v1941, %v1925
    %v2550 = vpack.c.b16 %v1942, %v1926
    %v2551 = vpack.c.b16 %v1943, %v1927
    %v2552 = vpack.c.b16 %v1944, %v1928
    %v2553 = vpack.c.b16 %v1945, %v1929
    %v2554 = vpack.c.b16 %v1946, %v1930
    %v2555 = vpack.c.b16 %v1947, %v1931
    %v2556 = vpack.c.b16 %v1948, %v1932
    %v2557 = vpack.c.b16 %v1949, %v1933
    %v2558 = vpack.c.b16 %v1950, %v1934
    %v2559 = vpack.c.b16 %v1951, %v1935
    %v2560 = vpack.c.b16 %v1968, %v1952
    %v2561 = vpack.c.b16 %v1969, %v1953
    %v2562 = vpack.c.b16 %v1970, %v1954
    %v2563 = vpack.c.b16 %v1971, %v1955
    %v2564 = vpack.c.b16 %v1972, %v1956
    %v2565 = vpack.c.b16 %v1973, %v1957
    %v2566 = vpack.c.b16 %v1974, %v1958
    %v2567 = vpack.c.b16 %v1975, %v1959
    %v2568 = vpack.c.b16 %v1976, %v1960
    %v2569 = vpack.c.b16 %v1977, %v1961
    %v2570 = vpack.c.b16 %v1978, %v1962
    %v2571 = vpack.c.b16 %v1979, %v1963
    %v2572 = vpack.c.b16 %v1980, %v1964
    %v2573 = vpack.c.b16 %v1981, %v1965
    %v2574 = vpack.c.b16 %v1982, %v1966
    %v2575 = vpack.c.b16 %v1983, %v1967
    %v2576 = vpack.c.b16 %v2000, %v1984
    %v2577 = vpack.c.b16 %v2001, %v1985
    %v2578 = vpack.c.b16 %v2002, %v1986
    %v2579 = vpack.c.b16 %v2003, %v1987
    %v2580 = vpack.c.b16 %v2004, %v1988
    %v2581 = vpack.c.b16 %v2005, %v1989
    %v2582 = vpack.c.b16 %v2006, %v1990
    %v2583 = vpack.c.b16 %v2007, %v1991
    %v2584 = vpack.c.b16 %v2008, %v1992
    %v2585 = vpack.c.b16 %v2009, %v1993
    %v2586 = vpack.c.b16 %v2010, %v1994
    %v2587 = vpack.c.b16 %v2011, %v1995
    %v2588 = vpack.c.b16 %v2012, %v1996
    %v2589 = vpack.c.b16 %v2013, %v1997
    %v2590 = vpack.c.b16 %v2014, %v1998
    %v2591 = vpack.c.b16 %v2015, %v1999
    %v2592 = vpack.c.b16 %v2032, %v2016
    %v2593 = vpack.c.b16 %v2033, %v2017
    %v2594 = vpack.c.b16 %v2034, %v2018
    %v2595 = vpack.c.b16 %v2035, %v2019
    %v2596 = vpack.c.b16 %v2036, %v2020
    %v2597 = vpack.c.b16 %v2037, %v2021
    %v2598 = vpack.c.b16 %v2038, %v2022
    %v2599 = vpack.c.b16 %v2039, %v2023
    %v2600 = vpack.c.b16 %v2040, %v2024
    %v2601 = vpack.c.b16 %v2041, %v2025
    %v2602 = vpack.c.b16 %v2042, %v2026
    %v2603 = vpack.c.b16 %v2043, %v2027
    %v2604 = vpack.c.b16 %v2044, %v2028
    %v2605 = vpack.c.b16 %v2045, %v2029
    %v2606 = vpack.c.b16 %v2046, %v2030
    %v2607 = vpack.c.b16 %v2047, %v2031
    %v2608 = vpack.c.b16 %v2064, %v2048
    %v2609 = vpack.c.b16 %v2065, %v2049
    %v2610 = vpack.c.b16 %v2066, %v2050
    %v2611 = vpack.c.b16 %v2067, %v2051
    %v2612 = vpack.c.b16 %v2068, %v2052
    %v2613 = vpack.c.b16 %v2069, %v2053
    %v2614 = vpack.c.b16 %v2070, %v2054
    %v2615 = vpack.c.b16 %v2071, %v2055
    %v2616 = vpack.c.b16 %v2072, %v2056
    %v2617 = vpack.c.b16 %v2073, %v2057
    %v2618 = vpack.c.b16 %v2074, %v2058
    %v2619 = vpack.c.b16 %v2075, %v2059
    %v2620 = vpack.c.b16 %v2076, %v2060
    %v2621 = vpack.c.b16 %v2077, %v2061
    %v2622 = vpack.c.b16 %v2078, %v2062
    %v2623 = vpack.c.b16 %v2079, %v2063
    %v2624 = vpack.c.b16 %v2096, %v2080
    %v2625 = vpack.c.b16 %v2097, %v2081
    %v2626 = vpack.c.b16 %v2098, %v2082
    %v2627 = vpack.c.b16 %v2099, %v2083
    %v2628 = vpack.c.b16 %v2100, %v2084
    %v2629 = vpack.c.b16 %v2101, %v2085
    %v2630 = vpack.c.b16 %v2102, %v2086
    %v2631 = vpack.c.b16 %v2103, %v2087
    %v2632 = vpack.c.b16 %v2104, %v2088
    %v2633 = vpack.c.b16 %v2105, %v2089
    %v2634 = vpack.c.b16 %v2106, %v2090
    %v2635 = vpack.c.b16 %v2107, %v2091
    %v2636 = vpack.c.b16 %v2108, %v2092
    %v2637 = vpack.c.b16 %v2109, %v2093
    %v2638 = vpack.c.b16 %v2110, %v2094
    %v2639 = vpack.c.b16 %v2111, %v2095
    %v2640 = vpack.c.b16 %v2128, %v2112
    %v2641 = vpack.c.b16 %v2129, %v2113
    %v2642 = vpack.c.b16 %v2130, %v2114
    %v2643 = vpack.c.b16 %v2131, %v2115
    %v2644 = vpack.c.b16 %v2132, %v2116
    %v2645 = vpack.c.b16 %v2133, %v2117
    %v2646 = vpack.c.b16 %v2134, %v2118
    %v2647 = vpack.c.b16 %v2135, %v2119
    %v2648 = vpack.c.b16 %v2136, %v2120
    %v2649 = vpack.c.b16 %v2137, %v2121
    %v2650 = vpack.c.b16 %v2138, %v2122
    %v2651 = vpack.c.b16 %v2139, %v2123
    %v2652 = vpack.c.b16 %v2140, %v2124
    %v2653 = vpack.c.b16 %v2141, %v2125
    %v2654 = vpack.c.b16 %v2142, %v2126
    %v2655 = vpack.c.b16 %v2143, %v2127
    %3168 = vmatprep.subr.bf16.mxu0 %v2145
    %3169 = vmatpush1.bf16.msra.mxu0 %v2144
    %3170 = vmatprep.subr.bf16.mxu0 %v2161
    %3171 = vmatpush1.bf16.msra.mxu0 %v2160
    %3172 = vmatprep.subr.bf16.mxu0 %v2177
    %3173 = vmatpush1.bf16.msra.mxu0 %v2176
    %3174 = vmatprep.subr.bf16.mxu0 %v2193
    %3175 = vmatpush1.bf16.msra.mxu0 %v2192
    %3176 = vmatprep.subr.bf16.mxu0 %v2209
    %3177 = vmatpush1.bf16.msra.mxu0 %v2208
    %3178 = vmatprep.subr.bf16.mxu0 %v2225
    %3179 = vmatpush1.bf16.msra.mxu0 %v2224
    %3180 = vmatprep.subr.bf16.mxu0 %v2241
    %3181 = vmatpush1.bf16.msra.mxu0 %v2240
    %3182 = vmatprep.subr.bf16.mxu0 %v2257
    %3183 = vmatpush1.bf16.msra.mxu0 %v2256
    %3184 = vmatprep.subr.bf16.mxu0 %v2273
    %3185 = vmatpush1.bf16.msra.mxu0 %v2272
    %3186 = vmatprep.subr.bf16.mxu0 %v2289
    %3187 = vmatpush1.bf16.msra.mxu0 %v2288
    %3188 = vmatprep.subr.bf16.mxu0 %v2305
    %3189 = vmatpush1.bf16.msra.mxu0 %v2304
    %3190 = vmatprep.subr.bf16.mxu0 %v2321
    %3191 = vmatpush1.bf16.msra.mxu0 %v2320
    %3192 = vmatprep.subr.bf16.mxu0 %v2337
    %3193 = vmatpush1.bf16.msra.mxu0 %v2336
    %3194 = vmatprep.subr.bf16.mxu0 %v2353
    %3195 = vmatpush1.bf16.msra.mxu0 %v2352
    %3196 = vmatprep.subr.bf16.mxu0 %v2369
    %3197 = vmatpush1.bf16.msra.mxu0 %v2368
    %3198 = vmatprep.subr.bf16.mxu0 %v2385
    %3199 = vmatpush1.bf16.msra.mxu0 %v2384
    %3200 = vmatprep.mubr.bf16.mxu0 %v601
    %3201 = vmatmul.mubr.bf16.gmra.mrb[0].mxu0 %v600
    %v3202 = vpop.f32.mrb[0].mxu0
    %v3203 = vadd.f32 0.0, %v3202
    %v3204 = vpop.f32.mrb[0].mxu0
    %v3205 = vadd.f32 0.0, %v3204
    %v3206 = vpop.f32.mrb[0].mxu0
    %v3207 = vpop.f32.mrb[0].mxu0
    %3208 = vdwg.mxu0
    %3209 = vmatprep.subr.bf16.mxu0 %v2401
    %3210 = vmatpush1.bf16.msra.mxu0 %v2400
    %3211 = vmatprep.subr.bf16.mxu0 %v2417
    %3212 = vmatpush1.bf16.msra.mxu0 %v2416
    %3213 = vmatprep.subr.bf16.mxu0 %v2433
    %3214 = vmatpush1.bf16.msra.mxu0 %v2432
    %3215 = vmatprep.subr.bf16.mxu0 %v2449
    %3216 = vmatpush1.bf16.msra.mxu0 %v2448
    %3217 = vmatprep.subr.bf16.mxu0 %v2465
    %3218 = vmatpush1.bf16.msra.mxu0 %v2464
    %3219 = vmatprep.subr.bf16.mxu0 %v2481
    %3220 = vmatpush1.bf16.msra.mxu0 %v2480
    %3221 = vmatprep.subr.bf16.mxu0 %v2497
    %3222 = vmatpush1.bf16.msra.mxu0 %v2496
    %3223 = vmatprep.subr.bf16.mxu0 %v2513
    %3224 = vmatpush1.bf16.msra.mxu0 %v2512
    %3225 = vmatprep.subr.bf16.mxu0 %v2529
    %3226 = vmatpush1.bf16.msra.mxu0 %v2528
    %3227 = vmatprep.subr.bf16.mxu0 %v2545
    %3228 = vmatpush1.bf16.msra.mxu0 %v2544
    %3229 = vmatprep.subr.bf16.mxu0 %v2561
    %3230 = vmatpush1.bf16.msra.mxu0 %v2560
    %3231 = vmatprep.subr.bf16.mxu0 %v2577
    %3232 = vmatpush1.bf16.msra.mxu0 %v2576
    %3233 = vmatprep.subr.bf16.mxu0 %v2593
    %3234 = vmatpush1.bf16.msra.mxu0 %v2592
    %3235 = vmatprep.subr.bf16.mxu0 %v2609
    %3236 = vmatpush1.bf16.msra.mxu0 %v2608
    %3237 = vmatprep.subr.bf16.mxu0 %v2625
    %3238 = vmatpush1.bf16.msra.mxu0 %v2624
    %3239 = vmatprep.subr.bf16.mxu0 %v2641
    %3240 = vmatpush1.bf16.msra.mxu0 %v2640
    %3241 = vmatprep.mubr.bf16.mxu0 %v603
    %3242 = vmatmul.mubr.bf16.gmra.mrb[0].mxu0 %v602
    %v3243 = vpop.f32.mrb[0].mxu0
    %v3244 = vadd.f32 %v3203, %v3243
    %v3245 = vpop.f32.mrb[0].mxu0
    %v3246 = vadd.f32 %v3205, %v3245
    %v3247 = vpop.f32.mrb[0].mxu0
    %v3248 = vpop.f32.mrb[0].mxu0
    %3249 = vdwg.mxu0
    %3250 = vmatprep.subr.bf16.mxu0 %v2147
    %3251 = vmatpush1.bf16.msra.mxu0 %v2146
    %3252 = vmatprep.subr.bf16.mxu0 %v2163
    %3253 = vmatpush1.bf16.msra.mxu0 %v2162
    %3254 = vmatprep.subr.bf16.mxu0 %v2179
    %3255 = vmatpush1.bf16.msra.mxu0 %v2178
    %3256 = vmatprep.subr.bf16.mxu0 %v2195
    %3257 = vmatpush1.bf16.msra.mxu0 %v2194
    %3258 = vmatprep.subr.bf16.mxu0 %v2211
    %3259 = vmatpush1.bf16.msra.mxu0 %v2210
    %3260 = vmatprep.subr.bf16.mxu0 %v2227
    %3261 = vmatpush1.bf16.msra.mxu0 %v2226
    %3262 = vmatprep.subr.bf16.mxu0 %v2243
    %3263 = vmatpush1.bf16.msra.mxu0 %v2242
    %3264 = vmatprep.subr.bf16.mxu0 %v2259
    %3265 = vmatpush1.bf16.msra.mxu0 %v2258
    %3266 = vmatprep.subr.bf16.mxu0 %v2275
    %3267 = vmatpush1.bf16.msra.mxu0 %v2274
    %3268 = vmatprep.subr.bf16.mxu0 %v2291
    %3269 = vmatpush1.bf16.msra.mxu0 %v2290
    %3270 = vmatprep.subr.bf16.mxu0 %v2307
    %3271 = vmatpush1.bf16.msra.mxu0 %v2306
    %3272 = vmatprep.subr.bf16.mxu0 %v2323
    %3273 = vmatpush1.bf16.msra.mxu0 %v2322
    %3274 = vmatprep.subr.bf16.mxu0 %v2339
    %3275 = vmatpush1.bf16.msra.mxu0 %v2338
    %3276 = vmatprep.subr.bf16.mxu0 %v2355
    %3277 = vmatpush1.bf16.msra.mxu0 %v2354
    %3278 = vmatprep.subr.bf16.mxu0 %v2371
    %3279 = vmatpush1.bf16.msra.mxu0 %v2370
    %3280 = vmatprep.subr.bf16.mxu0 %v2387
    %3281 = vmatpush1.bf16.msra.mxu0 %v2386
    %3282 = vmatprep.mubr.bf16.mxu0 %v601
    %3283 = vmatmul.mubr.bf16.gmra.mrb[0].mxu0 %v600
    %v3284 = vpop.f32.mrb[0].mxu0
    %v3285 = vadd.f32 0.0, %v3284
    %v3286 = vpop.f32.mrb[0].mxu0
    %v3287 = vadd.f32 0.0, %v3286
    %v3288 = vpop.f32.mrb[0].mxu0
    %v3289 = vpop.f32.mrb[0].mxu0
    %3290 = vdwg.mxu0
    %3291 = vmatprep.subr.bf16.mxu0 %v2403
    %3292 = vmatpush1.bf16.msra.mxu0 %v2402
    %3293 = vmatprep.subr.bf16.mxu0 %v2419
    %3294 = vmatpush1.bf16.msra.mxu0 %v2418
    %3295 = vmatprep.subr.bf16.mxu0 %v2435
    %3296 = vmatpush1.bf16.msra.mxu0 %v2434
    %3297 = vmatprep.subr.bf16.mxu0 %v2451
    %3298 = vmatpush1.bf16.msra.mxu0 %v2450
    %3299 = vmatprep.subr.bf16.mxu0 %v2467
    %3300 = vmatpush1.bf16.msra.mxu0 %v2466
    %3301 = vmatprep.subr.bf16.mxu0 %v2483
    %3302 = vmatpush1.bf16.msra.mxu0 %v2482
    %3303 = vmatprep.subr.bf16.mxu0 %v2499
    %3304 = vmatpush1.bf16.msra.mxu0 %v2498
    %3305 = vmatprep.subr.bf16.mxu0 %v2515
    %3306 = vmatpush1.bf16.msra.mxu0 %v2514
    %3307 = vmatprep.subr.bf16.mxu0 %v2531
    %3308 = vmatpush1.bf16.msra.mxu0 %v2530
    %3309 = vmatprep.subr.bf16.mxu0 %v2547
    %3310 = vmatpush1.bf16.msra.mxu0 %v2546
    %3311 = vmatprep.subr.bf16.mxu0 %v2563
    %3312 = vmatpush1.bf16.msra.mxu0 %v2562
    %3313 = vmatprep.subr.bf16.mxu0 %v2579
    %3314 = vmatpush1.bf16.msra.mxu0 %v2578
    %3315 = vmatprep.subr.bf16.mxu0 %v2595
    %3316 = vmatpush1.bf16.msra.mxu0 %v2594
    %3317 = vmatprep.subr.bf16.mxu0 %v2611
    %3318 = vmatpush1.bf16.msra.mxu0 %v2610
    %3319 = vmatprep.subr.bf16.mxu0 %v2627
    %3320 = vmatpush1.bf16.msra.mxu0 %v2626
    %3321 = vmatprep.subr.bf16.mxu0 %v2643
    %3322 = vmatpush1.bf16.msra.mxu0 %v2642
    %3323 = vmatprep.mubr.bf16.mxu0 %v603
    %3324 = vmatmul.mubr.bf16.gmra.mrb[0].mxu0 %v602
    %v3325 = vpop.f32.mrb[0].mxu0
    %v3326 = vadd.f32 %v3285, %v3325
    %v3327 = vpop.f32.mrb[0].mxu0
    %v3328 = vadd.f32 %v3287, %v3327
    %v3329 = vpop.f32.mrb[0].mxu0
    %v3330 = vpop.f32.mrb[0].mxu0
    %3331 = vdwg.mxu0
    %3332 = vmatprep.subr.bf16.mxu0 %v2149
    %3333 = vmatpush1.bf16.msra.mxu0 %v2148
    %3334 = vmatprep.subr.bf16.mxu0 %v2165
    %3335 = vmatpush1.bf16.msra.mxu0 %v2164
    %3336 = vmatprep.subr.bf16.mxu0 %v2181
    %3337 = vmatpush1.bf16.msra.mxu0 %v2180
    %3338 = vmatprep.subr.bf16.mxu0 %v2197
    %3339 = vmatpush1.bf16.msra.mxu0 %v2196
    %3340 = vmatprep.subr.bf16.mxu0 %v2213
    %3341 = vmatpush1.bf16.msra.mxu0 %v2212
    %3342 = vmatprep.subr.bf16.mxu0 %v2229
    %3343 = vmatpush1.bf16.msra.mxu0 %v2228
    %3344 = vmatprep.subr.bf16.mxu0 %v2245
    %3345 = vmatpush1.bf16.msra.mxu0 %v2244
    %3346 = vmatprep.subr.bf16.mxu0 %v2261
    %3347 = vmatpush1.bf16.msra.mxu0 %v2260
    %3348 = vmatprep.subr.bf16.mxu0 %v2277
    %3349 = vmatpush1.bf16.msra.mxu0 %v2276
    %3350 = vmatprep.subr.bf16.mxu0 %v2293
    %3351 = vmatpush1.bf16.msra.mxu0 %v2292
    %3352 = vmatprep.subr.bf16.mxu0 %v2309
    %3353 = vmatpush1.bf16.msra.mxu0 %v2308
    %3354 = vmatprep.subr.bf16.mxu0 %v2325
    %3355 = vmatpush1.bf16.msra.mxu0 %v2324
    %3356 = vmatprep.subr.bf16.mxu0 %v2341
    %3357 = vmatpush1.bf16.msra.mxu0 %v2340
    %3358 = vmatprep.subr.bf16.mxu0 %v2357
    %3359 = vmatpush1.bf16.msra.mxu0 %v2356
    %3360 = vmatprep.subr.bf16.mxu0 %v2373
    %3361 = vmatpush1.bf16.msra.mxu0 %v2372
    %3362 = vmatprep.subr.bf16.mxu0 %v2389
    %3363 = vmatpush1.bf16.msra.mxu0 %v2388
    %3364 = vmatprep.mubr.bf16.mxu0 %v601
    %3365 = vmatmul.mubr.bf16.gmra.mrb[0].mxu0 %v600
    %v3366 = vpop.f32.mrb[0].mxu0
    %v3367 = vadd.f32 0.0, %v3366
    %v3368 = vpop.f32.mrb[0].mxu0
    %v3369 = vadd.f32 0.0, %v3368
    %v3370 = vpop.f32.mrb[0].mxu0
    %v3371 = vpop.f32.mrb[0].mxu0
    %3372 = vdwg.mxu0
    %3373 = vmatprep.subr.bf16.mxu0 %v2405
    %3374 = vmatpush1.bf16.msra.mxu0 %v2404
    %3375 = vmatprep.subr.bf16.mxu0 %v2421
    %3376 = vmatpush1.bf16.msra.mxu0 %v2420
    %3377 = vmatprep.subr.bf16.mxu0 %v2437
    %3378 = vmatpush1.bf16.msra.mxu0 %v2436
    %3379 = vmatprep.subr.bf16.mxu0 %v2453
    %3380 = vmatpush1.bf16.msra.mxu0 %v2452
    %3381 = vmatprep.subr.bf16.mxu0 %v2469
    %3382 = vmatpush1.bf16.msra.mxu0 %v2468
    %3383 = vmatprep.subr.bf16.mxu0 %v2485
    %3384 = vmatpush1.bf16.msra.mxu0 %v2484
    %3385 = vmatprep.subr.bf16.mxu0 %v2501
    %3386 = vmatpush1.bf16.msra.mxu0 %v2500
    %3387 = vmatprep.subr.bf16.mxu0 %v2517
    %3388 = vmatpush1.bf16.msra.mxu0 %v2516
    %3389 = vmatprep.subr.bf16.mxu0 %v2533
    %3390 = vmatpush1.bf16.msra.mxu0 %v2532
    %3391 = vmatprep.subr.bf16.mxu0 %v2549
    %3392 = vmatpush1.bf16.msra.mxu0 %v2548
    %3393 = vmatprep.subr.bf16.mxu0 %v2565
    %3394 = vmatpush1.bf16.msra.mxu0 %v2564
    %3395 = vmatprep.subr.bf16.mxu0 %v2581
    %3396 = vmatpush1.bf16.msra.mxu0 %v2580
    %3397 = vmatprep.subr.bf16.mxu0 %v2597
    %3398 = vmatpush1.bf16.msra.mxu0 %v2596
    %3399 = vmatprep.subr.bf16.mxu0 %v2613
    %3400 = vmatpush1.bf16.msra.mxu0 %v2612
    %3401 = vmatprep.subr.bf16.mxu0 %v2629
    %3402 = vmatpush1.bf16.msra.mxu0 %v2628
    %3403 = vmatprep.subr.bf16.mxu0 %v2645
    %3404 = vmatpush1.bf16.msra.mxu0 %v2644
    %3405 = vmatprep.mubr.bf16.mxu0 %v603
    %3406 = vmatmul.mubr.bf16.gmra.mrb[0].mxu0 %v602
    %v3407 = vpop.f32.mrb[0].mxu0
    %v3408 = vadd.f32 %v3367, %v3407
    %v3409 = vpop.f32.mrb[0].mxu0
    %v3410 = vadd.f32 %v3369, %v3409
    %v3411 = vpop.f32.mrb[0].mxu0
    %v3412 = vpop.f32.mrb[0].mxu0
    %3413 = vdwg.mxu0
    %3414 = vmatprep.subr.bf16.mxu0 %v2151
    %3415 = vmatpush1.bf16.msra.mxu0 %v2150
    %3416 = vmatprep.subr.bf16.mxu0 %v2167
    %3417 = vmatpush1.bf16.msra.mxu0 %v2166
    %3418 = vmatprep.subr.bf16.mxu0 %v2183
    %3419 = vmatpush1.bf16.msra.mxu0 %v2182
    %3420 = vmatprep.subr.bf16.mxu0 %v2199
    %3421 = vmatpush1.bf16.msra.mxu0 %v2198
    %3422 = vmatprep.subr.bf16.mxu0 %v2215
    %3423 = vmatpush1.bf16.msra.mxu0 %v2214
    %3424 = vmatprep.subr.bf16.mxu0 %v2231
    %3425 = vmatpush1.bf16.msra.mxu0 %v2230
    %3426 = vmatprep.subr.bf16.mxu0 %v2247
    %3427 = vmatpush1.bf16.msra.mxu0 %v2246
    %3428 = vmatprep.subr.bf16.mxu0 %v2263
    %3429 = vmatpush1.bf16.msra.mxu0 %v2262
    %3430 = vmatprep.subr.bf16.mxu0 %v2279
    %3431 = vmatpush1.bf16.msra.mxu0 %v2278
    %3432 = vmatprep.subr.bf16.mxu0 %v2295
    %3433 = vmatpush1.bf16.msra.mxu0 %v2294
    %3434 = vmatprep.subr.bf16.mxu0 %v2311
    %3435 = vmatpush1.bf16.msra.mxu0 %v2310
    %3436 = vmatprep.subr.bf16.mxu0 %v2327
    %3437 = vmatpush1.bf16.msra.mxu0 %v2326
    %3438 = vmatprep.subr.bf16.mxu0 %v2343
    %3439 = vmatpush1.bf16.msra.mxu0 %v2342
    %3440 = vmatprep.subr.bf16.mxu0 %v2359
    %3441 = vmatpush1.bf16.msra.mxu0 %v2358
    %3442 = vmatprep.subr.bf16.mxu0 %v2375
    %3443 = vmatpush1.bf16.msra.mxu0 %v2374
    %3444 = vmatprep.subr.bf16.mxu0 %v2391
    %3445 = vmatpush1.bf16.msra.mxu0 %v2390
    %3446 = vmatprep.mubr.bf16.mxu0 %v601
    %3447 = vmatmul.mubr.bf16.gmra.mrb[0].mxu0 %v600
    %v3448 = vpop.f32.mrb[0].mxu0
    %v3449 = vadd.f32 0.0, %v3448
    %v3450 = vpop.f32.mrb[0].mxu0
    %v3451 = vadd.f32 0.0, %v3450
    %v3452 = vpop.f32.mrb[0].mxu0
    %v3453 = vpop.f32.mrb[0].mxu0
    %3454 = vdwg.mxu0
    %3455 = vmatprep.subr.bf16.mxu0 %v2407
    %3456 = vmatpush1.bf16.msra.mxu0 %v2406
    %3457 = vmatprep.subr.bf16.mxu0 %v2423
    %3458 = vmatpush1.bf16.msra.mxu0 %v2422
    %3459 = vmatprep.subr.bf16.mxu0 %v2439
    %3460 = vmatpush1.bf16.msra.mxu0 %v2438
    %3461 = vmatprep.subr.bf16.mxu0 %v2455
    %3462 = vmatpush1.bf16.msra.mxu0 %v2454
    %3463 = vmatprep.subr.bf16.mxu0 %v2471
    %3464 = vmatpush1.bf16.msra.mxu0 %v2470
    %3465 = vmatprep.subr.bf16.mxu0 %v2487
    %3466 = vmatpush1.bf16.msra.mxu0 %v2486
    %3467 = vmatprep.subr.bf16.mxu0 %v2503
    %3468 = vmatpush1.bf16.msra.mxu0 %v2502
    %3469 = vmatprep.subr.bf16.mxu0 %v2519
    %3470 = vmatpush1.bf16.msra.mxu0 %v2518
    %3471 = vmatprep.subr.bf16.mxu0 %v2535
    %3472 = vmatpush1.bf16.msra.mxu0 %v2534
    %3473 = vmatprep.subr.bf16.mxu0 %v2551
    %3474 = vmatpush1.bf16.msra.mxu0 %v2550
    %3475 = vmatprep.subr.bf16.mxu0 %v2567
    %3476 = vmatpush1.bf16.msra.mxu0 %v2566
    %3477 = vmatprep.subr.bf16.mxu0 %v2583
    %3478 = vmatpush1.bf16.msra.mxu0 %v2582
    %3479 = vmatprep.subr.bf16.mxu0 %v2599
    %3480 = vmatpush1.bf16.msra.mxu0 %v2598
    %3481 = vmatprep.subr.bf16.mxu0 %v2615
    %3482 = vmatpush1.bf16.msra.mxu0 %v2614
    %3483 = vmatprep.subr.bf16.mxu0 %v2631
    %3484 = vmatpush1.bf16.msra.mxu0 %v2630
    %3485 = vmatprep.subr.bf16.mxu0 %v2647
    %3486 = vmatpush1.bf16.msra.mxu0 %v2646
    %3487 = vmatprep.mubr.bf16.mxu0 %v603
    %3488 = vmatmul.mubr.bf16.gmra.mrb[0].mxu0 %v602
    %v3489 = vpop.f32.mrb[0].mxu0
    %v3490 = vadd.f32 %v3449, %v3489
    %v3491 = vpop.f32.mrb[0].mxu0
    %v3492 = vadd.f32 %v3451, %v3491
    %v3493 = vpop.f32.mrb[0].mxu0
    %v3494 = vpop.f32.mrb[0].mxu0
    %3495 = vdwg.mxu0
    %3496 = vmatprep.subr.bf16.mxu0 %v2153
    %3497 = vmatpush1.bf16.msra.mxu0 %v2152
    %3498 = vmatprep.subr.bf16.mxu0 %v2169
    %3499 = vmatpush1.bf16.msra.mxu0 %v2168
    %3500 = vmatprep.subr.bf16.mxu0 %v2185
    %3501 = vmatpush1.bf16.msra.mxu0 %v2184
    %3502 = vmatprep.subr.bf16.mxu0 %v2201
    %3503 = vmatpush1.bf16.msra.mxu0 %v2200
    %3504 = vmatprep.subr.bf16.mxu0 %v2217
    %3505 = vmatpush1.bf16.msra.mxu0 %v2216
    %3506 = vmatprep.subr.bf16.mxu0 %v2233
    %3507 = vmatpush1.bf16.msra.mxu0 %v2232
    %3508 = vmatprep.subr.bf16.mxu0 %v2249
    %3509 = vmatpush1.bf16.msra.mxu0 %v2248
    %3510 = vmatprep.subr.bf16.mxu0 %v2265
    %3511 = vmatpush1.bf16.msra.mxu0 %v2264
    %3512 = vmatprep.subr.bf16.mxu0 %v2281
    %3513 = vmatpush1.bf16.msra.mxu0 %v2280
    %3514 = vmatprep.subr.bf16.mxu0 %v2297
    %3515 = vmatpush1.bf16.msra.mxu0 %v2296
    %3516 = vmatprep.subr.bf16.mxu0 %v2313
    %3517 = vmatpush1.bf16.msra.mxu0 %v2312
    %3518 = vmatprep.subr.bf16.mxu0 %v2329
    %3519 = vmatpush1.bf16.msra.mxu0 %v2328
    %3520 = vmatprep.subr.bf16.mxu0 %v2345
    %3521 = vmatpush1.bf16.msra.mxu0 %v2344
    %3522 = vmatprep.subr.bf16.mxu0 %v2361
    %3523 = vmatpush1.bf16.msra.mxu0 %v2360
    %3524 = vmatprep.subr.bf16.mxu0 %v2377
    %3525 = vmatpush1.bf16.msra.mxu0 %v2376
    %3526 = vmatprep.subr.bf16.mxu0 %v2393
    %3527 = vmatpush1.bf16.msra.mxu0 %v2392
    %3528 = vmatprep.mubr.bf16.mxu0 %v601
    %3529 = vmatmul.mubr.bf16.gmra.mrb[0].mxu0 %v600
    %v3530 = vpop.f32.mrb[0].mxu0
    %v3531 = vadd.f32 0.0, %v3530
    %v3532 = vpop.f32.mrb[0].mxu0
    %v3533 = vadd.f32 0.0, %v3532
    %v3534 = vpop.f32.mrb[0].mxu0
    %v3535 = vpop.f32.mrb[0].mxu0
    %3536 = vdwg.mxu0
    %3537 = vmatprep.subr.bf16.mxu0 %v2409
    %3538 = vmatpush1.bf16.msra.mxu0 %v2408
    %3539 = vmatprep.subr.bf16.mxu0 %v2425
    %3540 = vmatpush1.bf16.msra.mxu0 %v2424
    %3541 = vmatprep.subr.bf16.mxu0 %v2441
    %3542 = vmatpush1.bf16.msra.mxu0 %v2440
    %3543 = vmatprep.subr.bf16.mxu0 %v2457
    %3544 = vmatpush1.bf16.msra.mxu0 %v2456
    %3545 = vmatprep.subr.bf16.mxu0 %v2473
    %3546 = vmatpush1.bf16.msra.mxu0 %v2472
    %3547 = vmatprep.subr.bf16.mxu0 %v2489
    %3548 = vmatpush1.bf16.msra.mxu0 %v2488
    %3549 = vmatprep.subr.bf16.mxu0 %v2505
    %3550 = vmatpush1.bf16.msra.mxu0 %v2504
    %3551 = vmatprep.subr.bf16.mxu0 %v2521
    %3552 = vmatpush1.bf16.msra.mxu0 %v2520
    %3553 = vmatprep.subr.bf16.mxu0 %v2537
    %3554 = vmatpush1.bf16.msra.mxu0 %v2536
    %3555 = vmatprep.subr.bf16.mxu0 %v2553
    %3556 = vmatpush1.bf16.msra.mxu0 %v2552
    %3557 = vmatprep.subr.bf16.mxu0 %v2569
    %3558 = vmatpush1.bf16.msra.mxu0 %v2568
    %3559 = vmatprep.subr.bf16.mxu0 %v2585
    %3560 = vmatpush1.bf16.msra.mxu0 %v2584
    %3561 = vmatprep.subr.bf16.mxu0 %v2601
    %3562 = vmatpush1.bf16.msra.mxu0 %v2600
    %3563 = vmatprep.subr.bf16.mxu0 %v2617
    %3564 = vmatpush1.bf16.msra.mxu0 %v2616
    %3565 = vmatprep.subr.bf16.mxu0 %v2633
    %3566 = vmatpush1.bf16.msra.mxu0 %v2632
    %3567 = vmatprep.subr.bf16.mxu0 %v2649
    %3568 = vmatpush1.bf16.msra.mxu0 %v2648
    %3569 = vmatprep.mubr.bf16.mxu0 %v603
    %3570 = vmatmul.mubr.bf16.gmra.mrb[0].mxu0 %v602
    %v3571 = vpop.f32.mrb[0].mxu0
    %v3572 = vadd.f32 %v3531, %v3571
    %v3573 = vpop.f32.mrb[0].mxu0
    %v3574 = vadd.f32 %v3533, %v3573
    %v3575 = vpop.f32.mrb[0].mxu0
    %v3576 = vpop.f32.mrb[0].mxu0
    %3577 = vdwg.mxu0
    %3578 = vmatprep.subr.bf16.mxu0 %v2155
    %3579 = vmatpush1.bf16.msra.mxu0 %v2154
    %3580 = vmatprep.subr.bf16.mxu0 %v2171
    %3581 = vmatpush1.bf16.msra.mxu0 %v2170
    %3582 = vmatprep.subr.bf16.mxu0 %v2187
    %3583 = vmatpush1.bf16.msra.mxu0 %v2186
    %3584 = vmatprep.subr.bf16.mxu0 %v2203
    %3585 = vmatpush1.bf16.msra.mxu0 %v2202
    %3586 = vmatprep.subr.bf16.mxu0 %v2219
    %3587 = vmatpush1.bf16.msra.mxu0 %v2218
    %3588 = vmatprep.subr.bf16.mxu0 %v2235
    %3589 = vmatpush1.bf16.msra.mxu0 %v2234
    %3590 = vmatprep.subr.bf16.mxu0 %v2251
    %3591 = vmatpush1.bf16.msra.mxu0 %v2250
    %3592 = vmatprep.subr.bf16.mxu0 %v2267
    %3593 = vmatpush1.bf16.msra.mxu0 %v2266
    %3594 = vmatprep.subr.bf16.mxu0 %v2283
    %3595 = vmatpush1.bf16.msra.mxu0 %v2282
    %3596 = vmatprep.subr.bf16.mxu0 %v2299
    %3597 = vmatpush1.bf16.msra.mxu0 %v2298
    %3598 = vmatprep.subr.bf16.mxu0 %v2315
    %3599 = vmatpush1.bf16.msra.mxu0 %v2314
    %3600 = vmatprep.subr.bf16.mxu0 %v2331
    %3601 = vmatpush1.bf16.msra.mxu0 %v2330
    %3602 = vmatprep.subr.bf16.mxu0 %v2347
    %3603 = vmatpush1.bf16.msra.mxu0 %v2346
    %3604 = vmatprep.subr.bf16.mxu0 %v2363
    %3605 = vmatpush1.bf16.msra.mxu0 %v2362
    %3606 = vmatprep.subr.bf16.mxu0 %v2379
    %3607 = vmatpush1.bf16.msra.mxu0 %v2378
    %3608 = vmatprep.subr.bf16.mxu0 %v2395
    %3609 = vmatpush1.bf16.msra.mxu0 %v2394
    %3610 = vmatprep.mubr.bf16.mxu0 %v601
    %3611 = vmatmul.mubr.bf16.gmra.mrb[0].mxu0 %v600
    %v3612 = vpop.f32.mrb[0].mxu0
    %v3613 = vadd.f32 0.0, %v3612
    %v3614 = vpop.f32.mrb[0].mxu0
    %v3615 = vadd.f32 0.0, %v3614
    %v3616 = vpop.f32.mrb[0].mxu0
    %v3617 = vpop.f32.mrb[0].mxu0
    %3618 = vdwg.mxu0
    %3619 = vmatprep.subr.bf16.mxu0 %v2411
    %3620 = vmatpush1.bf16.msra.mxu0 %v2410
    %3621 = vmatprep.subr.bf16.mxu0 %v2427
    %3622 = vmatpush1.bf16.msra.mxu0 %v2426
    %3623 = vmatprep.subr.bf16.mxu0 %v2443
    %3624 = vmatpush1.bf16.msra.mxu0 %v2442
    %3625 = vmatprep.subr.bf16.mxu0 %v2459
    %3626 = vmatpush1.bf16.msra.mxu0 %v2458
    %3627 = vmatprep.subr.bf16.mxu0 %v2475
    %3628 = vmatpush1.bf16.msra.mxu0 %v2474
    %3629 = vmatprep.subr.bf16.mxu0 %v2491
    %3630 = vmatpush1.bf16.msra.mxu0 %v2490
    %3631 = vmatprep.subr.bf16.mxu0 %v2507
    %3632 = vmatpush1.bf16.msra.mxu0 %v2506
    %3633 = vmatprep.subr.bf16.mxu0 %v2523
    %3634 = vmatpush1.bf16.msra.mxu0 %v2522
    %3635 = vmatprep.subr.bf16.mxu0 %v2539
    %3636 = vmatpush1.bf16.msra.mxu0 %v2538
    %3637 = vmatprep.subr.bf16.mxu0 %v2555
    %3638 = vmatpush1.bf16.msra.mxu0 %v2554
    %3639 = vmatprep.subr.bf16.mxu0 %v2571
    %3640 = vmatpush1.bf16.msra.mxu0 %v2570
    %3641 = vmatprep.subr.bf16.mxu0 %v2587
    %3642 = vmatpush1.bf16.msra.mxu0 %v2586
    %3643 = vmatprep.subr.bf16.mxu0 %v2603
    %3644 = vmatpush1.bf16.msra.mxu0 %v2602
    %3645 = vmatprep.subr.bf16.mxu0 %v2619
    %3646 = vmatpush1.bf16.msra.mxu0 %v2618
    %3647 = vmatprep.subr.bf16.mxu0 %v2635
    %3648 = vmatpush1.bf16.msra.mxu0 %v2634
    %3649 = vmatprep.subr.bf16.mxu0 %v2651
    %3650 = vmatpush1.bf16.msra.mxu0 %v2650
    %3651 = vmatprep.mubr.bf16.mxu0 %v603
    %3652 = vmatmul.mubr.bf16.gmra.mrb[0].mxu0 %v602
    %v3653 = vpop.f32.mrb[0].mxu0
    %v3654 = vadd.f32 %v3613, %v3653
    %v3655 = vpop.f32.mrb[0].mxu0
    %v3656 = vadd.f32 %v3615, %v3655
    %v3657 = vpop.f32.mrb[0].mxu0
    %v3658 = vpop.f32.mrb[0].mxu0
    %3659 = vdwg.mxu0
    %3660 = vmatprep.subr.bf16.mxu0 %v2157
    %3661 = vmatpush1.bf16.msra.mxu0 %v2156
    %3662 = vmatprep.subr.bf16.mxu0 %v2173
    %3663 = vmatpush1.bf16.msra.mxu0 %v2172
    %3664 = vmatprep.subr.bf16.mxu0 %v2189
    %3665 = vmatpush1.bf16.msra.mxu0 %v2188
    %3666 = vmatprep.subr.bf16.mxu0 %v2205
    %3667 = vmatpush1.bf16.msra.mxu0 %v2204
    %3668 = vmatprep.subr.bf16.mxu0 %v2221
    %3669 = vmatpush1.bf16.msra.mxu0 %v2220
    %3670 = vmatprep.subr.bf16.mxu0 %v2237
    %3671 = vmatpush1.bf16.msra.mxu0 %v2236
    %3672 = vmatprep.subr.bf16.mxu0 %v2253
    %3673 = vmatpush1.bf16.msra.mxu0 %v2252
    %3674 = vmatprep.subr.bf16.mxu0 %v2269
    %3675 = vmatpush1.bf16.msra.mxu0 %v2268
    %3676 = vmatprep.subr.bf16.mxu0 %v2285
    %3677 = vmatpush1.bf16.msra.mxu0 %v2284
    %3678 = vmatprep.subr.bf16.mxu0 %v2301
    %3679 = vmatpush1.bf16.msra.mxu0 %v2300
    %3680 = vmatprep.subr.bf16.mxu0 %v2317
    %3681 = vmatpush1.bf16.msra.mxu0 %v2316
    %3682 = vmatprep.subr.bf16.mxu0 %v2333
    %3683 = vmatpush1.bf16.msra.mxu0 %v2332
    %3684 = vmatprep.subr.bf16.mxu0 %v2349
    %3685 = vmatpush1.bf16.msra.mxu0 %v2348
    %3686 = vmatprep.subr.bf16.mxu0 %v2365
    %3687 = vmatpush1.bf16.msra.mxu0 %v2364
    %3688 = vmatprep.subr.bf16.mxu0 %v2381
    %3689 = vmatpush1.bf16.msra.mxu0 %v2380
    %3690 = vmatprep.subr.bf16.mxu0 %v2397
    %3691 = vmatpush1.bf16.msra.mxu0 %v2396
    %3692 = vmatprep.mubr.bf16.mxu0 %v601
    %3693 = vmatmul.mubr.bf16.gmra.mrb[0].mxu0 %v600
    %v3694 = vpop.f32.mrb[0].mxu0
    %v3695 = vadd.f32 0.0, %v3694
    %v3696 = vpop.f32.mrb[0].mxu0
    %v3697 = vadd.f32 0.0, %v3696
    %v3698 = vpop.f32.mrb[0].mxu0
    %v3699 = vpop.f32.mrb[0].mxu0
    %3700 = vdwg.mxu0
    %3701 = vmatprep.subr.bf16.mxu0 %v2413
    %3702 = vmatpush1.bf16.msra.mxu0 %v2412
    %3703 = vmatprep.subr.bf16.mxu0 %v2429
    %3704 = vmatpush1.bf16.msra.mxu0 %v2428
    %3705 = vmatprep.subr.bf16.mxu0 %v2445
    %3706 = vmatpush1.bf16.msra.mxu0 %v2444
    %3707 = vmatprep.subr.bf16.mxu0 %v2461
    %3708 = vmatpush1.bf16.msra.mxu0 %v2460
    %3709 = vmatprep.subr.bf16.mxu0 %v2477
    %3710 = vmatpush1.bf16.msra.mxu0 %v2476
    %3711 = vmatprep.subr.bf16.mxu0 %v2493
    %3712 = vmatpush1.bf16.msra.mxu0 %v2492
    %3713 = vmatprep.subr.bf16.mxu0 %v2509
    %3714 = vmatpush1.bf16.msra.mxu0 %v2508
    %3715 = vmatprep.subr.bf16.mxu0 %v2525
    %3716 = vmatpush1.bf16.msra.mxu0 %v2524
    %3717 = vmatprep.subr.bf16.mxu0 %v2541
    %3718 = vmatpush1.bf16.msra.mxu0 %v2540
    %3719 = vmatprep.subr.bf16.mxu0 %v2557
    %3720 = vmatpush1.bf16.msra.mxu0 %v2556
    %3721 = vmatprep.subr.bf16.mxu0 %v2573
    %3722 = vmatpush1.bf16.msra.mxu0 %v2572
    %3723 = vmatprep.subr.bf16.mxu0 %v2589
    %3724 = vmatpush1.bf16.msra.mxu0 %v2588
    %3725 = vmatprep.subr.bf16.mxu0 %v2605
    %3726 = vmatpush1.bf16.msra.mxu0 %v2604
    %3727 = vmatprep.subr.bf16.mxu0 %v2621
    %3728 = vmatpush1.bf16.msra.mxu0 %v2620
    %3729 = vmatprep.subr.bf16.mxu0 %v2637
    %3730 = vmatpush1.bf16.msra.mxu0 %v2636
    %3731 = vmatprep.subr.bf16.mxu0 %v2653
    %3732 = vmatpush1.bf16.msra.mxu0 %v2652
    %3733 = vmatprep.mubr.bf16.mxu0 %v603
    %3734 = vmatmul.mubr.bf16.gmra.mrb[0].mxu0 %v602
    %v3735 = vpop.f32.mrb[0].mxu0
    %v3736 = vadd.f32 %v3695, %v3735
    %v3737 = vpop.f32.mrb[0].mxu0
    %v3738 = vadd.f32 %v3697, %v3737
    %v3739 = vpop.f32.mrb[0].mxu0
    %v3740 = vpop.f32.mrb[0].mxu0
    %3741 = vdwg.mxu0
    %3742 = vmatprep.subr.bf16.mxu0 %v2159
    %3743 = vmatpush1.bf16.msra.mxu0 %v2158
    %3744 = vmatprep.subr.bf16.mxu0 %v2175
    %3745 = vmatpush1.bf16.msra.mxu0 %v2174
    %3746 = vmatprep.subr.bf16.mxu0 %v2191
    %3747 = vmatpush1.bf16.msra.mxu0 %v2190
    %3748 = vmatprep.subr.bf16.mxu0 %v2207
    %3749 = vmatpush1.bf16.msra.mxu0 %v2206
    %3750 = vmatprep.subr.bf16.mxu0 %v2223
    %3751 = vmatpush1.bf16.msra.mxu0 %v2222
    %3752 = vmatprep.subr.bf16.mxu0 %v2239
    %3753 = vmatpush1.bf16.msra.mxu0 %v2238
    %3754 = vmatprep.subr.bf16.mxu0 %v2255
    %3755 = vmatpush1.bf16.msra.mxu0 %v2254
    %3756 = vmatprep.subr.bf16.mxu0 %v2271
    %3757 = vmatpush1.bf16.msra.mxu0 %v2270
    %3758 = vmatprep.subr.bf16.mxu0 %v2287
    %3759 = vmatpush1.bf16.msra.mxu0 %v2286
    %3760 = vmatprep.subr.bf16.mxu0 %v2303
    %3761 = vmatpush1.bf16.msra.mxu0 %v2302
    %3762 = vmatprep.subr.bf16.mxu0 %v2319
    %3763 = vmatpush1.bf16.msra.mxu0 %v2318
    %3764 = vmatprep.subr.bf16.mxu0 %v2335
    %3765 = vmatpush1.bf16.msra.mxu0 %v2334
    %3766 = vmatprep.subr.bf16.mxu0 %v2351
    %3767 = vmatpush1.bf16.msra.mxu0 %v2350
    %3768 = vmatprep.subr.bf16.mxu0 %v2367
    %3769 = vmatpush1.bf16.msra.mxu0 %v2366
    %3770 = vmatprep.subr.bf16.mxu0 %v2383
    %3771 = vmatpush1.bf16.msra.mxu0 %v2382
    %3772 = vmatprep.subr.bf16.mxu0 %v2399
    %3773 = vmatpush1.bf16.msra.mxu0 %v2398
    %3774 = vmatprep.mubr.bf16.mxu0 %v601
    %3775 = vmatmul.mubr.bf16.gmra.mrb[0].mxu0 %v600
    %v3776 = vpop.f32.mrb[0].mxu0
    %v3777 = vadd.f32 0.0, %v3776
    %v3778 = vpop.f32.mrb[0].mxu0
    %v3779 = vadd.f32 0.0, %v3778
    %v3780 = vpop.f32.mrb[0].mxu0
    %v3781 = vpop.f32.mrb[0].mxu0
    %3782 = vdwg.mxu0
    %3783 = vmatprep.subr.bf16.mxu0 %v2415
    %3784 = vmatpush1.bf16.msra.mxu0 %v2414
    %3785 = vmatprep.subr.bf16.mxu0 %v2431
    %3786 = vmatpush1.bf16.msra.mxu0 %v2430
    %3787 = vmatprep.subr.bf16.mxu0 %v2447
    %3788 = vmatpush1.bf16.msra.mxu0 %v2446
    %3789 = vmatprep.subr.bf16.mxu0 %v2463
    %3790 = vmatpush1.bf16.msra.mxu0 %v2462
    %3791 = vmatprep.subr.bf16.mxu0 %v2479
    %3792 = vmatpush1.bf16.msra.mxu0 %v2478
    %3793 = vmatprep.subr.bf16.mxu0 %v2495
    %3794 = vmatpush1.bf16.msra.mxu0 %v2494
    %3795 = vmatprep.subr.bf16.mxu0 %v2511
    %3796 = vmatpush1.bf16.msra.mxu0 %v2510
    %3797 = vmatprep.subr.bf16.mxu0 %v2527
    %3798 = vmatpush1.bf16.msra.mxu0 %v2526
    %3799 = vmatprep.subr.bf16.mxu0 %v2543
    %3800 = vmatpush1.bf16.msra.mxu0 %v2542
    %3801 = vmatprep.subr.bf16.mxu0 %v2559
    %3802 = vmatpush1.bf16.msra.mxu0 %v2558
    %3803 = vmatprep.subr.bf16.mxu0 %v2575
    %3804 = vmatpush1.bf16.msra.mxu0 %v2574
    %3805 = vmatprep.subr.bf16.mxu0 %v2591
    %3806 = vmatpush1.bf16.msra.mxu0 %v2590
    %3807 = vmatprep.subr.bf16.mxu0 %v2607
    %3808 = vmatpush1.bf16.msra.mxu0 %v2606
    %3809 = vmatprep.subr.bf16.mxu0 %v2623
    %3810 = vmatpush1.bf16.msra.mxu0 %v2622
    %3811 = vmatprep.subr.bf16.mxu0 %v2639
    %3812 = vmatpush1.bf16.msra.mxu0 %v2638
    %3813 = vmatprep.subr.bf16.mxu0 %v2655
    %3814 = vmatpush1.bf16.msra.mxu0 %v2654
    %3815 = vmatprep.mubr.bf16.mxu0 %v603
    %3816 = vmatmul.mubr.bf16.gmra.mrb[0].mxu0 %v602
    %v3817 = vpop.f32.mrb[0].mxu0
    %v3818 = vadd.f32 %v3777, %v3817
    %v3819 = vpop.f32.mrb[0].mxu0
    %v3820 = vadd.f32 %v3779, %v3819
    %v3821 = vpop.f32.mrb[0].mxu0
    %v3822 = vpop.f32.mrb[0].mxu0
    %3823 = vdwg.mxu0
    %s3824 = smul.u32 4, 64
    %s3825 = smul.u32 %s3824, 16
    %s3826 = sshll.u32 %s3825, 4
    %3827 = dma.done [#allocation3], %s3826
    %v3828 = vld [vmem:[#allocation2] sm:$0xff]
    %v3829 = vld [vmem:[#allocation2 + $0x8] sm:$0xff]
    %v3830 = vld [vmem:[#allocation2 + $0x10] sm:$0xff]
    %v3831 = vld [vmem:[#allocation2 + $0x18] sm:$0xff]
    %v3832 = vld [vmem:[#allocation2 + $0x20] sm:$0xff]
    %v3833 = vld [vmem:[#allocation2 + $0x28] sm:$0xff]
    %v3834 = vld [vmem:[#allocation2 + $0x30] sm:$0xff]
    %v3835 = vld [vmem:[#allocation2 + $0x38] sm:$0xff]
    %v3836 = vld [vmem:[#allocation2 + $0x40] sm:$0xff]
    %v3837 = vld [vmem:[#allocation2 + $0x48] sm:$0xff]
    %v3838 = vld [vmem:[#allocation2 + $0x50] sm:$0xff]
    %v3839 = vld [vmem:[#allocation2 + $0x58] sm:$0xff]
    %v3840 = vld [vmem:[#allocation2 + $0x60] sm:$0xff]
    %v3841 = vld [vmem:[#allocation2 + $0x68] sm:$0xff]
    %v3842 = vld [vmem:[#allocation2 + $0x70] sm:$0xff]
    %v3843 = vld [vmem:[#allocation2 + $0x78] sm:$0xff]
    %v3844 = vld [vmem:[#allocation2 + $0x80] sm:$0xff]
    %v3845 = vld [vmem:[#allocation2 + $0x88] sm:$0xff]
    %v3846 = vld [vmem:[#allocation2 + $0x90] sm:$0xff]
    %v3847 = vld [vmem:[#allocation2 + $0x98] sm:$0xff]
    %v3848 = vld [vmem:[#allocation2 + $0xa0] sm:$0xff]
    %v3849 = vld [vmem:[#allocation2 + $0xa8] sm:$0xff]
    %v3850 = vld [vmem:[#allocation2 + $0xb0] sm:$0xff]
    %v3851 = vld [vmem:[#allocation2 + $0xb8] sm:$0xff]
    %v3852 = vld [vmem:[#allocation2 + $0xc0] sm:$0xff]
    %v3853 = vld [vmem:[#allocation2 + $0xc8] sm:$0xff]
    %v3854 = vld [vmem:[#allocation2 + $0xd0] sm:$0xff]
    %v3855 = vld [vmem:[#allocation2 + $0xd8] sm:$0xff]
    %v3856 = vld [vmem:[#allocation2 + $0xe0] sm:$0xff]
    %v3857 = vld [vmem:[#allocation2 + $0xe8] sm:$0xff]
    %v3858 = vld [vmem:[#allocation2 + $0xf0] sm:$0xff]
    %v3859 = vld [vmem:[#allocation2 + $0xf8] sm:$0xff]
    %v3860 = vld [vmem:[#allocation2 + $0x100] sm:$0xff]
    %v3861 = vld [vmem:[#allocation2 + $0x108] sm:$0xff]
    %v3862 = vld [vmem:[#allocation2 + $0x110] sm:$0xff]
    %v3863 = vld [vmem:[#allocation2 + $0x118] sm:$0xff]
    %v3864 = vld [vmem:[#allocation2 + $0x120] sm:$0xff]
    %v3865 = vld [vmem:[#allocation2 + $0x128] sm:$0xff]
    %v3866 = vld [vmem:[#allocation2 + $0x130] sm:$0xff]
    %v3867 = vld [vmem:[#allocation2 + $0x138] sm:$0xff]
    %v3868 = vld [vmem:[#allocation2 + $0x140] sm:$0xff]
    %v3869 = vld [vmem:[#allocation2 + $0x148] sm:$0xff]
    %v3870 = vld [vmem:[#allocation2 + $0x150] sm:$0xff]
    %v3871 = vld [vmem:[#allocation2 + $0x158] sm:$0xff]
    %v3872 = vld [vmem:[#allocation2 + $0x160] sm:$0xff]
    %v3873 = vld [vmem:[#allocation2 + $0x168] sm:$0xff]
    %v3874 = vld [vmem:[#allocation2 + $0x170] sm:$0xff]
    %v3875 = vld [vmem:[#allocation2 + $0x178] sm:$0xff]
    %v3876 = vld [vmem:[#allocation2 + $0x180] sm:$0xff]
    %v3877 = vld [vmem:[#allocation2 + $0x188] sm:$0xff]
    %v3878 = vld [vmem:[#allocation2 + $0x190] sm:$0xff]
    %v3879 = vld [vmem:[#allocation2 + $0x198] sm:$0xff]
    %v3880 = vld [vmem:[#allocation2 + $0x1a0] sm:$0xff]
    %v3881 = vld [vmem:[#allocation2 + $0x1a8] sm:$0xff]
    %v3882 = vld [vmem:[#allocation2 + $0x1b0] sm:$0xff]
    %v3883 = vld [vmem:[#allocation2 + $0x1b8] sm:$0xff]
    %v3884 = vld [vmem:[#allocation2 + $0x1c0] sm:$0xff]
    %v3885 = vld [vmem:[#allocation2 + $0x1c8] sm:$0xff]
    %v3886 = vld [vmem:[#allocation2 + $0x1d0] sm:$0xff]
    %v3887 = vld [vmem:[#allocation2 + $0x1d8] sm:$0xff]
    %v3888 = vld [vmem:[#allocation2 + $0x1e0] sm:$0xff]
    %v3889 = vld [vmem:[#allocation2 + $0x1e8] sm:$0xff]
    %v3890 = vld [vmem:[#allocation2 + $0x1f0] sm:$0xff]
    %v3891 = vld [vmem:[#allocation2 + $0x1f8] sm:$0xff]
    %v3892 = vld [vmem:[#allocation2 + $0x200] sm:$0xff]
    %v3893 = vld [vmem:[#allocation2 + $0x208] sm:$0xff]
    %v3894 = vld [vmem:[#allocation2 + $0x210] sm:$0xff]
    %v3895 = vld [vmem:[#allocation2 + $0x218] sm:$0xff]
    %v3896 = vld [vmem:[#allocation2 + $0x220] sm:$0xff]
    %v3897 = vld [vmem:[#allocation2 + $0x228] sm:$0xff]
    %v3898 = vld [vmem:[#allocation2 + $0x230] sm:$0xff]
    %v3899 = vld [vmem:[#allocation2 + $0x238] sm:$0xff]
    %v3900 = vld [vmem:[#allocation2 + $0x240] sm:$0xff]
    %v3901 = vld [vmem:[#allocation2 + $0x248] sm:$0xff]
    %v3902 = vld [vmem:[#allocation2 + $0x250] sm:$0xff]
    %v3903 = vld [vmem:[#allocation2 + $0x258] sm:$0xff]
    %v3904 = vld [vmem:[#allocation2 + $0x260] sm:$0xff]
    %v3905 = vld [vmem:[#allocation2 + $0x268] sm:$0xff]
    %v3906 = vld [vmem:[#allocation2 + $0x270] sm:$0xff]
    %v3907 = vld [vmem:[#allocation2 + $0x278] sm:$0xff]
    %v3908 = vld [vmem:[#allocation2 + $0x280] sm:$0xff]
    %v3909 = vld [vmem:[#allocation2 + $0x288] sm:$0xff]
    %v3910 = vld [vmem:[#allocation2 + $0x290] sm:$0xff]
    %v3911 = vld [vmem:[#allocation2 + $0x298] sm:$0xff]
    %v3912 = vld [vmem:[#allocation2 + $0x2a0] sm:$0xff]
    %v3913 = vld [vmem:[#allocation2 + $0x2a8] sm:$0xff]
    %v3914 = vld [vmem:[#allocation2 + $0x2b0] sm:$0xff]
    %v3915 = vld [vmem:[#allocation2 + $0x2b8] sm:$0xff]
    %v3916 = vld [vmem:[#allocation2 + $0x2c0] sm:$0xff]
    %v3917 = vld [vmem:[#allocation2 + $0x2c8] sm:$0xff]
    %v3918 = vld [vmem:[#allocation2 + $0x2d0] sm:$0xff]
    %v3919 = vld [vmem:[#allocation2 + $0x2d8] sm:$0xff]
    %v3920 = vld [vmem:[#allocation2 + $0x2e0] sm:$0xff]
    %v3921 = vld [vmem:[#allocation2 + $0x2e8] sm:$0xff]
    %v3922 = vld [vmem:[#allocation2 + $0x2f0] sm:$0xff]
    %v3923 = vld [vmem:[#allocation2 + $0x2f8] sm:$0xff]
    %v3924 = vld [vmem:[#allocation2 + $0x300] sm:$0xff]
    %v3925 = vld [vmem:[#allocation2 + $0x308] sm:$0xff]
    %v3926 = vld [vmem:[#allocation2 + $0x310] sm:$0xff]
    %v3927 = vld [vmem:[#allocation2 + $0x318] sm:$0xff]
    %v3928 = vld [vmem:[#allocation2 + $0x320] sm:$0xff]
    %v3929 = vld [vmem:[#allocation2 + $0x328] sm:$0xff]
    %v3930 = vld [vmem:[#allocation2 + $0x330] sm:$0xff]
    %v3931 = vld [vmem:[#allocation2 + $0x338] sm:$0xff]
    %v3932 = vld [vmem:[#allocation2 + $0x340] sm:$0xff]
    %v3933 = vld [vmem:[#allocation2 + $0x348] sm:$0xff]
    %v3934 = vld [vmem:[#allocation2 + $0x350] sm:$0xff]
    %v3935 = vld [vmem:[#allocation2 + $0x358] sm:$0xff]
    %v3936 = vld [vmem:[#allocation2 + $0x360] sm:$0xff]
    %v3937 = vld [vmem:[#allocation2 + $0x368] sm:$0xff]
    %v3938 = vld [vmem:[#allocation2 + $0x370] sm:$0xff]
    %v3939 = vld [vmem:[#allocation2 + $0x378] sm:$0xff]
    %v3940 = vld [vmem:[#allocation2 + $0x380] sm:$0xff]
    %v3941 = vld [vmem:[#allocation2 + $0x388] sm:$0xff]
    %v3942 = vld [vmem:[#allocation2 + $0x390] sm:$0xff]
    %v3943 = vld [vmem:[#allocation2 + $0x398] sm:$0xff]
    %v3944 = vld [vmem:[#allocation2 + $0x3a0] sm:$0xff]
    %v3945 = vld [vmem:[#allocation2 + $0x3a8] sm:$0xff]
    %v3946 = vld [vmem:[#allocation2 + $0x3b0] sm:$0xff]
    %v3947 = vld [vmem:[#allocation2 + $0x3b8] sm:$0xff]
    %v3948 = vld [vmem:[#allocation2 + $0x3c0] sm:$0xff]
    %v3949 = vld [vmem:[#allocation2 + $0x3c8] sm:$0xff]
    %v3950 = vld [vmem:[#allocation2 + $0x3d0] sm:$0xff]
    %v3951 = vld [vmem:[#allocation2 + $0x3d8] sm:$0xff]
    %v3952 = vld [vmem:[#allocation2 + $0x3e0] sm:$0xff]
    %v3953 = vld [vmem:[#allocation2 + $0x3e8] sm:$0xff]
    %v3954 = vld [vmem:[#allocation2 + $0x3f0] sm:$0xff]
    %v3955 = vld [vmem:[#allocation2 + $0x3f8] sm:$0xff]
    %v3956 = vld [vmem:[#allocation2 + $0x400] sm:$0xff]
    %v3957 = vld [vmem:[#allocation2 + $0x408] sm:$0xff]
    %v3958 = vld [vmem:[#allocation2 + $0x410] sm:$0xff]
    %v3959 = vld [vmem:[#allocation2 + $0x418] sm:$0xff]
    %v3960 = vld [vmem:[#allocation2 + $0x420] sm:$0xff]
    %v3961 = vld [vmem:[#allocation2 + $0x428] sm:$0xff]
    %v3962 = vld [vmem:[#allocation2 + $0x430] sm:$0xff]
    %v3963 = vld [vmem:[#allocation2 + $0x438] sm:$0xff]
    %v3964 = vld [vmem:[#allocation2 + $0x440] sm:$0xff]
    %v3965 = vld [vmem:[#allocation2 + $0x448] sm:$0xff]
    %v3966 = vld [vmem:[#allocation2 + $0x450] sm:$0xff]
    %v3967 = vld [vmem:[#allocation2 + $0x458] sm:$0xff]
    %v3968 = vld [vmem:[#allocation2 + $0x460] sm:$0xff]
    %v3969 = vld [vmem:[#allocation2 + $0x468] sm:$0xff]
    %v3970 = vld [vmem:[#allocation2 + $0x470] sm:$0xff]
    %v3971 = vld [vmem:[#allocation2 + $0x478] sm:$0xff]
    %v3972 = vld [vmem:[#allocation2 + $0x480] sm:$0xff]
    %v3973 = vld [vmem:[#allocation2 + $0x488] sm:$0xff]
    %v3974 = vld [vmem:[#allocation2 + $0x490] sm:$0xff]
    %v3975 = vld [vmem:[#allocation2 + $0x498] sm:$0xff]
    %v3976 = vld [vmem:[#allocation2 + $0x4a0] sm:$0xff]
    %v3977 = vld [vmem:[#allocation2 + $0x4a8] sm:$0xff]
    %v3978 = vld [vmem:[#allocation2 + $0x4b0] sm:$0xff]
    %v3979 = vld [vmem:[#allocation2 + $0x4b8] sm:$0xff]
    %v3980 = vld [vmem:[#allocation2 + $0x4c0] sm:$0xff]
    %v3981 = vld [vmem:[#allocation2 + $0x4c8] sm:$0xff]
    %v3982 = vld [vmem:[#allocation2 + $0x4d0] sm:$0xff]
    %v3983 = vld [vmem:[#allocation2 + $0x4d8] sm:$0xff]
    %v3984 = vld [vmem:[#allocation2 + $0x4e0] sm:$0xff]
    %v3985 = vld [vmem:[#allocation2 + $0x4e8] sm:$0xff]
    %v3986 = vld [vmem:[#allocation2 + $0x4f0] sm:$0xff]
    %v3987 = vld [vmem:[#allocation2 + $0x4f8] sm:$0xff]
    %v3988 = vld [vmem:[#allocation2 + $0x500] sm:$0xff]
    %v3989 = vld [vmem:[#allocation2 + $0x508] sm:$0xff]
    %v3990 = vld [vmem:[#allocation2 + $0x510] sm:$0xff]
    %v3991 = vld [vmem:[#allocation2 + $0x518] sm:$0xff]
    %v3992 = vld [vmem:[#allocation2 + $0x520] sm:$0xff]
    %v3993 = vld [vmem:[#allocation2 + $0x528] sm:$0xff]
    %v3994 = vld [vmem:[#allocation2 + $0x530] sm:$0xff]
    %v3995 = vld [vmem:[#allocation2 + $0x538] sm:$0xff]
    %v3996 = vld [vmem:[#allocation2 + $0x540] sm:$0xff]
    %v3997 = vld [vmem:[#allocation2 + $0x548] sm:$0xff]
    %v3998 = vld [vmem:[#allocation2 + $0x550] sm:$0xff]
    %v3999 = vld [vmem:[#allocation2 + $0x558] sm:$0xff]
    %v4000 = vld [vmem:[#allocation2 + $0x560] sm:$0xff]
    %v4001 = vld [vmem:[#allocation2 + $0x568] sm:$0xff]
    %v4002 = vld [vmem:[#allocation2 + $0x570] sm:$0xff]
    %v4003 = vld [vmem:[#allocation2 + $0x578] sm:$0xff]
    %v4004 = vld [vmem:[#allocation2 + $0x580] sm:$0xff]
    %v4005 = vld [vmem:[#allocation2 + $0x588] sm:$0xff]
    %v4006 = vld [vmem:[#allocation2 + $0x590] sm:$0xff]
    %v4007 = vld [vmem:[#allocation2 + $0x598] sm:$0xff]
    %v4008 = vld [vmem:[#allocation2 + $0x5a0] sm:$0xff]
    %v4009 = vld [vmem:[#allocation2 + $0x5a8] sm:$0xff]
    %v4010 = vld [vmem:[#allocation2 + $0x5b0] sm:$0xff]
    %v4011 = vld [vmem:[#allocation2 + $0x5b8] sm:$0xff]
    %v4012 = vld [vmem:[#allocation2 + $0x5c0] sm:$0xff]
    %v4013 = vld [vmem:[#allocation2 + $0x5c8] sm:$0xff]
    %v4014 = vld [vmem:[#allocation2 + $0x5d0] sm:$0xff]
    %v4015 = vld [vmem:[#allocation2 + $0x5d8] sm:$0xff]
    %v4016 = vld [vmem:[#allocation2 + $0x5e0] sm:$0xff]
    %v4017 = vld [vmem:[#allocation2 + $0x5e8] sm:$0xff]
    %v4018 = vld [vmem:[#allocation2 + $0x5f0] sm:$0xff]
    %v4019 = vld [vmem:[#allocation2 + $0x5f8] sm:$0xff]
    %v4020 = vld [vmem:[#allocation2 + $0x600] sm:$0xff]
    %v4021 = vld [vmem:[#allocation2 + $0x608] sm:$0xff]
    %v4022 = vld [vmem:[#allocation2 + $0x610] sm:$0xff]
    %v4023 = vld [vmem:[#allocation2 + $0x618] sm:$0xff]
    %v4024 = vld [vmem:[#allocation2 + $0x620] sm:$0xff]
    %v4025 = vld [vmem:[#allocation2 + $0x628] sm:$0xff]
    %v4026 = vld [vmem:[#allocation2 + $0x630] sm:$0xff]
    %v4027 = vld [vmem:[#allocation2 + $0x638] sm:$0xff]
    %v4028 = vld [vmem:[#allocation2 + $0x640] sm:$0xff]
    %v4029 = vld [vmem:[#allocation2 + $0x648] sm:$0xff]
    %v4030 = vld [vmem:[#allocation2 + $0x650] sm:$0xff]
    %v4031 = vld [vmem:[#allocation2 + $0x658] sm:$0xff]
    %v4032 = vld [vmem:[#allocation2 + $0x660] sm:$0xff]
    %v4033 = vld [vmem:[#allocation2 + $0x668] sm:$0xff]
    %v4034 = vld [vmem:[#allocation2 + $0x670] sm:$0xff]
    %v4035 = vld [vmem:[#allocation2 + $0x678] sm:$0xff]
    %v4036 = vld [vmem:[#allocation2 + $0x680] sm:$0xff]
    %v4037 = vld [vmem:[#allocation2 + $0x688] sm:$0xff]
    %v4038 = vld [vmem:[#allocation2 + $0x690] sm:$0xff]
    %v4039 = vld [vmem:[#allocation2 + $0x698] sm:$0xff]
    %v4040 = vld [vmem:[#allocation2 + $0x6a0] sm:$0xff]
    %v4041 = vld [vmem:[#allocation2 + $0x6a8] sm:$0xff]
    %v4042 = vld [vmem:[#allocation2 + $0x6b0] sm:$0xff]
    %v4043 = vld [vmem:[#allocation2 + $0x6b8] sm:$0xff]
    %v4044 = vld [vmem:[#allocation2 + $0x6c0] sm:$0xff]
    %v4045 = vld [vmem:[#allocation2 + $0x6c8] sm:$0xff]
    %v4046 = vld [vmem:[#allocation2 + $0x6d0] sm:$0xff]
    %v4047 = vld [vmem:[#allocation2 + $0x6d8] sm:$0xff]
    %v4048 = vld [vmem:[#allocation2 + $0x6e0] sm:$0xff]
    %v4049 = vld [vmem:[#allocation2 + $0x6e8] sm:$0xff]
    %v4050 = vld [vmem:[#allocation2 + $0x6f0] sm:$0xff]
    %v4051 = vld [vmem:[#allocation2 + $0x6f8] sm:$0xff]
    %v4052 = vld [vmem:[#allocation2 + $0x700] sm:$0xff]
    %v4053 = vld [vmem:[#allocation2 + $0x708] sm:$0xff]
    %v4054 = vld [vmem:[#allocation2 + $0x710] sm:$0xff]
    %v4055 = vld [vmem:[#allocation2 + $0x718] sm:$0xff]
    %v4056 = vld [vmem:[#allocation2 + $0x720] sm:$0xff]
    %v4057 = vld [vmem:[#allocation2 + $0x728] sm:$0xff]
    %v4058 = vld [vmem:[#allocation2 + $0x730] sm:$0xff]
    %v4059 = vld [vmem:[#allocation2 + $0x738] sm:$0xff]
    %v4060 = vld [vmem:[#allocation2 + $0x740] sm:$0xff]
    %v4061 = vld [vmem:[#allocation2 + $0x748] sm:$0xff]
    %v4062 = vld [vmem:[#allocation2 + $0x750] sm:$0xff]
    %v4063 = vld [vmem:[#allocation2 + $0x758] sm:$0xff]
    %v4064 = vld [vmem:[#allocation2 + $0x760] sm:$0xff]
    %v4065 = vld [vmem:[#allocation2 + $0x768] sm:$0xff]
    %v4066 = vld [vmem:[#allocation2 + $0x770] sm:$0xff]
    %v4067 = vld [vmem:[#allocation2 + $0x778] sm:$0xff]
    %v4068 = vld [vmem:[#allocation2 + $0x780] sm:$0xff]
    %v4069 = vld [vmem:[#allocation2 + $0x788] sm:$0xff]
    %v4070 = vld [vmem:[#allocation2 + $0x790] sm:$0xff]
    %v4071 = vld [vmem:[#allocation2 + $0x798] sm:$0xff]
    %v4072 = vld [vmem:[#allocation2 + $0x7a0] sm:$0xff]
    %v4073 = vld [vmem:[#allocation2 + $0x7a8] sm:$0xff]
    %v4074 = vld [vmem:[#allocation2 + $0x7b0] sm:$0xff]
    %v4075 = vld [vmem:[#allocation2 + $0x7b8] sm:$0xff]
    %v4076 = vld [vmem:[#allocation2 + $0x7c0] sm:$0xff]
    %v4077 = vld [vmem:[#allocation2 + $0x7c8] sm:$0xff]
    %v4078 = vld [vmem:[#allocation2 + $0x7d0] sm:$0xff]
    %v4079 = vld [vmem:[#allocation2 + $0x7d8] sm:$0xff]
    %v4080 = vld [vmem:[#allocation2 + $0x7e0] sm:$0xff]
    %v4081 = vld [vmem:[#allocation2 + $0x7e8] sm:$0xff]
    %v4082 = vld [vmem:[#allocation2 + $0x7f0] sm:$0xff]
    %v4083 = vld [vmem:[#allocation2 + $0x7f8] sm:$0xff]
    %v4084 = vld [vmem:[#allocation2 + $0x800] sm:$0xff]
    %v4085 = vld [vmem:[#allocation2 + $0x808] sm:$0xff]
    %v4086 = vld [vmem:[#allocation2 + $0x810] sm:$0xff]
    %v4087 = vld [vmem:[#allocation2 + $0x818] sm:$0xff]
    %v4088 = vld [vmem:[#allocation2 + $0x820] sm:$0xff]
    %v4089 = vld [vmem:[#allocation2 + $0x828] sm:$0xff]
    %v4090 = vld [vmem:[#allocation2 + $0x830] sm:$0xff]
    %v4091 = vld [vmem:[#allocation2 + $0x838] sm:$0xff]
    %v4092 = vld [vmem:[#allocation2 + $0x840] sm:$0xff]
    %v4093 = vld [vmem:[#allocation2 + $0x848] sm:$0xff]
    %v4094 = vld [vmem:[#allocation2 + $0x850] sm:$0xff]
    %v4095 = vld [vmem:[#allocation2 + $0x858] sm:$0xff]
    %v4096 = vld [vmem:[#allocation2 + $0x860] sm:$0xff]
    %v4097 = vld [vmem:[#allocation2 + $0x868] sm:$0xff]
    %v4098 = vld [vmem:[#allocation2 + $0x870] sm:$0xff]
    %v4099 = vld [vmem:[#allocation2 + $0x878] sm:$0xff]
    %v4100 = vld [vmem:[#allocation2 + $0x880] sm:$0xff]
    %v4101 = vld [vmem:[#allocation2 + $0x888] sm:$0xff]
    %v4102 = vld [vmem:[#allocation2 + $0x890] sm:$0xff]
    %v4103 = vld [vmem:[#allocation2 + $0x898] sm:$0xff]
    %v4104 = vld [vmem:[#allocation2 + $0x8a0] sm:$0xff]
    %v4105 = vld [vmem:[#allocation2 + $0x8a8] sm:$0xff]
    %v4106 = vld [vmem:[#allocation2 + $0x8b0] sm:$0xff]
    %v4107 = vld [vmem:[#allocation2 + $0x8b8] sm:$0xff]
    %v4108 = vld [vmem:[#allocation2 + $0x8c0] sm:$0xff]
    %v4109 = vld [vmem:[#allocation2 + $0x8c8] sm:$0xff]
    %v4110 = vld [vmem:[#allocation2 + $0x8d0] sm:$0xff]
    %v4111 = vld [vmem:[#allocation2 + $0x8d8] sm:$0xff]
    %v4112 = vld [vmem:[#allocation2 + $0x8e0] sm:$0xff]
    %v4113 = vld [vmem:[#allocation2 + $0x8e8] sm:$0xff]
    %v4114 = vld [vmem:[#allocation2 + $0x8f0] sm:$0xff]
    %v4115 = vld [vmem:[#allocation2 + $0x8f8] sm:$0xff]
    %v4116 = vld [vmem:[#allocation2 + $0x900] sm:$0xff]
    %v4117 = vld [vmem:[#allocation2 + $0x908] sm:$0xff]
    %v4118 = vld [vmem:[#allocation2 + $0x910] sm:$0xff]
    %v4119 = vld [vmem:[#allocation2 + $0x918] sm:$0xff]
    %v4120 = vld [vmem:[#allocation2 + $0x920] sm:$0xff]
    %v4121 = vld [vmem:[#allocation2 + $0x928] sm:$0xff]
    %v4122 = vld [vmem:[#allocation2 + $0x930] sm:$0xff]
    %v4123 = vld [vmem:[#allocation2 + $0x938] sm:$0xff]
    %v4124 = vld [vmem:[#allocation2 + $0x940] sm:$0xff]
    %v4125 = vld [vmem:[#allocation2 + $0x948] sm:$0xff]
    %v4126 = vld [vmem:[#allocation2 + $0x950] sm:$0xff]
    %v4127 = vld [vmem:[#allocation2 + $0x958] sm:$0xff]
    %v4128 = vld [vmem:[#allocation2 + $0x960] sm:$0xff]
    %v4129 = vld [vmem:[#allocation2 + $0x968] sm:$0xff]
    %v4130 = vld [vmem:[#allocation2 + $0x970] sm:$0xff]
    %v4131 = vld [vmem:[#allocation2 + $0x978] sm:$0xff]
    %v4132 = vld [vmem:[#allocation2 + $0x980] sm:$0xff]
    %v4133 = vld [vmem:[#allocation2 + $0x988] sm:$0xff]
    %v4134 = vld [vmem:[#allocation2 + $0x990] sm:$0xff]
    %v4135 = vld [vmem:[#allocation2 + $0x998] sm:$0xff]
    %v4136 = vld [vmem:[#allocation2 + $0x9a0] sm:$0xff]
    %v4137 = vld [vmem:[#allocation2 + $0x9a8] sm:$0xff]
    %v4138 = vld [vmem:[#allocation2 + $0x9b0] sm:$0xff]
    %v4139 = vld [vmem:[#allocation2 + $0x9b8] sm:$0xff]
    %v4140 = vld [vmem:[#allocation2 + $0x9c0] sm:$0xff]
    %v4141 = vld [vmem:[#allocation2 + $0x9c8] sm:$0xff]
    %v4142 = vld [vmem:[#allocation2 + $0x9d0] sm:$0xff]
    %v4143 = vld [vmem:[#allocation2 + $0x9d8] sm:$0xff]
    %v4144 = vld [vmem:[#allocation2 + $0x9e0] sm:$0xff]
    %v4145 = vld [vmem:[#allocation2 + $0x9e8] sm:$0xff]
    %v4146 = vld [vmem:[#allocation2 + $0x9f0] sm:$0xff]
    %v4147 = vld [vmem:[#allocation2 + $0x9f8] sm:$0xff]
    %v4148 = vld [vmem:[#allocation2 + $0xa00] sm:$0xff]
    %v4149 = vld [vmem:[#allocation2 + $0xa08] sm:$0xff]
    %v4150 = vld [vmem:[#allocation2 + $0xa10] sm:$0xff]
    %v4151 = vld [vmem:[#allocation2 + $0xa18] sm:$0xff]
    %v4152 = vld [vmem:[#allocation2 + $0xa20] sm:$0xff]
    %v4153 = vld [vmem:[#allocation2 + $0xa28] sm:$0xff]
    %v4154 = vld [vmem:[#allocation2 + $0xa30] sm:$0xff]
    %v4155 = vld [vmem:[#allocation2 + $0xa38] sm:$0xff]
    %v4156 = vld [vmem:[#allocation2 + $0xa40] sm:$0xff]
    %v4157 = vld [vmem:[#allocation2 + $0xa48] sm:$0xff]
    %v4158 = vld [vmem:[#allocation2 + $0xa50] sm:$0xff]
    %v4159 = vld [vmem:[#allocation2 + $0xa58] sm:$0xff]
    %v4160 = vld [vmem:[#allocation2 + $0xa60] sm:$0xff]
    %v4161 = vld [vmem:[#allocation2 + $0xa68] sm:$0xff]
    %v4162 = vld [vmem:[#allocation2 + $0xa70] sm:$0xff]
    %v4163 = vld [vmem:[#allocation2 + $0xa78] sm:$0xff]
    %v4164 = vld [vmem:[#allocation2 + $0xa80] sm:$0xff]
    %v4165 = vld [vmem:[#allocation2 + $0xa88] sm:$0xff]
    %v4166 = vld [vmem:[#allocation2 + $0xa90] sm:$0xff]
    %v4167 = vld [vmem:[#allocation2 + $0xa98] sm:$0xff]
    %v4168 = vld [vmem:[#allocation2 + $0xaa0] sm:$0xff]
    %v4169 = vld [vmem:[#allocation2 + $0xaa8] sm:$0xff]
    %v4170 = vld [vmem:[#allocation2 + $0xab0] sm:$0xff]
    %v4171 = vld [vmem:[#allocation2 + $0xab8] sm:$0xff]
    %v4172 = vld [vmem:[#allocation2 + $0xac0] sm:$0xff]
    %v4173 = vld [vmem:[#allocation2 + $0xac8] sm:$0xff]
    %v4174 = vld [vmem:[#allocation2 + $0xad0] sm:$0xff]
    %v4175 = vld [vmem:[#allocation2 + $0xad8] sm:$0xff]
    %v4176 = vld [vmem:[#allocation2 + $0xae0] sm:$0xff]
    %v4177 = vld [vmem:[#allocation2 + $0xae8] sm:$0xff]
    %v4178 = vld [vmem:[#allocation2 + $0xaf0] sm:$0xff]
    %v4179 = vld [vmem:[#allocation2 + $0xaf8] sm:$0xff]
    %v4180 = vld [vmem:[#allocation2 + $0xb00] sm:$0xff]
    %v4181 = vld [vmem:[#allocation2 + $0xb08] sm:$0xff]
    %v4182 = vld [vmem:[#allocation2 + $0xb10] sm:$0xff]
    %v4183 = vld [vmem:[#allocation2 + $0xb18] sm:$0xff]
    %v4184 = vld [vmem:[#allocation2 + $0xb20] sm:$0xff]
    %v4185 = vld [vmem:[#allocation2 + $0xb28] sm:$0xff]
    %v4186 = vld [vmem:[#allocation2 + $0xb30] sm:$0xff]
    %v4187 = vld [vmem:[#allocation2 + $0xb38] sm:$0xff]
    %v4188 = vld [vmem:[#allocation2 + $0xb40] sm:$0xff]
    %v4189 = vld [vmem:[#allocation2 + $0xb48] sm:$0xff]
    %v4190 = vld [vmem:[#allocation2 + $0xb50] sm:$0xff]
    %v4191 = vld [vmem:[#allocation2 + $0xb58] sm:$0xff]
    %v4192 = vld [vmem:[#allocation2 + $0xb60] sm:$0xff]
    %v4193 = vld [vmem:[#allocation2 + $0xb68] sm:$0xff]
    %v4194 = vld [vmem:[#allocation2 + $0xb70] sm:$0xff]
    %v4195 = vld [vmem:[#allocation2 + $0xb78] sm:$0xff]
    %v4196 = vld [vmem:[#allocation2 + $0xb80] sm:$0xff]
    %v4197 = vld [vmem:[#allocation2 + $0xb88] sm:$0xff]
    %v4198 = vld [vmem:[#allocation2 + $0xb90] sm:$0xff]
    %v4199 = vld [vmem:[#allocation2 + $0xb98] sm:$0xff]
    %v4200 = vld [vmem:[#allocation2 + $0xba0] sm:$0xff]
    %v4201 = vld [vmem:[#allocation2 + $0xba8] sm:$0xff]
    %v4202 = vld [vmem:[#allocation2 + $0xbb0] sm:$0xff]
    %v4203 = vld [vmem:[#allocation2 + $0xbb8] sm:$0xff]
    %v4204 = vld [vmem:[#allocation2 + $0xbc0] sm:$0xff]
    %v4205 = vld [vmem:[#allocation2 + $0xbc8] sm:$0xff]
    %v4206 = vld [vmem:[#allocation2 + $0xbd0] sm:$0xff]
    %v4207 = vld [vmem:[#allocation2 + $0xbd8] sm:$0xff]
    %v4208 = vld [vmem:[#allocation2 + $0xbe0] sm:$0xff]
    %v4209 = vld [vmem:[#allocation2 + $0xbe8] sm:$0xff]
    %v4210 = vld [vmem:[#allocation2 + $0xbf0] sm:$0xff]
    %v4211 = vld [vmem:[#allocation2 + $0xbf8] sm:$0xff]
    %v4212 = vld [vmem:[#allocation2 + $0xc00] sm:$0xff]
    %v4213 = vld [vmem:[#allocation2 + $0xc08] sm:$0xff]
    %v4214 = vld [vmem:[#allocation2 + $0xc10] sm:$0xff]
    %v4215 = vld [vmem:[#allocation2 + $0xc18] sm:$0xff]
    %v4216 = vld [vmem:[#allocation2 + $0xc20] sm:$0xff]
    %v4217 = vld [vmem:[#allocation2 + $0xc28] sm:$0xff]
    %v4218 = vld [vmem:[#allocation2 + $0xc30] sm:$0xff]
    %v4219 = vld [vmem:[#allocation2 + $0xc38] sm:$0xff]
    %v4220 = vld [vmem:[#allocation2 + $0xc40] sm:$0xff]
    %v4221 = vld [vmem:[#allocation2 + $0xc48] sm:$0xff]
    %v4222 = vld [vmem:[#allocation2 + $0xc50] sm:$0xff]
    %v4223 = vld [vmem:[#allocation2 + $0xc58] sm:$0xff]
    %v4224 = vld [vmem:[#allocation2 + $0xc60] sm:$0xff]
    %v4225 = vld [vmem:[#allocation2 + $0xc68] sm:$0xff]
    %v4226 = vld [vmem:[#allocation2 + $0xc70] sm:$0xff]
    %v4227 = vld [vmem:[#allocation2 + $0xc78] sm:$0xff]
    %v4228 = vld [vmem:[#allocation2 + $0xc80] sm:$0xff]
    %v4229 = vld [vmem:[#allocation2 + $0xc88] sm:$0xff]
    %v4230 = vld [vmem:[#allocation2 + $0xc90] sm:$0xff]
    %v4231 = vld [vmem:[#allocation2 + $0xc98] sm:$0xff]
    %v4232 = vld [vmem:[#allocation2 + $0xca0] sm:$0xff]
    %v4233 = vld [vmem:[#allocation2 + $0xca8] sm:$0xff]
    %v4234 = vld [vmem:[#allocation2 + $0xcb0] sm:$0xff]
    %v4235 = vld [vmem:[#allocation2 + $0xcb8] sm:$0xff]
    %v4236 = vld [vmem:[#allocation2 + $0xcc0] sm:$0xff]
    %v4237 = vld [vmem:[#allocation2 + $0xcc8] sm:$0xff]
    %v4238 = vld [vmem:[#allocation2 + $0xcd0] sm:$0xff]
    %v4239 = vld [vmem:[#allocation2 + $0xcd8] sm:$0xff]
    %v4240 = vld [vmem:[#allocation2 + $0xce0] sm:$0xff]
    %v4241 = vld [vmem:[#allocation2 + $0xce8] sm:$0xff]
    %v4242 = vld [vmem:[#allocation2 + $0xcf0] sm:$0xff]
    %v4243 = vld [vmem:[#allocation2 + $0xcf8] sm:$0xff]
    %v4244 = vld [vmem:[#allocation2 + $0xd00] sm:$0xff]
    %v4245 = vld [vmem:[#allocation2 + $0xd08] sm:$0xff]
    %v4246 = vld [vmem:[#allocation2 + $0xd10] sm:$0xff]
    %v4247 = vld [vmem:[#allocation2 + $0xd18] sm:$0xff]
    %v4248 = vld [vmem:[#allocation2 + $0xd20] sm:$0xff]
    %v4249 = vld [vmem:[#allocation2 + $0xd28] sm:$0xff]
    %v4250 = vld [vmem:[#allocation2 + $0xd30] sm:$0xff]
    %v4251 = vld [vmem:[#allocation2 + $0xd38] sm:$0xff]
    %v4252 = vld [vmem:[#allocation2 + $0xd40] sm:$0xff]
    %v4253 = vld [vmem:[#allocation2 + $0xd48] sm:$0xff]
    %v4254 = vld [vmem:[#allocation2 + $0xd50] sm:$0xff]
    %v4255 = vld [vmem:[#allocation2 + $0xd58] sm:$0xff]
    %v4256 = vld [vmem:[#allocation2 + $0xd60] sm:$0xff]
    %v4257 = vld [vmem:[#allocation2 + $0xd68] sm:$0xff]
    %v4258 = vld [vmem:[#allocation2 + $0xd70] sm:$0xff]
    %v4259 = vld [vmem:[#allocation2 + $0xd78] sm:$0xff]
    %v4260 = vld [vmem:[#allocation2 + $0xd80] sm:$0xff]
    %v4261 = vld [vmem:[#allocation2 + $0xd88] sm:$0xff]
    %v4262 = vld [vmem:[#allocation2 + $0xd90] sm:$0xff]
    %v4263 = vld [vmem:[#allocation2 + $0xd98] sm:$0xff]
    %v4264 = vld [vmem:[#allocation2 + $0xda0] sm:$0xff]
    %v4265 = vld [vmem:[#allocation2 + $0xda8] sm:$0xff]
    %v4266 = vld [vmem:[#allocation2 + $0xdb0] sm:$0xff]
    %v4267 = vld [vmem:[#allocation2 + $0xdb8] sm:$0xff]
    %v4268 = vld [vmem:[#allocation2 + $0xdc0] sm:$0xff]
    %v4269 = vld [vmem:[#allocation2 + $0xdc8] sm:$0xff]
    %v4270 = vld [vmem:[#allocation2 + $0xdd0] sm:$0xff]
    %v4271 = vld [vmem:[#allocation2 + $0xdd8] sm:$0xff]
    %v4272 = vld [vmem:[#allocation2 + $0xde0] sm:$0xff]
    %v4273 = vld [vmem:[#allocation2 + $0xde8] sm:$0xff]
    %v4274 = vld [vmem:[#allocation2 + $0xdf0] sm:$0xff]
    %v4275 = vld [vmem:[#allocation2 + $0xdf8] sm:$0xff]
    %v4276 = vld [vmem:[#allocation2 + $0xe00] sm:$0xff]
    %v4277 = vld [vmem:[#allocation2 + $0xe08] sm:$0xff]
    %v4278 = vld [vmem:[#allocation2 + $0xe10] sm:$0xff]
    %v4279 = vld [vmem:[#allocation2 + $0xe18] sm:$0xff]
    %v4280 = vld [vmem:[#allocation2 + $0xe20] sm:$0xff]
    %v4281 = vld [vmem:[#allocation2 + $0xe28] sm:$0xff]
    %v4282 = vld [vmem:[#allocation2 + $0xe30] sm:$0xff]
    %v4283 = vld [vmem:[#allocation2 + $0xe38] sm:$0xff]
    %v4284 = vld [vmem:[#allocation2 + $0xe40] sm:$0xff]
    %v4285 = vld [vmem:[#allocation2 + $0xe48] sm:$0xff]
    %v4286 = vld [vmem:[#allocation2 + $0xe50] sm:$0xff]
    %v4287 = vld [vmem:[#allocation2 + $0xe58] sm:$0xff]
    %v4288 = vld [vmem:[#allocation2 + $0xe60] sm:$0xff]
    %v4289 = vld [vmem:[#allocation2 + $0xe68] sm:$0xff]
    %v4290 = vld [vmem:[#allocation2 + $0xe70] sm:$0xff]
    %v4291 = vld [vmem:[#allocation2 + $0xe78] sm:$0xff]
    %v4292 = vld [vmem:[#allocation2 + $0xe80] sm:$0xff]
    %v4293 = vld [vmem:[#allocation2 + $0xe88] sm:$0xff]
    %v4294 = vld [vmem:[#allocation2 + $0xe90] sm:$0xff]
    %v4295 = vld [vmem:[#allocation2 + $0xe98] sm:$0xff]
    %v4296 = vld [vmem:[#allocation2 + $0xea0] sm:$0xff]
    %v4297 = vld [vmem:[#allocation2 + $0xea8] sm:$0xff]
    %v4298 = vld [vmem:[#allocation2 + $0xeb0] sm:$0xff]
    %v4299 = vld [vmem:[#allocation2 + $0xeb8] sm:$0xff]
    %v4300 = vld [vmem:[#allocation2 + $0xec0] sm:$0xff]
    %v4301 = vld [vmem:[#allocation2 + $0xec8] sm:$0xff]
    %v4302 = vld [vmem:[#allocation2 + $0xed0] sm:$0xff]
    %v4303 = vld [vmem:[#allocation2 + $0xed8] sm:$0xff]
    %v4304 = vld [vmem:[#allocation2 + $0xee0] sm:$0xff]
    %v4305 = vld [vmem:[#allocation2 + $0xee8] sm:$0xff]
    %v4306 = vld [vmem:[#allocation2 + $0xef0] sm:$0xff]
    %v4307 = vld [vmem:[#allocation2 + $0xef8] sm:$0xff]
    %v4308 = vld [vmem:[#allocation2 + $0xf00] sm:$0xff]
    %v4309 = vld [vmem:[#allocation2 + $0xf08] sm:$0xff]
    %v4310 = vld [vmem:[#allocation2 + $0xf10] sm:$0xff]
    %v4311 = vld [vmem:[#allocation2 + $0xf18] sm:$0xff]
    %v4312 = vld [vmem:[#allocation2 + $0xf20] sm:$0xff]
    %v4313 = vld [vmem:[#allocation2 + $0xf28] sm:$0xff]
    %v4314 = vld [vmem:[#allocation2 + $0xf30] sm:$0xff]
    %v4315 = vld [vmem:[#allocation2 + $0xf38] sm:$0xff]
    %v4316 = vld [vmem:[#allocation2 + $0xf40] sm:$0xff]
    %v4317 = vld [vmem:[#allocation2 + $0xf48] sm:$0xff]
    %v4318 = vld [vmem:[#allocation2 + $0xf50] sm:$0xff]
    %v4319 = vld [vmem:[#allocation2 + $0xf58] sm:$0xff]
    %v4320 = vld [vmem:[#allocation2 + $0xf60] sm:$0xff]
    %v4321 = vld [vmem:[#allocation2 + $0xf68] sm:$0xff]
    %v4322 = vld [vmem:[#allocation2 + $0xf70] sm:$0xff]
    %v4323 = vld [vmem:[#allocation2 + $0xf78] sm:$0xff]
    %v4324 = vld [vmem:[#allocation2 + $0xf80] sm:$0xff]
    %v4325 = vld [vmem:[#allocation2 + $0xf88] sm:$0xff]
    %v4326 = vld [vmem:[#allocation2 + $0xf90] sm:$0xff]
    %v4327 = vld [vmem:[#allocation2 + $0xf98] sm:$0xff]
    %v4328 = vld [vmem:[#allocation2 + $0xfa0] sm:$0xff]
    %v4329 = vld [vmem:[#allocation2 + $0xfa8] sm:$0xff]
    %v4330 = vld [vmem:[#allocation2 + $0xfb0] sm:$0xff]
    %v4331 = vld [vmem:[#allocation2 + $0xfb8] sm:$0xff]
    %v4332 = vld [vmem:[#allocation2 + $0xfc0] sm:$0xff]
    %v4333 = vld [vmem:[#allocation2 + $0xfc8] sm:$0xff]
    %v4334 = vld [vmem:[#allocation2 + $0xfd0] sm:$0xff]
    %v4335 = vld [vmem:[#allocation2 + $0xfd8] sm:$0xff]
    %v4336 = vld [vmem:[#allocation2 + $0xfe0] sm:$0xff]
    %v4337 = vld [vmem:[#allocation2 + $0xfe8] sm:$0xff]
    %v4338 = vld [vmem:[#allocation2 + $0xff0] sm:$0xff]
    %v4339 = vld [vmem:[#allocation2 + $0xff8] sm:$0xff]
    %v4340 = vld [vmem:[%s1] sm:$0xff]
    %v4341 = vld [vmem:[%s1 + $0x8] sm:$0xff]
    %v4344 = vunpack.c.l.b16 %v4340
    %v4345 = vunpack.c.h.b16 %v4340
    %v4346 = vunpack.c.l.b16 %v4341
    %v4347 = vunpack.c.h.b16 %v4341
    %v4348 = vpack.c.b16 %v4344, %v4344
    %v4349 = vpack.c.b16 %v4345, %v4345
    %v4350 = vpack.c.b16 %v4346, %v4346
    %v4351 = vpack.c.b16 %v4347, %v4347
    %4356 = vmatprep.subr.bf16.mxu0 %v3829
    %4357 = vmatpush1.bf16.msra.mxu0 %v3828
    %4358 = vmatprep.subr.bf16.mxu0 %v3845
    %4359 = vmatpush1.bf16.msra.mxu0 %v3844
    %4360 = vmatprep.subr.bf16.mxu0 %v3861
    %4361 = vmatpush1.bf16.msra.mxu0 %v3860
    %4362 = vmatprep.subr.bf16.mxu0 %v3877
    %4363 = vmatpush1.bf16.msra.mxu0 %v3876
    %4364 = vmatprep.subr.bf16.mxu0 %v3893
    %4365 = vmatpush1.bf16.msra.mxu0 %v3892
    %4366 = vmatprep.subr.bf16.mxu0 %v3909
    %4367 = vmatpush1.bf16.msra.mxu0 %v3908
    %4368 = vmatprep.subr.bf16.mxu0 %v3925
    %4369 = vmatpush1.bf16.msra.mxu0 %v3924
    %4370 = vmatprep.subr.bf16.mxu0 %v3941
    %4371 = vmatpush1.bf16.msra.mxu0 %v3940
    %4372 = vmatprep.subr.bf16.mxu0 %v3957
    %4373 = vmatpush1.bf16.msra.mxu0 %v3956
    %4374 = vmatprep.subr.bf16.mxu0 %v3973
    %4375 = vmatpush1.bf16.msra.mxu0 %v3972
    %4376 = vmatprep.subr.bf16.mxu0 %v3989
    %4377 = vmatpush1.bf16.msra.mxu0 %v3988
    %4378 = vmatprep.subr.bf16.mxu0 %v4005
    %4379 = vmatpush1.bf16.msra.mxu0 %v4004
    %4380 = vmatprep.subr.bf16.mxu0 %v4021
    %4381 = vmatpush1.bf16.msra.mxu0 %v4020
    %4382 = vmatprep.subr.bf16.mxu0 %v4037
    %4383 = vmatpush1.bf16.msra.mxu0 %v4036
    %4384 = vmatprep.subr.bf16.mxu0 %v4053
    %4385 = vmatpush1.bf16.msra.mxu0 %v4052
    %4386 = vmatprep.subr.bf16.mxu0 %v4069
    %4387 = vmatpush1.bf16.msra.mxu0 %v4068
    %4388 = vmatprep.mubr.bf16.mxu0 %v4349
    %4389 = vmatmul.mubr.bf16.gmra.mrb[0].mxu0 %v4348
    %v4390 = vpop.f32.mrb[0].mxu0
    %v4391 = vadd.f32 0.0, %v4390
    %v4392 = vpop.f32.mrb[0].mxu0
    %v4393 = vadd.f32 0.0, %v4392
    %v4394 = vpop.f32.mrb[0].mxu0
    %v4395 = vpop.f32.mrb[0].mxu0
    %4396 = vdwg.mxu0
    %4397 = vmatprep.subr.bf16.mxu0 %v4085
    %4398 = vmatpush1.bf16.msra.mxu0 %v4084
    %4399 = vmatprep.subr.bf16.mxu0 %v4101
    %4400 = vmatpush1.bf16.msra.mxu0 %v4100
    %4401 = vmatprep.subr.bf16.mxu0 %v4117
    %4402 = vmatpush1.bf16.msra.mxu0 %v4116
    %4403 = vmatprep.subr.bf16.mxu0 %v4133
    %4404 = vmatpush1.bf16.msra.mxu0 %v4132
    %4405 = vmatprep.subr.bf16.mxu0 %v4149
    %4406 = vmatpush1.bf16.msra.mxu0 %v4148
    %4407 = vmatprep.subr.bf16.mxu0 %v4165
    %4408 = vmatpush1.bf16.msra.mxu0 %v4164
    %4409 = vmatprep.subr.bf16.mxu0 %v4181
    %4410 = vmatpush1.bf16.msra.mxu0 %v4180
    %4411 = vmatprep.subr.bf16.mxu0 %v4197
    %4412 = vmatpush1.bf16.msra.mxu0 %v4196
    %4413 = vmatprep.subr.bf16.mxu0 %v4213
    %4414 = vmatpush1.bf16.msra.mxu0 %v4212
    %4415 = vmatprep.subr.bf16.mxu0 %v4229
    %4416 = vmatpush1.bf16.msra.mxu0 %v4228
    %4417 = vmatprep.subr.bf16.mxu0 %v4245
    %4418 = vmatpush1.bf16.msra.mxu0 %v4244
    %4419 = vmatprep.subr.bf16.mxu0 %v4261
    %4420 = vmatpush1.bf16.msra.mxu0 %v4260
    %4421 = vmatprep.subr.bf16.mxu0 %v4277
    %4422 = vmatpush1.bf16.msra.mxu0 %v4276
    %4423 = vmatprep.subr.bf16.mxu0 %v4293
    %4424 = vmatpush1.bf16.msra.mxu0 %v4292
    %4425 = vmatprep.subr.bf16.mxu0 %v4309
    %4426 = vmatpush1.bf16.msra.mxu0 %v4308
    %4427 = vmatprep.subr.bf16.mxu0 %v4325
    %4428 = vmatpush1.bf16.msra.mxu0 %v4324
    %4429 = vmatprep.mubr.bf16.mxu0 %v4351
    %4430 = vmatmul.mubr.bf16.gmra.mrb[0].mxu0 %v4350
    %v4431 = vpop.f32.mrb[0].mxu0
    %v4432 = vadd.f32 %v4391, %v4431
    %v4433 = vpop.f32.mrb[0].mxu0
    %v4434 = vadd.f32 %v4393, %v4433
    %v4435 = vpop.f32.mrb[0].mxu0
    %v4436 = vpop.f32.mrb[0].mxu0
    %4437 = vdwg.mxu0
    %4438 = vmatprep.subr.bf16.mxu0 %v3831
    %4439 = vmatpush1.bf16.msra.mxu0 %v3830
    %4440 = vmatprep.subr.bf16.mxu0 %v3847
    %4441 = vmatpush1.bf16.msra.mxu0 %v3846
    %4442 = vmatprep.subr.bf16.mxu0 %v3863
    %4443 = vmatpush1.bf16.msra.mxu0 %v3862
    %4444 = vmatprep.subr.bf16.mxu0 %v3879
    %4445 = vmatpush1.bf16.msra.mxu0 %v3878
    %4446 = vmatprep.subr.bf16.mxu0 %v3895
    %4447 = vmatpush1.bf16.msra.mxu0 %v3894
    %4448 = vmatprep.subr.bf16.mxu0 %v3911
    %4449 = vmatpush1.bf16.msra.mxu0 %v3910
    %4450 = vmatprep.subr.bf16.mxu0 %v3927
    %4451 = vmatpush1.bf16.msra.mxu0 %v3926
    %4452 = vmatprep.subr.bf16.mxu0 %v3943
    %4453 = vmatpush1.bf16.msra.mxu0 %v3942
    %4454 = vmatprep.subr.bf16.mxu0 %v3959
    %4455 = vmatpush1.bf16.msra.mxu0 %v3958
    %4456 = vmatprep.subr.bf16.mxu0 %v3975
    %4457 = vmatpush1.bf16.msra.mxu0 %v3974
    %4458 = vmatprep.subr.bf16.mxu0 %v3991
    %4459 = vmatpush1.bf16.msra.mxu0 %v3990
    %4460 = vmatprep.subr.bf16.mxu0 %v4007
    %4461 = vmatpush1.bf16.msra.mxu0 %v4006
    %4462 = vmatprep.subr.bf16.mxu0 %v4023
    %4463 = vmatpush1.bf16.msra.mxu0 %v4022
    %4464 = vmatprep.subr.bf16.mxu0 %v4039
    %4465 = vmatpush1.bf16.msra.mxu0 %v4038
    %4466 = vmatprep.subr.bf16.mxu0 %v4055
    %4467 = vmatpush1.bf16.msra.mxu0 %v4054
    %4468 = vmatprep.subr.bf16.mxu0 %v4071
    %4469 = vmatpush1.bf16.msra.mxu0 %v4070
    %4470 = vmatprep.mubr.bf16.mxu0 %v4349
    %4471 = vmatmul.mubr.bf16.gmra.mrb[0].mxu0 %v4348
    %v4472 = vpop.f32.mrb[0].mxu0
    %v4473 = vadd.f32 0.0, %v4472
    %v4474 = vpop.f32.mrb[0].mxu0
    %v4475 = vadd.f32 0.0, %v4474
    %v4476 = vpop.f32.mrb[0].mxu0
    %v4477 = vpop.f32.mrb[0].mxu0
    %4478 = vdwg.mxu0
    %4479 = vmatprep.subr.bf16.mxu0 %v4087
    %4480 = vmatpush1.bf16.msra.mxu0 %v4086
    %4481 = vmatprep.subr.bf16.mxu0 %v4103
    %4482 = vmatpush1.bf16.msra.mxu0 %v4102
    %4483 = vmatprep.subr.bf16.mxu0 %v4119
    %4484 = vmatpush1.bf16.msra.mxu0 %v4118
    %4485 = vmatprep.subr.bf16.mxu0 %v4135
    %4486 = vmatpush1.bf16.msra.mxu0 %v4134
    %4487 = vmatprep.subr.bf16.mxu0 %v4151
    %4488 = vmatpush1.bf16.msra.mxu0 %v4150
    %4489 = vmatprep.subr.bf16.mxu0 %v4167
    %4490 = vmatpush1.bf16.msra.mxu0 %v4166
    %4491 = vmatprep.subr.bf16.mxu0 %v4183
    %4492 = vmatpush1.bf16.msra.mxu0 %v4182
    %4493 = vmatprep.subr.bf16.mxu0 %v4199
    %4494 = vmatpush1.bf16.msra.mxu0 %v4198
    %4495 = vmatprep.subr.bf16.mxu0 %v4215
    %4496 = vmatpush1.bf16.msra.mxu0 %v4214
    %4497 = vmatprep.subr.bf16.mxu0 %v4231
    %4498 = vmatpush1.bf16.msra.mxu0 %v4230
    %4499 = vmatprep.subr.bf16.mxu0 %v4247
    %4500 = vmatpush1.bf16.msra.mxu0 %v4246
    %4501 = vmatprep.subr.bf16.mxu0 %v4263
    %4502 = vmatpush1.bf16.msra.mxu0 %v4262
    %4503 = vmatprep.subr.bf16.mxu0 %v4279
    %4504 = vmatpush1.bf16.msra.mxu0 %v4278
    %4505 = vmatprep.subr.bf16.mxu0 %v4295
    %4506 = vmatpush1.bf16.msra.mxu0 %v4294
    %4507 = vmatprep.subr.bf16.mxu0 %v4311
    %4508 = vmatpush1.bf16.msra.mxu0 %v4310
    %4509 = vmatprep.subr.bf16.mxu0 %v4327
    %4510 = vmatpush1.bf16.msra.mxu0 %v4326
    %4511 = vmatprep.mubr.bf16.mxu0 %v4351
    %4512 = vmatmul.mubr.bf16.gmra.mrb[0].mxu0 %v4350
    %v4513 = vpop.f32.mrb[0].mxu0
    %v4514 = vadd.f32 %v4473, %v4513
    %v4515 = vpop.f32.mrb[0].mxu0
    %v4516 = vadd.f32 %v4475, %v4515
    %v4517 = vpop.f32.mrb[0].mxu0
    %v4518 = vpop.f32.mrb[0].mxu0
    %4519 = vdwg.mxu0
    %4520 = vmatprep.subr.bf16.mxu0 %v3833
    %4521 = vmatpush1.bf16.msra.mxu0 %v3832
    %4522 = vmatprep.subr.bf16.mxu0 %v3849
    %4523 = vmatpush1.bf16.msra.mxu0 %v3848
    %4524 = vmatprep.subr.bf16.mxu0 %v3865
    %4525 = vmatpush1.bf16.msra.mxu0 %v3864
    %4526 = vmatprep.subr.bf16.mxu0 %v3881
    %4527 = vmatpush1.bf16.msra.mxu0 %v3880
    %4528 = vmatprep.subr.bf16.mxu0 %v3897
    %4529 = vmatpush1.bf16.msra.mxu0 %v3896
    %4530 = vmatprep.subr.bf16.mxu0 %v3913
    %4531 = vmatpush1.bf16.msra.mxu0 %v3912
    %4532 = vmatprep.subr.bf16.mxu0 %v3929
    %4533 = vmatpush1.bf16.msra.mxu0 %v3928
    %4534 = vmatprep.subr.bf16.mxu0 %v3945
    %4535 = vmatpush1.bf16.msra.mxu0 %v3944
    %4536 = vmatprep.subr.bf16.mxu0 %v3961
    %4537 = vmatpush1.bf16.msra.mxu0 %v3960
    %4538 = vmatprep.subr.bf16.mxu0 %v3977
    %4539 = vmatpush1.bf16.msra.mxu0 %v3976
    %4540 = vmatprep.subr.bf16.mxu0 %v3993
    %4541 = vmatpush1.bf16.msra.mxu0 %v3992
    %4542 = vmatprep.subr.bf16.mxu0 %v4009
    %4543 = vmatpush1.bf16.msra.mxu0 %v4008
    %4544 = vmatprep.subr.bf16.mxu0 %v4025
    %4545 = vmatpush1.bf16.msra.mxu0 %v4024
    %4546 = vmatprep.subr.bf16.mxu0 %v4041
    %4547 = vmatpush1.bf16.msra.mxu0 %v4040
    %4548 = vmatprep.subr.bf16.mxu0 %v4057
    %4549 = vmatpush1.bf16.msra.mxu0 %v4056
    %4550 = vmatprep.subr.bf16.mxu0 %v4073
    %4551 = vmatpush1.bf16.msra.mxu0 %v4072
    %4552 = vmatprep.mubr.bf16.mxu0 %v4349
    %4553 = vmatmul.mubr.bf16.gmra.mrb[0].mxu0 %v4348
    %v4554 = vpop.f32.mrb[0].mxu0
    %v4555 = vadd.f32 0.0, %v4554
    %v4556 = vpop.f32.mrb[0].mxu0
    %v4557 = vadd.f32 0.0, %v4556
    %v4558 = vpop.f32.mrb[0].mxu0
    %v4559 = vpop.f32.mrb[0].mxu0
    %4560 = vdwg.mxu0
    %4561 = vmatprep.subr.bf16.mxu0 %v4089
    %4562 = vmatpush1.bf16.msra.mxu0 %v4088
    %4563 = vmatprep.subr.bf16.mxu0 %v4105
    %4564 = vmatpush1.bf16.msra.mxu0 %v4104
    %4565 = vmatprep.subr.bf16.mxu0 %v4121
    %4566 = vmatpush1.bf16.msra.mxu0 %v4120
    %4567 = vmatprep.subr.bf16.mxu0 %v4137
    %4568 = vmatpush1.bf16.msra.mxu0 %v4136
    %4569 = vmatprep.subr.bf16.mxu0 %v4153
    %4570 = vmatpush1.bf16.msra.mxu0 %v4152
    %4571 = vmatprep.subr.bf16.mxu0 %v4169
    %4572 = vmatpush1.bf16.msra.mxu0 %v4168
    %4573 = vmatprep.subr.bf16.mxu0 %v4185
    %4574 = vmatpush1.bf16.msra.mxu0 %v4184
    %4575 = vmatprep.subr.bf16.mxu0 %v4201
    %4576 = vmatpush1.bf16.msra.mxu0 %v4200
    %4577 = vmatprep.subr.bf16.mxu0 %v4217
    %4578 = vmatpush1.bf16.msra.mxu0 %v4216
    %4579 = vmatprep.subr.bf16.mxu0 %v4233
    %4580 = vmatpush1.bf16.msra.mxu0 %v4232
    %4581 = vmatprep.subr.bf16.mxu0 %v4249
    %4582 = vmatpush1.bf16.msra.mxu0 %v4248
    %4583 = vmatprep.subr.bf16.mxu0 %v4265
    %4584 = vmatpush1.bf16.msra.mxu0 %v4264
    %4585 = vmatprep.subr.bf16.mxu0 %v4281
    %4586 = vmatpush1.bf16.msra.mxu0 %v4280
    %4587 = vmatprep.subr.bf16.mxu0 %v4297
    %4588 = vmatpush1.bf16.msra.mxu0 %v4296
    %4589 = vmatprep.subr.bf16.mxu0 %v4313
    %4590 = vmatpush1.bf16.msra.mxu0 %v4312
    %4591 = vmatprep.subr.bf16.mxu0 %v4329
    %4592 = vmatpush1.bf16.msra.mxu0 %v4328
    %4593 = vmatprep.mubr.bf16.mxu0 %v4351
    %4594 = vmatmul.mubr.bf16.gmra.mrb[0].mxu0 %v4350
    %v4595 = vpop.f32.mrb[0].mxu0
    %v4596 = vadd.f32 %v4555, %v4595
    %v4597 = vpop.f32.mrb[0].mxu0
    %v4598 = vadd.f32 %v4557, %v4597
    %v4599 = vpop.f32.mrb[0].mxu0
    %v4600 = vpop.f32.mrb[0].mxu0
    %4601 = vdwg.mxu0
    %4602 = vmatprep.subr.bf16.mxu0 %v3835
    %4603 = vmatpush1.bf16.msra.mxu0 %v3834
    %4604 = vmatprep.subr.bf16.mxu0 %v3851
    %4605 = vmatpush1.bf16.msra.mxu0 %v3850
    %4606 = vmatprep.subr.bf16.mxu0 %v3867
    %4607 = vmatpush1.bf16.msra.mxu0 %v3866
    %4608 = vmatprep.subr.bf16.mxu0 %v3883
    %4609 = vmatpush1.bf16.msra.mxu0 %v3882
    %4610 = vmatprep.subr.bf16.mxu0 %v3899
    %4611 = vmatpush1.bf16.msra.mxu0 %v3898
    %4612 = vmatprep.subr.bf16.mxu0 %v3915
    %4613 = vmatpush1.bf16.msra.mxu0 %v3914
    %4614 = vmatprep.subr.bf16.mxu0 %v3931
    %4615 = vmatpush1.bf16.msra.mxu0 %v3930
    %4616 = vmatprep.subr.bf16.mxu0 %v3947
    %4617 = vmatpush1.bf16.msra.mxu0 %v3946
    %4618 = vmatprep.subr.bf16.mxu0 %v3963
    %4619 = vmatpush1.bf16.msra.mxu0 %v3962
    %4620 = vmatprep.subr.bf16.mxu0 %v3979
    %4621 = vmatpush1.bf16.msra.mxu0 %v3978
    %4622 = vmatprep.subr.bf16.mxu0 %v3995
    %4623 = vmatpush1.bf16.msra.mxu0 %v3994
    %4624 = vmatprep.subr.bf16.mxu0 %v4011
    %4625 = vmatpush1.bf16.msra.mxu0 %v4010
    %4626 = vmatprep.subr.bf16.mxu0 %v4027
    %4627 = vmatpush1.bf16.msra.mxu0 %v4026
    %4628 = vmatprep.subr.bf16.mxu0 %v4043
    %4629 = vmatpush1.bf16.msra.mxu0 %v4042
    %4630 = vmatprep.subr.bf16.mxu0 %v4059
    %4631 = vmatpush1.bf16.msra.mxu0 %v4058
    %4632 = vmatprep.subr.bf16.mxu0 %v4075
    %4633 = vmatpush1.bf16.msra.mxu0 %v4074
    %4634 = vmatprep.mubr.bf16.mxu0 %v4349
    %4635 = vmatmul.mubr.bf16.gmra.mrb[0].mxu0 %v4348
    %v4636 = vpop.f32.mrb[0].mxu0
    %v4637 = vadd.f32 0.0, %v4636
    %v4638 = vpop.f32.mrb[0].mxu0
    %v4639 = vadd.f32 0.0, %v4638
    %v4640 = vpop.f32.mrb[0].mxu0
    %v4641 = vpop.f32.mrb[0].mxu0
    %4642 = vdwg.mxu0
    %4643 = vmatprep.subr.bf16.mxu0 %v4091
    %4644 = vmatpush1.bf16.msra.mxu0 %v4090
    %4645 = vmatprep.subr.bf16.mxu0 %v4107
    %4646 = vmatpush1.bf16.msra.mxu0 %v4106
    %4647 = vmatprep.subr.bf16.mxu0 %v4123
    %4648 = vmatpush1.bf16.msra.mxu0 %v4122
    %4649 = vmatprep.subr.bf16.mxu0 %v4139
    %4650 = vmatpush1.bf16.msra.mxu0 %v4138
    %4651 = vmatprep.subr.bf16.mxu0 %v4155
    %4652 = vmatpush1.bf16.msra.mxu0 %v4154
    %4653 = vmatprep.subr.bf16.mxu0 %v4171
    %4654 = vmatpush1.bf16.msra.mxu0 %v4170
    %4655 = vmatprep.subr.bf16.mxu0 %v4187
    %4656 = vmatpush1.bf16.msra.mxu0 %v4186
    %4657 = vmatprep.subr.bf16.mxu0 %v4203
    %4658 = vmatpush1.bf16.msra.mxu0 %v4202
    %4659 = vmatprep.subr.bf16.mxu0 %v4219
    %4660 = vmatpush1.bf16.msra.mxu0 %v4218
    %4661 = vmatprep.subr.bf16.mxu0 %v4235
    %4662 = vmatpush1.bf16.msra.mxu0 %v4234
    %4663 = vmatprep.subr.bf16.mxu0 %v4251
    %4664 = vmatpush1.bf16.msra.mxu0 %v4250
    %4665 = vmatprep.subr.bf16.mxu0 %v4267
    %4666 = vmatpush1.bf16.msra.mxu0 %v4266
    %4667 = vmatprep.subr.bf16.mxu0 %v4283
    %4668 = vmatpush1.bf16.msra.mxu0 %v4282
    %4669 = vmatprep.subr.bf16.mxu0 %v4299
    %4670 = vmatpush1.bf16.msra.mxu0 %v4298
    %4671 = vmatprep.subr.bf16.mxu0 %v4315
    %4672 = vmatpush1.bf16.msra.mxu0 %v4314
    %4673 = vmatprep.subr.bf16.mxu0 %v4331
    %4674 = vmatpush1.bf16.msra.mxu0 %v4330
    %4675 = vmatprep.mubr.bf16.mxu0 %v4351
    %4676 = vmatmul.mubr.bf16.gmra.mrb[0].mxu0 %v4350
    %v4677 = vpop.f32.mrb[0].mxu0
    %v4678 = vadd.f32 %v4637, %v4677
    %v4679 = vpop.f32.mrb[0].mxu0
    %v4680 = vadd.f32 %v4639, %v4679
    %v4681 = vpop.f32.mrb[0].mxu0
    %v4682 = vpop.f32.mrb[0].mxu0
    %4683 = vdwg.mxu0
    %4684 = vmatprep.subr.bf16.mxu0 %v3837
    %4685 = vmatpush1.bf16.msra.mxu0 %v3836
    %4686 = vmatprep.subr.bf16.mxu0 %v3853
    %4687 = vmatpush1.bf16.msra.mxu0 %v3852
    %4688 = vmatprep.subr.bf16.mxu0 %v3869
    %4689 = vmatpush1.bf16.msra.mxu0 %v3868
    %4690 = vmatprep.subr.bf16.mxu0 %v3885
    %4691 = vmatpush1.bf16.msra.mxu0 %v3884
    %4692 = vmatprep.subr.bf16.mxu0 %v3901
    %4693 = vmatpush1.bf16.msra.mxu0 %v3900
    %4694 = vmatprep.subr.bf16.mxu0 %v3917
    %4695 = vmatpush1.bf16.msra.mxu0 %v3916
    %4696 = vmatprep.subr.bf16.mxu0 %v3933
    %4697 = vmatpush1.bf16.msra.mxu0 %v3932
    %4698 = vmatprep.subr.bf16.mxu0 %v3949
    %4699 = vmatpush1.bf16.msra.mxu0 %v3948
    %4700 = vmatprep.subr.bf16.mxu0 %v3965
    %4701 = vmatpush1.bf16.msra.mxu0 %v3964
    %4702 = vmatprep.subr.bf16.mxu0 %v3981
    %4703 = vmatpush1.bf16.msra.mxu0 %v3980
    %4704 = vmatprep.subr.bf16.mxu0 %v3997
    %4705 = vmatpush1.bf16.msra.mxu0 %v3996
    %4706 = vmatprep.subr.bf16.mxu0 %v4013
    %4707 = vmatpush1.bf16.msra.mxu0 %v4012
    %4708 = vmatprep.subr.bf16.mxu0 %v4029
    %4709 = vmatpush1.bf16.msra.mxu0 %v4028
    %4710 = vmatprep.subr.bf16.mxu0 %v4045
    %4711 = vmatpush1.bf16.msra.mxu0 %v4044
    %4712 = vmatprep.subr.bf16.mxu0 %v4061
    %4713 = vmatpush1.bf16.msra.mxu0 %v4060
    %4714 = vmatprep.subr.bf16.mxu0 %v4077
    %4715 = vmatpush1.bf16.msra.mxu0 %v4076
    %4716 = vmatprep.mubr.bf16.mxu0 %v4349
    %4717 = vmatmul.mubr.bf16.gmra.mrb[0].mxu0 %v4348
    %v4718 = vpop.f32.mrb[0].mxu0
    %v4719 = vadd.f32 0.0, %v4718
    %v4720 = vpop.f32.mrb[0].mxu0
    %v4721 = vadd.f32 0.0, %v4720
    %v4722 = vpop.f32.mrb[0].mxu0
    %v4723 = vpop.f32.mrb[0].mxu0
    %4724 = vdwg.mxu0
    %4725 = vmatprep.subr.bf16.mxu0 %v4093
    %4726 = vmatpush1.bf16.msra.mxu0 %v4092
    %4727 = vmatprep.subr.bf16.mxu0 %v4109
    %4728 = vmatpush1.bf16.msra.mxu0 %v4108
    %4729 = vmatprep.subr.bf16.mxu0 %v4125
    %4730 = vmatpush1.bf16.msra.mxu0 %v4124
    %4731 = vmatprep.subr.bf16.mxu0 %v4141
    %4732 = vmatpush1.bf16.msra.mxu0 %v4140
    %4733 = vmatprep.subr.bf16.mxu0 %v4157
    %4734 = vmatpush1.bf16.msra.mxu0 %v4156
    %4735 = vmatprep.subr.bf16.mxu0 %v4173
    %4736 = vmatpush1.bf16.msra.mxu0 %v4172
    %4737 = vmatprep.subr.bf16.mxu0 %v4189
    %4738 = vmatpush1.bf16.msra.mxu0 %v4188
    %4739 = vmatprep.subr.bf16.mxu0 %v4205
    %4740 = vmatpush1.bf16.msra.mxu0 %v4204
    %4741 = vmatprep.subr.bf16.mxu0 %v4221
    %4742 = vmatpush1.bf16.msra.mxu0 %v4220
    %4743 = vmatprep.subr.bf16.mxu0 %v4237
    %4744 = vmatpush1.bf16.msra.mxu0 %v4236
    %4745 = vmatprep.subr.bf16.mxu0 %v4253
    %4746 = vmatpush1.bf16.msra.mxu0 %v4252
    %4747 = vmatprep.subr.bf16.mxu0 %v4269
    %4748 = vmatpush1.bf16.msra.mxu0 %v4268
    %4749 = vmatprep.subr.bf16.mxu0 %v4285
    %4750 = vmatpush1.bf16.msra.mxu0 %v4284
    %4751 = vmatprep.subr.bf16.mxu0 %v4301
    %4752 = vmatpush1.bf16.msra.mxu0 %v4300
    %4753 = vmatprep.subr.bf16.mxu0 %v4317
    %4754 = vmatpush1.bf16.msra.mxu0 %v4316
    %4755 = vmatprep.subr.bf16.mxu0 %v4333
    %4756 = vmatpush1.bf16.msra.mxu0 %v4332
    %4757 = vmatprep.mubr.bf16.mxu0 %v4351
    %4758 = vmatmul.mubr.bf16.gmra.mrb[0].mxu0 %v4350
    %v4759 = vpop.f32.mrb[0].mxu0
    %v4760 = vadd.f32 %v4719, %v4759
    %v4761 = vpop.f32.mrb[0].mxu0
    %v4762 = vadd.f32 %v4721, %v4761
    %v4763 = vpop.f32.mrb[0].mxu0
    %v4764 = vpop.f32.mrb[0].mxu0
    %4765 = vdwg.mxu0
    %4766 = vmatprep.subr.bf16.mxu0 %v3839
    %4767 = vmatpush1.bf16.msra.mxu0 %v3838
    %4768 = vmatprep.subr.bf16.mxu0 %v3855
    %4769 = vmatpush1.bf16.msra.mxu0 %v3854
    %4770 = vmatprep.subr.bf16.mxu0 %v3871
    %4771 = vmatpush1.bf16.msra.mxu0 %v3870
    %4772 = vmatprep.subr.bf16.mxu0 %v3887
    %4773 = vmatpush1.bf16.msra.mxu0 %v3886
    %4774 = vmatprep.subr.bf16.mxu0 %v3903
    %4775 = vmatpush1.bf16.msra.mxu0 %v3902
    %4776 = vmatprep.subr.bf16.mxu0 %v3919
    %4777 = vmatpush1.bf16.msra.mxu0 %v3918
    %4778 = vmatprep.subr.bf16.mxu0 %v3935
    %4779 = vmatpush1.bf16.msra.mxu0 %v3934
    %4780 = vmatprep.subr.bf16.mxu0 %v3951
    %4781 = vmatpush1.bf16.msra.mxu0 %v3950
    %4782 = vmatprep.subr.bf16.mxu0 %v3967
    %4783 = vmatpush1.bf16.msra.mxu0 %v3966
    %4784 = vmatprep.subr.bf16.mxu0 %v3983
    %4785 = vmatpush1.bf16.msra.mxu0 %v3982
    %4786 = vmatprep.subr.bf16.mxu0 %v3999
    %4787 = vmatpush1.bf16.msra.mxu0 %v3998
    %4788 = vmatprep.subr.bf16.mxu0 %v4015
    %4789 = vmatpush1.bf16.msra.mxu0 %v4014
    %4790 = vmatprep.subr.bf16.mxu0 %v4031
    %4791 = vmatpush1.bf16.msra.mxu0 %v4030
    %4792 = vmatprep.subr.bf16.mxu0 %v4047
    %4793 = vmatpush1.bf16.msra.mxu0 %v4046
    %4794 = vmatprep.subr.bf16.mxu0 %v4063
    %4795 = vmatpush1.bf16.msra.mxu0 %v4062
    %4796 = vmatprep.subr.bf16.mxu0 %v4079
    %4797 = vmatpush1.bf16.msra.mxu0 %v4078
    %4798 = vmatprep.mubr.bf16.mxu0 %v4349
    %4799 = vmatmul.mubr.bf16.gmra.mrb[0].mxu0 %v4348
    %v4800 = vpop.f32.mrb[0].mxu0
    %v4801 = vadd.f32 0.0, %v4800
    %v4802 = vpop.f32.mrb[0].mxu0
    %v4803 = vadd.f32 0.0, %v4802
    %v4804 = vpop.f32.mrb[0].mxu0
    %v4805 = vpop.f32.mrb[0].mxu0
    %4806 = vdwg.mxu0
    %4807 = vmatprep.subr.bf16.mxu0 %v4095
    %4808 = vmatpush1.bf16.msra.mxu0 %v4094
    %4809 = vmatprep.subr.bf16.mxu0 %v4111
    %4810 = vmatpush1.bf16.msra.mxu0 %v4110
    %4811 = vmatprep.subr.bf16.mxu0 %v4127
    %4812 = vmatpush1.bf16.msra.mxu0 %v4126
    %4813 = vmatprep.subr.bf16.mxu0 %v4143
    %4814 = vmatpush1.bf16.msra.mxu0 %v4142
    %4815 = vmatprep.subr.bf16.mxu0 %v4159
    %4816 = vmatpush1.bf16.msra.mxu0 %v4158
    %4817 = vmatprep.subr.bf16.mxu0 %v4175
    %4818 = vmatpush1.bf16.msra.mxu0 %v4174
    %4819 = vmatprep.subr.bf16.mxu0 %v4191
    %4820 = vmatpush1.bf16.msra.mxu0 %v4190
    %4821 = vmatprep.subr.bf16.mxu0 %v4207
    %4822 = vmatpush1.bf16.msra.mxu0 %v4206
    %4823 = vmatprep.subr.bf16.mxu0 %v4223
    %4824 = vmatpush1.bf16.msra.mxu0 %v4222
    %4825 = vmatprep.subr.bf16.mxu0 %v4239
    %4826 = vmatpush1.bf16.msra.mxu0 %v4238
    %4827 = vmatprep.subr.bf16.mxu0 %v4255
    %4828 = vmatpush1.bf16.msra.mxu0 %v4254
    %4829 = vmatprep.subr.bf16.mxu0 %v4271
    %4830 = vmatpush1.bf16.msra.mxu0 %v4270
    %4831 = vmatprep.subr.bf16.mxu0 %v4287
    %4832 = vmatpush1.bf16.msra.mxu0 %v4286
    %4833 = vmatprep.subr.bf16.mxu0 %v4303
    %4834 = vmatpush1.bf16.msra.mxu0 %v4302
    %4835 = vmatprep.subr.bf16.mxu0 %v4319
    %4836 = vmatpush1.bf16.msra.mxu0 %v4318
    %4837 = vmatprep.subr.bf16.mxu0 %v4335
    %4838 = vmatpush1.bf16.msra.mxu0 %v4334
    %4839 = vmatprep.mubr.bf16.mxu0 %v4351
    %4840 = vmatmul.mubr.bf16.gmra.mrb[0].mxu0 %v4350
    %v4841 = vpop.f32.mrb[0].mxu0
    %v4842 = vadd.f32 %v4801, %v4841
    %v4843 = vpop.f32.mrb[0].mxu0
    %v4844 = vadd.f32 %v4803, %v4843
    %v4845 = vpop.f32.mrb[0].mxu0
    %v4846 = vpop.f32.mrb[0].mxu0
    %4847 = vdwg.mxu0
    %4848 = vmatprep.subr.bf16.mxu0 %v3841
    %4849 = vmatpush1.bf16.msra.mxu0 %v3840
    %4850 = vmatprep.subr.bf16.mxu0 %v3857
    %4851 = vmatpush1.bf16.msra.mxu0 %v3856
    %4852 = vmatprep.subr.bf16.mxu0 %v3873
    %4853 = vmatpush1.bf16.msra.mxu0 %v3872
    %4854 = vmatprep.subr.bf16.mxu0 %v3889
    %4855 = vmatpush1.bf16.msra.mxu0 %v3888
    %4856 = vmatprep.subr.bf16.mxu0 %v3905
    %4857 = vmatpush1.bf16.msra.mxu0 %v3904
    %4858 = vmatprep.subr.bf16.mxu0 %v3921
    %4859 = vmatpush1.bf16.msra.mxu0 %v3920
    %4860 = vmatprep.subr.bf16.mxu0 %v3937
    %4861 = vmatpush1.bf16.msra.mxu0 %v3936
    %4862 = vmatprep.subr.bf16.mxu0 %v3953
    %4863 = vmatpush1.bf16.msra.mxu0 %v3952
    %4864 = vmatprep.subr.bf16.mxu0 %v3969
    %4865 = vmatpush1.bf16.msra.mxu0 %v3968
    %4866 = vmatprep.subr.bf16.mxu0 %v3985
    %4867 = vmatpush1.bf16.msra.mxu0 %v3984
    %4868 = vmatprep.subr.bf16.mxu0 %v4001
    %4869 = vmatpush1.bf16.msra.mxu0 %v4000
    %4870 = vmatprep.subr.bf16.mxu0 %v4017
    %4871 = vmatpush1.bf16.msra.mxu0 %v4016
    %4872 = vmatprep.subr.bf16.mxu0 %v4033
    %4873 = vmatpush1.bf16.msra.mxu0 %v4032
    %4874 = vmatprep.subr.bf16.mxu0 %v4049
    %4875 = vmatpush1.bf16.msra.mxu0 %v4048
    %4876 = vmatprep.subr.bf16.mxu0 %v4065
    %4877 = vmatpush1.bf16.msra.mxu0 %v4064
    %4878 = vmatprep.subr.bf16.mxu0 %v4081
    %4879 = vmatpush1.bf16.msra.mxu0 %v4080
    %4880 = vmatprep.mubr.bf16.mxu0 %v4349
    %4881 = vmatmul.mubr.bf16.gmra.mrb[0].mxu0 %v4348
    %v4882 = vpop.f32.mrb[0].mxu0
    %v4883 = vadd.f32 0.0, %v4882
    %v4884 = vpop.f32.mrb[0].mxu0
    %v4885 = vadd.f32 0.0, %v4884
    %v4886 = vpop.f32.mrb[0].mxu0
    %v4887 = vpop.f32.mrb[0].mxu0
    %4888 = vdwg.mxu0
    %4889 = vmatprep.subr.bf16.mxu0 %v4097
    %4890 = vmatpush1.bf16.msra.mxu0 %v4096
    %4891 = vmatprep.subr.bf16.mxu0 %v4113
    %4892 = vmatpush1.bf16.msra.mxu0 %v4112
    %4893 = vmatprep.subr.bf16.mxu0 %v4129
    %4894 = vmatpush1.bf16.msra.mxu0 %v4128
    %4895 = vmatprep.subr.bf16.mxu0 %v4145
    %4896 = vmatpush1.bf16.msra.mxu0 %v4144
    %4897 = vmatprep.subr.bf16.mxu0 %v4161
    %4898 = vmatpush1.bf16.msra.mxu0 %v4160
    %4899 = vmatprep.subr.bf16.mxu0 %v4177
    %4900 = vmatpush1.bf16.msra.mxu0 %v4176
    %4901 = vmatprep.subr.bf16.mxu0 %v4193
    %4902 = vmatpush1.bf16.msra.mxu0 %v4192
    %4903 = vmatprep.subr.bf16.mxu0 %v4209
    %4904 = vmatpush1.bf16.msra.mxu0 %v4208
    %4905 = vmatprep.subr.bf16.mxu0 %v4225
    %4906 = vmatpush1.bf16.msra.mxu0 %v4224
    %4907 = vmatprep.subr.bf16.mxu0 %v4241
    %4908 = vmatpush1.bf16.msra.mxu0 %v4240
    %4909 = vmatprep.subr.bf16.mxu0 %v4257
    %4910 = vmatpush1.bf16.msra.mxu0 %v4256
    %4911 = vmatprep.subr.bf16.mxu0 %v4273
    %4912 = vmatpush1.bf16.msra.mxu0 %v4272
    %4913 = vmatprep.subr.bf16.mxu0 %v4289
    %4914 = vmatpush1.bf16.msra.mxu0 %v4288
    %4915 = vmatprep.subr.bf16.mxu0 %v4305
    %4916 = vmatpush1.bf16.msra.mxu0 %v4304
    %4917 = vmatprep.subr.bf16.mxu0 %v4321
    %4918 = vmatpush1.bf16.msra.mxu0 %v4320
    %4919 = vmatprep.subr.bf16.mxu0 %v4337
    %4920 = vmatpush1.bf16.msra.mxu0 %v4336
    %4921 = vmatprep.mubr.bf16.mxu0 %v4351
    %4922 = vmatmul.mubr.bf16.gmra.mrb[0].mxu0 %v4350
    %v4923 = vpop.f32.mrb[0].mxu0
    %v4924 = vadd.f32 %v4883, %v4923
    %v4925 = vpop.f32.mrb[0].mxu0
    %v4926 = vadd.f32 %v4885, %v4925
    %v4927 = vpop.f32.mrb[0].mxu0
    %v4928 = vpop.f32.mrb[0].mxu0
    %4929 = vdwg.mxu0
    %4930 = vmatprep.subr.bf16.mxu0 %v3843
    %4931 = vmatpush1.bf16.msra.mxu0 %v3842
    %4932 = vmatprep.subr.bf16.mxu0 %v3859
    %4933 = vmatpush1.bf16.msra.mxu0 %v3858
    %4934 = vmatprep.subr.bf16.mxu0 %v3875
    %4935 = vmatpush1.bf16.msra.mxu0 %v3874
    %4936 = vmatprep.subr.bf16.mxu0 %v3891
    %4937 = vmatpush1.bf16.msra.mxu0 %v3890
    %4938 = vmatprep.subr.bf16.mxu0 %v3907
    %4939 = vmatpush1.bf16.msra.mxu0 %v3906
    %4940 = vmatprep.subr.bf16.mxu0 %v3923
    %4941 = vmatpush1.bf16.msra.mxu0 %v3922
    %4942 = vmatprep.subr.bf16.mxu0 %v3939
    %4943 = vmatpush1.bf16.msra.mxu0 %v3938
    %4944 = vmatprep.subr.bf16.mxu0 %v3955
    %4945 = vmatpush1.bf16.msra.mxu0 %v3954
    %4946 = vmatprep.subr.bf16.mxu0 %v3971
    %4947 = vmatpush1.bf16.msra.mxu0 %v3970
    %4948 = vmatprep.subr.bf16.mxu0 %v3987
    %4949 = vmatpush1.bf16.msra.mxu0 %v3986
    %4950 = vmatprep.subr.bf16.mxu0 %v4003
    %4951 = vmatpush1.bf16.msra.mxu0 %v4002
    %4952 = vmatprep.subr.bf16.mxu0 %v4019
    %4953 = vmatpush1.bf16.msra.mxu0 %v4018
    %4954 = vmatprep.subr.bf16.mxu0 %v4035
    %4955 = vmatpush1.bf16.msra.mxu0 %v4034
    %4956 = vmatprep.subr.bf16.mxu0 %v4051
    %4957 = vmatpush1.bf16.msra.mxu0 %v4050
    %4958 = vmatprep.subr.bf16.mxu0 %v4067
    %4959 = vmatpush1.bf16.msra.mxu0 %v4066
    %4960 = vmatprep.subr.bf16.mxu0 %v4083
    %4961 = vmatpush1.bf16.msra.mxu0 %v4082
    %4962 = vmatprep.mubr.bf16.mxu0 %v4349
    %4963 = vmatmul.mubr.bf16.gmra.mrb[0].mxu0 %v4348
    %v4964 = vpop.f32.mrb[0].mxu0
    %v4965 = vadd.f32 0.0, %v4964
    %v4966 = vpop.f32.mrb[0].mxu0
    %v4967 = vadd.f32 0.0, %v4966
    %v4968 = vpop.f32.mrb[0].mxu0
    %v4969 = vpop.f32.mrb[0].mxu0
    %4970 = vdwg.mxu0
    %4971 = vmatprep.subr.bf16.mxu0 %v4099
    %4972 = vmatpush1.bf16.msra.mxu0 %v4098
    %4973 = vmatprep.subr.bf16.mxu0 %v4115
    %4974 = vmatpush1.bf16.msra.mxu0 %v4114
    %4975 = vmatprep.subr.bf16.mxu0 %v4131
    %4976 = vmatpush1.bf16.msra.mxu0 %v4130
    %4977 = vmatprep.subr.bf16.mxu0 %v4147
    %4978 = vmatpush1.bf16.msra.mxu0 %v4146
    %4979 = vmatprep.subr.bf16.mxu0 %v4163
    %4980 = vmatpush1.bf16.msra.mxu0 %v4162
    %4981 = vmatprep.subr.bf16.mxu0 %v4179
    %4982 = vmatpush1.bf16.msra.mxu0 %v4178
    %4983 = vmatprep.subr.bf16.mxu0 %v4195
    %4984 = vmatpush1.bf16.msra.mxu0 %v4194
    %4985 = vmatprep.subr.bf16.mxu0 %v4211
    %4986 = vmatpush1.bf16.msra.mxu0 %v4210
    %4987 = vmatprep.subr.bf16.mxu0 %v4227
    %4988 = vmatpush1.bf16.msra.mxu0 %v4226
    %4989 = vmatprep.subr.bf16.mxu0 %v4243
    %4990 = vmatpush1.bf16.msra.mxu0 %v4242
    %4991 = vmatprep.subr.bf16.mxu0 %v4259
    %4992 = vmatpush1.bf16.msra.mxu0 %v4258
    %4993 = vmatprep.subr.bf16.mxu0 %v4275
    %4994 = vmatpush1.bf16.msra.mxu0 %v4274
    %4995 = vmatprep.subr.bf16.mxu0 %v4291
    %4996 = vmatpush1.bf16.msra.mxu0 %v4290
    %4997 = vmatprep.subr.bf16.mxu0 %v4307
    %4998 = vmatpush1.bf16.msra.mxu0 %v4306
    %4999 = vmatprep.subr.bf16.mxu0 %v4323
    %5000 = vmatpush1.bf16.msra.mxu0 %v4322
    %5001 = vmatprep.subr.bf16.mxu0 %v4339
    %5002 = vmatpush1.bf16.msra.mxu0 %v4338
    %5003 = vmatprep.mubr.bf16.mxu0 %v4351
    %5004 = vmatmul.mubr.bf16.gmra.mrb[0].mxu0 %v4350
    %v5005 = vpop.f32.mrb[0].mxu0
    %v5006 = vadd.f32 %v4965, %v5005
    %v5007 = vpop.f32.mrb[0].mxu0
    %v5008 = vadd.f32 %v4967, %v5007
    %v5009 = vpop.f32.mrb[0].mxu0
    %v5010 = vpop.f32.mrb[0].mxu0
    %5011 = vdwg.mxu0
    %v5012 = vld [vmem:[#allocation7] sm:$0xff]
    %v5013 = vld [vmem:[#allocation7 + $0x8] sm:$0xff]
    %v5016 = vlaneseq
    %v5017 = vshrl.u32 %v5016, 7
    %v5018 = vsub.s32 0, %v5017
    %v5019 = vrot.slane %v5012, %v5018
    %v5020 = vlaneseq
    %v5021 = vshrl.u32 %v5020, 7
    %v5022 = vsub.s32 1, %v5021
    %v5023 = vrot.slane %v5012, %v5022
    %v5024 = vlaneseq
    %v5025 = vshrl.u32 %v5024, 7
    %v5026 = vsub.s32 2, %v5025
    %v5027 = vrot.slane %v5012, %v5026
    %v5028 = vlaneseq
    %v5029 = vshrl.u32 %v5028, 7
    %v5030 = vsub.s32 3, %v5029
    %v5031 = vrot.slane %v5012, %v5030
    %v5032 = vlaneseq
    %v5033 = vshrl.u32 %v5032, 7
    %v5034 = vsub.s32 0, %v5033
    %v5035 = vrot.slane %v5013, %v5034
    %v5036 = vlaneseq
    %v5037 = vshrl.u32 %v5036, 7
    %v5038 = vsub.s32 1, %v5037
    %v5039 = vrot.slane %v5013, %v5038
    %v5040 = vlaneseq
    %v5041 = vshrl.u32 %v5040, 7
    %v5042 = vsub.s32 2, %v5041
    %v5043 = vrot.slane %v5013, %v5042
    %v5044 = vlaneseq
    %v5045 = vshrl.u32 %v5044, 7
    %v5046 = vsub.s32 3, %v5045
    %v5047 = vrot.slane %v5013, %v5046
    %v5048 = vlaneseq
    %v5049 = vshrl.u32 %v5048, 7
    %v5050 = vsub.s32 4, %v5049
    %v5051 = vrot.slane %v5013, %v5050
    %v5052 = vlaneseq
    %v5053 = vshrl.u32 %v5052, 7
    %v5054 = vsub.s32 5, %v5053
    %v5055 = vrot.slane %v5013, %v5054
    %v5056 = vlaneseq
    %v5057 = vshrl.u32 %v5056, 7
    %v5058 = vsub.s32 6, %v5057
    %v5059 = vrot.slane %v5013, %v5058
    %v5060 = vlaneseq
    %v5061 = vshrl.u32 %v5060, 7
    %v5062 = vsub.s32 7, %v5061
    %v5063 = vrot.slane %v5013, %v5062
    %v5076 = vadd.f32 %v3244, %v5019
    %v5077 = vadd.f32 %v3246, %v5023
    %v5078 = vadd.f32 %v3326, %v5027
    %v5079 = vadd.f32 %v3328, %v5031
    %v5080 = vadd.f32 %v3572, %v5035
    %v5081 = vadd.f32 %v3574, %v5039
    %v5082 = vadd.f32 %v3654, %v5043
    %v5083 = vadd.f32 %v3656, %v5047
    %v5084 = vadd.f32 %v3736, %v5051
    %v5085 = vadd.f32 %v3738, %v5055
    %v5086 = vadd.f32 %v3818, %v5059
    %v5087 = vadd.f32 %v3820, %v5063
    %v5088 = vmul.f32 %v5076, 0.5
    %v5089 = vmul.f32 %v5077, 0.5
    %v5090 = vmul.f32 %v5078, 0.5
    %v5091 = vmul.f32 %v5079, 0.5
    %v5092 = vtanh.pop %v5088
    %v5093 = vtanh.pop %v5089
    %v5094 = vtanh.pop %v5090
    %v5095 = vtanh.pop %v5091
    %v5096 = vmul.f32 %v5092, 0.5
    %v5097 = vmul.f32 %v5093, 0.5
    %v5098 = vmul.f32 %v5094, 0.5
    %v5099 = vmul.f32 %v5095, 0.5
    %v5100 = vadd.f32 %v5096, 0.5
    %v5101 = vadd.f32 %v5097, 0.5
    %v5102 = vadd.f32 %v5098, 0.5
    %v5103 = vadd.f32 %v5099, 0.5
    %v5104 = vtanh.pop %v5080
    %v5105 = vtanh.pop %v5081
    %v5106 = vtanh.pop %v5082
    %v5107 = vtanh.pop %v5083
    %v5108 = vmul.f32 %v5084, 0.5
    %v5109 = vmul.f32 %v5085, 0.5
    %v5110 = vmul.f32 %v5086, 0.5
    %v5111 = vmul.f32 %v5087, 0.5
    %v5112 = vtanh.pop %v5108
    %v5113 = vtanh.pop %v5109
    %v5114 = vtanh.pop %v5110
    %v5115 = vtanh.pop %v5111
    %v5116 = vmul.f32 %v5112, 0.5
    %v5117 = vmul.f32 %v5113, 0.5
    %v5118 = vmul.f32 %v5114, 0.5
    %v5119 = vmul.f32 %v5115, 0.5
    %v5120 = vadd.f32 %v5116, 0.5
    %v5121 = vadd.f32 %v5117, 0.5
    %v5122 = vadd.f32 %v5118, 0.5
    %v5123 = vadd.f32 %v5119, 0.5
    %v5124 = vmul.f32 %v5100, %v5104
    %v5125 = vmul.f32 %v5101, %v5105
    %v5126 = vmul.f32 %v5102, %v5106
    %v5127 = vmul.f32 %v5103, %v5107
    %v5128 = vtanh.pop %v5124
    %v5129 = vtanh.pop %v5125
    %v5130 = vtanh.pop %v5126
    %v5131 = vtanh.pop %v5127
    %v5132 = vmul.f32 %v5120, %v5128
    %v5133 = vmul.f32 %v5121, %v5129
    %v5134 = vmul.f32 %v5122, %v5130
    %v5135 = vmul.f32 %v5123, %v5131
    %v5152 = vrot.slane %v4432, 7
    %v5153 = vrot.slane %v4434, 7
    %v5154 = vrot.slane %v4514, 7
    %v5155 = vrot.slane %v4516, 7
    %v5156 = vrot.slane %v4596, 7
    %v5157 = vrot.slane %v4598, 7
    %v5158 = vrot.slane %v4678, 7
    %v5159 = vrot.slane %v4680, 7
    %v5160 = vrot.slane %v4760, 7
    %v5161 = vrot.slane %v4762, 7
    %v5162 = vrot.slane %v4842, 7
    %v5163 = vrot.slane %v4844, 7
    %v5164 = vrot.slane %v4924, 7
    %v5165 = vrot.slane %v4926, 7
    %v5166 = vrot.slane %v5006, 7
    %v5167 = vrot.slane %v5008, 7
    %v5184 = vadd.f32 %v3244, %v5152
    %v5185 = vadd.f32 %v3246, %v5153
    %v5186 = vadd.f32 %v3326, %v5154
    %v5187 = vadd.f32 %v3328, %v5155
    %v5188 = vadd.f32 %v3408, %v5156
    %v5189 = vadd.f32 %v3410, %v5157
    %v5190 = vadd.f32 %v3490, %v5158
    %v5191 = vadd.f32 %v3492, %v5159
    %v5192 = vadd.f32 %v3572, %v5160
    %v5193 = vadd.f32 %v3574, %v5161
    %v5194 = vadd.f32 %v3654, %v5162
    %v5195 = vadd.f32 %v3656, %v5163
    %v5196 = vadd.f32 %v3736, %v5164
    %v5197 = vadd.f32 %v3738, %v5165
    %v5198 = vadd.f32 %v3818, %v5166
    %v5199 = vadd.f32 %v3820, %v5167
    %v5200 = vlaneseq
    %v5201 = vshrl.u32 %v5200, 7
    %v5202 = vsub.s32 4, %v5201
    %v5203 = vrot.slane %v5012, %v5202
    %v5204 = vlaneseq
    %v5205 = vshrl.u32 %v5204, 7
    %v5206 = vsub.s32 5, %v5205
    %v5207 = vrot.slane %v5012, %v5206
    %v5208 = vlaneseq
    %v5209 = vshrl.u32 %v5208, 7
    %v5210 = vsub.s32 6, %v5209
    %v5211 = vrot.slane %v5012, %v5210
    %v5212 = vlaneseq
    %v5213 = vshrl.u32 %v5212, 7
    %v5214 = vsub.s32 7, %v5213
    %v5215 = vrot.slane %v5012, %v5214
    %v5220 = vadd.f32 %v5184, %v5019
    %v5221 = vadd.f32 %v5185, %v5023
    %v5222 = vadd.f32 %v5186, %v5027
    %v5223 = vadd.f32 %v5187, %v5031
    %v5224 = vadd.f32 %v5188, %v5203
    %v5225 = vadd.f32 %v5189, %v5207
    %v5226 = vadd.f32 %v5190, %v5211
    %v5227 = vadd.f32 %v5191, %v5215
    %v5228 = vadd.f32 %v5192, %v5035
    %v5229 = vadd.f32 %v5193, %v5039
    %v5230 = vadd.f32 %v5194, %v5043
    %v5231 = vadd.f32 %v5195, %v5047
    %v5232 = vadd.f32 %v5196, %v5051
    %v5233 = vadd.f32 %v5197, %v5055
    %v5234 = vadd.f32 %v5198, %v5059
    %v5235 = vadd.f32 %v5199, %v5063
    %v5236 = vpack.c.bf16 %v5132, %v5132
    %v5237 = vpack.c.bf16 %v5133, %v5133
    %v5238 = vpack.c.bf16 %v5134, %v5134
    %v5239 = vpack.c.bf16 %v5135, %v5135
    %v5256 = vrot.slane %v5220, 1
    %v5257 = vrot.slane %v5221, 1
    %v5258 = vrot.slane %v5222, 1
    %v5259 = vrot.slane %v5223, 1
    %v5260 = vrot.slane %v5224, 1
    %v5261 = vrot.slane %v5225, 1
    %v5262 = vrot.slane %v5226, 1
    %v5263 = vrot.slane %v5227, 1
    %v5264 = vrot.slane %v5228, 1
    %v5265 = vrot.slane %v5229, 1
    %v5266 = vrot.slane %v5230, 1
    %v5267 = vrot.slane %v5231, 1
    %v5268 = vrot.slane %v5232, 1
    %v5269 = vrot.slane %v5233, 1
    %v5270 = vrot.slane %v5234, 1
    %v5271 = vrot.slane %v5235, 1
    %5288 = vmatprep.subr.bf16.mxu0 %v3829
    %5289 = vmatpush1.bf16.msra.mxu0 %v3828
    %5290 = vmatprep.subr.bf16.mxu0 %v3845
    %5291 = vmatpush1.bf16.msra.mxu0 %v3844
    %5292 = vmatprep.subr.bf16.mxu0 %v3861
    %5293 = vmatpush1.bf16.msra.mxu0 %v3860
    %5294 = vmatprep.subr.bf16.mxu0 %v3877
    %5295 = vmatpush1.bf16.msra.mxu0 %v3876
    %5296 = vmatprep.subr.bf16.mxu0 %v3893
    %5297 = vmatpush1.bf16.msra.mxu0 %v3892
    %5298 = vmatprep.subr.bf16.mxu0 %v3909
    %5299 = vmatpush1.bf16.msra.mxu0 %v3908
    %5300 = vmatprep.subr.bf16.mxu0 %v3925
    %5301 = vmatpush1.bf16.msra.mxu0 %v3924
    %5302 = vmatprep.subr.bf16.mxu0 %v3941
    %5303 = vmatpush1.bf16.msra.mxu0 %v3940
    %5304 = vmatprep.subr.bf16.mxu0 %v3957
    %5305 = vmatpush1.bf16.msra.mxu0 %v3956
    %5306 = vmatprep.subr.bf16.mxu0 %v3973
    %5307 = vmatpush1.bf16.msra.mxu0 %v3972
    %5308 = vmatprep.subr.bf16.mxu0 %v3989
    %5309 = vmatpush1.bf16.msra.mxu0 %v3988
    %5310 = vmatprep.subr.bf16.mxu0 %v4005
    %5311 = vmatpush1.bf16.msra.mxu0 %v4004
    %5312 = vmatprep.subr.bf16.mxu0 %v4021
    %5313 = vmatpush1.bf16.msra.mxu0 %v4020
    %5314 = vmatprep.subr.bf16.mxu0 %v4037
    %5315 = vmatpush1.bf16.msra.mxu0 %v4036
    %5316 = vmatprep.subr.bf16.mxu0 %v4053
    %5317 = vmatpush1.bf16.msra.mxu0 %v4052
    %5318 = vmatprep.subr.bf16.mxu0 %v4069
    %5319 = vmatpush1.bf16.msra.mxu0 %v4068
    %5320 = vmatprep.mubr.bf16.mxu0 %v5237
    %5321 = vmatmul.mubr.bf16.gmra.mrb[0].mxu0 %v5236
    %v5322 = vpop.f32.mrb[0].mxu0
    %v5323 = vadd.f32 %v5256, %v5322
    %v5324 = vpop.f32.mrb[0].mxu0
    %v5325 = vadd.f32 %v5257, %v5324
    %v5326 = vpop.f32.mrb[0].mxu0
    %v5327 = vpop.f32.mrb[0].mxu0
    %5328 = vdwg.mxu0
    %5329 = vmatprep.subr.bf16.mxu0 %v4085
    %5330 = vmatpush1.bf16.msra.mxu0 %v4084
    %5331 = vmatprep.subr.bf16.mxu0 %v4101
    %5332 = vmatpush1.bf16.msra.mxu0 %v4100
    %5333 = vmatprep.subr.bf16.mxu0 %v4117
    %5334 = vmatpush1.bf16.msra.mxu0 %v4116
    %5335 = vmatprep.subr.bf16.mxu0 %v4133
    %5336 = vmatpush1.bf16.msra.mxu0 %v4132
    %5337 = vmatprep.subr.bf16.mxu0 %v4149
    %5338 = vmatpush1.bf16.msra.mxu0 %v4148
    %5339 = vmatprep.subr.bf16.mxu0 %v4165
    %5340 = vmatpush1.bf16.msra.mxu0 %v4164
    %5341 = vmatprep.subr.bf16.mxu0 %v4181
    %5342 = vmatpush1.bf16.msra.mxu0 %v4180
    %5343 = vmatprep.subr.bf16.mxu0 %v4197
    %5344 = vmatpush1.bf16.msra.mxu0 %v4196
    %5345 = vmatprep.subr.bf16.mxu0 %v4213
    %5346 = vmatpush1.bf16.msra.mxu0 %v4212
    %5347 = vmatprep.subr.bf16.mxu0 %v4229
    %5348 = vmatpush1.bf16.msra.mxu0 %v4228
    %5349 = vmatprep.subr.bf16.mxu0 %v4245
    %5350 = vmatpush1.bf16.msra.mxu0 %v4244
    %5351 = vmatprep.subr.bf16.mxu0 %v4261
    %5352 = vmatpush1.bf16.msra.mxu0 %v4260
    %5353 = vmatprep.subr.bf16.mxu0 %v4277
    %5354 = vmatpush1.bf16.msra.mxu0 %v4276
    %5355 = vmatprep.subr.bf16.mxu0 %v4293
    %5356 = vmatpush1.bf16.msra.mxu0 %v4292
    %5357 = vmatprep.subr.bf16.mxu0 %v4309
    %5358 = vmatpush1.bf16.msra.mxu0 %v4308
    %5359 = vmatprep.subr.bf16.mxu0 %v4325
    %5360 = vmatpush1.bf16.msra.mxu0 %v4324
    %5361 = vmatprep.mubr.bf16.mxu0 %v5239
    %5362 = vmatmul.mubr.bf16.gmra.mrb[0].mxu0 %v5238
    %v5363 = vpop.f32.mrb[0].mxu0
    %v5364 = vadd.f32 %v5323, %v5363
    %v5365 = vpop.f32.mrb[0].mxu0
    %v5366 = vadd.f32 %v5325, %v5365
    %v5367 = vpop.f32.mrb[0].mxu0
    %v5368 = vpop.f32.mrb[0].mxu0
    %5369 = vdwg.mxu0
    %5370 = vmatprep.subr.bf16.mxu0 %v3831
    %5371 = vmatpush1.bf16.msra.mxu0 %v3830
    %5372 = vmatprep.subr.bf16.mxu0 %v3847
    %5373 = vmatpush1.bf16.msra.mxu0 %v3846
    %5374 = vmatprep.subr.bf16.mxu0 %v3863
    %5375 = vmatpush1.bf16.msra.mxu0 %v3862
    %5376 = vmatprep.subr.bf16.mxu0 %v3879
    %5377 = vmatpush1.bf16.msra.mxu0 %v3878
    %5378 = vmatprep.subr.bf16.mxu0 %v3895
    %5379 = vmatpush1.bf16.msra.mxu0 %v3894
    %5380 = vmatprep.subr.bf16.mxu0 %v3911
    %5381 = vmatpush1.bf16.msra.mxu0 %v3910
    %5382 = vmatprep.subr.bf16.mxu0 %v3927
    %5383 = vmatpush1.bf16.msra.mxu0 %v3926
    %5384 = vmatprep.subr.bf16.mxu0 %v3943
    %5385 = vmatpush1.bf16.msra.mxu0 %v3942
    %5386 = vmatprep.subr.bf16.mxu0 %v3959
    %5387 = vmatpush1.bf16.msra.mxu0 %v3958
    %5388 = vmatprep.subr.bf16.mxu0 %v3975
    %5389 = vmatpush1.bf16.msra.mxu0 %v3974
    %5390 = vmatprep.subr.bf16.mxu0 %v3991
    %5391 = vmatpush1.bf16.msra.mxu0 %v3990
    %5392 = vmatprep.subr.bf16.mxu0 %v4007
    %5393 = vmatpush1.bf16.msra.mxu0 %v4006
    %5394 = vmatprep.subr.bf16.mxu0 %v4023
    %5395 = vmatpush1.bf16.msra.mxu0 %v4022
    %5396 = vmatprep.subr.bf16.mxu0 %v4039
    %5397 = vmatpush1.bf16.msra.mxu0 %v4038
    %5398 = vmatprep.subr.bf16.mxu0 %v4055
    %5399 = vmatpush1.bf16.msra.mxu0 %v4054
    %5400 = vmatprep.subr.bf16.mxu0 %v4071
    %5401 = vmatpush1.bf16.msra.mxu0 %v4070
    %5402 = vmatprep.mubr.bf16.mxu0 %v5237
    %5403 = vmatmul.mubr.bf16.gmra.mrb[0].mxu0 %v5236
    %v5404 = vpop.f32.mrb[0].mxu0
    %v5405 = vadd.f32 %v5258, %v5404
    %v5406 = vpop.f32.mrb[0].mxu0
    %v5407 = vadd.f32 %v5259, %v5406
    %v5408 = vpop.f32.mrb[0].mxu0
    %v5409 = vpop.f32.mrb[0].mxu0
    %5410 = vdwg.mxu0
    %5411 = vmatprep.subr.bf16.mxu0 %v4087
    %5412 = vmatpush1.bf16.msra.mxu0 %v4086
    %5413 = vmatprep.subr.bf16.mxu0 %v4103
    %5414 = vmatpush1.bf16.msra.mxu0 %v4102
    %5415 = vmatprep.subr.bf16.mxu0 %v4119
    %5416 = vmatpush1.bf16.msra.mxu0 %v4118
    %5417 = vmatprep.subr.bf16.mxu0 %v4135
    %5418 = vmatpush1.bf16.msra.mxu0 %v4134
    %5419 = vmatprep.subr.bf16.mxu0 %v4151
    %5420 = vmatpush1.bf16.msra.mxu0 %v4150
    %5421 = vmatprep.subr.bf16.mxu0 %v4167
    %5422 = vmatpush1.bf16.msra.mxu0 %v4166
    %5423 = vmatprep.subr.bf16.mxu0 %v4183
    %5424 = vmatpush1.bf16.msra.mxu0 %v4182
    %5425 = vmatprep.subr.bf16.mxu0 %v4199
    %5426 = vmatpush1.bf16.msra.mxu0 %v4198
    %5427 = vmatprep.subr.bf16.mxu0 %v4215
    %5428 = vmatpush1.bf16.msra.mxu0 %v4214
    %5429 = vmatprep.subr.bf16.mxu0 %v4231
    %5430 = vmatpush1.bf16.msra.mxu0 %v4230
    %5431 = vmatprep.subr.bf16.mxu0 %v4247
    %5432 = vmatpush1.bf16.msra.mxu0 %v4246
    %5433 = vmatprep.subr.bf16.mxu0 %v4263
    %5434 = vmatpush1.bf16.msra.mxu0 %v4262
    %5435 = vmatprep.subr.bf16.mxu0 %v4279
    %5436 = vmatpush1.bf16.msra.mxu0 %v4278
    %5437 = vmatprep.subr.bf16.mxu0 %v4295
    %5438 = vmatpush1.bf16.msra.mxu0 %v4294
    %5439 = vmatprep.subr.bf16.mxu0 %v4311
    %5440 = vmatpush1.bf16.msra.mxu0 %v4310
    %5441 = vmatprep.subr.bf16.mxu0 %v4327
    %5442 = vmatpush1.bf16.msra.mxu0 %v4326
    %5443 = vmatprep.mubr.bf16.mxu0 %v5239
    %5444 = vmatmul.mubr.bf16.gmra.mrb[0].mxu0 %v5238
    %v5445 = vpop.f32.mrb[0].mxu0
    %v5446 = vadd.f32 %v5405, %v5445
    %v5447 = vpop.f32.mrb[0].mxu0
    %v5448 = vadd.f32 %v5407, %v5447
    %v5449 = vpop.f32.mrb[0].mxu0
    %v5450 = vpop.f32.mrb[0].mxu0
    %5451 = vdwg.mxu0
    %5452 = vmatprep.subr.bf16.mxu0 %v3833
    %5453 = vmatpush1.bf16.msra.mxu0 %v3832
    %5454 = vmatprep.subr.bf16.mxu0 %v3849
    %5455 = vmatpush1.bf16.msra.mxu0 %v3848
    %5456 = vmatprep.subr.bf16.mxu0 %v3865
    %5457 = vmatpush1.bf16.msra.mxu0 %v3864
    %5458 = vmatprep.subr.bf16.mxu0 %v3881
    %5459 = vmatpush1.bf16.msra.mxu0 %v3880
    %5460 = vmatprep.subr.bf16.mxu0 %v3897
    %5461 = vmatpush1.bf16.msra.mxu0 %v3896
    %5462 = vmatprep.subr.bf16.mxu0 %v3913
    %5463 = vmatpush1.bf16.msra.mxu0 %v3912
    %5464 = vmatprep.subr.bf16.mxu0 %v3929
    %5465 = vmatpush1.bf16.msra.mxu0 %v3928
    %5466 = vmatprep.subr.bf16.mxu0 %v3945
    %5467 = vmatpush1.bf16.msra.mxu0 %v3944
    %5468 = vmatprep.subr.bf16.mxu0 %v3961
    %5469 = vmatpush1.bf16.msra.mxu0 %v3960
    %5470 = vmatprep.subr.bf16.mxu0 %v3977
    %5471 = vmatpush1.bf16.msra.mxu0 %v3976
    %5472 = vmatprep.subr.bf16.mxu0 %v3993
    %5473 = vmatpush1.bf16.msra.mxu0 %v3992
    %5474 = vmatprep.subr.bf16.mxu0 %v4009
    %5475 = vmatpush1.bf16.msra.mxu0 %v4008
    %5476 = vmatprep.subr.bf16.mxu0 %v4025
    %5477 = vmatpush1.bf16.msra.mxu0 %v4024
    %5478 = vmatprep.subr.bf16.mxu0 %v4041
    %5479 = vmatpush1.bf16.msra.mxu0 %v4040
    %5480 = vmatprep.subr.bf16.mxu0 %v4057
    %5481 = vmatpush1.bf16.msra.mxu0 %v4056
    %5482 = vmatprep.subr.bf16.mxu0 %v4073
    %5483 = vmatpush1.bf16.msra.mxu0 %v4072
    %5484 = vmatprep.mubr.bf16.mxu0 %v5237
    %5485 = vmatmul.mubr.bf16.gmra.mrb[0].mxu0 %v5236
    %v5486 = vpop.f32.mrb[0].mxu0
    %v5487 = vadd.f32 %v5260, %v5486
    %v5488 = vpop.f32.mrb[0].mxu0
    %v5489 = vadd.f32 %v5261, %v5488
    %v5490 = vpop.f32.mrb[0].mxu0
    %v5491 = vpop.f32.mrb[0].mxu0
    %5492 = vdwg.mxu0
    %5493 = vmatprep.subr.bf16.mxu0 %v4089
    %5494 = vmatpush1.bf16.msra.mxu0 %v4088
    %5495 = vmatprep.subr.bf16.mxu0 %v4105
    %5496 = vmatpush1.bf16.msra.mxu0 %v4104
    %5497 = vmatprep.subr.bf16.mxu0 %v4121
    %5498 = vmatpush1.bf16.msra.mxu0 %v4120
    %5499 = vmatprep.subr.bf16.mxu0 %v4137
    %5500 = vmatpush1.bf16.msra.mxu0 %v4136
    %5501 = vmatprep.subr.bf16.mxu0 %v4153
    %5502 = vmatpush1.bf16.msra.mxu0 %v4152
    %5503 = vmatprep.subr.bf16.mxu0 %v4169
    %5504 = vmatpush1.bf16.msra.mxu0 %v4168
    %5505 = vmatprep.subr.bf16.mxu0 %v4185
    %5506 = vmatpush1.bf16.msra.mxu0 %v4184
    %5507 = vmatprep.subr.bf16.mxu0 %v4201
    %5508 = vmatpush1.bf16.msra.mxu0 %v4200
    %5509 = vmatprep.subr.bf16.mxu0 %v4217
    %5510 = vmatpush1.bf16.msra.mxu0 %v4216
    %5511 = vmatprep.subr.bf16.mxu0 %v4233
    %5512 = vmatpush1.bf16.msra.mxu0 %v4232
    %5513 = vmatprep.subr.bf16.mxu0 %v4249
    %5514 = vmatpush1.bf16.msra.mxu0 %v4248
    %5515 = vmatprep.subr.bf16.mxu0 %v4265
    %5516 = vmatpush1.bf16.msra.mxu0 %v4264
    %5517 = vmatprep.subr.bf16.mxu0 %v4281
    %5518 = vmatpush1.bf16.msra.mxu0 %v4280
    %5519 = vmatprep.subr.bf16.mxu0 %v4297
    %5520 = vmatpush1.bf16.msra.mxu0 %v4296
    %5521 = vmatprep.subr.bf16.mxu0 %v4313
    %5522 = vmatpush1.bf16.msra.mxu0 %v4312
    %5523 = vmatprep.subr.bf16.mxu0 %v4329
    %5524 = vmatpush1.bf16.msra.mxu0 %v4328
    %5525 = vmatprep.mubr.bf16.mxu0 %v5239
    %5526 = vmatmul.mubr.bf16.gmra.mrb[0].mxu0 %v5238
    %v5527 = vpop.f32.mrb[0].mxu0
    %v5528 = vadd.f32 %v5487, %v5527
    %v5529 = vpop.f32.mrb[0].mxu0
    %v5530 = vadd.f32 %v5489, %v5529
    %v5531 = vpop.f32.mrb[0].mxu0
    %v5532 = vpop.f32.mrb[0].mxu0
    %5533 = vdwg.mxu0
    %5534 = vmatprep.subr.bf16.mxu0 %v3835
    %5535 = vmatpush1.bf16.msra.mxu0 %v3834
    %5536 = vmatprep.subr.bf16.mxu0 %v3851
    %5537 = vmatpush1.bf16.msra.mxu0 %v3850
    %5538 = vmatprep.subr.bf16.mxu0 %v3867
    %5539 = vmatpush1.bf16.msra.mxu0 %v3866
    %5540 = vmatprep.subr.bf16.mxu0 %v3883
    %5541 = vmatpush1.bf16.msra.mxu0 %v3882
    %5542 = vmatprep.subr.bf16.mxu0 %v3899
    %5543 = vmatpush1.bf16.msra.mxu0 %v3898
    %5544 = vmatprep.subr.bf16.mxu0 %v3915
    %5545 = vmatpush1.bf16.msra.mxu0 %v3914
    %5546 = vmatprep.subr.bf16.mxu0 %v3931
    %5547 = vmatpush1.bf16.msra.mxu0 %v3930
    %5548 = vmatprep.subr.bf16.mxu0 %v3947
    %5549 = vmatpush1.bf16.msra.mxu0 %v3946
    %5550 = vmatprep.subr.bf16.mxu0 %v3963
    %5551 = vmatpush1.bf16.msra.mxu0 %v3962
    %5552 = vmatprep.subr.bf16.mxu0 %v3979
    %5553 = vmatpush1.bf16.msra.mxu0 %v3978
    %5554 = vmatprep.subr.bf16.mxu0 %v3995
    %5555 = vmatpush1.bf16.msra.mxu0 %v3994
    %5556 = vmatprep.subr.bf16.mxu0 %v4011
    %5557 = vmatpush1.bf16.msra.mxu0 %v4010
    %5558 = vmatprep.subr.bf16.mxu0 %v4027
    %5559 = vmatpush1.bf16.msra.mxu0 %v4026
    %5560 = vmatprep.subr.bf16.mxu0 %v4043
    %5561 = vmatpush1.bf16.msra.mxu0 %v4042
    %5562 = vmatprep.subr.bf16.mxu0 %v4059
    %5563 = vmatpush1.bf16.msra.mxu0 %v4058
    %5564 = vmatprep.subr.bf16.mxu0 %v4075
    %5565 = vmatpush1.bf16.msra.mxu0 %v4074
    %5566 = vmatprep.mubr.bf16.mxu0 %v5237
    %5567 = vmatmul.mubr.bf16.gmra.mrb[0].mxu0 %v5236
    %v5568 = vpop.f32.mrb[0].mxu0
    %v5569 = vadd.f32 %v5262, %v5568
    %v5570 = vpop.f32.mrb[0].mxu0
    %v5571 = vadd.f32 %v5263, %v5570
    %v5572 = vpop.f32.mrb[0].mxu0
    %v5573 = vpop.f32.mrb[0].mxu0
    %5574 = vdwg.mxu0
    %5575 = vmatprep.subr.bf16.mxu0 %v4091
    %5576 = vmatpush1.bf16.msra.mxu0 %v4090
    %5577 = vmatprep.subr.bf16.mxu0 %v4107
    %5578 = vmatpush1.bf16.msra.mxu0 %v4106
    %5579 = vmatprep.subr.bf16.mxu0 %v4123
    %5580 = vmatpush1.bf16.msra.mxu0 %v4122
    %5581 = vmatprep.subr.bf16.mxu0 %v4139
    %5582 = vmatpush1.bf16.msra.mxu0 %v4138
    %5583 = vmatprep.subr.bf16.mxu0 %v4155
    %5584 = vmatpush1.bf16.msra.mxu0 %v4154
    %5585 = vmatprep.subr.bf16.mxu0 %v4171
    %5586 = vmatpush1.bf16.msra.mxu0 %v4170
    %5587 = vmatprep.subr.bf16.mxu0 %v4187
    %5588 = vmatpush1.bf16.msra.mxu0 %v4186
    %5589 = vmatprep.subr.bf16.mxu0 %v4203
    %5590 = vmatpush1.bf16.msra.mxu0 %v4202
    %5591 = vmatprep.subr.bf16.mxu0 %v4219
    %5592 = vmatpush1.bf16.msra.mxu0 %v4218
    %5593 = vmatprep.subr.bf16.mxu0 %v4235
    %5594 = vmatpush1.bf16.msra.mxu0 %v4234
    %5595 = vmatprep.subr.bf16.mxu0 %v4251
    %5596 = vmatpush1.bf16.msra.mxu0 %v4250
    %5597 = vmatprep.subr.bf16.mxu0 %v4267
    %5598 = vmatpush1.bf16.msra.mxu0 %v4266
    %5599 = vmatprep.subr.bf16.mxu0 %v4283
    %5600 = vmatpush1.bf16.msra.mxu0 %v4282
    %5601 = vmatprep.subr.bf16.mxu0 %v4299
    %5602 = vmatpush1.bf16.msra.mxu0 %v4298
    %5603 = vmatprep.subr.bf16.mxu0 %v4315
    %5604 = vmatpush1.bf16.msra.mxu0 %v4314
    %5605 = vmatprep.subr.bf16.mxu0 %v4331
    %5606 = vmatpush1.bf16.msra.mxu0 %v4330
    %5607 = vmatprep.mubr.bf16.mxu0 %v5239
    %5608 = vmatmul.mubr.bf16.gmra.mrb[0].mxu0 %v5238
    %v5609 = vpop.f32.mrb[0].mxu0
    %v5610 = vadd.f32 %v5569, %v5609
    %v5611 = vpop.f32.mrb[0].mxu0
    %v5612 = vadd.f32 %v5571, %v5611
    %v5613 = vpop.f32.mrb[0].mxu0
    %v5614 = vpop.f32.mrb[0].mxu0
    %5615 = vdwg.mxu0
    %5616 = vmatprep.subr.bf16.mxu0 %v3837
    %5617 = vmatpush1.bf16.msra.mxu0 %v3836
    %5618 = vmatprep.subr.bf16.mxu0 %v3853
    %5619 = vmatpush1.bf16.msra.mxu0 %v3852
    %5620 = vmatprep.subr.bf16.mxu0 %v3869
    %5621 = vmatpush1.bf16.msra.mxu0 %v3868
    %5622 = vmatprep.subr.bf16.mxu0 %v3885
    %5623 = vmatpush1.bf16.msra.mxu0 %v3884
    %5624 = vmatprep.subr.bf16.mxu0 %v3901
    %5625 = vmatpush1.bf16.msra.mxu0 %v3900
    %5626 = vmatprep.subr.bf16.mxu0 %v3917
    %5627 = vmatpush1.bf16.msra.mxu0 %v3916
    %5628 = vmatprep.subr.bf16.mxu0 %v3933
    %5629 = vmatpush1.bf16.msra.mxu0 %v3932
    %5630 = vmatprep.subr.bf16.mxu0 %v3949
    %5631 = vmatpush1.bf16.msra.mxu0 %v3948
    %5632 = vmatprep.subr.bf16.mxu0 %v3965
    %5633 = vmatpush1.bf16.msra.mxu0 %v3964
    %5634 = vmatprep.subr.bf16.mxu0 %v3981
    %5635 = vmatpush1.bf16.msra.mxu0 %v3980
    %5636 = vmatprep.subr.bf16.mxu0 %v3997
    %5637 = vmatpush1.bf16.msra.mxu0 %v3996
    %5638 = vmatprep.subr.bf16.mxu0 %v4013
    %5639 = vmatpush1.bf16.msra.mxu0 %v4012
    %5640 = vmatprep.subr.bf16.mxu0 %v4029
    %5641 = vmatpush1.bf16.msra.mxu0 %v4028
    %5642 = vmatprep.subr.bf16.mxu0 %v4045
    %5643 = vmatpush1.bf16.msra.mxu0 %v4044
    %5644 = vmatprep.subr.bf16.mxu0 %v4061
    %5645 = vmatpush1.bf16.msra.mxu0 %v4060
    %5646 = vmatprep.subr.bf16.mxu0 %v4077
    %5647 = vmatpush1.bf16.msra.mxu0 %v4076
    %5648 = vmatprep.mubr.bf16.mxu0 %v5237
    %5649 = vmatmul.mubr.bf16.gmra.mrb[0].mxu0 %v5236
    %v5650 = vpop.f32.mrb[0].mxu0
    %v5651 = vadd.f32 %v5264, %v5650
    %v5652 = vpop.f32.mrb[0].mxu0
    %v5653 = vadd.f32 %v5265, %v5652
    %v5654 = vpop.f32.mrb[0].mxu0
    %v5655 = vpop.f32.mrb[0].mxu0
    %5656 = vdwg.mxu0
    %5657 = vmatprep.subr.bf16.mxu0 %v4093
    %5658 = vmatpush1.bf16.msra.mxu0 %v4092
    %5659 = vmatprep.subr.bf16.mxu0 %v4109
    %5660 = vmatpush1.bf16.msra.mxu0 %v4108
    %5661 = vmatprep.subr.bf16.mxu0 %v4125
    %5662 = vmatpush1.bf16.msra.mxu0 %v4124
    %5663 = vmatprep.subr.bf16.mxu0 %v4141
    %5664 = vmatpush1.bf16.msra.mxu0 %v4140
    %5665 = vmatprep.subr.bf16.mxu0 %v4157
    %5666 = vmatpush1.bf16.msra.mxu0 %v4156
    %5667 = vmatprep.subr.bf16.mxu0 %v4173
    %5668 = vmatpush1.bf16.msra.mxu0 %v4172
    %5669 = vmatprep.subr.bf16.mxu0 %v4189
    %5670 = vmatpush1.bf16.msra.mxu0 %v4188
    %5671 = vmatprep.subr.bf16.mxu0 %v4205
    %5672 = vmatpush1.bf16.msra.mxu0 %v4204
    %5673 = vmatprep.subr.bf16.mxu0 %v4221
    %5674 = vmatpush1.bf16.msra.mxu0 %v4220
    %5675 = vmatprep.subr.bf16.mxu0 %v4237
    %5676 = vmatpush1.bf16.msra.mxu0 %v4236
    %5677 = vmatprep.subr.bf16.mxu0 %v4253
    %5678 = vmatpush1.bf16.msra.mxu0 %v4252
    %5679 = vmatprep.subr.bf16.mxu0 %v4269
    %5680 = vmatpush1.bf16.msra.mxu0 %v4268
    %5681 = vmatprep.subr.bf16.mxu0 %v4285
    %5682 = vmatpush1.bf16.msra.mxu0 %v4284
    %5683 = vmatprep.subr.bf16.mxu0 %v4301
    %5684 = vmatpush1.bf16.msra.mxu0 %v4300
    %5685 = vmatprep.subr.bf16.mxu0 %v4317
    %5686 = vmatpush1.bf16.msra.mxu0 %v4316
    %5687 = vmatprep.subr.bf16.mxu0 %v4333
    %5688 = vmatpush1.bf16.msra.mxu0 %v4332
    %5689 = vmatprep.mubr.bf16.mxu0 %v5239
    %5690 = vmatmul.mubr.bf16.gmra.mrb[0].mxu0 %v5238
    %v5691 = vpop.f32.mrb[0].mxu0
    %v5692 = vadd.f32 %v5651, %v5691
    %v5693 = vpop.f32.mrb[0].mxu0
    %v5694 = vadd.f32 %v5653, %v5693
    %v5695 = vpop.f32.mrb[0].mxu0
    %v5696 = vpop.f32.mrb[0].mxu0
    %5697 = vdwg.mxu0
    %5698 = vmatprep.subr.bf16.mxu0 %v3839
    %5699 = vmatpush1.bf16.msra.mxu0 %v3838
    %5700 = vmatprep.subr.bf16.mxu0 %v3855
    %5701 = vmatpush1.bf16.msra.mxu0 %v3854
    %5702 = vmatprep.subr.bf16.mxu0 %v3871
    %5703 = vmatpush1.bf16.msra.mxu0 %v3870
    %5704 = vmatprep.subr.bf16.mxu0 %v3887
    %5705 = vmatpush1.bf16.msra.mxu0 %v3886
    %5706 = vmatprep.subr.bf16.mxu0 %v3903
    %5707 = vmatpush1.bf16.msra.mxu0 %v3902
    %5708 = vmatprep.subr.bf16.mxu0 %v3919
    %5709 = vmatpush1.bf16.msra.mxu0 %v3918
    %5710 = vmatprep.subr.bf16.mxu0 %v3935
    %5711 = vmatpush1.bf16.msra.mxu0 %v3934
    %5712 = vmatprep.subr.bf16.mxu0 %v3951
    %5713 = vmatpush1.bf16.msra.mxu0 %v3950
    %5714 = vmatprep.subr.bf16.mxu0 %v3967
    %5715 = vmatpush1.bf16.msra.mxu0 %v3966
    %5716 = vmatprep.subr.bf16.mxu0 %v3983
    %5717 = vmatpush1.bf16.msra.mxu0 %v3982
    %5718 = vmatprep.subr.bf16.mxu0 %v3999
    %5719 = vmatpush1.bf16.msra.mxu0 %v3998
    %5720 = vmatprep.subr.bf16.mxu0 %v4015
    %5721 = vmatpush1.bf16.msra.mxu0 %v4014
    %5722 = vmatprep.subr.bf16.mxu0 %v4031
    %5723 = vmatpush1.bf16.msra.mxu0 %v4030
    %5724 = vmatprep.subr.bf16.mxu0 %v4047
    %5725 = vmatpush1.bf16.msra.mxu0 %v4046
    %5726 = vmatprep.subr.bf16.mxu0 %v4063
    %5727 = vmatpush1.bf16.msra.mxu0 %v4062
    %5728 = vmatprep.subr.bf16.mxu0 %v4079
    %5729 = vmatpush1.bf16.msra.mxu0 %v4078
    %5730 = vmatprep.mubr.bf16.mxu0 %v5237
    %5731 = vmatmul.mubr.bf16.gmra.mrb[0].mxu0 %v5236
    %v5732 = vpop.f32.mrb[0].mxu0
    %v5733 = vadd.f32 %v5266, %v5732
    %v5734 = vpop.f32.mrb[0].mxu0
    %v5735 = vadd.f32 %v5267, %v5734
    %v5736 = vpop.f32.mrb[0].mxu0
    %v5737 = vpop.f32.mrb[0].mxu0
    %5738 = vdwg.mxu0
    %5739 = vmatprep.subr.bf16.mxu0 %v4095
    %5740 = vmatpush1.bf16.msra.mxu0 %v4094
    %5741 = vmatprep.subr.bf16.mxu0 %v4111
    %5742 = vmatpush1.bf16.msra.mxu0 %v4110
    %5743 = vmatprep.subr.bf16.mxu0 %v4127
    %5744 = vmatpush1.bf16.msra.mxu0 %v4126
    %5745 = vmatprep.subr.bf16.mxu0 %v4143
    %5746 = vmatpush1.bf16.msra.mxu0 %v4142
    %5747 = vmatprep.subr.bf16.mxu0 %v4159
    %5748 = vmatpush1.bf16.msra.mxu0 %v4158
    %5749 = vmatprep.subr.bf16.mxu0 %v4175
    %5750 = vmatpush1.bf16.msra.mxu0 %v4174
    %5751 = vmatprep.subr.bf16.mxu0 %v4191
    %5752 = vmatpush1.bf16.msra.mxu0 %v4190
    %5753 = vmatprep.subr.bf16.mxu0 %v4207
    %5754 = vmatpush1.bf16.msra.mxu0 %v4206
    %5755 = vmatprep.subr.bf16.mxu0 %v4223
    %5756 = vmatpush1.bf16.msra.mxu0 %v4222
    %5757 = vmatprep.subr.bf16.mxu0 %v4239
    %5758 = vmatpush1.bf16.msra.mxu0 %v4238
    %5759 = vmatprep.subr.bf16.mxu0 %v4255
    %5760 = vmatpush1.bf16.msra.mxu0 %v4254
    %5761 = vmatprep.subr.bf16.mxu0 %v4271
    %5762 = vmatpush1.bf16.msra.mxu0 %v4270
    %5763 = vmatprep.subr.bf16.mxu0 %v4287
    %5764 = vmatpush1.bf16.msra.mxu0 %v4286
    %5765 = vmatprep.subr.bf16.mxu0 %v4303
    %5766 = vmatpush1.bf16.msra.mxu0 %v4302
    %5767 = vmatprep.subr.bf16.mxu0 %v4319
    %5768 = vmatpush1.bf16.msra.mxu0 %v4318
    %5769 = vmatprep.subr.bf16.mxu0 %v4335
    %5770 = vmatpush1.bf16.msra.mxu0 %v4334
    %5771 = vmatprep.mubr.bf16.mxu0 %v5239
    %5772 = vmatmul.mubr.bf16.gmra.mrb[0].mxu0 %v5238
    %v5773 = vpop.f32.mrb[0].mxu0
    %v5774 = vadd.f32 %v5733, %v5773
    %v5775 = vpop.f32.mrb[0].mxu0
    %v5776 = vadd.f32 %v5735, %v5775
    %v5777 = vpop.f32.mrb[0].mxu0
    %v5778 = vpop.f32.mrb[0].mxu0
    %5779 = vdwg.mxu0
    %5780 = vmatprep.subr.bf16.mxu0 %v3841
    %5781 = vmatpush1.bf16.msra.mxu0 %v3840
    %5782 = vmatprep.subr.bf16.mxu0 %v3857
    %5783 = vmatpush1.bf16.msra.mxu0 %v3856
    %5784 = vmatprep.subr.bf16.mxu0 %v3873
    %5785 = vmatpush1.bf16.msra.mxu0 %v3872
    %5786 = vmatprep.subr.bf16.mxu0 %v3889
    %5787 = vmatpush1.bf16.msra.mxu0 %v3888
    %5788 = vmatprep.subr.bf16.mxu0 %v3905
    %5789 = vmatpush1.bf16.msra.mxu0 %v3904
    %5790 = vmatprep.subr.bf16.mxu0 %v3921
    %5791 = vmatpush1.bf16.msra.mxu0 %v3920
    %5792 = vmatprep.subr.bf16.mxu0 %v3937
    %5793 = vmatpush1.bf16.msra.mxu0 %v3936
    %5794 = vmatprep.subr.bf16.mxu0 %v3953
    %5795 = vmatpush1.bf16.msra.mxu0 %v3952
    %5796 = vmatprep.subr.bf16.mxu0 %v3969
    %5797 = vmatpush1.bf16.msra.mxu0 %v3968
    %5798 = vmatprep.subr.bf16.mxu0 %v3985
    %5799 = vmatpush1.bf16.msra.mxu0 %v3984
    %5800 = vmatprep.subr.bf16.mxu0 %v4001
    %5801 = vmatpush1.bf16.msra.mxu0 %v4000
    %5802 = vmatprep.subr.bf16.mxu0 %v4017
    %5803 = vmatpush1.bf16.msra.mxu0 %v4016
    %5804 = vmatprep.subr.bf16.mxu0 %v4033
    %5805 = vmatpush1.bf16.msra.mxu0 %v4032
    %5806 = vmatprep.subr.bf16.mxu0 %v4049
    %5807 = vmatpush1.bf16.msra.mxu0 %v4048
    %5808 = vmatprep.subr.bf16.mxu0 %v4065
    %5809 = vmatpush1.bf16.msra.mxu0 %v4064
    %5810 = vmatprep.subr.bf16.mxu0 %v4081
    %5811 = vmatpush1.bf16.msra.mxu0 %v4080
    %5812 = vmatprep.mubr.bf16.mxu0 %v5237
    %5813 = vmatmul.mubr.bf16.gmra.mrb[0].mxu0 %v5236
    %v5814 = vpop.f32.mrb[0].mxu0
    %v5815 = vadd.f32 %v5268, %v5814
    %v5816 = vpop.f32.mrb[0].mxu0
    %v5817 = vadd.f32 %v5269, %v5816
    %v5818 = vpop.f32.mrb[0].mxu0
    %v5819 = vpop.f32.mrb[0].mxu0
    %5820 = vdwg.mxu0
    %5821 = vmatprep.subr.bf16.mxu0 %v4097
    %5822 = vmatpush1.bf16.msra.mxu0 %v4096
    %5823 = vmatprep.subr.bf16.mxu0 %v4113
    %5824 = vmatpush1.bf16.msra.mxu0 %v4112
    %5825 = vmatprep.subr.bf16.mxu0 %v4129
    %5826 = vmatpush1.bf16.msra.mxu0 %v4128
    %5827 = vmatprep.subr.bf16.mxu0 %v4145
    %5828 = vmatpush1.bf16.msra.mxu0 %v4144
    %5829 = vmatprep.subr.bf16.mxu0 %v4161
    %5830 = vmatpush1.bf16.msra.mxu0 %v4160
    %5831 = vmatprep.subr.bf16.mxu0 %v4177
    %5832 = vmatpush1.bf16.msra.mxu0 %v4176
    %5833 = vmatprep.subr.bf16.mxu0 %v4193
    %5834 = vmatpush1.bf16.msra.mxu0 %v4192
    %5835 = vmatprep.subr.bf16.mxu0 %v4209
    %5836 = vmatpush1.bf16.msra.mxu0 %v4208
    %5837 = vmatprep.subr.bf16.mxu0 %v4225
    %5838 = vmatpush1.bf16.msra.mxu0 %v4224
    %5839 = vmatprep.subr.bf16.mxu0 %v4241
    %5840 = vmatpush1.bf16.msra.mxu0 %v4240
    %5841 = vmatprep.subr.bf16.mxu0 %v4257
    %5842 = vmatpush1.bf16.msra.mxu0 %v4256
    %5843 = vmatprep.subr.bf16.mxu0 %v4273
    %5844 = vmatpush1.bf16.msra.mxu0 %v4272
    %5845 = vmatprep.subr.bf16.mxu0 %v4289
    %5846 = vmatpush1.bf16.msra.mxu0 %v4288
    %5847 = vmatprep.subr.bf16.mxu0 %v4305
    %5848 = vmatpush1.bf16.msra.mxu0 %v4304
    %5849 = vmatprep.subr.bf16.mxu0 %v4321
    %5850 = vmatpush1.bf16.msra.mxu0 %v4320
    %5851 = vmatprep.subr.bf16.mxu0 %v4337
    %5852 = vmatpush1.bf16.msra.mxu0 %v4336
    %5853 = vmatprep.mubr.bf16.mxu0 %v5239
    %5854 = vmatmul.mubr.bf16.gmra.mrb[0].mxu0 %v5238
    %v5855 = vpop.f32.mrb[0].mxu0
    %v5856 = vadd.f32 %v5815, %v5855
    %v5857 = vpop.f32.mrb[0].mxu0
    %v5858 = vadd.f32 %v5817, %v5857
    %v5859 = vpop.f32.mrb[0].mxu0
    %v5860 = vpop.f32.mrb[0].mxu0
    %5861 = vdwg.mxu0
    %5862 = vmatprep.subr.bf16.mxu0 %v3843
    %5863 = vmatpush1.bf16.msra.mxu0 %v3842
    %5864 = vmatprep.subr.bf16.mxu0 %v3859
    %5865 = vmatpush1.bf16.msra.mxu0 %v3858
    %5866 = vmatprep.subr.bf16.mxu0 %v3875
    %5867 = vmatpush1.bf16.msra.mxu0 %v3874
    %5868 = vmatprep.subr.bf16.mxu0 %v3891
    %5869 = vmatpush1.bf16.msra.mxu0 %v3890
    %5870 = vmatprep.subr.bf16.mxu0 %v3907
    %5871 = vmatpush1.bf16.msra.mxu0 %v3906
    %5872 = vmatprep.subr.bf16.mxu0 %v3923
    %5873 = vmatpush1.bf16.msra.mxu0 %v3922
    %5874 = vmatprep.subr.bf16.mxu0 %v3939
    %5875 = vmatpush1.bf16.msra.mxu0 %v3938
    %5876 = vmatprep.subr.bf16.mxu0 %v3955
    %5877 = vmatpush1.bf16.msra.mxu0 %v3954
    %5878 = vmatprep.subr.bf16.mxu0 %v3971
    %5879 = vmatpush1.bf16.msra.mxu0 %v3970
    %5880 = vmatprep.subr.bf16.mxu0 %v3987
    %5881 = vmatpush1.bf16.msra.mxu0 %v3986
    %5882 = vmatprep.subr.bf16.mxu0 %v4003
    %5883 = vmatpush1.bf16.msra.mxu0 %v4002
    %5884 = vmatprep.subr.bf16.mxu0 %v4019
    %5885 = vmatpush1.bf16.msra.mxu0 %v4018
    %5886 = vmatprep.subr.bf16.mxu0 %v4035
    %5887 = vmatpush1.bf16.msra.mxu0 %v4034
    %5888 = vmatprep.subr.bf16.mxu0 %v4051
    %5889 = vmatpush1.bf16.msra.mxu0 %v4050
    %5890 = vmatprep.subr.bf16.mxu0 %v4067
    %5891 = vmatpush1.bf16.msra.mxu0 %v4066
    %5892 = vmatprep.subr.bf16.mxu0 %v4083
    %5893 = vmatpush1.bf16.msra.mxu0 %v4082
    %5894 = vmatprep.mubr.bf16.mxu0 %v5237
    %5895 = vmatmul.mubr.bf16.gmra.mrb[0].mxu0 %v5236
    %v5896 = vpop.f32.mrb[0].mxu0
    %v5897 = vadd.f32 %v5270, %v5896
    %v5898 = vpop.f32.mrb[0].mxu0
    %v5899 = vadd.f32 %v5271, %v5898
    %v5900 = vpop.f32.mrb[0].mxu0
    %v5901 = vpop.f32.mrb[0].mxu0
    %5902 = vdwg.mxu0
    %5903 = vmatprep.subr.bf16.mxu0 %v4099
    %5904 = vmatpush1.bf16.msra.mxu0 %v4098
    %5905 = vmatprep.subr.bf16.mxu0 %v4115
    %5906 = vmatpush1.bf16.msra.mxu0 %v4114
    %5907 = vmatprep.subr.bf16.mxu0 %v4131
    %5908 = vmatpush1.bf16.msra.mxu0 %v4130
    %5909 = vmatprep.subr.bf16.mxu0 %v4147
    %5910 = vmatpush1.bf16.msra.mxu0 %v4146
    %5911 = vmatprep.subr.bf16.mxu0 %v4163
    %5912 = vmatpush1.bf16.msra.mxu0 %v4162
    %5913 = vmatprep.subr.bf16.mxu0 %v4179
    %5914 = vmatpush1.bf16.msra.mxu0 %v4178
    %5915 = vmatprep.subr.bf16.mxu0 %v4195
    %5916 = vmatpush1.bf16.msra.mxu0 %v4194
    %5917 = vmatprep.subr.bf16.mxu0 %v4211
    %5918 = vmatpush1.bf16.msra.mxu0 %v4210
    %5919 = vmatprep.subr.bf16.mxu0 %v4227
    %5920 = vmatpush1.bf16.msra.mxu0 %v4226
    %5921 = vmatprep.subr.bf16.mxu0 %v4243
    %5922 = vmatpush1.bf16.msra.mxu0 %v4242
    %5923 = vmatprep.subr.bf16.mxu0 %v4259
    %5924 = vmatpush1.bf16.msra.mxu0 %v4258
    %5925 = vmatprep.subr.bf16.mxu0 %v4275
    %5926 = vmatpush1.bf16.msra.mxu0 %v4274
    %5927 = vmatprep.subr.bf16.mxu0 %v4291
    %5928 = vmatpush1.bf16.msra.mxu0 %v4290
    %5929 = vmatprep.subr.bf16.mxu0 %v4307
    %5930 = vmatpush1.bf16.msra.mxu0 %v4306
    %5931 = vmatprep.subr.bf16.mxu0 %v4323
    %5932 = vmatpush1.bf16.msra.mxu0 %v4322
    %5933 = vmatprep.subr.bf16.mxu0 %v4339
    %5934 = vmatpush1.bf16.msra.mxu0 %v4338
    %5935 = vmatprep.mubr.bf16.mxu0 %v5239
    %5936 = vmatmul.mubr.bf16.gmra.mrb[0].mxu0 %v5238
    %v5937 = vpop.f32.mrb[0].mxu0
    %v5938 = vadd.f32 %v5897, %v5937
    %v5939 = vpop.f32.mrb[0].mxu0
    %v5940 = vadd.f32 %v5899, %v5939
    %v5941 = vpop.f32.mrb[0].mxu0
    %v5942 = vpop.f32.mrb[0].mxu0
    %5943 = vdwg.mxu0
    %v5944 = vmul.f32 %v5364, 0.5
    %v5945 = vmul.f32 %v5366, 0.5
    %v5946 = vmul.f32 %v5446, 0.5
    %v5947 = vmul.f32 %v5448, 0.5
    %v5948 = vtanh.pop %v5944
    %v5949 = vtanh.pop %v5945
    %v5950 = vtanh.pop %v5946
    %v5951 = vtanh.pop %v5947
    %v5952 = vmul.f32 %v5948, 0.5
    %v5953 = vmul.f32 %v5949, 0.5
    %v5954 = vmul.f32 %v5950, 0.5
    %v5955 = vmul.f32 %v5951, 0.5
    %v5956 = vadd.f32 %v5952, 0.5
    %v5957 = vadd.f32 %v5953, 0.5
    %v5958 = vadd.f32 %v5954, 0.5
    %v5959 = vadd.f32 %v5955, 0.5
    %v5960 = vmul.f32 %v5528, 0.5
    %v5961 = vmul.f32 %v5530, 0.5
    %v5962 = vmul.f32 %v5610, 0.5
    %v5963 = vmul.f32 %v5612, 0.5
    %v5964 = vtanh.pop %v5960
    %v5965 = vtanh.pop %v5961
    %v5966 = vtanh.pop %v5962
    %v5967 = vtanh.pop %v5963
    %v5968 = vmul.f32 %v5964, 0.5
    %v5969 = vmul.f32 %v5965, 0.5
    %v5970 = vmul.f32 %v5966, 0.5
    %v5971 = vmul.f32 %v5967, 0.5
    %v5972 = vadd.f32 %v5968, 0.5
    %v5973 = vadd.f32 %v5969, 0.5
    %v5974 = vadd.f32 %v5970, 0.5
    %v5975 = vadd.f32 %v5971, 0.5
    %v5976 = vtanh.pop %v5692
    %v5977 = vtanh.pop %v5694
    %v5978 = vtanh.pop %v5774
    %v5979 = vtanh.pop %v5776
    %v5980 = vmul.f32 %v5856, 0.5
    %v5981 = vmul.f32 %v5858, 0.5
    %v5982 = vmul.f32 %v5938, 0.5
    %v5983 = vmul.f32 %v5940, 0.5
    %v5984 = vtanh.pop %v5980
    %v5985 = vtanh.pop %v5981
    %v5986 = vtanh.pop %v5982
    %v5987 = vtanh.pop %v5983
    %v5988 = vmul.f32 %v5984, 0.5
    %v5989 = vmul.f32 %v5985, 0.5
    %v5990 = vmul.f32 %v5986, 0.5
    %v5991 = vmul.f32 %v5987, 0.5
    %v5992 = vadd.f32 %v5988, 0.5
    %v5993 = vadd.f32 %v5989, 0.5
    %v5994 = vadd.f32 %v5990, 0.5
    %v5995 = vadd.f32 %v5991, 0.5
    %v5996 = vmul.f32 %v5972, %v5124
    %v5997 = vmul.f32 %v5973, %v5125
    %v5998 = vmul.f32 %v5974, %v5126
    %v5999 = vmul.f32 %v5975, %v5127
    %v6000 = vmul.f32 %v5956, %v5976
    %v6001 = vmul.f32 %v5957, %v5977
    %v6002 = vmul.f32 %v5958, %v5978
    %v6003 = vmul.f32 %v5959, %v5979
    %v6004 = vadd.f32 %v5996, %v6000
    %v6005 = vadd.f32 %v5997, %v6001
    %v6006 = vadd.f32 %v5998, %v6002
    %v6007 = vadd.f32 %v5999, %v6003
    %v6008 = vtanh.pop %v6004
    %v6009 = vtanh.pop %v6005
    %v6010 = vtanh.pop %v6006
    %v6011 = vtanh.pop %v6007
    %v6012 = vmul.f32 %v5992, %v6008
    %v6013 = vmul.f32 %v5993, %v6009
    %v6014 = vmul.f32 %v5994, %v6010
    %v6015 = vmul.f32 %v5995, %v6011
    %v6016 = vpack.c.bf16 %v6012, %v6012
    %v6017 = vpack.c.bf16 %v6013, %v6013
    %v6018 = vpack.c.bf16 %v6014, %v6014
    %v6019 = vpack.c.bf16 %v6015, %v6015
    %v6020 = vrot.slane %v5220, 2
    %v6021 = vrot.slane %v5221, 2
    %v6022 = vrot.slane %v5222, 2
    %v6023 = vrot.slane %v5223, 2
    %v6024 = vrot.slane %v5224, 2
    %v6025 = vrot.slane %v5225, 2
    %v6026 = vrot.slane %v5226, 2
    %v6027 = vrot.slane %v5227, 2
    %v6028 = vrot.slane %v5228, 2
    %v6029 = vrot.slane %v5229, 2
    %v6030 = vrot.slane %v5230, 2
    %v6031 = vrot.slane %v5231, 2
    %v6032 = vrot.slane %v5232, 2
    %v6033 = vrot.slane %v5233, 2
    %v6034 = vrot.slane %v5234, 2
    %v6035 = vrot.slane %v5235, 2
    %6052 = vmatprep.subr.bf16.mxu0 %v3829
    %6053 = vmatpush1.bf16.msra.mxu0 %v3828
    %6054 = vmatprep.subr.bf16.mxu0 %v3845
    %6055 = vmatpush1.bf16.msra.mxu0 %v3844
    %6056 = vmatprep.subr.bf16.mxu0 %v3861
    %6057 = vmatpush1.bf16.msra.mxu0 %v3860
    %6058 = vmatprep.subr.bf16.mxu0 %v3877
    %6059 = vmatpush1.bf16.msra.mxu0 %v3876
    %6060 = vmatprep.subr.bf16.mxu0 %v3893
    %6061 = vmatpush1.bf16.msra.mxu0 %v3892
    %6062 = vmatprep.subr.bf16.mxu0 %v3909
    %6063 = vmatpush1.bf16.msra.mxu0 %v3908
    %6064 = vmatprep.subr.bf16.mxu0 %v3925
    %6065 = vmatpush1.bf16.msra.mxu0 %v3924
    %6066 = vmatprep.subr.bf16.mxu0 %v3941
    %6067 = vmatpush1.bf16.msra.mxu0 %v3940
    %6068 = vmatprep.subr.bf16.mxu0 %v3957
    %6069 = vmatpush1.bf16.msra.mxu0 %v3956
    %6070 = vmatprep.subr.bf16.mxu0 %v3973
    %6071 = vmatpush1.bf16.msra.mxu0 %v3972
    %6072 = vmatprep.subr.bf16.mxu0 %v3989
    %6073 = vmatpush1.bf16.msra.mxu0 %v3988
    %6074 = vmatprep.subr.bf16.mxu0 %v4005
    %6075 = vmatpush1.bf16.msra.mxu0 %v4004
    %6076 = vmatprep.subr.bf16.mxu0 %v4021
    %6077 = vmatpush1.bf16.msra.mxu0 %v4020
    %6078 = vmatprep.subr.bf16.mxu0 %v4037
    %6079 = vmatpush1.bf16.msra.mxu0 %v4036
    %6080 = vmatprep.subr.bf16.mxu0 %v4053
    %6081 = vmatpush1.bf16.msra.mxu0 %v4052
    %6082 = vmatprep.subr.bf16.mxu0 %v4069
    %6083 = vmatpush1.bf16.msra.mxu0 %v4068
    %6084 = vmatprep.mubr.bf16.mxu0 %v6017
    %6085 = vmatmul.mubr.bf16.gmra.mrb[0].mxu0 %v6016
    %v6086 = vpop.f32.mrb[0].mxu0
    %v6087 = vadd.f32 %v6020, %v6086
    %v6088 = vpop.f32.mrb[0].mxu0
    %v6089 = vadd.f32 %v6021, %v6088
    %v6090 = vpop.f32.mrb[0].mxu0
    %v6091 = vpop.f32.mrb[0].mxu0
    %6092 = vdwg.mxu0
    %6093 = vmatprep.subr.bf16.mxu0 %v4085
    %6094 = vmatpush1.bf16.msra.mxu0 %v4084
    %6095 = vmatprep.subr.bf16.mxu0 %v4101
    %6096 = vmatpush1.bf16.msra.mxu0 %v4100
    %6097 = vmatprep.subr.bf16.mxu0 %v4117
    %6098 = vmatpush1.bf16.msra.mxu0 %v4116
    %6099 = vmatprep.subr.bf16.mxu0 %v4133
    %6100 = vmatpush1.bf16.msra.mxu0 %v4132
    %6101 = vmatprep.subr.bf16.mxu0 %v4149
    %6102 = vmatpush1.bf16.msra.mxu0 %v4148
    %6103 = vmatprep.subr.bf16.mxu0 %v4165
    %6104 = vmatpush1.bf16.msra.mxu0 %v4164
    %6105 = vmatprep.subr.bf16.mxu0 %v4181
    %6106 = vmatpush1.bf16.msra.mxu0 %v4180
    %6107 = vmatprep.subr.bf16.mxu0 %v4197
    %6108 = vmatpush1.bf16.msra.mxu0 %v4196
    %6109 = vmatprep.subr.bf16.mxu0 %v4213
    %6110 = vmatpush1.bf16.msra.mxu0 %v4212
    %6111 = vmatprep.subr.bf16.mxu0 %v4229
    %6112 = vmatpush1.bf16.msra.mxu0 %v4228
    %6113 = vmatprep.subr.bf16.mxu0 %v4245
    %6114 = vmatpush1.bf16.msra.mxu0 %v4244
    %6115 = vmatprep.subr.bf16.mxu0 %v4261
    %6116 = vmatpush1.bf16.msra.mxu0 %v4260
    %6117 = vmatprep.subr.bf16.mxu0 %v4277
    %6118 = vmatpush1.bf16.msra.mxu0 %v4276
    %6119 = vmatprep.subr.bf16.mxu0 %v4293
    %6120 = vmatpush1.bf16.msra.mxu0 %v4292
    %6121 = vmatprep.subr.bf16.mxu0 %v4309
    %6122 = vmatpush1.bf16.msra.mxu0 %v4308
    %6123 = vmatprep.subr.bf16.mxu0 %v4325
    %6124 = vmatpush1.bf16.msra.mxu0 %v4324
    %6125 = vmatprep.mubr.bf16.mxu0 %v6019
    %6126 = vmatmul.mubr.bf16.gmra.mrb[0].mxu0 %v6018
    %v6127 = vpop.f32.mrb[0].mxu0
    %v6128 = vadd.f32 %v6087, %v6127
    %v6129 = vpop.f32.mrb[0].mxu0
    %v6130 = vadd.f32 %v6089, %v6129
    %v6131 = vpop.f32.mrb[0].mxu0
    %v6132 = vpop.f32.mrb[0].mxu0
    %6133 = vdwg.mxu0
    %6134 = vmatprep.subr.bf16.mxu0 %v3831
    %6135 = vmatpush1.bf16.msra.mxu0 %v3830
    %6136 = vmatprep.subr.bf16.mxu0 %v3847
    %6137 = vmatpush1.bf16.msra.mxu0 %v3846
    %6138 = vmatprep.subr.bf16.mxu0 %v3863
    %6139 = vmatpush1.bf16.msra.mxu0 %v3862
    %6140 = vmatprep.subr.bf16.mxu0 %v3879
    %6141 = vmatpush1.bf16.msra.mxu0 %v3878
    %6142 = vmatprep.subr.bf16.mxu0 %v3895
    %6143 = vmatpush1.bf16.msra.mxu0 %v3894
    %6144 = vmatprep.subr.bf16.mxu0 %v3911
    %6145 = vmatpush1.bf16.msra.mxu0 %v3910
    %6146 = vmatprep.subr.bf16.mxu0 %v3927
    %6147 = vmatpush1.bf16.msra.mxu0 %v3926
    %6148 = vmatprep.subr.bf16.mxu0 %v3943
    %6149 = vmatpush1.bf16.msra.mxu0 %v3942
    %6150 = vmatprep.subr.bf16.mxu0 %v3959
    %6151 = vmatpush1.bf16.msra.mxu0 %v3958
    %6152 = vmatprep.subr.bf16.mxu0 %v3975
    %6153 = vmatpush1.bf16.msra.mxu0 %v3974
    %6154 = vmatprep.subr.bf16.mxu0 %v3991
    %6155 = vmatpush1.bf16.msra.mxu0 %v3990
    %6156 = vmatprep.subr.bf16.mxu0 %v4007
    %6157 = vmatpush1.bf16.msra.mxu0 %v4006
    %6158 = vmatprep.subr.bf16.mxu0 %v4023
    %6159 = vmatpush1.bf16.msra.mxu0 %v4022
    %6160 = vmatprep.subr.bf16.mxu0 %v4039
    %6161 = vmatpush1.bf16.msra.mxu0 %v4038
    %6162 = vmatprep.subr.bf16.mxu0 %v4055
    %6163 = vmatpush1.bf16.msra.mxu0 %v4054
    %6164 = vmatprep.subr.bf16.mxu0 %v4071
    %6165 = vmatpush1.bf16.msra.mxu0 %v4070
    %6166 = vmatprep.mubr.bf16.mxu0 %v6017
    %6167 = vmatmul.mubr.bf16.gmra.mrb[0].mxu0 %v6016
    %v6168 = vpop.f32.mrb[0].mxu0
    %v6169 = vadd.f32 %v6022, %v6168
    %v6170 = vpop.f32.mrb[0].mxu0
    %v6171 = vadd.f32 %v6023, %v6170
    %v6172 = vpop.f32.mrb[0].mxu0
    %v6173 = vpop.f32.mrb[0].mxu0
    %6174 = vdwg.mxu0
    %6175 = vmatprep.subr.bf16.mxu0 %v4087
    %6176 = vmatpush1.bf16.msra.mxu0 %v4086
    %6177 = vmatprep.subr.bf16.mxu0 %v4103
    %6178 = vmatpush1.bf16.msra.mxu0 %v4102
    %6179 = vmatprep.subr.bf16.mxu0 %v4119
    %6180 = vmatpush1.bf16.msra.mxu0 %v4118
    %6181 = vmatprep.subr.bf16.mxu0 %v4135
    %6182 = vmatpush1.bf16.msra.mxu0 %v4134
    %6183 = vmatprep.subr.bf16.mxu0 %v4151
    %6184 = vmatpush1.bf16.msra.mxu0 %v4150
    %6185 = vmatprep.subr.bf16.mxu0 %v4167
    %6186 = vmatpush1.bf16.msra.mxu0 %v4166
    %6187 = vmatprep.subr.bf16.mxu0 %v4183
    %6188 = vmatpush1.bf16.msra.mxu0 %v4182
    %6189 = vmatprep.subr.bf16.mxu0 %v4199
    %6190 = vmatpush1.bf16.msra.mxu0 %v4198
    %6191 = vmatprep.subr.bf16.mxu0 %v4215
    %6192 = vmatpush1.bf16.msra.mxu0 %v4214
    %6193 = vmatprep.subr.bf16.mxu0 %v4231
    %6194 = vmatpush1.bf16.msra.mxu0 %v4230
    %6195 = vmatprep.subr.bf16.mxu0 %v4247
    %6196 = vmatpush1.bf16.msra.mxu0 %v4246
    %6197 = vmatprep.subr.bf16.mxu0 %v4263
    %6198 = vmatpush1.bf16.msra.mxu0 %v4262
    %6199 = vmatprep.subr.bf16.mxu0 %v4279
    %6200 = vmatpush1.bf16.msra.mxu0 %v4278
    %6201 = vmatprep.subr.bf16.mxu0 %v4295
    %6202 = vmatpush1.bf16.msra.mxu0 %v4294
    %6203 = vmatprep.subr.bf16.mxu0 %v4311
    %6204 = vmatpush1.bf16.msra.mxu0 %v4310
    %6205 = vmatprep.subr.bf16.mxu0 %v4327
    %6206 = vmatpush1.bf16.msra.mxu0 %v4326
    %6207 = vmatprep.mubr.bf16.mxu0 %v6019
    %6208 = vmatmul.mubr.bf16.gmra.mrb[0].mxu0 %v6018
    %v6209 = vpop.f32.mrb[0].mxu0
    %v6210 = vadd.f32 %v6169, %v6209
    %v6211 = vpop.f32.mrb[0].mxu0
    %v6212 = vadd.f32 %v6171, %v6211
    %v6213 = vpop.f32.mrb[0].mxu0
    %v6214 = vpop.f32.mrb[0].mxu0
    %6215 = vdwg.mxu0
    %6216 = vmatprep.subr.bf16.mxu0 %v3833
    %6217 = vmatpush1.bf16.msra.mxu0 %v3832
    %6218 = vmatprep.subr.bf16.mxu0 %v3849
    %6219 = vmatpush1.bf16.msra.mxu0 %v3848
    %6220 = vmatprep.subr.bf16.mxu0 %v3865
    %6221 = vmatpush1.bf16.msra.mxu0 %v3864
    %6222 = vmatprep.subr.bf16.mxu0 %v3881
    %6223 = vmatpush1.bf16.msra.mxu0 %v3880
    %6224 = vmatprep.subr.bf16.mxu0 %v3897
    %6225 = vmatpush1.bf16.msra.mxu0 %v3896
    %6226 = vmatprep.subr.bf16.mxu0 %v3913
    %6227 = vmatpush1.bf16.msra.mxu0 %v3912
    %6228 = vmatprep.subr.bf16.mxu0 %v3929
    %6229 = vmatpush1.bf16.msra.mxu0 %v3928
    %6230 = vmatprep.subr.bf16.mxu0 %v3945
    %6231 = vmatpush1.bf16.msra.mxu0 %v3944
    %6232 = vmatprep.subr.bf16.mxu0 %v3961
    %6233 = vmatpush1.bf16.msra.mxu0 %v3960
    %6234 = vmatprep.subr.bf16.mxu0 %v3977
    %6235 = vmatpush1.bf16.msra.mxu0 %v3976
    %6236 = vmatprep.subr.bf16.mxu0 %v3993
    %6237 = vmatpush1.bf16.msra.mxu0 %v3992
    %6238 = vmatprep.subr.bf16.mxu0 %v4009
    %6239 = vmatpush1.bf16.msra.mxu0 %v4008
    %6240 = vmatprep.subr.bf16.mxu0 %v4025
    %6241 = vmatpush1.bf16.msra.mxu0 %v4024
    %6242 = vmatprep.subr.bf16.mxu0 %v4041
    %6243 = vmatpush1.bf16.msra.mxu0 %v4040
    %6244 = vmatprep.subr.bf16.mxu0 %v4057
    %6245 = vmatpush1.bf16.msra.mxu0 %v4056
    %6246 = vmatprep.subr.bf16.mxu0 %v4073
    %6247 = vmatpush1.bf16.msra.mxu0 %v4072
    %6248 = vmatprep.mubr.bf16.mxu0 %v6017
    %6249 = vmatmul.mubr.bf16.gmra.mrb[0].mxu0 %v6016
    %v6250 = vpop.f32.mrb[0].mxu0
    %v6251 = vadd.f32 %v6024, %v6250
    %v6252 = vpop.f32.mrb[0].mxu0
    %v6253 = vadd.f32 %v6025, %v6252
    %v6254 = vpop.f32.mrb[0].mxu0
    %v6255 = vpop.f32.mrb[0].mxu0
    %6256 = vdwg.mxu0
    %6257 = vmatprep.subr.bf16.mxu0 %v4089
    %6258 = vmatpush1.bf16.msra.mxu0 %v4088
    %6259 = vmatprep.subr.bf16.mxu0 %v4105
    %6260 = vmatpush1.bf16.msra.mxu0 %v4104
    %6261 = vmatprep.subr.bf16.mxu0 %v4121
    %6262 = vmatpush1.bf16.msra.mxu0 %v4120
    %6263 = vmatprep.subr.bf16.mxu0 %v4137
    %6264 = vmatpush1.bf16.msra.mxu0 %v4136
    %6265 = vmatprep.subr.bf16.mxu0 %v4153
    %6266 = vmatpush1.bf16.msra.mxu0 %v4152
    %6267 = vmatprep.subr.bf16.mxu0 %v4169
    %6268 = vmatpush1.bf16.msra.mxu0 %v4168
    %6269 = vmatprep.subr.bf16.mxu0 %v4185
    %6270 = vmatpush1.bf16.msra.mxu0 %v4184
    %6271 = vmatprep.subr.bf16.mxu0 %v4201
    %6272 = vmatpush1.bf16.msra.mxu0 %v4200
    %6273 = vmatprep.subr.bf16.mxu0 %v4217
    %6274 = vmatpush1.bf16.msra.mxu0 %v4216
    %6275 = vmatprep.subr.bf16.mxu0 %v4233
    %6276 = vmatpush1.bf16.msra.mxu0 %v4232
    %6277 = vmatprep.subr.bf16.mxu0 %v4249
    %6278 = vmatpush1.bf16.msra.mxu0 %v4248
    %6279 = vmatprep.subr.bf16.mxu0 %v4265
    %6280 = vmatpush1.bf16.msra.mxu0 %v4264
    %6281 = vmatprep.subr.bf16.mxu0 %v4281
    %6282 = vmatpush1.bf16.msra.mxu0 %v4280
    %6283 = vmatprep.subr.bf16.mxu0 %v4297
    %6284 = vmatpush1.bf16.msra.mxu0 %v4296
    %6285 = vmatprep.subr.bf16.mxu0 %v4313
    %6286 = vmatpush1.bf16.msra.mxu0 %v4312
    %6287 = vmatprep.subr.bf16.mxu0 %v4329
    %6288 = vmatpush1.bf16.msra.mxu0 %v4328
    %6289 = vmatprep.mubr.bf16.mxu0 %v6019
    %6290 = vmatmul.mubr.bf16.gmra.mrb[0].mxu0 %v6018
    %v6291 = vpop.f32.mrb[0].mxu0
    %v6292 = vadd.f32 %v6251, %v6291
    %v6293 = vpop.f32.mrb[0].mxu0
    %v6294 = vadd.f32 %v6253, %v6293
    %v6295 = vpop.f32.mrb[0].mxu0
    %v6296 = vpop.f32.mrb[0].mxu0
    %6297 = vdwg.mxu0
    %6298 = vmatprep.subr.bf16.mxu0 %v3835
    %6299 = vmatpush1.bf16.msra.mxu0 %v3834
    %6300 = vmatprep.subr.bf16.mxu0 %v3851
    %6301 = vmatpush1.bf16.msra.mxu0 %v3850
    %6302 = vmatprep.subr.bf16.mxu0 %v3867
    %6303 = vmatpush1.bf16.msra.mxu0 %v3866
    %6304 = vmatprep.subr.bf16.mxu0 %v3883
    %6305 = vmatpush1.bf16.msra.mxu0 %v3882
    %6306 = vmatprep.subr.bf16.mxu0 %v3899
    %6307 = vmatpush1.bf16.msra.mxu0 %v3898
    %6308 = vmatprep.subr.bf16.mxu0 %v3915
    %6309 = vmatpush1.bf16.msra.mxu0 %v3914
    %6310 = vmatprep.subr.bf16.mxu0 %v3931
    %6311 = vmatpush1.bf16.msra.mxu0 %v3930
    %6312 = vmatprep.subr.bf16.mxu0 %v3947
    %6313 = vmatpush1.bf16.msra.mxu0 %v3946
    %6314 = vmatprep.subr.bf16.mxu0 %v3963
    %6315 = vmatpush1.bf16.msra.mxu0 %v3962
    %6316 = vmatprep.subr.bf16.mxu0 %v3979
    %6317 = vmatpush1.bf16.msra.mxu0 %v3978
    %6318 = vmatprep.subr.bf16.mxu0 %v3995
    %6319 = vmatpush1.bf16.msra.mxu0 %v3994
    %6320 = vmatprep.subr.bf16.mxu0 %v4011
    %6321 = vmatpush1.bf16.msra.mxu0 %v4010
    %6322 = vmatprep.subr.bf16.mxu0 %v4027
    %6323 = vmatpush1.bf16.msra.mxu0 %v4026
    %6324 = vmatprep.subr.bf16.mxu0 %v4043
    %6325 = vmatpush1.bf16.msra.mxu0 %v4042
    %6326 = vmatprep.subr.bf16.mxu0 %v4059
    %6327 = vmatpush1.bf16.msra.mxu0 %v4058
    %6328 = vmatprep.subr.bf16.mxu0 %v4075
    %6329 = vmatpush1.bf16.msra.mxu0 %v4074
    %6330 = vmatprep.mubr.bf16.mxu0 %v6017
    %6331 = vmatmul.mubr.bf16.gmra.mrb[0].mxu0 %v6016
    %v6332 = vpop.f32.mrb[0].mxu0
    %v6333 = vadd.f32 %v6026, %v6332
    %v6334 = vpop.f32.mrb[0].mxu0
    %v6335 = vadd.f32 %v6027, %v6334
    %v6336 = vpop.f32.mrb[0].mxu0
    %v6337 = vpop.f32.mrb[0].mxu0
    %6338 = vdwg.mxu0
    %6339 = vmatprep.subr.bf16.mxu0 %v4091
    %6340 = vmatpush1.bf16.msra.mxu0 %v4090
    %6341 = vmatprep.subr.bf16.mxu0 %v4107
    %6342 = vmatpush1.bf16.msra.mxu0 %v4106
    %6343 = vmatprep.subr.bf16.mxu0 %v4123
    %6344 = vmatpush1.bf16.msra.mxu0 %v4122
    %6345 = vmatprep.subr.bf16.mxu0 %v4139
    %6346 = vmatpush1.bf16.msra.mxu0 %v4138
    %6347 = vmatprep.subr.bf16.mxu0 %v4155
    %6348 = vmatpush1.bf16.msra.mxu0 %v4154
    %6349 = vmatprep.subr.bf16.mxu0 %v4171
    %6350 = vmatpush1.bf16.msra.mxu0 %v4170
    %6351 = vmatprep.subr.bf16.mxu0 %v4187
    %6352 = vmatpush1.bf16.msra.mxu0 %v4186
    %6353 = vmatprep.subr.bf16.mxu0 %v4203
    %6354 = vmatpush1.bf16.msra.mxu0 %v4202
    %6355 = vmatprep.subr.bf16.mxu0 %v4219
    %6356 = vmatpush1.bf16.msra.mxu0 %v4218
    %6357 = vmatprep.subr.bf16.mxu0 %v4235
    %6358 = vmatpush1.bf16.msra.mxu0 %v4234
    %6359 = vmatprep.subr.bf16.mxu0 %v4251
    %6360 = vmatpush1.bf16.msra.mxu0 %v4250
    %6361 = vmatprep.subr.bf16.mxu0 %v4267
    %6362 = vmatpush1.bf16.msra.mxu0 %v4266
    %6363 = vmatprep.subr.bf16.mxu0 %v4283
    %6364 = vmatpush1.bf16.msra.mxu0 %v4282
    %6365 = vmatprep.subr.bf16.mxu0 %v4299
    %6366 = vmatpush1.bf16.msra.mxu0 %v4298
    %6367 = vmatprep.subr.bf16.mxu0 %v4315
    %6368 = vmatpush1.bf16.msra.mxu0 %v4314
    %6369 = vmatprep.subr.bf16.mxu0 %v4331
    %6370 = vmatpush1.bf16.msra.mxu0 %v4330
    %6371 = vmatprep.mubr.bf16.mxu0 %v6019
    %6372 = vmatmul.mubr.bf16.gmra.mrb[0].mxu0 %v6018
    %v6373 = vpop.f32.mrb[0].mxu0
    %v6374 = vadd.f32 %v6333, %v6373
    %v6375 = vpop.f32.mrb[0].mxu0
    %v6376 = vadd.f32 %v6335, %v6375
    %v6377 = vpop.f32.mrb[0].mxu0
    %v6378 = vpop.f32.mrb[0].mxu0
    %6379 = vdwg.mxu0
    %6380 = vmatprep.subr.bf16.mxu0 %v3837
    %6381 = vmatpush1.bf16.msra.mxu0 %v3836
    %6382 = vmatprep.subr.bf16.mxu0 %v3853
    %6383 = vmatpush1.bf16.msra.mxu0 %v3852
    %6384 = vmatprep.subr.bf16.mxu0 %v3869
    %6385 = vmatpush1.bf16.msra.mxu0 %v3868
    %6386 = vmatprep.subr.bf16.mxu0 %v3885
    %6387 = vmatpush1.bf16.msra.mxu0 %v3884
    %6388 = vmatprep.subr.bf16.mxu0 %v3901
    %6389 = vmatpush1.bf16.msra.mxu0 %v3900
    %6390 = vmatprep.subr.bf16.mxu0 %v3917
    %6391 = vmatpush1.bf16.msra.mxu0 %v3916
    %6392 = vmatprep.subr.bf16.mxu0 %v3933
    %6393 = vmatpush1.bf16.msra.mxu0 %v3932
    %6394 = vmatprep.subr.bf16.mxu0 %v3949
    %6395 = vmatpush1.bf16.msra.mxu0 %v3948
    %6396 = vmatprep.subr.bf16.mxu0 %v3965
    %6397 = vmatpush1.bf16.msra.mxu0 %v3964
    %6398 = vmatprep.subr.bf16.mxu0 %v3981
    %6399 = vmatpush1.bf16.msra.mxu0 %v3980
    %6400 = vmatprep.subr.bf16.mxu0 %v3997
    %6401 = vmatpush1.bf16.msra.mxu0 %v3996
    %6402 = vmatprep.subr.bf16.mxu0 %v4013
    %6403 = vmatpush1.bf16.msra.mxu0 %v4012
    %6404 = vmatprep.subr.bf16.mxu0 %v4029
    %6405 = vmatpush1.bf16.msra.mxu0 %v4028
    %6406 = vmatprep.subr.bf16.mxu0 %v4045
    %6407 = vmatpush1.bf16.msra.mxu0 %v4044
    %6408 = vmatprep.subr.bf16.mxu0 %v4061
    %6409 = vmatpush1.bf16.msra.mxu0 %v4060
    %6410 = vmatprep.subr.bf16.mxu0 %v4077
    %6411 = vmatpush1.bf16.msra.mxu0 %v4076
    %6412 = vmatprep.mubr.bf16.mxu0 %v6017
    %6413 = vmatmul.mubr.bf16.gmra.mrb[0].mxu0 %v6016
    %v6414 = vpop.f32.mrb[0].mxu0
    %v6415 = vadd.f32 %v6028, %v6414
    %v6416 = vpop.f32.mrb[0].mxu0
    %v6417 = vadd.f32 %v6029, %v6416
    %v6418 = vpop.f32.mrb[0].mxu0
    %v6419 = vpop.f32.mrb[0].mxu0
    %6420 = vdwg.mxu0
    %6421 = vmatprep.subr.bf16.mxu0 %v4093
    %6422 = vmatpush1.bf16.msra.mxu0 %v4092
    %6423 = vmatprep.subr.bf16.mxu0 %v4109
    %6424 = vmatpush1.bf16.msra.mxu0 %v4108
    %6425 = vmatprep.subr.bf16.mxu0 %v4125
    %6426 = vmatpush1.bf16.msra.mxu0 %v4124
    %6427 = vmatprep.subr.bf16.mxu0 %v4141
    %6428 = vmatpush1.bf16.msra.mxu0 %v4140
    %6429 = vmatprep.subr.bf16.mxu0 %v4157
    %6430 = vmatpush1.bf16.msra.mxu0 %v4156
    %6431 = vmatprep.subr.bf16.mxu0 %v4173
    %6432 = vmatpush1.bf16.msra.mxu0 %v4172
    %6433 = vmatprep.subr.bf16.mxu0 %v4189
    %6434 = vmatpush1.bf16.msra.mxu0 %v4188
    %6435 = vmatprep.subr.bf16.mxu0 %v4205
    %6436 = vmatpush1.bf16.msra.mxu0 %v4204
    %6437 = vmatprep.subr.bf16.mxu0 %v4221
    %6438 = vmatpush1.bf16.msra.mxu0 %v4220
    %6439 = vmatprep.subr.bf16.mxu0 %v4237
    %6440 = vmatpush1.bf16.msra.mxu0 %v4236
    %6441 = vmatprep.subr.bf16.mxu0 %v4253
    %6442 = vmatpush1.bf16.msra.mxu0 %v4252
    %6443 = vmatprep.subr.bf16.mxu0 %v4269
    %6444 = vmatpush1.bf16.msra.mxu0 %v4268
    %6445 = vmatprep.subr.bf16.mxu0 %v4285
    %6446 = vmatpush1.bf16.msra.mxu0 %v4284
    %6447 = vmatprep.subr.bf16.mxu0 %v4301
    %6448 = vmatpush1.bf16.msra.mxu0 %v4300
    %6449 = vmatprep.subr.bf16.mxu0 %v4317
    %6450 = vmatpush1.bf16.msra.mxu0 %v4316
    %6451 = vmatprep.subr.bf16.mxu0 %v4333
    %6452 = vmatpush1.bf16.msra.mxu0 %v4332
    %6453 = vmatprep.mubr.bf16.mxu0 %v6019
    %6454 = vmatmul.mubr.bf16.gmra.mrb[0].mxu0 %v6018
    %v6455 = vpop.f32.mrb[0].mxu0
    %v6456 = vadd.f32 %v6415, %v6455
    %v6457 = vpop.f32.mrb[0].mxu0
    %v6458 = vadd.f32 %v6417, %v6457
    %v6459 = vpop.f32.mrb[0].mxu0
    %v6460 = vpop.f32.mrb[0].mxu0
    %6461 = vdwg.mxu0
    %6462 = vmatprep.subr.bf16.mxu0 %v3839
    %6463 = vmatpush1.bf16.msra.mxu0 %v3838
    %6464 = vmatprep.subr.bf16.mxu0 %v3855
    %6465 = vmatpush1.bf16.msra.mxu0 %v3854
    %6466 = vmatprep.subr.bf16.mxu0 %v3871
    %6467 = vmatpush1.bf16.msra.mxu0 %v3870
    %6468 = vmatprep.subr.bf16.mxu0 %v3887
    %6469 = vmatpush1.bf16.msra.mxu0 %v3886
    %6470 = vmatprep.subr.bf16.mxu0 %v3903
    %6471 = vmatpush1.bf16.msra.mxu0 %v3902
    %6472 = vmatprep.subr.bf16.mxu0 %v3919
    %6473 = vmatpush1.bf16.msra.mxu0 %v3918
    %6474 = vmatprep.subr.bf16.mxu0 %v3935
    %6475 = vmatpush1.bf16.msra.mxu0 %v3934
    %6476 = vmatprep.subr.bf16.mxu0 %v3951
    %6477 = vmatpush1.bf16.msra.mxu0 %v3950
    %6478 = vmatprep.subr.bf16.mxu0 %v3967
    %6479 = vmatpush1.bf16.msra.mxu0 %v3966
    %6480 = vmatprep.subr.bf16.mxu0 %v3983
    %6481 = vmatpush1.bf16.msra.mxu0 %v3982
    %6482 = vmatprep.subr.bf16.mxu0 %v3999
    %6483 = vmatpush1.bf16.msra.mxu0 %v3998
    %6484 = vmatprep.subr.bf16.mxu0 %v4015
    %6485 = vmatpush1.bf16.msra.mxu0 %v4014
    %6486 = vmatprep.subr.bf16.mxu0 %v4031
    %6487 = vmatpush1.bf16.msra.mxu0 %v4030
    %6488 = vmatprep.subr.bf16.mxu0 %v4047
    %6489 = vmatpush1.bf16.msra.mxu0 %v4046
    %6490 = vmatprep.subr.bf16.mxu0 %v4063
    %6491 = vmatpush1.bf16.msra.mxu0 %v4062
    %6492 = vmatprep.subr.bf16.mxu0 %v4079
    %6493 = vmatpush1.bf16.msra.mxu0 %v4078
    %6494 = vmatprep.mubr.bf16.mxu0 %v6017
    %6495 = vmatmul.mubr.bf16.gmra.mrb[0].mxu0 %v6016
    %v6496 = vpop.f32.mrb[0].mxu0
    %v6497 = vadd.f32 %v6030, %v6496
    %v6498 = vpop.f32.mrb[0].mxu0
    %v6499 = vadd.f32 %v6031, %v6498
    %v6500 = vpop.f32.mrb[0].mxu0
    %v6501 = vpop.f32.mrb[0].mxu0
    %6502 = vdwg.mxu0
    %6503 = vmatprep.subr.bf16.mxu0 %v4095
    %6504 = vmatpush1.bf16.msra.mxu0 %v4094
    %6505 = vmatprep.subr.bf16.mxu0 %v4111
    %6506 = vmatpush1.bf16.msra.mxu0 %v4110
    %6507 = vmatprep.subr.bf16.mxu0 %v4127
    %6508 = vmatpush1.bf16.msra.mxu0 %v4126
    %6509 = vmatprep.subr.bf16.mxu0 %v4143
    %6510 = vmatpush1.bf16.msra.mxu0 %v4142
    %6511 = vmatprep.subr.bf16.mxu0 %v4159
    %6512 = vmatpush1.bf16.msra.mxu0 %v4158
    %6513 = vmatprep.subr.bf16.mxu0 %v4175
    %6514 = vmatpush1.bf16.msra.mxu0 %v4174
    %6515 = vmatprep.subr.bf16.mxu0 %v4191
    %6516 = vmatpush1.bf16.msra.mxu0 %v4190
    %6517 = vmatprep.subr.bf16.mxu0 %v4207
    %6518 = vmatpush1.bf16.msra.mxu0 %v4206
    %6519 = vmatprep.subr.bf16.mxu0 %v4223
    %6520 = vmatpush1.bf16.msra.mxu0 %v4222
    %6521 = vmatprep.subr.bf16.mxu0 %v4239
    %6522 = vmatpush1.bf16.msra.mxu0 %v4238
    %6523 = vmatprep.subr.bf16.mxu0 %v4255
    %6524 = vmatpush1.bf16.msra.mxu0 %v4254
    %6525 = vmatprep.subr.bf16.mxu0 %v4271
    %6526 = vmatpush1.bf16.msra.mxu0 %v4270
    %6527 = vmatprep.subr.bf16.mxu0 %v4287
    %6528 = vmatpush1.bf16.msra.mxu0 %v4286
    %6529 = vmatprep.subr.bf16.mxu0 %v4303
    %6530 = vmatpush1.bf16.msra.mxu0 %v4302
    %6531 = vmatprep.subr.bf16.mxu0 %v4319
    %6532 = vmatpush1.bf16.msra.mxu0 %v4318
    %6533 = vmatprep.subr.bf16.mxu0 %v4335
    %6534 = vmatpush1.bf16.msra.mxu0 %v4334
    %6535 = vmatprep.mubr.bf16.mxu0 %v6019
    %6536 = vmatmul.mubr.bf16.gmra.mrb[0].mxu0 %v6018
    %v6537 = vpop.f32.mrb[0].mxu0
    %v6538 = vadd.f32 %v6497, %v6537
    %v6539 = vpop.f32.mrb[0].mxu0
    %v6540 = vadd.f32 %v6499, %v6539
    %v6541 = vpop.f32.mrb[0].mxu0
    %v6542 = vpop.f32.mrb[0].mxu0
    %6543 = vdwg.mxu0
    %6544 = vmatprep.subr.bf16.mxu0 %v3841
    %6545 = vmatpush1.bf16.msra.mxu0 %v3840
    %6546 = vmatprep.subr.bf16.mxu0 %v3857
    %6547 = vmatpush1.bf16.msra.mxu0 %v3856
    %6548 = vmatprep.subr.bf16.mxu0 %v3873
    %6549 = vmatpush1.bf16.msra.mxu0 %v3872
    %6550 = vmatprep.subr.bf16.mxu0 %v3889
    %6551 = vmatpush1.bf16.msra.mxu0 %v3888
    %6552 = vmatprep.subr.bf16.mxu0 %v3905
    %6553 = vmatpush1.bf16.msra.mxu0 %v3904
    %6554 = vmatprep.subr.bf16.mxu0 %v3921
    %6555 = vmatpush1.bf16.msra.mxu0 %v3920
    %6556 = vmatprep.subr.bf16.mxu0 %v3937
    %6557 = vmatpush1.bf16.msra.mxu0 %v3936
    %6558 = vmatprep.subr.bf16.mxu0 %v3953
    %6559 = vmatpush1.bf16.msra.mxu0 %v3952
    %6560 = vmatprep.subr.bf16.mxu0 %v3969
    %6561 = vmatpush1.bf16.msra.mxu0 %v3968
    %6562 = vmatprep.subr.bf16.mxu0 %v3985
    %6563 = vmatpush1.bf16.msra.mxu0 %v3984
    %6564 = vmatprep.subr.bf16.mxu0 %v4001
    %6565 = vmatpush1.bf16.msra.mxu0 %v4000
    %6566 = vmatprep.subr.bf16.mxu0 %v4017
    %6567 = vmatpush1.bf16.msra.mxu0 %v4016
    %6568 = vmatprep.subr.bf16.mxu0 %v4033
    %6569 = vmatpush1.bf16.msra.mxu0 %v4032
    %6570 = vmatprep.subr.bf16.mxu0 %v4049
    %6571 = vmatpush1.bf16.msra.mxu0 %v4048
    %6572 = vmatprep.subr.bf16.mxu0 %v4065
    %6573 = vmatpush1.bf16.msra.mxu0 %v4064
    %6574 = vmatprep.subr.bf16.mxu0 %v4081
    %6575 = vmatpush1.bf16.msra.mxu0 %v4080
    %6576 = vmatprep.mubr.bf16.mxu0 %v6017
    %6577 = vmatmul.mubr.bf16.gmra.mrb[0].mxu0 %v6016
    %v6578 = vpop.f32.mrb[0].mxu0
    %v6579 = vadd.f32 %v6032, %v6578
    %v6580 = vpop.f32.mrb[0].mxu0
    %v6581 = vadd.f32 %v6033, %v6580
    %v6582 = vpop.f32.mrb[0].mxu0
    %v6583 = vpop.f32.mrb[0].mxu0
    %6584 = vdwg.mxu0
    %6585 = vmatprep.subr.bf16.mxu0 %v4097
    %6586 = vmatpush1.bf16.msra.mxu0 %v4096
    %6587 = vmatprep.subr.bf16.mxu0 %v4113
    %6588 = vmatpush1.bf16.msra.mxu0 %v4112
    %6589 = vmatprep.subr.bf16.mxu0 %v4129
    %6590 = vmatpush1.bf16.msra.mxu0 %v4128
    %6591 = vmatprep.subr.bf16.mxu0 %v4145
    %6592 = vmatpush1.bf16.msra.mxu0 %v4144
    %6593 = vmatprep.subr.bf16.mxu0 %v4161
    %6594 = vmatpush1.bf16.msra.mxu0 %v4160
    %6595 = vmatprep.subr.bf16.mxu0 %v4177
    %6596 = vmatpush1.bf16.msra.mxu0 %v4176
    %6597 = vmatprep.subr.bf16.mxu0 %v4193
    %6598 = vmatpush1.bf16.msra.mxu0 %v4192
    %6599 = vmatprep.subr.bf16.mxu0 %v4209
    %6600 = vmatpush1.bf16.msra.mxu0 %v4208
    %6601 = vmatprep.subr.bf16.mxu0 %v4225
    %6602 = vmatpush1.bf16.msra.mxu0 %v4224
    %6603 = vmatprep.subr.bf16.mxu0 %v4241
    %6604 = vmatpush1.bf16.msra.mxu0 %v4240
    %6605 = vmatprep.subr.bf16.mxu0 %v4257
    %6606 = vmatpush1.bf16.msra.mxu0 %v4256
    %6607 = vmatprep.subr.bf16.mxu0 %v4273
    %6608 = vmatpush1.bf16.msra.mxu0 %v4272
    %6609 = vmatprep.subr.bf16.mxu0 %v4289
    %6610 = vmatpush1.bf16.msra.mxu0 %v4288
    %6611 = vmatprep.subr.bf16.mxu0 %v4305
    %6612 = vmatpush1.bf16.msra.mxu0 %v4304
    %6613 = vmatprep.subr.bf16.mxu0 %v4321
    %6614 = vmatpush1.bf16.msra.mxu0 %v4320
    %6615 = vmatprep.subr.bf16.mxu0 %v4337
    %6616 = vmatpush1.bf16.msra.mxu0 %v4336
    %6617 = vmatprep.mubr.bf16.mxu0 %v6019
    %6618 = vmatmul.mubr.bf16.gmra.mrb[0].mxu0 %v6018
    %v6619 = vpop.f32.mrb[0].mxu0
    %v6620 = vadd.f32 %v6579, %v6619
    %v6621 = vpop.f32.mrb[0].mxu0
    %v6622 = vadd.f32 %v6581, %v6621
    %v6623 = vpop.f32.mrb[0].mxu0
    %v6624 = vpop.f32.mrb[0].mxu0
    %6625 = vdwg.mxu0
    %6626 = vmatprep.subr.bf16.mxu0 %v3843
    %6627 = vmatpush1.bf16.msra.mxu0 %v3842
    %6628 = vmatprep.subr.bf16.mxu0 %v3859
    %6629 = vmatpush1.bf16.msra.mxu0 %v3858
    %6630 = vmatprep.subr.bf16.mxu0 %v3875
    %6631 = vmatpush1.bf16.msra.mxu0 %v3874
    %6632 = vmatprep.subr.bf16.mxu0 %v3891
    %6633 = vmatpush1.bf16.msra.mxu0 %v3890
    %6634 = vmatprep.subr.bf16.mxu0 %v3907
    %6635 = vmatpush1.bf16.msra.mxu0 %v3906
    %6636 = vmatprep.subr.bf16.mxu0 %v3923
    %6637 = vmatpush1.bf16.msra.mxu0 %v3922
    %6638 = vmatprep.subr.bf16.mxu0 %v3939
    %6639 = vmatpush1.bf16.msra.mxu0 %v3938
    %6640 = vmatprep.subr.bf16.mxu0 %v3955
    %6641 = vmatpush1.bf16.msra.mxu0 %v3954
    %6642 = vmatprep.subr.bf16.mxu0 %v3971
    %6643 = vmatpush1.bf16.msra.mxu0 %v3970
    %6644 = vmatprep.subr.bf16.mxu0 %v3987
    %6645 = vmatpush1.bf16.msra.mxu0 %v3986
    %6646 = vmatprep.subr.bf16.mxu0 %v4003
    %6647 = vmatpush1.bf16.msra.mxu0 %v4002
    %6648 = vmatprep.subr.bf16.mxu0 %v4019
    %6649 = vmatpush1.bf16.msra.mxu0 %v4018
    %6650 = vmatprep.subr.bf16.mxu0 %v4035
    %6651 = vmatpush1.bf16.msra.mxu0 %v4034
    %6652 = vmatprep.subr.bf16.mxu0 %v4051
    %6653 = vmatpush1.bf16.msra.mxu0 %v4050
    %6654 = vmatprep.subr.bf16.mxu0 %v4067
    %6655 = vmatpush1.bf16.msra.mxu0 %v4066
    %6656 = vmatprep.subr.bf16.mxu0 %v4083
    %6657 = vmatpush1.bf16.msra.mxu0 %v4082
    %6658 = vmatprep.mubr.bf16.mxu0 %v6017
    %6659 = vmatmul.mubr.bf16.gmra.mrb[0].mxu0 %v6016
    %v6660 = vpop.f32.mrb[0].mxu0
    %v6661 = vadd.f32 %v6034, %v6660
    %v6662 = vpop.f32.mrb[0].mxu0
    %v6663 = vadd.f32 %v6035, %v6662
    %v6664 = vpop.f32.mrb[0].mxu0
    %v6665 = vpop.f32.mrb[0].mxu0
    %6666 = vdwg.mxu0
    %6667 = vmatprep.subr.bf16.mxu0 %v4099
    %6668 = vmatpush1.bf16.msra.mxu0 %v4098
    %6669 = vmatprep.subr.bf16.mxu0 %v4115
    %6670 = vmatpush1.bf16.msra.mxu0 %v4114
    %6671 = vmatprep.subr.bf16.mxu0 %v4131
    %6672 = vmatpush1.bf16.msra.mxu0 %v4130
    %6673 = vmatprep.subr.bf16.mxu0 %v4147
    %6674 = vmatpush1.bf16.msra.mxu0 %v4146
    %6675 = vmatprep.subr.bf16.mxu0 %v4163
    %6676 = vmatpush1.bf16.msra.mxu0 %v4162
    %6677 = vmatprep.subr.bf16.mxu0 %v4179
    %6678 = vmatpush1.bf16.msra.mxu0 %v4178
    %6679 = vmatprep.subr.bf16.mxu0 %v4195
    %6680 = vmatpush1.bf16.msra.mxu0 %v4194
    %6681 = vmatprep.subr.bf16.mxu0 %v4211
    %6682 = vmatpush1.bf16.msra.mxu0 %v4210
    %6683 = vmatprep.subr.bf16.mxu0 %v4227
    %6684 = vmatpush1.bf16.msra.mxu0 %v4226
    %6685 = vmatprep.subr.bf16.mxu0 %v4243
    %6686 = vmatpush1.bf16.msra.mxu0 %v4242
    %6687 = vmatprep.subr.bf16.mxu0 %v4259
    %6688 = vmatpush1.bf16.msra.mxu0 %v4258
    %6689 = vmatprep.subr.bf16.mxu0 %v4275
    %6690 = vmatpush1.bf16.msra.mxu0 %v4274
    %6691 = vmatprep.subr.bf16.mxu0 %v4291
    %6692 = vmatpush1.bf16.msra.mxu0 %v4290
    %6693 = vmatprep.subr.bf16.mxu0 %v4307
    %6694 = vmatpush1.bf16.msra.mxu0 %v4306
    %6695 = vmatprep.subr.bf16.mxu0 %v4323
    %6696 = vmatpush1.bf16.msra.mxu0 %v4322
    %6697 = vmatprep.subr.bf16.mxu0 %v4339
    %6698 = vmatpush1.bf16.msra.mxu0 %v4338
    %6699 = vmatprep.mubr.bf16.mxu0 %v6019
    %6700 = vmatmul.mubr.bf16.gmra.mrb[0].mxu0 %v6018
    %v6701 = vpop.f32.mrb[0].mxu0
    %v6702 = vadd.f32 %v6661, %v6701
    %v6703 = vpop.f32.mrb[0].mxu0
    %v6704 = vadd.f32 %v6663, %v6703
    %v6705 = vpop.f32.mrb[0].mxu0
    %v6706 = vpop.f32.mrb[0].mxu0
    %6707 = vdwg.mxu0
    %v6708 = vmul.f32 %v6128, 0.5
    %v6709 = vmul.f32 %v6130, 0.5
    %v6710 = vmul.f32 %v6210, 0.5
    %v6711 = vmul.f32 %v6212, 0.5
    %v6712 = vtanh.pop %v6708
    %v6713 = vtanh.pop %v6709
    %v6714 = vtanh.pop %v6710
    %v6715 = vtanh.pop %v6711
    %v6716 = vmul.f32 %v6712, 0.5
    %v6717 = vmul.f32 %v6713, 0.5
    %v6718 = vmul.f32 %v6714, 0.5
    %v6719 = vmul.f32 %v6715, 0.5
    %v6720 = vadd.f32 %v6716, 0.5
    %v6721 = vadd.f32 %v6717, 0.5
    %v6722 = vadd.f32 %v6718, 0.5
    %v6723 = vadd.f32 %v6719, 0.5
    %v6724 = vmul.f32 %v6292, 0.5
    %v6725 = vmul.f32 %v6294, 0.5
    %v6726 = vmul.f32 %v6374, 0.5
    %v6727 = vmul.f32 %v6376, 0.5
    %v6728 = vtanh.pop %v6724
    %v6729 = vtanh.pop %v6725
    %v6730 = vtanh.pop %v6726
    %v6731 = vtanh.pop %v6727
    %v6732 = vmul.f32 %v6728, 0.5
    %v6733 = vmul.f32 %v6729, 0.5
    %v6734 = vmul.f32 %v6730, 0.5
    %v6735 = vmul.f32 %v6731, 0.5
    %v6736 = vadd.f32 %v6732, 0.5
    %v6737 = vadd.f32 %v6733, 0.5
    %v6738 = vadd.f32 %v6734, 0.5
    %v6739 = vadd.f32 %v6735, 0.5
    %v6740 = vtanh.pop %v6456
    %v6741 = vtanh.pop %v6458
    %v6742 = vtanh.pop %v6538
    %v6743 = vtanh.pop %v6540
    %v6744 = vmul.f32 %v6620, 0.5
    %v6745 = vmul.f32 %v6622, 0.5
    %v6746 = vmul.f32 %v6702, 0.5
    %v6747 = vmul.f32 %v6704, 0.5
    %v6748 = vtanh.pop %v6744
    %v6749 = vtanh.pop %v6745
    %v6750 = vtanh.pop %v6746
    %v6751 = vtanh.pop %v6747
    %v6752 = vmul.f32 %v6748, 0.5
    %v6753 = vmul.f32 %v6749, 0.5
    %v6754 = vmul.f32 %v6750, 0.5
    %v6755 = vmul.f32 %v6751, 0.5
    %v6756 = vadd.f32 %v6752, 0.5
    %v6757 = vadd.f32 %v6753, 0.5
    %v6758 = vadd.f32 %v6754, 0.5
    %v6759 = vadd.f32 %v6755, 0.5
    %v6760 = vmul.f32 %v6736, %v6004
    %v6761 = vmul.f32 %v6737, %v6005
    %v6762 = vmul.f32 %v6738, %v6006
    %v6763 = vmul.f32 %v6739, %v6007
    %v6764 = vmul.f32 %v6720, %v6740
    %v6765 = vmul.f32 %v6721, %v6741
    %v6766 = vmul.f32 %v6722, %v6742
    %v6767 = vmul.f32 %v6723, %v6743
    %v6768 = vadd.f32 %v6760, %v6764
    %v6769 = vadd.f32 %v6761, %v6765
    %v6770 = vadd.f32 %v6762, %v6766
    %v6771 = vadd.f32 %v6763, %v6767
    %v6772 = vtanh.pop %v6768
    %v6773 = vtanh.pop %v6769
    %v6774 = vtanh.pop %v6770
    %v6775 = vtanh.pop %v6771
    %v6776 = vmul.f32 %v6756, %v6772
    %v6777 = vmul.f32 %v6757, %v6773
    %v6778 = vmul.f32 %v6758, %v6774
    %v6779 = vmul.f32 %v6759, %v6775
    %v6780 = vpack.c.bf16 %v6776, %v6776
    %v6781 = vpack.c.bf16 %v6777, %v6777
    %v6782 = vpack.c.bf16 %v6778, %v6778
    %v6783 = vpack.c.bf16 %v6779, %v6779
    %v6784 = vrot.slane %v5220, 3
    %v6785 = vrot.slane %v5221, 3
    %v6786 = vrot.slane %v5222, 3
    %v6787 = vrot.slane %v5223, 3
    %v6788 = vrot.slane %v5224, 3
    %v6789 = vrot.slane %v5225, 3
    %v6790 = vrot.slane %v5226, 3
    %v6791 = vrot.slane %v5227, 3
    %v6792 = vrot.slane %v5228, 3
    %v6793 = vrot.slane %v5229, 3
    %v6794 = vrot.slane %v5230, 3
    %v6795 = vrot.slane %v5231, 3
    %v6796 = vrot.slane %v5232, 3
    %v6797 = vrot.slane %v5233, 3
    %v6798 = vrot.slane %v5234, 3
    %v6799 = vrot.slane %v5235, 3
    %6816 = vmatprep.subr.bf16.mxu0 %v3829
    %6817 = vmatpush1.bf16.msra.mxu0 %v3828
    %6818 = vmatprep.subr.bf16.mxu0 %v3845
    %6819 = vmatpush1.bf16.msra.mxu0 %v3844
    %6820 = vmatprep.subr.bf16.mxu0 %v3861
    %6821 = vmatpush1.bf16.msra.mxu0 %v3860
    %6822 = vmatprep.subr.bf16.mxu0 %v3877
    %6823 = vmatpush1.bf16.msra.mxu0 %v3876
    %6824 = vmatprep.subr.bf16.mxu0 %v3893
    %6825 = vmatpush1.bf16.msra.mxu0 %v3892
    %6826 = vmatprep.subr.bf16.mxu0 %v3909
    %6827 = vmatpush1.bf16.msra.mxu0 %v3908
    %6828 = vmatprep.subr.bf16.mxu0 %v3925
    %6829 = vmatpush1.bf16.msra.mxu0 %v3924
    %6830 = vmatprep.subr.bf16.mxu0 %v3941
    %6831 = vmatpush1.bf16.msra.mxu0 %v3940
    %6832 = vmatprep.subr.bf16.mxu0 %v3957
    %6833 = vmatpush1.bf16.msra.mxu0 %v3956
    %6834 = vmatprep.subr.bf16.mxu0 %v3973
    %6835 = vmatpush1.bf16.msra.mxu0 %v3972
    %6836 = vmatprep.subr.bf16.mxu0 %v3989
    %6837 = vmatpush1.bf16.msra.mxu0 %v3988
    %6838 = vmatprep.subr.bf16.mxu0 %v4005
    %6839 = vmatpush1.bf16.msra.mxu0 %v4004
    %6840 = vmatprep.subr.bf16.mxu0 %v4021
    %6841 = vmatpush1.bf16.msra.mxu0 %v4020
    %6842 = vmatprep.subr.bf16.mxu0 %v4037
    %6843 = vmatpush1.bf16.msra.mxu0 %v4036
    %6844 = vmatprep.subr.bf16.mxu0 %v4053
    %6845 = vmatpush1.bf16.msra.mxu0 %v4052
    %6846 = vmatprep.subr.bf16.mxu0 %v4069
    %6847 = vmatpush1.bf16.msra.mxu0 %v4068
    %6848 = vmatprep.mubr.bf16.mxu0 %v6781
    %6849 = vmatmul.mubr.bf16.gmra.mrb[0].mxu0 %v6780
    %v6850 = vpop.f32.mrb[0].mxu0
    %v6851 = vadd.f32 %v6784, %v6850
    %v6852 = vpop.f32.mrb[0].mxu0
    %v6853 = vadd.f32 %v6785, %v6852
    %v6854 = vpop.f32.mrb[0].mxu0
    %v6855 = vpop.f32.mrb[0].mxu0
    %6856 = vdwg.mxu0
    %6857 = vmatprep.subr.bf16.mxu0 %v4085
    %6858 = vmatpush1.bf16.msra.mxu0 %v4084
    %6859 = vmatprep.subr.bf16.mxu0 %v4101
    %6860 = vmatpush1.bf16.msra.mxu0 %v4100
    %6861 = vmatprep.subr.bf16.mxu0 %v4117
    %6862 = vmatpush1.bf16.msra.mxu0 %v4116
    %6863 = vmatprep.subr.bf16.mxu0 %v4133
    %6864 = vmatpush1.bf16.msra.mxu0 %v4132
    %6865 = vmatprep.subr.bf16.mxu0 %v4149
    %6866 = vmatpush1.bf16.msra.mxu0 %v4148
    %6867 = vmatprep.subr.bf16.mxu0 %v4165
    %6868 = vmatpush1.bf16.msra.mxu0 %v4164
    %6869 = vmatprep.subr.bf16.mxu0 %v4181
    %6870 = vmatpush1.bf16.msra.mxu0 %v4180
    %6871 = vmatprep.subr.bf16.mxu0 %v4197
    %6872 = vmatpush1.bf16.msra.mxu0 %v4196
    %6873 = vmatprep.subr.bf16.mxu0 %v4213
    %6874 = vmatpush1.bf16.msra.mxu0 %v4212
    %6875 = vmatprep.subr.bf16.mxu0 %v4229
    %6876 = vmatpush1.bf16.msra.mxu0 %v4228
    %6877 = vmatprep.subr.bf16.mxu0 %v4245
    %6878 = vmatpush1.bf16.msra.mxu0 %v4244
    %6879 = vmatprep.subr.bf16.mxu0 %v4261
    %6880 = vmatpush1.bf16.msra.mxu0 %v4260
    %6881 = vmatprep.subr.bf16.mxu0 %v4277
    %6882 = vmatpush1.bf16.msra.mxu0 %v4276
    %6883 = vmatprep.subr.bf16.mxu0 %v4293
    %6884 = vmatpush1.bf16.msra.mxu0 %v4292
    %6885 = vmatprep.subr.bf16.mxu0 %v4309
    %6886 = vmatpush1.bf16.msra.mxu0 %v4308
    %6887 = vmatprep.subr.bf16.mxu0 %v4325
    %6888 = vmatpush1.bf16.msra.mxu0 %v4324
    %6889 = vmatprep.mubr.bf16.mxu0 %v6783
    %6890 = vmatmul.mubr.bf16.gmra.mrb[0].mxu0 %v6782
    %v6891 = vpop.f32.mrb[0].mxu0
    %v6892 = vadd.f32 %v6851, %v6891
    %v6893 = vpop.f32.mrb[0].mxu0
    %v6894 = vadd.f32 %v6853, %v6893
    %v6895 = vpop.f32.mrb[0].mxu0
    %v6896 = vpop.f32.mrb[0].mxu0
    %6897 = vdwg.mxu0
    %6898 = vmatprep.subr.bf16.mxu0 %v3831
    %6899 = vmatpush1.bf16.msra.mxu0 %v3830
    %6900 = vmatprep.subr.bf16.mxu0 %v3847
    %6901 = vmatpush1.bf16.msra.mxu0 %v3846
    %6902 = vmatprep.subr.bf16.mxu0 %v3863
    %6903 = vmatpush1.bf16.msra.mxu0 %v3862
    %6904 = vmatprep.subr.bf16.mxu0 %v3879
    %6905 = vmatpush1.bf16.msra.mxu0 %v3878
    %6906 = vmatprep.subr.bf16.mxu0 %v3895
    %6907 = vmatpush1.bf16.msra.mxu0 %v3894
    %6908 = vmatprep.subr.bf16.mxu0 %v3911
    %6909 = vmatpush1.bf16.msra.mxu0 %v3910
    %6910 = vmatprep.subr.bf16.mxu0 %v3927
    %6911 = vmatpush1.bf16.msra.mxu0 %v3926
    %6912 = vmatprep.subr.bf16.mxu0 %v3943
    %6913 = vmatpush1.bf16.msra.mxu0 %v3942
    %6914 = vmatprep.subr.bf16.mxu0 %v3959
    %6915 = vmatpush1.bf16.msra.mxu0 %v3958
    %6916 = vmatprep.subr.bf16.mxu0 %v3975
    %6917 = vmatpush1.bf16.msra.mxu0 %v3974
    %6918 = vmatprep.subr.bf16.mxu0 %v3991
    %6919 = vmatpush1.bf16.msra.mxu0 %v3990
    %6920 = vmatprep.subr.bf16.mxu0 %v4007
    %6921 = vmatpush1.bf16.msra.mxu0 %v4006
    %6922 = vmatprep.subr.bf16.mxu0 %v4023
    %6923 = vmatpush1.bf16.msra.mxu0 %v4022
    %6924 = vmatprep.subr.bf16.mxu0 %v4039
    %6925 = vmatpush1.bf16.msra.mxu0 %v4038
    %6926 = vmatprep.subr.bf16.mxu0 %v4055
    %6927 = vmatpush1.bf16.msra.mxu0 %v4054
    %6928 = vmatprep.subr.bf16.mxu0 %v4071
    %6929 = vmatpush1.bf16.msra.mxu0 %v4070
    %6930 = vmatprep.mubr.bf16.mxu0 %v6781
    %6931 = vmatmul.mubr.bf16.gmra.mrb[0].mxu0 %v6780
    %v6932 = vpop.f32.mrb[0].mxu0
    %v6933 = vadd.f32 %v6786, %v6932
    %v6934 = vpop.f32.mrb[0].mxu0
    %v6935 = vadd.f32 %v6787, %v6934
    %v6936 = vpop.f32.mrb[0].mxu0
    %v6937 = vpop.f32.mrb[0].mxu0
    %6938 = vdwg.mxu0
    %6939 = vmatprep.subr.bf16.mxu0 %v4087
    %6940 = vmatpush1.bf16.msra.mxu0 %v4086
    %6941 = vmatprep.subr.bf16.mxu0 %v4103
    %6942 = vmatpush1.bf16.msra.mxu0 %v4102
    %6943 = vmatprep.subr.bf16.mxu0 %v4119
    %6944 = vmatpush1.bf16.msra.mxu0 %v4118
    %6945 = vmatprep.subr.bf16.mxu0 %v4135
    %6946 = vmatpush1.bf16.msra.mxu0 %v4134
    %6947 = vmatprep.subr.bf16.mxu0 %v4151
    %6948 = vmatpush1.bf16.msra.mxu0 %v4150
    %6949 = vmatprep.subr.bf16.mxu0 %v4167
    %6950 = vmatpush1.bf16.msra.mxu0 %v4166
    %6951 = vmatprep.subr.bf16.mxu0 %v4183
    %6952 = vmatpush1.bf16.msra.mxu0 %v4182
    %6953 = vmatprep.subr.bf16.mxu0 %v4199
    %6954 = vmatpush1.bf16.msra.mxu0 %v4198
    %6955 = vmatprep.subr.bf16.mxu0 %v4215
    %6956 = vmatpush1.bf16.msra.mxu0 %v4214
    %6957 = vmatprep.subr.bf16.mxu0 %v4231
    %6958 = vmatpush1.bf16.msra.mxu0 %v4230
    %6959 = vmatprep.subr.bf16.mxu0 %v4247
    %6960 = vmatpush1.bf16.msra.mxu0 %v4246
    %6961 = vmatprep.subr.bf16.mxu0 %v4263
    %6962 = vmatpush1.bf16.msra.mxu0 %v4262
    %6963 = vmatprep.subr.bf16.mxu0 %v4279
    %6964 = vmatpush1.bf16.msra.mxu0 %v4278
    %6965 = vmatprep.subr.bf16.mxu0 %v4295
    %6966 = vmatpush1.bf16.msra.mxu0 %v4294
    %6967 = vmatprep.subr.bf16.mxu0 %v4311
    %6968 = vmatpush1.bf16.msra.mxu0 %v4310
    %6969 = vmatprep.subr.bf16.mxu0 %v4327
    %6970 = vmatpush1.bf16.msra.mxu0 %v4326
    %6971 = vmatprep.mubr.bf16.mxu0 %v6783
    %6972 = vmatmul.mubr.bf16.gmra.mrb[0].mxu0 %v6782
    %v6973 = vpop.f32.mrb[0].mxu0
    %v6974 = vadd.f32 %v6933, %v6973
    %v6975 = vpop.f32.mrb[0].mxu0
    %v6976 = vadd.f32 %v6935, %v6975
    %v6977 = vpop.f32.mrb[0].mxu0
    %v6978 = vpop.f32.mrb[0].mxu0
    %6979 = vdwg.mxu0
    %6980 = vmatprep.subr.bf16.mxu0 %v3833
    %6981 = vmatpush1.bf16.msra.mxu0 %v3832
    %6982 = vmatprep.subr.bf16.mxu0 %v3849
    %6983 = vmatpush1.bf16.msra.mxu0 %v3848
    %6984 = vmatprep.subr.bf16.mxu0 %v3865
    %6985 = vmatpush1.bf16.msra.mxu0 %v3864
    %6986 = vmatprep.subr.bf16.mxu0 %v3881
    %6987 = vmatpush1.bf16.msra.mxu0 %v3880
    %6988 = vmatprep.subr.bf16.mxu0 %v3897
    %6989 = vmatpush1.bf16.msra.mxu0 %v3896
    %6990 = vmatprep.subr.bf16.mxu0 %v3913
    %6991 = vmatpush1.bf16.msra.mxu0 %v3912
    %6992 = vmatprep.subr.bf16.mxu0 %v3929
    %6993 = vmatpush1.bf16.msra.mxu0 %v3928
    %6994 = vmatprep.subr.bf16.mxu0 %v3945
    %6995 = vmatpush1.bf16.msra.mxu0 %v3944
    %6996 = vmatprep.subr.bf16.mxu0 %v3961
    %6997 = vmatpush1.bf16.msra.mxu0 %v3960
    %6998 = vmatprep.subr.bf16.mxu0 %v3977
    %6999 = vmatpush1.bf16.msra.mxu0 %v3976
    %7000 = vmatprep.subr.bf16.mxu0 %v3993
    %7001 = vmatpush1.bf16.msra.mxu0 %v3992
    %7002 = vmatprep.subr.bf16.mxu0 %v4009
    %7003 = vmatpush1.bf16.msra.mxu0 %v4008
    %7004 = vmatprep.subr.bf16.mxu0 %v4025
    %7005 = vmatpush1.bf16.msra.mxu0 %v4024
    %7006 = vmatprep.subr.bf16.mxu0 %v4041
    %7007 = vmatpush1.bf16.msra.mxu0 %v4040
    %7008 = vmatprep.subr.bf16.mxu0 %v4057
    %7009 = vmatpush1.bf16.msra.mxu0 %v4056
    %7010 = vmatprep.subr.bf16.mxu0 %v4073
    %7011 = vmatpush1.bf16.msra.mxu0 %v4072
    %7012 = vmatprep.mubr.bf16.mxu0 %v6781
    %7013 = vmatmul.mubr.bf16.gmra.mrb[0].mxu0 %v6780
    %v7014 = vpop.f32.mrb[0].mxu0
    %v7015 = vadd.f32 %v6788, %v7014
    %v7016 = vpop.f32.mrb[0].mxu0
    %v7017 = vadd.f32 %v6789, %v7016
    %v7018 = vpop.f32.mrb[0].mxu0
    %v7019 = vpop.f32.mrb[0].mxu0
    %7020 = vdwg.mxu0
    %7021 = vmatprep.subr.bf16.mxu0 %v4089
    %7022 = vmatpush1.bf16.msra.mxu0 %v4088
    %7023 = vmatprep.subr.bf16.mxu0 %v4105
    %7024 = vmatpush1.bf16.msra.mxu0 %v4104
    %7025 = vmatprep.subr.bf16.mxu0 %v4121
    %7026 = vmatpush1.bf16.msra.mxu0 %v4120
    %7027 = vmatprep.subr.bf16.mxu0 %v4137
    %7028 = vmatpush1.bf16.msra.mxu0 %v4136
    %7029 = vmatprep.subr.bf16.mxu0 %v4153
    %7030 = vmatpush1.bf16.msra.mxu0 %v4152
    %7031 = vmatprep.subr.bf16.mxu0 %v4169
    %7032 = vmatpush1.bf16.msra.mxu0 %v4168
    %7033 = vmatprep.subr.bf16.mxu0 %v4185
    %7034 = vmatpush1.bf16.msra.mxu0 %v4184
    %7035 = vmatprep.subr.bf16.mxu0 %v4201
    %7036 = vmatpush1.bf16.msra.mxu0 %v4200
    %7037 = vmatprep.subr.bf16.mxu0 %v4217
    %7038 = vmatpush1.bf16.msra.mxu0 %v4216
    %7039 = vmatprep.subr.bf16.mxu0 %v4233
    %7040 = vmatpush1.bf16.msra.mxu0 %v4232
    %7041 = vmatprep.subr.bf16.mxu0 %v4249
    %7042 = vmatpush1.bf16.msra.mxu0 %v4248
    %7043 = vmatprep.subr.bf16.mxu0 %v4265
    %7044 = vmatpush1.bf16.msra.mxu0 %v4264
    %7045 = vmatprep.subr.bf16.mxu0 %v4281
    %7046 = vmatpush1.bf16.msra.mxu0 %v4280
    %7047 = vmatprep.subr.bf16.mxu0 %v4297
    %7048 = vmatpush1.bf16.msra.mxu0 %v4296
    %7049 = vmatprep.subr.bf16.mxu0 %v4313
    %7050 = vmatpush1.bf16.msra.mxu0 %v4312
    %7051 = vmatprep.subr.bf16.mxu0 %v4329
    %7052 = vmatpush1.bf16.msra.mxu0 %v4328
    %7053 = vmatprep.mubr.bf16.mxu0 %v6783
    %7054 = vmatmul.mubr.bf16.gmra.mrb[0].mxu0 %v6782
    %v7055 = vpop.f32.mrb[0].mxu0
    %v7056 = vadd.f32 %v7015, %v7055
    %v7057 = vpop.f32.mrb[0].mxu0
    %v7058 = vadd.f32 %v7017, %v7057
    %v7059 = vpop.f32.mrb[0].mxu0
    %v7060 = vpop.f32.mrb[0].mxu0
    %7061 = vdwg.mxu0
    %7062 = vmatprep.subr.bf16.mxu0 %v3835
    %7063 = vmatpush1.bf16.msra.mxu0 %v3834
    %7064 = vmatprep.subr.bf16.mxu0 %v3851
    %7065 = vmatpush1.bf16.msra.mxu0 %v3850
    %7066 = vmatprep.subr.bf16.mxu0 %v3867
    %7067 = vmatpush1.bf16.msra.mxu0 %v3866
    %7068 = vmatprep.subr.bf16.mxu0 %v3883
    %7069 = vmatpush1.bf16.msra.mxu0 %v3882
    %7070 = vmatprep.subr.bf16.mxu0 %v3899
    %7071 = vmatpush1.bf16.msra.mxu0 %v3898
    %7072 = vmatprep.subr.bf16.mxu0 %v3915
    %7073 = vmatpush1.bf16.msra.mxu0 %v3914
    %7074 = vmatprep.subr.bf16.mxu0 %v3931
    %7075 = vmatpush1.bf16.msra.mxu0 %v3930
    %7076 = vmatprep.subr.bf16.mxu0 %v3947
    %7077 = vmatpush1.bf16.msra.mxu0 %v3946
    %7078 = vmatprep.subr.bf16.mxu0 %v3963
    %7079 = vmatpush1.bf16.msra.mxu0 %v3962
    %7080 = vmatprep.subr.bf16.mxu0 %v3979
    %7081 = vmatpush1.bf16.msra.mxu0 %v3978
    %7082 = vmatprep.subr.bf16.mxu0 %v3995
    %7083 = vmatpush1.bf16.msra.mxu0 %v3994
    %7084 = vmatprep.subr.bf16.mxu0 %v4011
    %7085 = vmatpush1.bf16.msra.mxu0 %v4010
    %7086 = vmatprep.subr.bf16.mxu0 %v4027
    %7087 = vmatpush1.bf16.msra.mxu0 %v4026
    %7088 = vmatprep.subr.bf16.mxu0 %v4043
    %7089 = vmatpush1.bf16.msra.mxu0 %v4042
    %7090 = vmatprep.subr.bf16.mxu0 %v4059
    %7091 = vmatpush1.bf16.msra.mxu0 %v4058
    %7092 = vmatprep.subr.bf16.mxu0 %v4075
    %7093 = vmatpush1.bf16.msra.mxu0 %v4074
    %7094 = vmatprep.mubr.bf16.mxu0 %v6781
    %7095 = vmatmul.mubr.bf16.gmra.mrb[0].mxu0 %v6780
    %v7096 = vpop.f32.mrb[0].mxu0
    %v7097 = vadd.f32 %v6790, %v7096
    %v7098 = vpop.f32.mrb[0].mxu0
    %v7099 = vadd.f32 %v6791, %v7098
    %v7100 = vpop.f32.mrb[0].mxu0
    %v7101 = vpop.f32.mrb[0].mxu0
    %7102 = vdwg.mxu0
    %7103 = vmatprep.subr.bf16.mxu0 %v4091
    %7104 = vmatpush1.bf16.msra.mxu0 %v4090
    %7105 = vmatprep.subr.bf16.mxu0 %v4107
    %7106 = vmatpush1.bf16.msra.mxu0 %v4106
    %7107 = vmatprep.subr.bf16.mxu0 %v4123
    %7108 = vmatpush1.bf16.msra.mxu0 %v4122
    %7109 = vmatprep.subr.bf16.mxu0 %v4139
    %7110 = vmatpush1.bf16.msra.mxu0 %v4138
    %7111 = vmatprep.subr.bf16.mxu0 %v4155
    %7112 = vmatpush1.bf16.msra.mxu0 %v4154
    %7113 = vmatprep.subr.bf16.mxu0 %v4171
    %7114 = vmatpush1.bf16.msra.mxu0 %v4170
    %7115 = vmatprep.subr.bf16.mxu0 %v4187
    %7116 = vmatpush1.bf16.msra.mxu0 %v4186
    %7117 = vmatprep.subr.bf16.mxu0 %v4203
    %7118 = vmatpush1.bf16.msra.mxu0 %v4202
    %7119 = vmatprep.subr.bf16.mxu0 %v4219
    %7120 = vmatpush1.bf16.msra.mxu0 %v4218
    %7121 = vmatprep.subr.bf16.mxu0 %v4235
    %7122 = vmatpush1.bf16.msra.mxu0 %v4234
    %7123 = vmatprep.subr.bf16.mxu0 %v4251
    %7124 = vmatpush1.bf16.msra.mxu0 %v4250
    %7125 = vmatprep.subr.bf16.mxu0 %v4267
    %7126 = vmatpush1.bf16.msra.mxu0 %v4266
    %7127 = vmatprep.subr.bf16.mxu0 %v4283
    %7128 = vmatpush1.bf16.msra.mxu0 %v4282
    %7129 = vmatprep.subr.bf16.mxu0 %v4299
    %7130 = vmatpush1.bf16.msra.mxu0 %v4298
    %7131 = vmatprep.subr.bf16.mxu0 %v4315
    %7132 = vmatpush1.bf16.msra.mxu0 %v4314
    %7133 = vmatprep.subr.bf16.mxu0 %v4331
    %7134 = vmatpush1.bf16.msra.mxu0 %v4330
    %7135 = vmatprep.mubr.bf16.mxu0 %v6783
    %7136 = vmatmul.mubr.bf16.gmra.mrb[0].mxu0 %v6782
    %v7137 = vpop.f32.mrb[0].mxu0
    %v7138 = vadd.f32 %v7097, %v7137
    %v7139 = vpop.f32.mrb[0].mxu0
    %v7140 = vadd.f32 %v7099, %v7139
    %v7141 = vpop.f32.mrb[0].mxu0
    %v7142 = vpop.f32.mrb[0].mxu0
    %7143 = vdwg.mxu0
    %7144 = vmatprep.subr.bf16.mxu0 %v3837
    %7145 = vmatpush1.bf16.msra.mxu0 %v3836
    %7146 = vmatprep.subr.bf16.mxu0 %v3853
    %7147 = vmatpush1.bf16.msra.mxu0 %v3852
    %7148 = vmatprep.subr.bf16.mxu0 %v3869
    %7149 = vmatpush1.bf16.msra.mxu0 %v3868
    %7150 = vmatprep.subr.bf16.mxu0 %v3885
    %7151 = vmatpush1.bf16.msra.mxu0 %v3884
    %7152 = vmatprep.subr.bf16.mxu0 %v3901
    %7153 = vmatpush1.bf16.msra.mxu0 %v3900
    %7154 = vmatprep.subr.bf16.mxu0 %v3917
    %7155 = vmatpush1.bf16.msra.mxu0 %v3916
    %7156 = vmatprep.subr.bf16.mxu0 %v3933
    %7157 = vmatpush1.bf16.msra.mxu0 %v3932
    %7158 = vmatprep.subr.bf16.mxu0 %v3949
    %7159 = vmatpush1.bf16.msra.mxu0 %v3948
    %7160 = vmatprep.subr.bf16.mxu0 %v3965
    %7161 = vmatpush1.bf16.msra.mxu0 %v3964
    %7162 = vmatprep.subr.bf16.mxu0 %v3981
    %7163 = vmatpush1.bf16.msra.mxu0 %v3980
    %7164 = vmatprep.subr.bf16.mxu0 %v3997
    %7165 = vmatpush1.bf16.msra.mxu0 %v3996
    %7166 = vmatprep.subr.bf16.mxu0 %v4013
    %7167 = vmatpush1.bf16.msra.mxu0 %v4012
    %7168 = vmatprep.subr.bf16.mxu0 %v4029
    %7169 = vmatpush1.bf16.msra.mxu0 %v4028
    %7170 = vmatprep.subr.bf16.mxu0 %v4045
    %7171 = vmatpush1.bf16.msra.mxu0 %v4044
    %7172 = vmatprep.subr.bf16.mxu0 %v4061
    %7173 = vmatpush1.bf16.msra.mxu0 %v4060
    %7174 = vmatprep.subr.bf16.mxu0 %v4077
    %7175 = vmatpush1.bf16.msra.mxu0 %v4076
    %7176 = vmatprep.mubr.bf16.mxu0 %v6781
    %7177 = vmatmul.mubr.bf16.gmra.mrb[0].mxu0 %v6780
    %v7178 = vpop.f32.mrb[0].mxu0
    %v7179 = vadd.f32 %v6792, %v7178
    %v7180 = vpop.f32.mrb[0].mxu0
    %v7181 = vadd.f32 %v6793, %v7180
    %v7182 = vpop.f32.mrb[0].mxu0
    %v7183 = vpop.f32.mrb[0].mxu0
    %7184 = vdwg.mxu0
    %7185 = vmatprep.subr.bf16.mxu0 %v4093
    %7186 = vmatpush1.bf16.msra.mxu0 %v4092
    %7187 = vmatprep.subr.bf16.mxu0 %v4109
    %7188 = vmatpush1.bf16.msra.mxu0 %v4108
    %7189 = vmatprep.subr.bf16.mxu0 %v4125
    %7190 = vmatpush1.bf16.msra.mxu0 %v4124
    %7191 = vmatprep.subr.bf16.mxu0 %v4141
    %7192 = vmatpush1.bf16.msra.mxu0 %v4140
    %7193 = vmatprep.subr.bf16.mxu0 %v4157
    %7194 = vmatpush1.bf16.msra.mxu0 %v4156
    %7195 = vmatprep.subr.bf16.mxu0 %v4173
    %7196 = vmatpush1.bf16.msra.mxu0 %v4172
    %7197 = vmatprep.subr.bf16.mxu0 %v4189
    %7198 = vmatpush1.bf16.msra.mxu0 %v4188
    %7199 = vmatprep.subr.bf16.mxu0 %v4205
    %7200 = vmatpush1.bf16.msra.mxu0 %v4204
    %7201 = vmatprep.subr.bf16.mxu0 %v4221
    %7202 = vmatpush1.bf16.msra.mxu0 %v4220
    %7203 = vmatprep.subr.bf16.mxu0 %v4237
    %7204 = vmatpush1.bf16.msra.mxu0 %v4236
    %7205 = vmatprep.subr.bf16.mxu0 %v4253
    %7206 = vmatpush1.bf16.msra.mxu0 %v4252
    %7207 = vmatprep.subr.bf16.mxu0 %v4269
    %7208 = vmatpush1.bf16.msra.mxu0 %v4268
    %7209 = vmatprep.subr.bf16.mxu0 %v4285
    %7210 = vmatpush1.bf16.msra.mxu0 %v4284
    %7211 = vmatprep.subr.bf16.mxu0 %v4301
    %7212 = vmatpush1.bf16.msra.mxu0 %v4300
    %7213 = vmatprep.subr.bf16.mxu0 %v4317
    %7214 = vmatpush1.bf16.msra.mxu0 %v4316
    %7215 = vmatprep.subr.bf16.mxu0 %v4333
    %7216 = vmatpush1.bf16.msra.mxu0 %v4332
    %7217 = vmatprep.mubr.bf16.mxu0 %v6783
    %7218 = vmatmul.mubr.bf16.gmra.mrb[0].mxu0 %v6782
    %v7219 = vpop.f32.mrb[0].mxu0
    %v7220 = vadd.f32 %v7179, %v7219
    %v7221 = vpop.f32.mrb[0].mxu0
    %v7222 = vadd.f32 %v7181, %v7221
    %v7223 = vpop.f32.mrb[0].mxu0
    %v7224 = vpop.f32.mrb[0].mxu0
    %7225 = vdwg.mxu0
    %7226 = vmatprep.subr.bf16.mxu0 %v3839
    %7227 = vmatpush1.bf16.msra.mxu0 %v3838
    %7228 = vmatprep.subr.bf16.mxu0 %v3855
    %7229 = vmatpush1.bf16.msra.mxu0 %v3854
    %7230 = vmatprep.subr.bf16.mxu0 %v3871
    %7231 = vmatpush1.bf16.msra.mxu0 %v3870
    %7232 = vmatprep.subr.bf16.mxu0 %v3887
    %7233 = vmatpush1.bf16.msra.mxu0 %v3886
    %7234 = vmatprep.subr.bf16.mxu0 %v3903
    %7235 = vmatpush1.bf16.msra.mxu0 %v3902
    %7236 = vmatprep.subr.bf16.mxu0 %v3919
    %7237 = vmatpush1.bf16.msra.mxu0 %v3918
    %7238 = vmatprep.subr.bf16.mxu0 %v3935
    %7239 = vmatpush1.bf16.msra.mxu0 %v3934
    %7240 = vmatprep.subr.bf16.mxu0 %v3951
    %7241 = vmatpush1.bf16.msra.mxu0 %v3950
    %7242 = vmatprep.subr.bf16.mxu0 %v3967
    %7243 = vmatpush1.bf16.msra.mxu0 %v3966
    %7244 = vmatprep.subr.bf16.mxu0 %v3983
    %7245 = vmatpush1.bf16.msra.mxu0 %v3982
    %7246 = vmatprep.subr.bf16.mxu0 %v3999
    %7247 = vmatpush1.bf16.msra.mxu0 %v3998
    %7248 = vmatprep.subr.bf16.mxu0 %v4015
    %7249 = vmatpush1.bf16.msra.mxu0 %v4014
    %7250 = vmatprep.subr.bf16.mxu0 %v4031
    %7251 = vmatpush1.bf16.msra.mxu0 %v4030
    %7252 = vmatprep.subr.bf16.mxu0 %v4047
    %7253 = vmatpush1.bf16.msra.mxu0 %v4046
    %7254 = vmatprep.subr.bf16.mxu0 %v4063
    %7255 = vmatpush1.bf16.msra.mxu0 %v4062
    %7256 = vmatprep.subr.bf16.mxu0 %v4079
    %7257 = vmatpush1.bf16.msra.mxu0 %v4078
    %7258 = vmatprep.mubr.bf16.mxu0 %v6781
    %7259 = vmatmul.mubr.bf16.gmra.mrb[0].mxu0 %v6780
    %v7260 = vpop.f32.mrb[0].mxu0
    %v7261 = vadd.f32 %v6794, %v7260
    %v7262 = vpop.f32.mrb[0].mxu0
    %v7263 = vadd.f32 %v6795, %v7262
    %v7264 = vpop.f32.mrb[0].mxu0
    %v7265 = vpop.f32.mrb[0].mxu0
    %7266 = vdwg.mxu0
    %7267 = vmatprep.subr.bf16.mxu0 %v4095
    %7268 = vmatpush1.bf16.msra.mxu0 %v4094
    %7269 = vmatprep.subr.bf16.mxu0 %v4111
    %7270 = vmatpush1.bf16.msra.mxu0 %v4110
    %7271 = vmatprep.subr.bf16.mxu0 %v4127
    %7272 = vmatpush1.bf16.msra.mxu0 %v4126
    %7273 = vmatprep.subr.bf16.mxu0 %v4143
    %7274 = vmatpush1.bf16.msra.mxu0 %v4142
    %7275 = vmatprep.subr.bf16.mxu0 %v4159
    %7276 = vmatpush1.bf16.msra.mxu0 %v4158
    %7277 = vmatprep.subr.bf16.mxu0 %v4175
    %7278 = vmatpush1.bf16.msra.mxu0 %v4174
    %7279 = vmatprep.subr.bf16.mxu0 %v4191
    %7280 = vmatpush1.bf16.msra.mxu0 %v4190
    %7281 = vmatprep.subr.bf16.mxu0 %v4207
    %7282 = vmatpush1.bf16.msra.mxu0 %v4206
    %7283 = vmatprep.subr.bf16.mxu0 %v4223
    %7284 = vmatpush1.bf16.msra.mxu0 %v4222
    %7285 = vmatprep.subr.bf16.mxu0 %v4239
    %7286 = vmatpush1.bf16.msra.mxu0 %v4238
    %7287 = vmatprep.subr.bf16.mxu0 %v4255
    %7288 = vmatpush1.bf16.msra.mxu0 %v4254
    %7289 = vmatprep.subr.bf16.mxu0 %v4271
    %7290 = vmatpush1.bf16.msra.mxu0 %v4270
    %7291 = vmatprep.subr.bf16.mxu0 %v4287
    %7292 = vmatpush1.bf16.msra.mxu0 %v4286
    %7293 = vmatprep.subr.bf16.mxu0 %v4303
    %7294 = vmatpush1.bf16.msra.mxu0 %v4302
    %7295 = vmatprep.subr.bf16.mxu0 %v4319
    %7296 = vmatpush1.bf16.msra.mxu0 %v4318
    %7297 = vmatprep.subr.bf16.mxu0 %v4335
    %7298 = vmatpush1.bf16.msra.mxu0 %v4334
    %7299 = vmatprep.mubr.bf16.mxu0 %v6783
    %7300 = vmatmul.mubr.bf16.gmra.mrb[0].mxu0 %v6782
    %v7301 = vpop.f32.mrb[0].mxu0
    %v7302 = vadd.f32 %v7261, %v7301
    %v7303 = vpop.f32.mrb[0].mxu0
    %v7304 = vadd.f32 %v7263, %v7303
    %v7305 = vpop.f32.mrb[0].mxu0
    %v7306 = vpop.f32.mrb[0].mxu0
    %7307 = vdwg.mxu0
    %7308 = vmatprep.subr.bf16.mxu0 %v3841
    %7309 = vmatpush1.bf16.msra.mxu0 %v3840
    %7310 = vmatprep.subr.bf16.mxu0 %v3857
    %7311 = vmatpush1.bf16.msra.mxu0 %v3856
    %7312 = vmatprep.subr.bf16.mxu0 %v3873
    %7313 = vmatpush1.bf16.msra.mxu0 %v3872
    %7314 = vmatprep.subr.bf16.mxu0 %v3889
    %7315 = vmatpush1.bf16.msra.mxu0 %v3888
    %7316 = vmatprep.subr.bf16.mxu0 %v3905
    %7317 = vmatpush1.bf16.msra.mxu0 %v3904
    %7318 = vmatprep.subr.bf16.mxu0 %v3921
    %7319 = vmatpush1.bf16.msra.mxu0 %v3920
    %7320 = vmatprep.subr.bf16.mxu0 %v3937
    %7321 = vmatpush1.bf16.msra.mxu0 %v3936
    %7322 = vmatprep.subr.bf16.mxu0 %v3953
    %7323 = vmatpush1.bf16.msra.mxu0 %v3952
    %7324 = vmatprep.subr.bf16.mxu0 %v3969
    %7325 = vmatpush1.bf16.msra.mxu0 %v3968
    %7326 = vmatprep.subr.bf16.mxu0 %v3985
    %7327 = vmatpush1.bf16.msra.mxu0 %v3984
    %7328 = vmatprep.subr.bf16.mxu0 %v4001
    %7329 = vmatpush1.bf16.msra.mxu0 %v4000
    %7330 = vmatprep.subr.bf16.mxu0 %v4017
    %7331 = vmatpush1.bf16.msra.mxu0 %v4016
    %7332 = vmatprep.subr.bf16.mxu0 %v4033
    %7333 = vmatpush1.bf16.msra.mxu0 %v4032
    %7334 = vmatprep.subr.bf16.mxu0 %v4049
    %7335 = vmatpush1.bf16.msra.mxu0 %v4048
    %7336 = vmatprep.subr.bf16.mxu0 %v4065
    %7337 = vmatpush1.bf16.msra.mxu0 %v4064
    %7338 = vmatprep.subr.bf16.mxu0 %v4081
    %7339 = vmatpush1.bf16.msra.mxu0 %v4080
    %7340 = vmatprep.mubr.bf16.mxu0 %v6781
    %7341 = vmatmul.mubr.bf16.gmra.mrb[0].mxu0 %v6780
    %v7342 = vpop.f32.mrb[0].mxu0
    %v7343 = vadd.f32 %v6796, %v7342
    %v7344 = vpop.f32.mrb[0].mxu0
    %v7345 = vadd.f32 %v6797, %v7344
    %v7346 = vpop.f32.mrb[0].mxu0
    %v7347 = vpop.f32.mrb[0].mxu0
    %7348 = vdwg.mxu0
    %7349 = vmatprep.subr.bf16.mxu0 %v4097
    %7350 = vmatpush1.bf16.msra.mxu0 %v4096
    %7351 = vmatprep.subr.bf16.mxu0 %v4113
    %7352 = vmatpush1.bf16.msra.mxu0 %v4112
    %7353 = vmatprep.subr.bf16.mxu0 %v4129
    %7354 = vmatpush1.bf16.msra.mxu0 %v4128
    %7355 = vmatprep.subr.bf16.mxu0 %v4145
    %7356 = vmatpush1.bf16.msra.mxu0 %v4144
    %7357 = vmatprep.subr.bf16.mxu0 %v4161
    %7358 = vmatpush1.bf16.msra.mxu0 %v4160
    %7359 = vmatprep.subr.bf16.mxu0 %v4177
    %7360 = vmatpush1.bf16.msra.mxu0 %v4176
    %7361 = vmatprep.subr.bf16.mxu0 %v4193
    %7362 = vmatpush1.bf16.msra.mxu0 %v4192
    %7363 = vmatprep.subr.bf16.mxu0 %v4209
    %7364 = vmatpush1.bf16.msra.mxu0 %v4208
    %7365 = vmatprep.subr.bf16.mxu0 %v4225
    %7366 = vmatpush1.bf16.msra.mxu0 %v4224
    %7367 = vmatprep.subr.bf16.mxu0 %v4241
    %7368 = vmatpush1.bf16.msra.mxu0 %v4240
    %7369 = vmatprep.subr.bf16.mxu0 %v4257
    %7370 = vmatpush1.bf16.msra.mxu0 %v4256
    %7371 = vmatprep.subr.bf16.mxu0 %v4273
    %7372 = vmatpush1.bf16.msra.mxu0 %v4272
    %7373 = vmatprep.subr.bf16.mxu0 %v4289
    %7374 = vmatpush1.bf16.msra.mxu0 %v4288
    %7375 = vmatprep.subr.bf16.mxu0 %v4305
    %7376 = vmatpush1.bf16.msra.mxu0 %v4304
    %7377 = vmatprep.subr.bf16.mxu0 %v4321
    %7378 = vmatpush1.bf16.msra.mxu0 %v4320
    %7379 = vmatprep.subr.bf16.mxu0 %v4337
    %7380 = vmatpush1.bf16.msra.mxu0 %v4336
    %7381 = vmatprep.mubr.bf16.mxu0 %v6783
    %7382 = vmatmul.mubr.bf16.gmra.mrb[0].mxu0 %v6782
    %v7383 = vpop.f32.mrb[0].mxu0
    %v7384 = vadd.f32 %v7343, %v7383
    %v7385 = vpop.f32.mrb[0].mxu0
    %v7386 = vadd.f32 %v7345, %v7385
    %v7387 = vpop.f32.mrb[0].mxu0
    %v7388 = vpop.f32.mrb[0].mxu0
    %7389 = vdwg.mxu0
    %7390 = vmatprep.subr.bf16.mxu0 %v3843
    %7391 = vmatpush1.bf16.msra.mxu0 %v3842
    %7392 = vmatprep.subr.bf16.mxu0 %v3859
    %7393 = vmatpush1.bf16.msra.mxu0 %v3858
    %7394 = vmatprep.subr.bf16.mxu0 %v3875
    %7395 = vmatpush1.bf16.msra.mxu0 %v3874
    %7396 = vmatprep.subr.bf16.mxu0 %v3891
    %7397 = vmatpush1.bf16.msra.mxu0 %v3890
    %7398 = vmatprep.subr.bf16.mxu0 %v3907
    %7399 = vmatpush1.bf16.msra.mxu0 %v3906
    %7400 = vmatprep.subr.bf16.mxu0 %v3923
    %7401 = vmatpush1.bf16.msra.mxu0 %v3922
    %7402 = vmatprep.subr.bf16.mxu0 %v3939
    %7403 = vmatpush1.bf16.msra.mxu0 %v3938
    %7404 = vmatprep.subr.bf16.mxu0 %v3955
    %7405 = vmatpush1.bf16.msra.mxu0 %v3954
    %7406 = vmatprep.subr.bf16.mxu0 %v3971
    %7407 = vmatpush1.bf16.msra.mxu0 %v3970
    %7408 = vmatprep.subr.bf16.mxu0 %v3987
    %7409 = vmatpush1.bf16.msra.mxu0 %v3986
    %7410 = vmatprep.subr.bf16.mxu0 %v4003
    %7411 = vmatpush1.bf16.msra.mxu0 %v4002
    %7412 = vmatprep.subr.bf16.mxu0 %v4019
    %7413 = vmatpush1.bf16.msra.mxu0 %v4018
    %7414 = vmatprep.subr.bf16.mxu0 %v4035
    %7415 = vmatpush1.bf16.msra.mxu0 %v4034
    %7416 = vmatprep.subr.bf16.mxu0 %v4051
    %7417 = vmatpush1.bf16.msra.mxu0 %v4050
    %7418 = vmatprep.subr.bf16.mxu0 %v4067
    %7419 = vmatpush1.bf16.msra.mxu0 %v4066
    %7420 = vmatprep.subr.bf16.mxu0 %v4083
    %7421 = vmatpush1.bf16.msra.mxu0 %v4082
    %7422 = vmatprep.mubr.bf16.mxu0 %v6781
    %7423 = vmatmul.mubr.bf16.gmra.mrb[0].mxu0 %v6780
    %v7424 = vpop.f32.mrb[0].mxu0
    %v7425 = vadd.f32 %v6798, %v7424
    %v7426 = vpop.f32.mrb[0].mxu0
    %v7427 = vadd.f32 %v6799, %v7426
    %v7428 = vpop.f32.mrb[0].mxu0
    %v7429 = vpop.f32.mrb[0].mxu0
    %7430 = vdwg.mxu0
    %7431 = vmatprep.subr.bf16.mxu0 %v4099
    %7432 = vmatpush1.bf16.msra.mxu0 %v4098
    %7433 = vmatprep.subr.bf16.mxu0 %v4115
    %7434 = vmatpush1.bf16.msra.mxu0 %v4114
    %7435 = vmatprep.subr.bf16.mxu0 %v4131
    %7436 = vmatpush1.bf16.msra.mxu0 %v4130
    %7437 = vmatprep.subr.bf16.mxu0 %v4147
    %7438 = vmatpush1.bf16.msra.mxu0 %v4146
    %7439 = vmatprep.subr.bf16.mxu0 %v4163
    %7440 = vmatpush1.bf16.msra.mxu0 %v4162
    %7441 = vmatprep.subr.bf16.mxu0 %v4179
    %7442 = vmatpush1.bf16.msra.mxu0 %v4178
    %7443 = vmatprep.subr.bf16.mxu0 %v4195
    %7444 = vmatpush1.bf16.msra.mxu0 %v4194
    %7445 = vmatprep.subr.bf16.mxu0 %v4211
    %7446 = vmatpush1.bf16.msra.mxu0 %v4210
    %7447 = vmatprep.subr.bf16.mxu0 %v4227
    %7448 = vmatpush1.bf16.msra.mxu0 %v4226
    %7449 = vmatprep.subr.bf16.mxu0 %v4243
    %7450 = vmatpush1.bf16.msra.mxu0 %v4242
    %7451 = vmatprep.subr.bf16.mxu0 %v4259
    %7452 = vmatpush1.bf16.msra.mxu0 %v4258
    %7453 = vmatprep.subr.bf16.mxu0 %v4275
    %7454 = vmatpush1.bf16.msra.mxu0 %v4274
    %7455 = vmatprep.subr.bf16.mxu0 %v4291
    %7456 = vmatpush1.bf16.msra.mxu0 %v4290
    %7457 = vmatprep.subr.bf16.mxu0 %v4307
    %7458 = vmatpush1.bf16.msra.mxu0 %v4306
    %7459 = vmatprep.subr.bf16.mxu0 %v4323
    %7460 = vmatpush1.bf16.msra.mxu0 %v4322
    %7461 = vmatprep.subr.bf16.mxu0 %v4339
    %7462 = vmatpush1.bf16.msra.mxu0 %v4338
    %7463 = vmatprep.mubr.bf16.mxu0 %v6783
    %7464 = vmatmul.mubr.bf16.gmra.mrb[0].mxu0 %v6782
    %v7465 = vpop.f32.mrb[0].mxu0
    %v7466 = vadd.f32 %v7425, %v7465
    %v7467 = vpop.f32.mrb[0].mxu0
    %v7468 = vadd.f32 %v7427, %v7467
    %v7469 = vpop.f32.mrb[0].mxu0
    %v7470 = vpop.f32.mrb[0].mxu0
    %7471 = vdwg.mxu0
    %v7472 = vmul.f32 %v6892, 0.5
    %v7473 = vmul.f32 %v6894, 0.5
    %v7474 = vmul.f32 %v6974, 0.5
    %v7475 = vmul.f32 %v6976, 0.5
    %v7476 = vtanh.pop %v7472
    %v7477 = vtanh.pop %v7473
    %v7478 = vtanh.pop %v7474
    %v7479 = vtanh.pop %v7475
    %v7480 = vmul.f32 %v7476, 0.5
    %v7481 = vmul.f32 %v7477, 0.5
    %v7482 = vmul.f32 %v7478, 0.5
    %v7483 = vmul.f32 %v7479, 0.5
    %v7484 = vadd.f32 %v7480, 0.5
    %v7485 = vadd.f32 %v7481, 0.5
    %v7486 = vadd.f32 %v7482, 0.5
    %v7487 = vadd.f32 %v7483, 0.5
    %v7488 = vmul.f32 %v7056, 0.5
    %v7489 = vmul.f32 %v7058, 0.5
    %v7490 = vmul.f32 %v7138, 0.5
    %v7491 = vmul.f32 %v7140, 0.5
    %v7492 = vtanh.pop %v7488
    %v7493 = vtanh.pop %v7489
    %v7494 = vtanh.pop %v7490
    %v7495 = vtanh.pop %v7491
    %v7496 = vmul.f32 %v7492, 0.5
    %v7497 = vmul.f32 %v7493, 0.5
    %v7498 = vmul.f32 %v7494, 0.5
    %v7499 = vmul.f32 %v7495, 0.5
    %v7500 = vadd.f32 %v7496, 0.5
    %v7501 = vadd.f32 %v7497, 0.5
    %v7502 = vadd.f32 %v7498, 0.5
    %v7503 = vadd.f32 %v7499, 0.5
    %v7504 = vtanh.pop %v7220
    %v7505 = vtanh.pop %v7222
    %v7506 = vtanh.pop %v7302
    %v7507 = vtanh.pop %v7304
    %v7508 = vmul.f32 %v7384, 0.5
    %v7509 = vmul.f32 %v7386, 0.5
    %v7510 = vmul.f32 %v7466, 0.5
    %v7511 = vmul.f32 %v7468, 0.5
    %v7512 = vtanh.pop %v7508
    %v7513 = vtanh.pop %v7509
    %v7514 = vtanh.pop %v7510
    %v7515 = vtanh.pop %v7511
    %v7516 = vmul.f32 %v7512, 0.5
    %v7517 = vmul.f32 %v7513, 0.5
    %v7518 = vmul.f32 %v7514, 0.5
    %v7519 = vmul.f32 %v7515, 0.5
    %v7520 = vadd.f32 %v7516, 0.5
    %v7521 = vadd.f32 %v7517, 0.5
    %v7522 = vadd.f32 %v7518, 0.5
    %v7523 = vadd.f32 %v7519, 0.5
    %v7524 = vmul.f32 %v7500, %v6768
    %v7525 = vmul.f32 %v7501, %v6769
    %v7526 = vmul.f32 %v7502, %v6770
    %v7527 = vmul.f32 %v7503, %v6771
    %v7528 = vmul.f32 %v7484, %v7504
    %v7529 = vmul.f32 %v7485, %v7505
    %v7530 = vmul.f32 %v7486, %v7506
    %v7531 = vmul.f32 %v7487, %v7507
    %v7532 = vadd.f32 %v7524, %v7528
    %v7533 = vadd.f32 %v7525, %v7529
    %v7534 = vadd.f32 %v7526, %v7530
    %v7535 = vadd.f32 %v7527, %v7531
    %v7536 = vtanh.pop %v7532
    %v7537 = vtanh.pop %v7533
    %v7538 = vtanh.pop %v7534
    %v7539 = vtanh.pop %v7535
    %v7540 = vmul.f32 %v7520, %v7536
    %v7541 = vmul.f32 %v7521, %v7537
    %v7542 = vmul.f32 %v7522, %v7538
    %v7543 = vmul.f32 %v7523, %v7539
    %v7544 = vpack.c.bf16 %v7540, %v7540
    %v7545 = vpack.c.bf16 %v7541, %v7541
    %v7546 = vpack.c.bf16 %v7542, %v7542
    %v7547 = vpack.c.bf16 %v7543, %v7543
    %v7548 = vrot.slane %v5220, 4
    %v7549 = vrot.slane %v5221, 4
    %v7550 = vrot.slane %v5222, 4
    %v7551 = vrot.slane %v5223, 4
    %v7552 = vrot.slane %v5224, 4
    %v7553 = vrot.slane %v5225, 4
    %v7554 = vrot.slane %v5226, 4
    %v7555 = vrot.slane %v5227, 4
    %v7556 = vrot.slane %v5228, 4
    %v7557 = vrot.slane %v5229, 4
    %v7558 = vrot.slane %v5230, 4
    %v7559 = vrot.slane %v5231, 4
    %v7560 = vrot.slane %v5232, 4
    %v7561 = vrot.slane %v5233, 4
    %v7562 = vrot.slane %v5234, 4
    %v7563 = vrot.slane %v5235, 4
    %7580 = vmatprep.subr.bf16.mxu0 %v3829
    %7581 = vmatpush1.bf16.msra.mxu0 %v3828
    %7582 = vmatprep.subr.bf16.mxu0 %v3845
    %7583 = vmatpush1.bf16.msra.mxu0 %v3844
    %7584 = vmatprep.subr.bf16.mxu0 %v3861
    %7585 = vmatpush1.bf16.msra.mxu0 %v3860
    %7586 = vmatprep.subr.bf16.mxu0 %v3877
    %7587 = vmatpush1.bf16.msra.mxu0 %v3876
    %7588 = vmatprep.subr.bf16.mxu0 %v3893
    %7589 = vmatpush1.bf16.msra.mxu0 %v3892
    %7590 = vmatprep.subr.bf16.mxu0 %v3909
    %7591 = vmatpush1.bf16.msra.mxu0 %v3908
    %7592 = vmatprep.subr.bf16.mxu0 %v3925
    %7593 = vmatpush1.bf16.msra.mxu0 %v3924
    %7594 = vmatprep.subr.bf16.mxu0 %v3941
    %7595 = vmatpush1.bf16.msra.mxu0 %v3940
    %7596 = vmatprep.subr.bf16.mxu0 %v3957
    %7597 = vmatpush1.bf16.msra.mxu0 %v3956
    %7598 = vmatprep.subr.bf16.mxu0 %v3973
    %7599 = vmatpush1.bf16.msra.mxu0 %v3972
    %7600 = vmatprep.subr.bf16.mxu0 %v3989
    %7601 = vmatpush1.bf16.msra.mxu0 %v3988
    %7602 = vmatprep.subr.bf16.mxu0 %v4005
    %7603 = vmatpush1.bf16.msra.mxu0 %v4004
    %7604 = vmatprep.subr.bf16.mxu0 %v4021
    %7605 = vmatpush1.bf16.msra.mxu0 %v4020
    %7606 = vmatprep.subr.bf16.mxu0 %v4037
    %7607 = vmatpush1.bf16.msra.mxu0 %v4036
    %7608 = vmatprep.subr.bf16.mxu0 %v4053
    %7609 = vmatpush1.bf16.msra.mxu0 %v4052
    %7610 = vmatprep.subr.bf16.mxu0 %v4069
    %7611 = vmatpush1.bf16.msra.mxu0 %v4068
    %7612 = vmatprep.mubr.bf16.mxu0 %v7545
    %7613 = vmatmul.mubr.bf16.gmra.mrb[0].mxu0 %v7544
    %v7614 = vpop.f32.mrb[0].mxu0
    %v7615 = vadd.f32 %v7548, %v7614
    %v7616 = vpop.f32.mrb[0].mxu0
    %v7617 = vadd.f32 %v7549, %v7616
    %v7618 = vpop.f32.mrb[0].mxu0
    %v7619 = vpop.f32.mrb[0].mxu0
    %7620 = vdwg.mxu0
    %7621 = vmatprep.subr.bf16.mxu0 %v4085
    %7622 = vmatpush1.bf16.msra.mxu0 %v4084
    %7623 = vmatprep.subr.bf16.mxu0 %v4101
    %7624 = vmatpush1.bf16.msra.mxu0 %v4100
    %7625 = vmatprep.subr.bf16.mxu0 %v4117
    %7626 = vmatpush1.bf16.msra.mxu0 %v4116
    %7627 = vmatprep.subr.bf16.mxu0 %v4133
    %7628 = vmatpush1.bf16.msra.mxu0 %v4132
    %7629 = vmatprep.subr.bf16.mxu0 %v4149
    %7630 = vmatpush1.bf16.msra.mxu0 %v4148
    %7631 = vmatprep.subr.bf16.mxu0 %v4165
    %7632 = vmatpush1.bf16.msra.mxu0 %v4164
    %7633 = vmatprep.subr.bf16.mxu0 %v4181
    %7634 = vmatpush1.bf16.msra.mxu0 %v4180
    %7635 = vmatprep.subr.bf16.mxu0 %v4197
    %7636 = vmatpush1.bf16.msra.mxu0 %v4196
    %7637 = vmatprep.subr.bf16.mxu0 %v4213
    %7638 = vmatpush1.bf16.msra.mxu0 %v4212
    %7639 = vmatprep.subr.bf16.mxu0 %v4229
    %7640 = vmatpush1.bf16.msra.mxu0 %v4228
    %7641 = vmatprep.subr.bf16.mxu0 %v4245
    %7642 = vmatpush1.bf16.msra.mxu0 %v4244
    %7643 = vmatprep.subr.bf16.mxu0 %v4261
    %7644 = vmatpush1.bf16.msra.mxu0 %v4260
    %7645 = vmatprep.subr.bf16.mxu0 %v4277
    %7646 = vmatpush1.bf16.msra.mxu0 %v4276
    %7647 = vmatprep.subr.bf16.mxu0 %v4293
    %7648 = vmatpush1.bf16.msra.mxu0 %v4292
    %7649 = vmatprep.subr.bf16.mxu0 %v4309
    %7650 = vmatpush1.bf16.msra.mxu0 %v4308
    %7651 = vmatprep.subr.bf16.mxu0 %v4325
    %7652 = vmatpush1.bf16.msra.mxu0 %v4324
    %7653 = vmatprep.mubr.bf16.mxu0 %v7547
    %7654 = vmatmul.mubr.bf16.gmra.mrb[0].mxu0 %v7546
    %v7655 = vpop.f32.mrb[0].mxu0
    %v7656 = vadd.f32 %v7615, %v7655
    %v7657 = vpop.f32.mrb[0].mxu0
    %v7658 = vadd.f32 %v7617, %v7657
    %v7659 = vpop.f32.mrb[0].mxu0
    %v7660 = vpop.f32.mrb[0].mxu0
    %7661 = vdwg.mxu0
    %7662 = vmatprep.subr.bf16.mxu0 %v3831
    %7663 = vmatpush1.bf16.msra.mxu0 %v3830
    %7664 = vmatprep.subr.bf16.mxu0 %v3847
    %7665 = vmatpush1.bf16.msra.mxu0 %v3846
    %7666 = vmatprep.subr.bf16.mxu0 %v3863
    %7667 = vmatpush1.bf16.msra.mxu0 %v3862
    %7668 = vmatprep.subr.bf16.mxu0 %v3879
    %7669 = vmatpush1.bf16.msra.mxu0 %v3878
    %7670 = vmatprep.subr.bf16.mxu0 %v3895
    %7671 = vmatpush1.bf16.msra.mxu0 %v3894
    %7672 = vmatprep.subr.bf16.mxu0 %v3911
    %7673 = vmatpush1.bf16.msra.mxu0 %v3910
    %7674 = vmatprep.subr.bf16.mxu0 %v3927
    %7675 = vmatpush1.bf16.msra.mxu0 %v3926
    %7676 = vmatprep.subr.bf16.mxu0 %v3943
    %7677 = vmatpush1.bf16.msra.mxu0 %v3942
    %7678 = vmatprep.subr.bf16.mxu0 %v3959
    %7679 = vmatpush1.bf16.msra.mxu0 %v3958
    %7680 = vmatprep.subr.bf16.mxu0 %v3975
    %7681 = vmatpush1.bf16.msra.mxu0 %v3974
    %7682 = vmatprep.subr.bf16.mxu0 %v3991
    %7683 = vmatpush1.bf16.msra.mxu0 %v3990
    %7684 = vmatprep.subr.bf16.mxu0 %v4007
    %7685 = vmatpush1.bf16.msra.mxu0 %v4006
    %7686 = vmatprep.subr.bf16.mxu0 %v4023
    %7687 = vmatpush1.bf16.msra.mxu0 %v4022
    %7688 = vmatprep.subr.bf16.mxu0 %v4039
    %7689 = vmatpush1.bf16.msra.mxu0 %v4038
    %7690 = vmatprep.subr.bf16.mxu0 %v4055
    %7691 = vmatpush1.bf16.msra.mxu0 %v4054
    %7692 = vmatprep.subr.bf16.mxu0 %v4071
    %7693 = vmatpush1.bf16.msra.mxu0 %v4070
    %7694 = vmatprep.mubr.bf16.mxu0 %v7545
    %7695 = vmatmul.mubr.bf16.gmra.mrb[0].mxu0 %v7544
    %v7696 = vpop.f32.mrb[0].mxu0
    %v7697 = vadd.f32 %v7550, %v7696
    %v7698 = vpop.f32.mrb[0].mxu0
    %v7699 = vadd.f32 %v7551, %v7698
    %v7700 = vpop.f32.mrb[0].mxu0
    %v7701 = vpop.f32.mrb[0].mxu0
    %7702 = vdwg.mxu0
    %7703 = vmatprep.subr.bf16.mxu0 %v4087
    %7704 = vmatpush1.bf16.msra.mxu0 %v4086
    %7705 = vmatprep.subr.bf16.mxu0 %v4103
    %7706 = vmatpush1.bf16.msra.mxu0 %v4102
    %7707 = vmatprep.subr.bf16.mxu0 %v4119
    %7708 = vmatpush1.bf16.msra.mxu0 %v4118
    %7709 = vmatprep.subr.bf16.mxu0 %v4135
    %7710 = vmatpush1.bf16.msra.mxu0 %v4134
    %7711 = vmatprep.subr.bf16.mxu0 %v4151
    %7712 = vmatpush1.bf16.msra.mxu0 %v4150
    %7713 = vmatprep.subr.bf16.mxu0 %v4167
    %7714 = vmatpush1.bf16.msra.mxu0 %v4166
    %7715 = vmatprep.subr.bf16.mxu0 %v4183
    %7716 = vmatpush1.bf16.msra.mxu0 %v4182
    %7717 = vmatprep.subr.bf16.mxu0 %v4199
    %7718 = vmatpush1.bf16.msra.mxu0 %v4198
    %7719 = vmatprep.subr.bf16.mxu0 %v4215
    %7720 = vmatpush1.bf16.msra.mxu0 %v4214
    %7721 = vmatprep.subr.bf16.mxu0 %v4231
    %7722 = vmatpush1.bf16.msra.mxu0 %v4230
    %7723 = vmatprep.subr.bf16.mxu0 %v4247
    %7724 = vmatpush1.bf16.msra.mxu0 %v4246
    %7725 = vmatprep.subr.bf16.mxu0 %v4263
    %7726 = vmatpush1.bf16.msra.mxu0 %v4262
    %7727 = vmatprep.subr.bf16.mxu0 %v4279
    %7728 = vmatpush1.bf16.msra.mxu0 %v4278
    %7729 = vmatprep.subr.bf16.mxu0 %v4295
    %7730 = vmatpush1.bf16.msra.mxu0 %v4294
    %7731 = vmatprep.subr.bf16.mxu0 %v4311
    %7732 = vmatpush1.bf16.msra.mxu0 %v4310
    %7733 = vmatprep.subr.bf16.mxu0 %v4327
    %7734 = vmatpush1.bf16.msra.mxu0 %v4326
    %7735 = vmatprep.mubr.bf16.mxu0 %v7547
    %7736 = vmatmul.mubr.bf16.gmra.mrb[0].mxu0 %v7546
    %v7737 = vpop.f32.mrb[0].mxu0
    %v7738 = vadd.f32 %v7697, %v7737
    %v7739 = vpop.f32.mrb[0].mxu0
    %v7740 = vadd.f32 %v7699, %v7739
    %v7741 = vpop.f32.mrb[0].mxu0
    %v7742 = vpop.f32.mrb[0].mxu0
    %7743 = vdwg.mxu0
    %7744 = vmatprep.subr.bf16.mxu0 %v3833
    %7745 = vmatpush1.bf16.msra.mxu0 %v3832
    %7746 = vmatprep.subr.bf16.mxu0 %v3849
    %7747 = vmatpush1.bf16.msra.mxu0 %v3848
    %7748 = vmatprep.subr.bf16.mxu0 %v3865
    %7749 = vmatpush1.bf16.msra.mxu0 %v3864
    %7750 = vmatprep.subr.bf16.mxu0 %v3881
    %7751 = vmatpush1.bf16.msra.mxu0 %v3880
    %7752 = vmatprep.subr.bf16.mxu0 %v3897
    %7753 = vmatpush1.bf16.msra.mxu0 %v3896
    %7754 = vmatprep.subr.bf16.mxu0 %v3913
    %7755 = vmatpush1.bf16.msra.mxu0 %v3912
    %7756 = vmatprep.subr.bf16.mxu0 %v3929
    %7757 = vmatpush1.bf16.msra.mxu0 %v3928
    %7758 = vmatprep.subr.bf16.mxu0 %v3945
    %7759 = vmatpush1.bf16.msra.mxu0 %v3944
    %7760 = vmatprep.subr.bf16.mxu0 %v3961
    %7761 = vmatpush1.bf16.msra.mxu0 %v3960
    %7762 = vmatprep.subr.bf16.mxu0 %v3977
    %7763 = vmatpush1.bf16.msra.mxu0 %v3976
    %7764 = vmatprep.subr.bf16.mxu0 %v3993
    %7765 = vmatpush1.bf16.msra.mxu0 %v3992
    %7766 = vmatprep.subr.bf16.mxu0 %v4009
    %7767 = vmatpush1.bf16.msra.mxu0 %v4008
    %7768 = vmatprep.subr.bf16.mxu0 %v4025
    %7769 = vmatpush1.bf16.msra.mxu0 %v4024
    %7770 = vmatprep.subr.bf16.mxu0 %v4041
    %7771 = vmatpush1.bf16.msra.mxu0 %v4040
    %7772 = vmatprep.subr.bf16.mxu0 %v4057
    %7773 = vmatpush1.bf16.msra.mxu0 %v4056
    %7774 = vmatprep.subr.bf16.mxu0 %v4073
    %7775 = vmatpush1.bf16.msra.mxu0 %v4072
    %7776 = vmatprep.mubr.bf16.mxu0 %v7545
    %7777 = vmatmul.mubr.bf16.gmra.mrb[0].mxu0 %v7544
    %v7778 = vpop.f32.mrb[0].mxu0
    %v7779 = vadd.f32 %v7552, %v7778
    %v7780 = vpop.f32.mrb[0].mxu0
    %v7781 = vadd.f32 %v7553, %v7780
    %v7782 = vpop.f32.mrb[0].mxu0
    %v7783 = vpop.f32.mrb[0].mxu0
    %7784 = vdwg.mxu0
    %7785 = vmatprep.subr.bf16.mxu0 %v4089
    %7786 = vmatpush1.bf16.msra.mxu0 %v4088
    %7787 = vmatprep.subr.bf16.mxu0 %v4105
    %7788 = vmatpush1.bf16.msra.mxu0 %v4104
    %7789 = vmatprep.subr.bf16.mxu0 %v4121
    %7790 = vmatpush1.bf16.msra.mxu0 %v4120
    %7791 = vmatprep.subr.bf16.mxu0 %v4137
    %7792 = vmatpush1.bf16.msra.mxu0 %v4136
    %7793 = vmatprep.subr.bf16.mxu0 %v4153
    %7794 = vmatpush1.bf16.msra.mxu0 %v4152
    %7795 = vmatprep.subr.bf16.mxu0 %v4169
    %7796 = vmatpush1.bf16.msra.mxu0 %v4168
    %7797 = vmatprep.subr.bf16.mxu0 %v4185
    %7798 = vmatpush1.bf16.msra.mxu0 %v4184
    %7799 = vmatprep.subr.bf16.mxu0 %v4201
    %7800 = vmatpush1.bf16.msra.mxu0 %v4200
    %7801 = vmatprep.subr.bf16.mxu0 %v4217
    %7802 = vmatpush1.bf16.msra.mxu0 %v4216
    %7803 = vmatprep.subr.bf16.mxu0 %v4233
    %7804 = vmatpush1.bf16.msra.mxu0 %v4232
    %7805 = vmatprep.subr.bf16.mxu0 %v4249
    %7806 = vmatpush1.bf16.msra.mxu0 %v4248
    %7807 = vmatprep.subr.bf16.mxu0 %v4265
    %7808 = vmatpush1.bf16.msra.mxu0 %v4264
    %7809 = vmatprep.subr.bf16.mxu0 %v4281
    %7810 = vmatpush1.bf16.msra.mxu0 %v4280
    %7811 = vmatprep.subr.bf16.mxu0 %v4297
    %7812 = vmatpush1.bf16.msra.mxu0 %v4296
    %7813 = vmatprep.subr.bf16.mxu0 %v4313
    %7814 = vmatpush1.bf16.msra.mxu0 %v4312
    %7815 = vmatprep.subr.bf16.mxu0 %v4329
    %7816 = vmatpush1.bf16.msra.mxu0 %v4328
    %7817 = vmatprep.mubr.bf16.mxu0 %v7547
    %7818 = vmatmul.mubr.bf16.gmra.mrb[0].mxu0 %v7546
    %v7819 = vpop.f32.mrb[0].mxu0
    %v7820 = vadd.f32 %v7779, %v7819
    %v7821 = vpop.f32.mrb[0].mxu0
    %v7822 = vadd.f32 %v7781, %v7821
    %v7823 = vpop.f32.mrb[0].mxu0
    %v7824 = vpop.f32.mrb[0].mxu0
    %7825 = vdwg.mxu0
    %7826 = vmatprep.subr.bf16.mxu0 %v3835
    %7827 = vmatpush1.bf16.msra.mxu0 %v3834
    %7828 = vmatprep.subr.bf16.mxu0 %v3851
    %7829 = vmatpush1.bf16.msra.mxu0 %v3850
    %7830 = vmatprep.subr.bf16.mxu0 %v3867
    %7831 = vmatpush1.bf16.msra.mxu0 %v3866
    %7832 = vmatprep.subr.bf16.mxu0 %v3883
    %7833 = vmatpush1.bf16.msra.mxu0 %v3882
    %7834 = vmatprep.subr.bf16.mxu0 %v3899
    %7835 = vmatpush1.bf16.msra.mxu0 %v3898
    %7836 = vmatprep.subr.bf16.mxu0 %v3915
    %7837 = vmatpush1.bf16.msra.mxu0 %v3914
    %7838 = vmatprep.subr.bf16.mxu0 %v3931
    %7839 = vmatpush1.bf16.msra.mxu0 %v3930
    %7840 = vmatprep.subr.bf16.mxu0 %v3947
    %7841 = vmatpush1.bf16.msra.mxu0 %v3946
    %7842 = vmatprep.subr.bf16.mxu0 %v3963
    %7843 = vmatpush1.bf16.msra.mxu0 %v3962
    %7844 = vmatprep.subr.bf16.mxu0 %v3979
    %7845 = vmatpush1.bf16.msra.mxu0 %v3978
    %7846 = vmatprep.subr.bf16.mxu0 %v3995
    %7847 = vmatpush1.bf16.msra.mxu0 %v3994
    %7848 = vmatprep.subr.bf16.mxu0 %v4011
    %7849 = vmatpush1.bf16.msra.mxu0 %v4010
    %7850 = vmatprep.subr.bf16.mxu0 %v4027
    %7851 = vmatpush1.bf16.msra.mxu0 %v4026
    %7852 = vmatprep.subr.bf16.mxu0 %v4043
    %7853 = vmatpush1.bf16.msra.mxu0 %v4042
    %7854 = vmatprep.subr.bf16.mxu0 %v4059
    %7855 = vmatpush1.bf16.msra.mxu0 %v4058
    %7856 = vmatprep.subr.bf16.mxu0 %v4075
    %7857 = vmatpush1.bf16.msra.mxu0 %v4074
    %7858 = vmatprep.mubr.bf16.mxu0 %v7545
    %7859 = vmatmul.mubr.bf16.gmra.mrb[0].mxu0 %v7544
    %v7860 = vpop.f32.mrb[0].mxu0
    %v7861 = vadd.f32 %v7554, %v7860
    %v7862 = vpop.f32.mrb[0].mxu0
    %v7863 = vadd.f32 %v7555, %v7862
    %v7864 = vpop.f32.mrb[0].mxu0
    %v7865 = vpop.f32.mrb[0].mxu0
    %7866 = vdwg.mxu0
    %7867 = vmatprep.subr.bf16.mxu0 %v4091
    %7868 = vmatpush1.bf16.msra.mxu0 %v4090
    %7869 = vmatprep.subr.bf16.mxu0 %v4107
    %7870 = vmatpush1.bf16.msra.mxu0 %v4106
    %7871 = vmatprep.subr.bf16.mxu0 %v4123
    %7872 = vmatpush1.bf16.msra.mxu0 %v4122
    %7873 = vmatprep.subr.bf16.mxu0 %v4139
    %7874 = vmatpush1.bf16.msra.mxu0 %v4138
    %7875 = vmatprep.subr.bf16.mxu0 %v4155
    %7876 = vmatpush1.bf16.msra.mxu0 %v4154
    %7877 = vmatprep.subr.bf16.mxu0 %v4171
    %7878 = vmatpush1.bf16.msra.mxu0 %v4170
    %7879 = vmatprep.subr.bf16.mxu0 %v4187
    %7880 = vmatpush1.bf16.msra.mxu0 %v4186
    %7881 = vmatprep.subr.bf16.mxu0 %v4203
    %7882 = vmatpush1.bf16.msra.mxu0 %v4202
    %7883 = vmatprep.subr.bf16.mxu0 %v4219
    %7884 = vmatpush1.bf16.msra.mxu0 %v4218
    %7885 = vmatprep.subr.bf16.mxu0 %v4235
    %7886 = vmatpush1.bf16.msra.mxu0 %v4234
    %7887 = vmatprep.subr.bf16.mxu0 %v4251
    %7888 = vmatpush1.bf16.msra.mxu0 %v4250
    %7889 = vmatprep.subr.bf16.mxu0 %v4267
    %7890 = vmatpush1.bf16.msra.mxu0 %v4266
    %7891 = vmatprep.subr.bf16.mxu0 %v4283
    %7892 = vmatpush1.bf16.msra.mxu0 %v4282
    %7893 = vmatprep.subr.bf16.mxu0 %v4299
    %7894 = vmatpush1.bf16.msra.mxu0 %v4298
    %7895 = vmatprep.subr.bf16.mxu0 %v4315
    %7896 = vmatpush1.bf16.msra.mxu0 %v4314
    %7897 = vmatprep.subr.bf16.mxu0 %v4331
    %7898 = vmatpush1.bf16.msra.mxu0 %v4330
    %7899 = vmatprep.mubr.bf16.mxu0 %v7547
    %7900 = vmatmul.mubr.bf16.gmra.mrb[0].mxu0 %v7546
    %v7901 = vpop.f32.mrb[0].mxu0
    %v7902 = vadd.f32 %v7861, %v7901
    %v7903 = vpop.f32.mrb[0].mxu0
    %v7904 = vadd.f32 %v7863, %v7903
    %v7905 = vpop.f32.mrb[0].mxu0
    %v7906 = vpop.f32.mrb[0].mxu0
    %7907 = vdwg.mxu0
    %7908 = vmatprep.subr.bf16.mxu0 %v3837
    %7909 = vmatpush1.bf16.msra.mxu0 %v3836
    %7910 = vmatprep.subr.bf16.mxu0 %v3853
    %7911 = vmatpush1.bf16.msra.mxu0 %v3852
    %7912 = vmatprep.subr.bf16.mxu0 %v3869
    %7913 = vmatpush1.bf16.msra.mxu0 %v3868
    %7914 = vmatprep.subr.bf16.mxu0 %v3885
    %7915 = vmatpush1.bf16.msra.mxu0 %v3884
    %7916 = vmatprep.subr.bf16.mxu0 %v3901
    %7917 = vmatpush1.bf16.msra.mxu0 %v3900
    %7918 = vmatprep.subr.bf16.mxu0 %v3917
    %7919 = vmatpush1.bf16.msra.mxu0 %v3916
    %7920 = vmatprep.subr.bf16.mxu0 %v3933
    %7921 = vmatpush1.bf16.msra.mxu0 %v3932
    %7922 = vmatprep.subr.bf16.mxu0 %v3949
    %7923 = vmatpush1.bf16.msra.mxu0 %v3948
    %7924 = vmatprep.subr.bf16.mxu0 %v3965
    %7925 = vmatpush1.bf16.msra.mxu0 %v3964
    %7926 = vmatprep.subr.bf16.mxu0 %v3981
    %7927 = vmatpush1.bf16.msra.mxu0 %v3980
    %7928 = vmatprep.subr.bf16.mxu0 %v3997
    %7929 = vmatpush1.bf16.msra.mxu0 %v3996
    %7930 = vmatprep.subr.bf16.mxu0 %v4013
    %7931 = vmatpush1.bf16.msra.mxu0 %v4012
    %7932 = vmatprep.subr.bf16.mxu0 %v4029
    %7933 = vmatpush1.bf16.msra.mxu0 %v4028
    %7934 = vmatprep.subr.bf16.mxu0 %v4045
    %7935 = vmatpush1.bf16.msra.mxu0 %v4044
    %7936 = vmatprep.subr.bf16.mxu0 %v4061
    %7937 = vmatpush1.bf16.msra.mxu0 %v4060
    %7938 = vmatprep.subr.bf16.mxu0 %v4077
    %7939 = vmatpush1.bf16.msra.mxu0 %v4076
    %7940 = vmatprep.mubr.bf16.mxu0 %v7545
    %7941 = vmatmul.mubr.bf16.gmra.mrb[0].mxu0 %v7544
    %v7942 = vpop.f32.mrb[0].mxu0
    %v7943 = vadd.f32 %v7556, %v7942
    %v7944 = vpop.f32.mrb[0].mxu0
    %v7945 = vadd.f32 %v7557, %v7944
    %v7946 = vpop.f32.mrb[0].mxu0
    %v7947 = vpop.f32.mrb[0].mxu0
    %7948 = vdwg.mxu0
    %7949 = vmatprep.subr.bf16.mxu0 %v4093
    %7950 = vmatpush1.bf16.msra.mxu0 %v4092
    %7951 = vmatprep.subr.bf16.mxu0 %v4109
    %7952 = vmatpush1.bf16.msra.mxu0 %v4108
    %7953 = vmatprep.subr.bf16.mxu0 %v4125
    %7954 = vmatpush1.bf16.msra.mxu0 %v4124
    %7955 = vmatprep.subr.bf16.mxu0 %v4141
    %7956 = vmatpush1.bf16.msra.mxu0 %v4140
    %7957 = vmatprep.subr.bf16.mxu0 %v4157
    %7958 = vmatpush1.bf16.msra.mxu0 %v4156
    %7959 = vmatprep.subr.bf16.mxu0 %v4173
    %7960 = vmatpush1.bf16.msra.mxu0 %v4172
    %7961 = vmatprep.subr.bf16.mxu0 %v4189
    %7962 = vmatpush1.bf16.msra.mxu0 %v4188
    %7963 = vmatprep.subr.bf16.mxu0 %v4205
    %7964 = vmatpush1.bf16.msra.mxu0 %v4204
    %7965 = vmatprep.subr.bf16.mxu0 %v4221
    %7966 = vmatpush1.bf16.msra.mxu0 %v4220
    %7967 = vmatprep.subr.bf16.mxu0 %v4237
    %7968 = vmatpush1.bf16.msra.mxu0 %v4236
    %7969 = vmatprep.subr.bf16.mxu0 %v4253
    %7970 = vmatpush1.bf16.msra.mxu0 %v4252
    %7971 = vmatprep.subr.bf16.mxu0 %v4269
    %7972 = vmatpush1.bf16.msra.mxu0 %v4268
    %7973 = vmatprep.subr.bf16.mxu0 %v4285
    %7974 = vmatpush1.bf16.msra.mxu0 %v4284
    %7975 = vmatprep.subr.bf16.mxu0 %v4301
    %7976 = vmatpush1.bf16.msra.mxu0 %v4300
    %7977 = vmatprep.subr.bf16.mxu0 %v4317
    %7978 = vmatpush1.bf16.msra.mxu0 %v4316
    %7979 = vmatprep.subr.bf16.mxu0 %v4333
    %7980 = vmatpush1.bf16.msra.mxu0 %v4332
    %7981 = vmatprep.mubr.bf16.mxu0 %v7547
    %7982 = vmatmul.mubr.bf16.gmra.mrb[0].mxu0 %v7546
    %v7983 = vpop.f32.mrb[0].mxu0
    %v7984 = vadd.f32 %v7943, %v7983
    %v7985 = vpop.f32.mrb[0].mxu0
    %v7986 = vadd.f32 %v7945, %v7985
    %v7987 = vpop.f32.mrb[0].mxu0
    %v7988 = vpop.f32.mrb[0].mxu0
    %7989 = vdwg.mxu0
    %7990 = vmatprep.subr.bf16.mxu0 %v3839
    %7991 = vmatpush1.bf16.msra.mxu0 %v3838
    %7992 = vmatprep.subr.bf16.mxu0 %v3855
    %7993 = vmatpush1.bf16.msra.mxu0 %v3854
    %7994 = vmatprep.subr.bf16.mxu0 %v3871
    %7995 = vmatpush1.bf16.msra.mxu0 %v3870
    %7996 = vmatprep.subr.bf16.mxu0 %v3887
    %7997 = vmatpush1.bf16.msra.mxu0 %v3886
    %7998 = vmatprep.subr.bf16.mxu0 %v3903
    %7999 = vmatpush1.bf16.msra.mxu0 %v3902
    %8000 = vmatprep.subr.bf16.mxu0 %v3919
    %8001 = vmatpush1.bf16.msra.mxu0 %v3918
    %8002 = vmatprep.subr.bf16.mxu0 %v3935
    %8003 = vmatpush1.bf16.msra.mxu0 %v3934
    %8004 = vmatprep.subr.bf16.mxu0 %v3951
    %8005 = vmatpush1.bf16.msra.mxu0 %v3950
    %8006 = vmatprep.subr.bf16.mxu0 %v3967
    %8007 = vmatpush1.bf16.msra.mxu0 %v3966
    %8008 = vmatprep.subr.bf16.mxu0 %v3983
    %8009 = vmatpush1.bf16.msra.mxu0 %v3982
    %8010 = vmatprep.subr.bf16.mxu0 %v3999
    %8011 = vmatpush1.bf16.msra.mxu0 %v3998
    %8012 = vmatprep.subr.bf16.mxu0 %v4015
    %8013 = vmatpush1.bf16.msra.mxu0 %v4014
    %8014 = vmatprep.subr.bf16.mxu0 %v4031
    %8015 = vmatpush1.bf16.msra.mxu0 %v4030
    %8016 = vmatprep.subr.bf16.mxu0 %v4047
    %8017 = vmatpush1.bf16.msra.mxu0 %v4046
    %8018 = vmatprep.subr.bf16.mxu0 %v4063
    %8019 = vmatpush1.bf16.msra.mxu0 %v4062
    %8020 = vmatprep.subr.bf16.mxu0 %v4079
    %8021 = vmatpush1.bf16.msra.mxu0 %v4078
    %8022 = vmatprep.mubr.bf16.mxu0 %v7545
    %8023 = vmatmul.mubr.bf16.gmra.mrb[0].mxu0 %v7544
    %v8024 = vpop.f32.mrb[0].mxu0
    %v8025 = vadd.f32 %v7558, %v8024
    %v8026 = vpop.f32.mrb[0].mxu0
    %v8027 = vadd.f32 %v7559, %v8026
    %v8028 = vpop.f32.mrb[0].mxu0
    %v8029 = vpop.f32.mrb[0].mxu0
    %8030 = vdwg.mxu0
    %8031 = vmatprep.subr.bf16.mxu0 %v4095
    %8032 = vmatpush1.bf16.msra.mxu0 %v4094
    %8033 = vmatprep.subr.bf16.mxu0 %v4111
    %8034 = vmatpush1.bf16.msra.mxu0 %v4110
    %8035 = vmatprep.subr.bf16.mxu0 %v4127
    %8036 = vmatpush1.bf16.msra.mxu0 %v4126
    %8037 = vmatprep.subr.bf16.mxu0 %v4143
    %8038 = vmatpush1.bf16.msra.mxu0 %v4142
    %8039 = vmatprep.subr.bf16.mxu0 %v4159
    %8040 = vmatpush1.bf16.msra.mxu0 %v4158
    %8041 = vmatprep.subr.bf16.mxu0 %v4175
    %8042 = vmatpush1.bf16.msra.mxu0 %v4174
    %8043 = vmatprep.subr.bf16.mxu0 %v4191
    %8044 = vmatpush1.bf16.msra.mxu0 %v4190
    %8045 = vmatprep.subr.bf16.mxu0 %v4207
    %8046 = vmatpush1.bf16.msra.mxu0 %v4206
    %8047 = vmatprep.subr.bf16.mxu0 %v4223
    %8048 = vmatpush1.bf16.msra.mxu0 %v4222
    %8049 = vmatprep.subr.bf16.mxu0 %v4239
    %8050 = vmatpush1.bf16.msra.mxu0 %v4238
    %8051 = vmatprep.subr.bf16.mxu0 %v4255
    %8052 = vmatpush1.bf16.msra.mxu0 %v4254
    %8053 = vmatprep.subr.bf16.mxu0 %v4271
    %8054 = vmatpush1.bf16.msra.mxu0 %v4270
    %8055 = vmatprep.subr.bf16.mxu0 %v4287
    %8056 = vmatpush1.bf16.msra.mxu0 %v4286
    %8057 = vmatprep.subr.bf16.mxu0 %v4303
    %8058 = vmatpush1.bf16.msra.mxu0 %v4302
    %8059 = vmatprep.subr.bf16.mxu0 %v4319
    %8060 = vmatpush1.bf16.msra.mxu0 %v4318
    %8061 = vmatprep.subr.bf16.mxu0 %v4335
    %8062 = vmatpush1.bf16.msra.mxu0 %v4334
    %8063 = vmatprep.mubr.bf16.mxu0 %v7547
    %8064 = vmatmul.mubr.bf16.gmra.mrb[0].mxu0 %v7546
    %v8065 = vpop.f32.mrb[0].mxu0
    %v8066 = vadd.f32 %v8025, %v8065
    %v8067 = vpop.f32.mrb[0].mxu0
    %v8068 = vadd.f32 %v8027, %v8067
    %v8069 = vpop.f32.mrb[0].mxu0
    %v8070 = vpop.f32.mrb[0].mxu0
    %8071 = vdwg.mxu0
    %8072 = vmatprep.subr.bf16.mxu0 %v3841
    %8073 = vmatpush1.bf16.msra.mxu0 %v3840
    %8074 = vmatprep.subr.bf16.mxu0 %v3857
    %8075 = vmatpush1.bf16.msra.mxu0 %v3856
    %8076 = vmatprep.subr.bf16.mxu0 %v3873
    %8077 = vmatpush1.bf16.msra.mxu0 %v3872
    %8078 = vmatprep.subr.bf16.mxu0 %v3889
    %8079 = vmatpush1.bf16.msra.mxu0 %v3888
    %8080 = vmatprep.subr.bf16.mxu0 %v3905
    %8081 = vmatpush1.bf16.msra.mxu0 %v3904
    %8082 = vmatprep.subr.bf16.mxu0 %v3921
    %8083 = vmatpush1.bf16.msra.mxu0 %v3920
    %8084 = vmatprep.subr.bf16.mxu0 %v3937
    %8085 = vmatpush1.bf16.msra.mxu0 %v3936
    %8086 = vmatprep.subr.bf16.mxu0 %v3953
    %8087 = vmatpush1.bf16.msra.mxu0 %v3952
    %8088 = vmatprep.subr.bf16.mxu0 %v3969
    %8089 = vmatpush1.bf16.msra.mxu0 %v3968
    %8090 = vmatprep.subr.bf16.mxu0 %v3985
    %8091 = vmatpush1.bf16.msra.mxu0 %v3984
    %8092 = vmatprep.subr.bf16.mxu0 %v4001
    %8093 = vmatpush1.bf16.msra.mxu0 %v4000
    %8094 = vmatprep.subr.bf16.mxu0 %v4017
    %8095 = vmatpush1.bf16.msra.mxu0 %v4016
    %8096 = vmatprep.subr.bf16.mxu0 %v4033
    %8097 = vmatpush1.bf16.msra.mxu0 %v4032
    %8098 = vmatprep.subr.bf16.mxu0 %v4049
    %8099 = vmatpush1.bf16.msra.mxu0 %v4048
    %8100 = vmatprep.subr.bf16.mxu0 %v4065
    %8101 = vmatpush1.bf16.msra.mxu0 %v4064
    %8102 = vmatprep.subr.bf16.mxu0 %v4081
    %8103 = vmatpush1.bf16.msra.mxu0 %v4080
    %8104 = vmatprep.mubr.bf16.mxu0 %v7545
    %8105 = vmatmul.mubr.bf16.gmra.mrb[0].mxu0 %v7544
    %v8106 = vpop.f32.mrb[0].mxu0
    %v8107 = vadd.f32 %v7560, %v8106
    %v8108 = vpop.f32.mrb[0].mxu0
    %v8109 = vadd.f32 %v7561, %v8108
    %v8110 = vpop.f32.mrb[0].mxu0
    %v8111 = vpop.f32.mrb[0].mxu0
    %8112 = vdwg.mxu0
    %8113 = vmatprep.subr.bf16.mxu0 %v4097
    %8114 = vmatpush1.bf16.msra.mxu0 %v4096
    %8115 = vmatprep.subr.bf16.mxu0 %v4113
    %8116 = vmatpush1.bf16.msra.mxu0 %v4112
    %8117 = vmatprep.subr.bf16.mxu0 %v4129
    %8118 = vmatpush1.bf16.msra.mxu0 %v4128
    %8119 = vmatprep.subr.bf16.mxu0 %v4145
    %8120 = vmatpush1.bf16.msra.mxu0 %v4144
    %8121 = vmatprep.subr.bf16.mxu0 %v4161
    %8122 = vmatpush1.bf16.msra.mxu0 %v4160
    %8123 = vmatprep.subr.bf16.mxu0 %v4177
    %8124 = vmatpush1.bf16.msra.mxu0 %v4176
    %8125 = vmatprep.subr.bf16.mxu0 %v4193
    %8126 = vmatpush1.bf16.msra.mxu0 %v4192
    %8127 = vmatprep.subr.bf16.mxu0 %v4209
    %8128 = vmatpush1.bf16.msra.mxu0 %v4208
    %8129 = vmatprep.subr.bf16.mxu0 %v4225
    %8130 = vmatpush1.bf16.msra.mxu0 %v4224
    %8131 = vmatprep.subr.bf16.mxu0 %v4241
    %8132 = vmatpush1.bf16.msra.mxu0 %v4240
    %8133 = vmatprep.subr.bf16.mxu0 %v4257
    %8134 = vmatpush1.bf16.msra.mxu0 %v4256
    %8135 = vmatprep.subr.bf16.mxu0 %v4273
    %8136 = vmatpush1.bf16.msra.mxu0 %v4272
    %8137 = vmatprep.subr.bf16.mxu0 %v4289
    %8138 = vmatpush1.bf16.msra.mxu0 %v4288
    %8139 = vmatprep.subr.bf16.mxu0 %v4305
    %8140 = vmatpush1.bf16.msra.mxu0 %v4304
    %8141 = vmatprep.subr.bf16.mxu0 %v4321
    %8142 = vmatpush1.bf16.msra.mxu0 %v4320
    %8143 = vmatprep.subr.bf16.mxu0 %v4337
    %8144 = vmatpush1.bf16.msra.mxu0 %v4336
    %8145 = vmatprep.mubr.bf16.mxu0 %v7547
    %8146 = vmatmul.mubr.bf16.gmra.mrb[0].mxu0 %v7546
    %v8147 = vpop.f32.mrb[0].mxu0
    %v8148 = vadd.f32 %v8107, %v8147
    %v8149 = vpop.f32.mrb[0].mxu0
    %v8150 = vadd.f32 %v8109, %v8149
    %v8151 = vpop.f32.mrb[0].mxu0
    %v8152 = vpop.f32.mrb[0].mxu0
    %8153 = vdwg.mxu0
    %8154 = vmatprep.subr.bf16.mxu0 %v3843
    %8155 = vmatpush1.bf16.msra.mxu0 %v3842
    %8156 = vmatprep.subr.bf16.mxu0 %v3859
    %8157 = vmatpush1.bf16.msra.mxu0 %v3858
    %8158 = vmatprep.subr.bf16.mxu0 %v3875
    %8159 = vmatpush1.bf16.msra.mxu0 %v3874
    %8160 = vmatprep.subr.bf16.mxu0 %v3891
    %8161 = vmatpush1.bf16.msra.mxu0 %v3890
    %8162 = vmatprep.subr.bf16.mxu0 %v3907
    %8163 = vmatpush1.bf16.msra.mxu0 %v3906
    %8164 = vmatprep.subr.bf16.mxu0 %v3923
    %8165 = vmatpush1.bf16.msra.mxu0 %v3922
    %8166 = vmatprep.subr.bf16.mxu0 %v3939
    %8167 = vmatpush1.bf16.msra.mxu0 %v3938
    %8168 = vmatprep.subr.bf16.mxu0 %v3955
    %8169 = vmatpush1.bf16.msra.mxu0 %v3954
    %8170 = vmatprep.subr.bf16.mxu0 %v3971
    %8171 = vmatpush1.bf16.msra.mxu0 %v3970
    %8172 = vmatprep.subr.bf16.mxu0 %v3987
    %8173 = vmatpush1.bf16.msra.mxu0 %v3986
    %8174 = vmatprep.subr.bf16.mxu0 %v4003
    %8175 = vmatpush1.bf16.msra.mxu0 %v4002
    %8176 = vmatprep.subr.bf16.mxu0 %v4019
    %8177 = vmatpush1.bf16.msra.mxu0 %v4018
    %8178 = vmatprep.subr.bf16.mxu0 %v4035
    %8179 = vmatpush1.bf16.msra.mxu0 %v4034
    %8180 = vmatprep.subr.bf16.mxu0 %v4051
    %8181 = vmatpush1.bf16.msra.mxu0 %v4050
    %8182 = vmatprep.subr.bf16.mxu0 %v4067
    %8183 = vmatpush1.bf16.msra.mxu0 %v4066
    %8184 = vmatprep.subr.bf16.mxu0 %v4083
    %8185 = vmatpush1.bf16.msra.mxu0 %v4082
    %8186 = vmatprep.mubr.bf16.mxu0 %v7545
    %8187 = vmatmul.mubr.bf16.gmra.mrb[0].mxu0 %v7544
    %v8188 = vpop.f32.mrb[0].mxu0
    %v8189 = vadd.f32 %v7562, %v8188
    %v8190 = vpop.f32.mrb[0].mxu0
    %v8191 = vadd.f32 %v7563, %v8190
    %v8192 = vpop.f32.mrb[0].mxu0
    %v8193 = vpop.f32.mrb[0].mxu0
    %8194 = vdwg.mxu0
    %8195 = vmatprep.subr.bf16.mxu0 %v4099
    %8196 = vmatpush1.bf16.msra.mxu0 %v4098
    %8197 = vmatprep.subr.bf16.mxu0 %v4115
    %8198 = vmatpush1.bf16.msra.mxu0 %v4114
    %8199 = vmatprep.subr.bf16.mxu0 %v4131
    %8200 = vmatpush1.bf16.msra.mxu0 %v4130
    %8201 = vmatprep.subr.bf16.mxu0 %v4147
    %8202 = vmatpush1.bf16.msra.mxu0 %v4146
    %8203 = vmatprep.subr.bf16.mxu0 %v4163
    %8204 = vmatpush1.bf16.msra.mxu0 %v4162
    %8205 = vmatprep.subr.bf16.mxu0 %v4179
    %8206 = vmatpush1.bf16.msra.mxu0 %v4178
    %8207 = vmatprep.subr.bf16.mxu0 %v4195
    %8208 = vmatpush1.bf16.msra.mxu0 %v4194
    %8209 = vmatprep.subr.bf16.mxu0 %v4211
    %8210 = vmatpush1.bf16.msra.mxu0 %v4210
    %8211 = vmatprep.subr.bf16.mxu0 %v4227
    %8212 = vmatpush1.bf16.msra.mxu0 %v4226
    %8213 = vmatprep.subr.bf16.mxu0 %v4243
    %8214 = vmatpush1.bf16.msra.mxu0 %v4242
    %8215 = vmatprep.subr.bf16.mxu0 %v4259
    %8216 = vmatpush1.bf16.msra.mxu0 %v4258
    %8217 = vmatprep.subr.bf16.mxu0 %v4275
    %8218 = vmatpush1.bf16.msra.mxu0 %v4274
    %8219 = vmatprep.subr.bf16.mxu0 %v4291
    %8220 = vmatpush1.bf16.msra.mxu0 %v4290
    %8221 = vmatprep.subr.bf16.mxu0 %v4307
    %8222 = vmatpush1.bf16.msra.mxu0 %v4306
    %8223 = vmatprep.subr.bf16.mxu0 %v4323
    %8224 = vmatpush1.bf16.msra.mxu0 %v4322
    %8225 = vmatprep.subr.bf16.mxu0 %v4339
    %8226 = vmatpush1.bf16.msra.mxu0 %v4338
    %8227 = vmatprep.mubr.bf16.mxu0 %v7547
    %8228 = vmatmul.mubr.bf16.gmra.mrb[0].mxu0 %v7546
    %v8229 = vpop.f32.mrb[0].mxu0
    %v8230 = vadd.f32 %v8189, %v8229
    %v8231 = vpop.f32.mrb[0].mxu0
    %v8232 = vadd.f32 %v8191, %v8231
    %v8233 = vpop.f32.mrb[0].mxu0
    %v8234 = vpop.f32.mrb[0].mxu0
    %8235 = vdwg.mxu0
    %v8236 = vmul.f32 %v7656, 0.5
    %v8237 = vmul.f32 %v7658, 0.5
    %v8238 = vmul.f32 %v7738, 0.5
    %v8239 = vmul.f32 %v7740, 0.5
    %v8240 = vtanh.pop %v8236
    %v8241 = vtanh.pop %v8237
    %v8242 = vtanh.pop %v8238
    %v8243 = vtanh.pop %v8239
    %v8244 = vmul.f32 %v8240, 0.5
    %v8245 = vmul.f32 %v8241, 0.5
    %v8246 = vmul.f32 %v8242, 0.5
    %v8247 = vmul.f32 %v8243, 0.5
    %v8248 = vadd.f32 %v8244, 0.5
    %v8249 = vadd.f32 %v8245, 0.5
    %v8250 = vadd.f32 %v8246, 0.5
    %v8251 = vadd.f32 %v8247, 0.5
    %v8252 = vmul.f32 %v7820, 0.5
    %v8253 = vmul.f32 %v7822, 0.5
    %v8254 = vmul.f32 %v7902, 0.5
    %v8255 = vmul.f32 %v7904, 0.5
    %v8256 = vtanh.pop %v8252
    %v8257 = vtanh.pop %v8253
    %v8258 = vtanh.pop %v8254
    %v8259 = vtanh.pop %v8255
    %v8260 = vmul.f32 %v8256, 0.5
    %v8261 = vmul.f32 %v8257, 0.5
    %v8262 = vmul.f32 %v8258, 0.5
    %v8263 = vmul.f32 %v8259, 0.5
    %v8264 = vadd.f32 %v8260, 0.5
    %v8265 = vadd.f32 %v8261, 0.5
    %v8266 = vadd.f32 %v8262, 0.5
    %v8267 = vadd.f32 %v8263, 0.5
    %v8268 = vtanh.pop %v7984
    %v8269 = vtanh.pop %v7986
    %v8270 = vtanh.pop %v8066
    %v8271 = vtanh.pop %v8068
    %v8272 = vmul.f32 %v8148, 0.5
    %v8273 = vmul.f32 %v8150, 0.5
    %v8274 = vmul.f32 %v8230, 0.5
    %v8275 = vmul.f32 %v8232, 0.5
    %v8276 = vtanh.pop %v8272
    %v8277 = vtanh.pop %v8273
    %v8278 = vtanh.pop %v8274
    %v8279 = vtanh.pop %v8275
    %v8280 = vmul.f32 %v8276, 0.5
    %v8281 = vmul.f32 %v8277, 0.5
    %v8282 = vmul.f32 %v8278, 0.5
    %v8283 = vmul.f32 %v8279, 0.5
    %v8284 = vadd.f32 %v8280, 0.5
    %v8285 = vadd.f32 %v8281, 0.5
    %v8286 = vadd.f32 %v8282, 0.5
    %v8287 = vadd.f32 %v8283, 0.5
    %v8288 = vmul.f32 %v8264, %v7532
    %v8289 = vmul.f32 %v8265, %v7533
    %v8290 = vmul.f32 %v8266, %v7534
    %v8291 = vmul.f32 %v8267, %v7535
    %v8292 = vmul.f32 %v8248, %v8268
    %v8293 = vmul.f32 %v8249, %v8269
    %v8294 = vmul.f32 %v8250, %v8270
    %v8295 = vmul.f32 %v8251, %v8271
    %v8296 = vadd.f32 %v8288, %v8292
    %v8297 = vadd.f32 %v8289, %v8293
    %v8298 = vadd.f32 %v8290, %v8294
    %v8299 = vadd.f32 %v8291, %v8295
    %v8300 = vtanh.pop %v8296
    %v8301 = vtanh.pop %v8297
    %v8302 = vtanh.pop %v8298
    %v8303 = vtanh.pop %v8299
    %v8304 = vmul.f32 %v8284, %v8300
    %v8305 = vmul.f32 %v8285, %v8301
    %v8306 = vmul.f32 %v8286, %v8302
    %v8307 = vmul.f32 %v8287, %v8303
    %v8308 = vpack.c.bf16 %v8304, %v8304
    %v8309 = vpack.c.bf16 %v8305, %v8305
    %v8310 = vpack.c.bf16 %v8306, %v8306
    %v8311 = vpack.c.bf16 %v8307, %v8307
    %v8312 = vrot.slane %v5220, 5
    %v8313 = vrot.slane %v5221, 5
    %v8314 = vrot.slane %v5222, 5
    %v8315 = vrot.slane %v5223, 5
    %v8316 = vrot.slane %v5224, 5
    %v8317 = vrot.slane %v5225, 5
    %v8318 = vrot.slane %v5226, 5
    %v8319 = vrot.slane %v5227, 5
    %v8320 = vrot.slane %v5228, 5
    %v8321 = vrot.slane %v5229, 5
    %v8322 = vrot.slane %v5230, 5
    %v8323 = vrot.slane %v5231, 5
    %v8324 = vrot.slane %v5232, 5
    %v8325 = vrot.slane %v5233, 5
    %v8326 = vrot.slane %v5234, 5
    %v8327 = vrot.slane %v5235, 5
    %8344 = vmatprep.subr.bf16.mxu0 %v3829
    %8345 = vmatpush1.bf16.msra.mxu0 %v3828
    %8346 = vmatprep.subr.bf16.mxu0 %v3845
    %8347 = vmatpush1.bf16.msra.mxu0 %v3844
    %8348 = vmatprep.subr.bf16.mxu0 %v3861
    %8349 = vmatpush1.bf16.msra.mxu0 %v3860
    %8350 = vmatprep.subr.bf16.mxu0 %v3877
    %8351 = vmatpush1.bf16.msra.mxu0 %v3876
    %8352 = vmatprep.subr.bf16.mxu0 %v3893
    %8353 = vmatpush1.bf16.msra.mxu0 %v3892
    %8354 = vmatprep.subr.bf16.mxu0 %v3909
    %8355 = vmatpush1.bf16.msra.mxu0 %v3908
    %8356 = vmatprep.subr.bf16.mxu0 %v3925
    %8357 = vmatpush1.bf16.msra.mxu0 %v3924
    %8358 = vmatprep.subr.bf16.mxu0 %v3941
    %8359 = vmatpush1.bf16.msra.mxu0 %v3940
    %8360 = vmatprep.subr.bf16.mxu0 %v3957
    %8361 = vmatpush1.bf16.msra.mxu0 %v3956
    %8362 = vmatprep.subr.bf16.mxu0 %v3973
    %8363 = vmatpush1.bf16.msra.mxu0 %v3972
    %8364 = vmatprep.subr.bf16.mxu0 %v3989
    %8365 = vmatpush1.bf16.msra.mxu0 %v3988
    %8366 = vmatprep.subr.bf16.mxu0 %v4005
    %8367 = vmatpush1.bf16.msra.mxu0 %v4004
    %8368 = vmatprep.subr.bf16.mxu0 %v4021
    %8369 = vmatpush1.bf16.msra.mxu0 %v4020
    %8370 = vmatprep.subr.bf16.mxu0 %v4037
    %8371 = vmatpush1.bf16.msra.mxu0 %v4036
    %8372 = vmatprep.subr.bf16.mxu0 %v4053
    %8373 = vmatpush1.bf16.msra.mxu0 %v4052
    %8374 = vmatprep.subr.bf16.mxu0 %v4069
    %8375 = vmatpush1.bf16.msra.mxu0 %v4068
    %8376 = vmatprep.mubr.bf16.mxu0 %v8309
    %8377 = vmatmul.mubr.bf16.gmra.mrb[0].mxu0 %v8308
    %v8378 = vpop.f32.mrb[0].mxu0
    %v8379 = vadd.f32 %v8312, %v8378
    %v8380 = vpop.f32.mrb[0].mxu0
    %v8381 = vadd.f32 %v8313, %v8380
    %v8382 = vpop.f32.mrb[0].mxu0
    %v8383 = vpop.f32.mrb[0].mxu0
    %8384 = vdwg.mxu0
    %8385 = vmatprep.subr.bf16.mxu0 %v4085
    %8386 = vmatpush1.bf16.msra.mxu0 %v4084
    %8387 = vmatprep.subr.bf16.mxu0 %v4101
    %8388 = vmatpush1.bf16.msra.mxu0 %v4100
    %8389 = vmatprep.subr.bf16.mxu0 %v4117
    %8390 = vmatpush1.bf16.msra.mxu0 %v4116
    %8391 = vmatprep.subr.bf16.mxu0 %v4133
    %8392 = vmatpush1.bf16.msra.mxu0 %v4132
    %8393 = vmatprep.subr.bf16.mxu0 %v4149
    %8394 = vmatpush1.bf16.msra.mxu0 %v4148
    %8395 = vmatprep.subr.bf16.mxu0 %v4165
    %8396 = vmatpush1.bf16.msra.mxu0 %v4164
    %8397 = vmatprep.subr.bf16.mxu0 %v4181
    %8398 = vmatpush1.bf16.msra.mxu0 %v4180
    %8399 = vmatprep.subr.bf16.mxu0 %v4197
    %8400 = vmatpush1.bf16.msra.mxu0 %v4196
    %8401 = vmatprep.subr.bf16.mxu0 %v4213
    %8402 = vmatpush1.bf16.msra.mxu0 %v4212
    %8403 = vmatprep.subr.bf16.mxu0 %v4229
    %8404 = vmatpush1.bf16.msra.mxu0 %v4228
    %8405 = vmatprep.subr.bf16.mxu0 %v4245
    %8406 = vmatpush1.bf16.msra.mxu0 %v4244
    %8407 = vmatprep.subr.bf16.mxu0 %v4261
    %8408 = vmatpush1.bf16.msra.mxu0 %v4260
    %8409 = vmatprep.subr.bf16.mxu0 %v4277
    %8410 = vmatpush1.bf16.msra.mxu0 %v4276
    %8411 = vmatprep.subr.bf16.mxu0 %v4293
    %8412 = vmatpush1.bf16.msra.mxu0 %v4292
    %8413 = vmatprep.subr.bf16.mxu0 %v4309
    %8414 = vmatpush1.bf16.msra.mxu0 %v4308
    %8415 = vmatprep.subr.bf16.mxu0 %v4325
    %8416 = vmatpush1.bf16.msra.mxu0 %v4324
    %8417 = vmatprep.mubr.bf16.mxu0 %v8311
    %8418 = vmatmul.mubr.bf16.gmra.mrb[0].mxu0 %v8310
    %v8419 = vpop.f32.mrb[0].mxu0
    %v8420 = vadd.f32 %v8379, %v8419
    %v8421 = vpop.f32.mrb[0].mxu0
    %v8422 = vadd.f32 %v8381, %v8421
    %v8423 = vpop.f32.mrb[0].mxu0
    %v8424 = vpop.f32.mrb[0].mxu0
    %8425 = vdwg.mxu0
    %8426 = vmatprep.subr.bf16.mxu0 %v3831
    %8427 = vmatpush1.bf16.msra.mxu0 %v3830
    %8428 = vmatprep.subr.bf16.mxu0 %v3847
    %8429 = vmatpush1.bf16.msra.mxu0 %v3846
    %8430 = vmatprep.subr.bf16.mxu0 %v3863
    %8431 = vmatpush1.bf16.msra.mxu0 %v3862
    %8432 = vmatprep.subr.bf16.mxu0 %v3879
    %8433 = vmatpush1.bf16.msra.mxu0 %v3878
    %8434 = vmatprep.subr.bf16.mxu0 %v3895
    %8435 = vmatpush1.bf16.msra.mxu0 %v3894
    %8436 = vmatprep.subr.bf16.mxu0 %v3911
    %8437 = vmatpush1.bf16.msra.mxu0 %v3910
    %8438 = vmatprep.subr.bf16.mxu0 %v3927
    %8439 = vmatpush1.bf16.msra.mxu0 %v3926
    %8440 = vmatprep.subr.bf16.mxu0 %v3943
    %8441 = vmatpush1.bf16.msra.mxu0 %v3942
    %8442 = vmatprep.subr.bf16.mxu0 %v3959
    %8443 = vmatpush1.bf16.msra.mxu0 %v3958
    %8444 = vmatprep.subr.bf16.mxu0 %v3975
    %8445 = vmatpush1.bf16.msra.mxu0 %v3974
    %8446 = vmatprep.subr.bf16.mxu0 %v3991
    %8447 = vmatpush1.bf16.msra.mxu0 %v3990
    %8448 = vmatprep.subr.bf16.mxu0 %v4007
    %8449 = vmatpush1.bf16.msra.mxu0 %v4006
    %8450 = vmatprep.subr.bf16.mxu0 %v4023
    %8451 = vmatpush1.bf16.msra.mxu0 %v4022
    %8452 = vmatprep.subr.bf16.mxu0 %v4039
    %8453 = vmatpush1.bf16.msra.mxu0 %v4038
    %8454 = vmatprep.subr.bf16.mxu0 %v4055
    %8455 = vmatpush1.bf16.msra.mxu0 %v4054
    %8456 = vmatprep.subr.bf16.mxu0 %v4071
    %8457 = vmatpush1.bf16.msra.mxu0 %v4070
    %8458 = vmatprep.mubr.bf16.mxu0 %v8309
    %8459 = vmatmul.mubr.bf16.gmra.mrb[0].mxu0 %v8308
    %v8460 = vpop.f32.mrb[0].mxu0
    %v8461 = vadd.f32 %v8314, %v8460
    %v8462 = vpop.f32.mrb[0].mxu0
    %v8463 = vadd.f32 %v8315, %v8462
    %v8464 = vpop.f32.mrb[0].mxu0
    %v8465 = vpop.f32.mrb[0].mxu0
    %8466 = vdwg.mxu0
    %8467 = vmatprep.subr.bf16.mxu0 %v4087
    %8468 = vmatpush1.bf16.msra.mxu0 %v4086
    %8469 = vmatprep.subr.bf16.mxu0 %v4103
    %8470 = vmatpush1.bf16.msra.mxu0 %v4102
    %8471 = vmatprep.subr.bf16.mxu0 %v4119
    %8472 = vmatpush1.bf16.msra.mxu0 %v4118
    %8473 = vmatprep.subr.bf16.mxu0 %v4135
    %8474 = vmatpush1.bf16.msra.mxu0 %v4134
    %8475 = vmatprep.subr.bf16.mxu0 %v4151
    %8476 = vmatpush1.bf16.msra.mxu0 %v4150
    %8477 = vmatprep.subr.bf16.mxu0 %v4167
    %8478 = vmatpush1.bf16.msra.mxu0 %v4166
    %8479 = vmatprep.subr.bf16.mxu0 %v4183
    %8480 = vmatpush1.bf16.msra.mxu0 %v4182
    %8481 = vmatprep.subr.bf16.mxu0 %v4199
    %8482 = vmatpush1.bf16.msra.mxu0 %v4198
    %8483 = vmatprep.subr.bf16.mxu0 %v4215
    %8484 = vmatpush1.bf16.msra.mxu0 %v4214
    %8485 = vmatprep.subr.bf16.mxu0 %v4231
    %8486 = vmatpush1.bf16.msra.mxu0 %v4230
    %8487 = vmatprep.subr.bf16.mxu0 %v4247
    %8488 = vmatpush1.bf16.msra.mxu0 %v4246
    %8489 = vmatprep.subr.bf16.mxu0 %v4263
    %8490 = vmatpush1.bf16.msra.mxu0 %v4262
    %8491 = vmatprep.subr.bf16.mxu0 %v4279
    %8492 = vmatpush1.bf16.msra.mxu0 %v4278
    %8493 = vmatprep.subr.bf16.mxu0 %v4295
    %8494 = vmatpush1.bf16.msra.mxu0 %v4294
    %8495 = vmatprep.subr.bf16.mxu0 %v4311
    %8496 = vmatpush1.bf16.msra.mxu0 %v4310
    %8497 = vmatprep.subr.bf16.mxu0 %v4327
    %8498 = vmatpush1.bf16.msra.mxu0 %v4326
    %8499 = vmatprep.mubr.bf16.mxu0 %v8311
    %8500 = vmatmul.mubr.bf16.gmra.mrb[0].mxu0 %v8310
    %v8501 = vpop.f32.mrb[0].mxu0
    %v8502 = vadd.f32 %v8461, %v8501
    %v8503 = vpop.f32.mrb[0].mxu0
    %v8504 = vadd.f32 %v8463, %v8503
    %v8505 = vpop.f32.mrb[0].mxu0
    %v8506 = vpop.f32.mrb[0].mxu0
    %8507 = vdwg.mxu0
    %8508 = vmatprep.subr.bf16.mxu0 %v3833
    %8509 = vmatpush1.bf16.msra.mxu0 %v3832
    %8510 = vmatprep.subr.bf16.mxu0 %v3849
    %8511 = vmatpush1.bf16.msra.mxu0 %v3848
    %8512 = vmatprep.subr.bf16.mxu0 %v3865
    %8513 = vmatpush1.bf16.msra.mxu0 %v3864
    %8514 = vmatprep.subr.bf16.mxu0 %v3881
    %8515 = vmatpush1.bf16.msra.mxu0 %v3880
    %8516 = vmatprep.subr.bf16.mxu0 %v3897
    %8517 = vmatpush1.bf16.msra.mxu0 %v3896
    %8518 = vmatprep.subr.bf16.mxu0 %v3913
    %8519 = vmatpush1.bf16.msra.mxu0 %v3912
    %8520 = vmatprep.subr.bf16.mxu0 %v3929
    %8521 = vmatpush1.bf16.msra.mxu0 %v3928
    %8522 = vmatprep.subr.bf16.mxu0 %v3945
    %8523 = vmatpush1.bf16.msra.mxu0 %v3944
    %8524 = vmatprep.subr.bf16.mxu0 %v3961
    %8525 = vmatpush1.bf16.msra.mxu0 %v3960
    %8526 = vmatprep.subr.bf16.mxu0 %v3977
    %8527 = vmatpush1.bf16.msra.mxu0 %v3976
    %8528 = vmatprep.subr.bf16.mxu0 %v3993
    %8529 = vmatpush1.bf16.msra.mxu0 %v3992
    %8530 = vmatprep.subr.bf16.mxu0 %v4009
    %8531 = vmatpush1.bf16.msra.mxu0 %v4008
    %8532 = vmatprep.subr.bf16.mxu0 %v4025
    %8533 = vmatpush1.bf16.msra.mxu0 %v4024
    %8534 = vmatprep.subr.bf16.mxu0 %v4041
    %8535 = vmatpush1.bf16.msra.mxu0 %v4040
    %8536 = vmatprep.subr.bf16.mxu0 %v4057
    %8537 = vmatpush1.bf16.msra.mxu0 %v4056
    %8538 = vmatprep.subr.bf16.mxu0 %v4073
    %8539 = vmatpush1.bf16.msra.mxu0 %v4072
    %8540 = vmatprep.mubr.bf16.mxu0 %v8309
    %8541 = vmatmul.mubr.bf16.gmra.mrb[0].mxu0 %v8308
    %v8542 = vpop.f32.mrb[0].mxu0
    %v8543 = vadd.f32 %v8316, %v8542
    %v8544 = vpop.f32.mrb[0].mxu0
    %v8545 = vadd.f32 %v8317, %v8544
    %v8546 = vpop.f32.mrb[0].mxu0
    %v8547 = vpop.f32.mrb[0].mxu0
    %8548 = vdwg.mxu0
    %8549 = vmatprep.subr.bf16.mxu0 %v4089
    %8550 = vmatpush1.bf16.msra.mxu0 %v4088
    %8551 = vmatprep.subr.bf16.mxu0 %v4105
    %8552 = vmatpush1.bf16.msra.mxu0 %v4104
    %8553 = vmatprep.subr.bf16.mxu0 %v4121
    %8554 = vmatpush1.bf16.msra.mxu0 %v4120
    %8555 = vmatprep.subr.bf16.mxu0 %v4137
    %8556 = vmatpush1.bf16.msra.mxu0 %v4136
    %8557 = vmatprep.subr.bf16.mxu0 %v4153
    %8558 = vmatpush1.bf16.msra.mxu0 %v4152
    %8559 = vmatprep.subr.bf16.mxu0 %v4169
    %8560 = vmatpush1.bf16.msra.mxu0 %v4168
    %8561 = vmatprep.subr.bf16.mxu0 %v4185
    %8562 = vmatpush1.bf16.msra.mxu0 %v4184
    %8563 = vmatprep.subr.bf16.mxu0 %v4201
    %8564 = vmatpush1.bf16.msra.mxu0 %v4200
    %8565 = vmatprep.subr.bf16.mxu0 %v4217
    %8566 = vmatpush1.bf16.msra.mxu0 %v4216
    %8567 = vmatprep.subr.bf16.mxu0 %v4233
    %8568 = vmatpush1.bf16.msra.mxu0 %v4232
    %8569 = vmatprep.subr.bf16.mxu0 %v4249
    %8570 = vmatpush1.bf16.msra.mxu0 %v4248
    %8571 = vmatprep.subr.bf16.mxu0 %v4265
    %8572 = vmatpush1.bf16.msra.mxu0 %v4264
    %8573 = vmatprep.subr.bf16.mxu0 %v4281
    %8574 = vmatpush1.bf16.msra.mxu0 %v4280
    %8575 = vmatprep.subr.bf16.mxu0 %v4297
    %8576 = vmatpush1.bf16.msra.mxu0 %v4296
    %8577 = vmatprep.subr.bf16.mxu0 %v4313
    %8578 = vmatpush1.bf16.msra.mxu0 %v4312
    %8579 = vmatprep.subr.bf16.mxu0 %v4329
    %8580 = vmatpush1.bf16.msra.mxu0 %v4328
    %8581 = vmatprep.mubr.bf16.mxu0 %v8311
    %8582 = vmatmul.mubr.bf16.gmra.mrb[0].mxu0 %v8310
    %v8583 = vpop.f32.mrb[0].mxu0
    %v8584 = vadd.f32 %v8543, %v8583
    %v8585 = vpop.f32.mrb[0].mxu0
    %v8586 = vadd.f32 %v8545, %v8585
    %v8587 = vpop.f32.mrb[0].mxu0
    %v8588 = vpop.f32.mrb[0].mxu0
    %8589 = vdwg.mxu0
    %8590 = vmatprep.subr.bf16.mxu0 %v3835
    %8591 = vmatpush1.bf16.msra.mxu0 %v3834
    %8592 = vmatprep.subr.bf16.mxu0 %v3851
    %8593 = vmatpush1.bf16.msra.mxu0 %v3850
    %8594 = vmatprep.subr.bf16.mxu0 %v3867
    %8595 = vmatpush1.bf16.msra.mxu0 %v3866
    %8596 = vmatprep.subr.bf16.mxu0 %v3883
    %8597 = vmatpush1.bf16.msra.mxu0 %v3882
    %8598 = vmatprep.subr.bf16.mxu0 %v3899
    %8599 = vmatpush1.bf16.msra.mxu0 %v3898
    %8600 = vmatprep.subr.bf16.mxu0 %v3915
    %8601 = vmatpush1.bf16.msra.mxu0 %v3914
    %8602 = vmatprep.subr.bf16.mxu0 %v3931
    %8603 = vmatpush1.bf16.msra.mxu0 %v3930
    %8604 = vmatprep.subr.bf16.mxu0 %v3947
    %8605 = vmatpush1.bf16.msra.mxu0 %v3946
    %8606 = vmatprep.subr.bf16.mxu0 %v3963
    %8607 = vmatpush1.bf16.msra.mxu0 %v3962
    %8608 = vmatprep.subr.bf16.mxu0 %v3979
    %8609 = vmatpush1.bf16.msra.mxu0 %v3978
    %8610 = vmatprep.subr.bf16.mxu0 %v3995
    %8611 = vmatpush1.bf16.msra.mxu0 %v3994
    %8612 = vmatprep.subr.bf16.mxu0 %v4011
    %8613 = vmatpush1.bf16.msra.mxu0 %v4010
    %8614 = vmatprep.subr.bf16.mxu0 %v4027
    %8615 = vmatpush1.bf16.msra.mxu0 %v4026
    %8616 = vmatprep.subr.bf16.mxu0 %v4043
    %8617 = vmatpush1.bf16.msra.mxu0 %v4042
    %8618 = vmatprep.subr.bf16.mxu0 %v4059
    %8619 = vmatpush1.bf16.msra.mxu0 %v4058
    %8620 = vmatprep.subr.bf16.mxu0 %v4075
    %8621 = vmatpush1.bf16.msra.mxu0 %v4074
    %8622 = vmatprep.mubr.bf16.mxu0 %v8309
    %8623 = vmatmul.mubr.bf16.gmra.mrb[0].mxu0 %v8308
    %v8624 = vpop.f32.mrb[0].mxu0
    %v8625 = vadd.f32 %v8318, %v8624
    %v8626 = vpop.f32.mrb[0].mxu0
    %v8627 = vadd.f32 %v8319, %v8626
    %v8628 = vpop.f32.mrb[0].mxu0
    %v8629 = vpop.f32.mrb[0].mxu0
    %8630 = vdwg.mxu0
    %8631 = vmatprep.subr.bf16.mxu0 %v4091
    %8632 = vmatpush1.bf16.msra.mxu0 %v4090
    %8633 = vmatprep.subr.bf16.mxu0 %v4107
    %8634 = vmatpush1.bf16.msra.mxu0 %v4106
    %8635 = vmatprep.subr.bf16.mxu0 %v4123
    %8636 = vmatpush1.bf16.msra.mxu0 %v4122
    %8637 = vmatprep.subr.bf16.mxu0 %v4139
    %8638 = vmatpush1.bf16.msra.mxu0 %v4138
    %8639 = vmatprep.subr.bf16.mxu0 %v4155
    %8640 = vmatpush1.bf16.msra.mxu0 %v4154
    %8641 = vmatprep.subr.bf16.mxu0 %v4171
    %8642 = vmatpush1.bf16.msra.mxu0 %v4170
    %8643 = vmatprep.subr.bf16.mxu0 %v4187
    %8644 = vmatpush1.bf16.msra.mxu0 %v4186
    %8645 = vmatprep.subr.bf16.mxu0 %v4203
    %8646 = vmatpush1.bf16.msra.mxu0 %v4202
    %8647 = vmatprep.subr.bf16.mxu0 %v4219
    %8648 = vmatpush1.bf16.msra.mxu0 %v4218
    %8649 = vmatprep.subr.bf16.mxu0 %v4235
    %8650 = vmatpush1.bf16.msra.mxu0 %v4234
    %8651 = vmatprep.subr.bf16.mxu0 %v4251
    %8652 = vmatpush1.bf16.msra.mxu0 %v4250
    %8653 = vmatprep.subr.bf16.mxu0 %v4267
    %8654 = vmatpush1.bf16.msra.mxu0 %v4266
    %8655 = vmatprep.subr.bf16.mxu0 %v4283
    %8656 = vmatpush1.bf16.msra.mxu0 %v4282
    %8657 = vmatprep.subr.bf16.mxu0 %v4299
    %8658 = vmatpush1.bf16.msra.mxu0 %v4298
    %8659 = vmatprep.subr.bf16.mxu0 %v4315
    %8660 = vmatpush1.bf16.msra.mxu0 %v4314
    %8661 = vmatprep.subr.bf16.mxu0 %v4331
    %8662 = vmatpush1.bf16.msra.mxu0 %v4330
    %8663 = vmatprep.mubr.bf16.mxu0 %v8311
    %8664 = vmatmul.mubr.bf16.gmra.mrb[0].mxu0 %v8310
    %v8665 = vpop.f32.mrb[0].mxu0
    %v8666 = vadd.f32 %v8625, %v8665
    %v8667 = vpop.f32.mrb[0].mxu0
    %v8668 = vadd.f32 %v8627, %v8667
    %v8669 = vpop.f32.mrb[0].mxu0
    %v8670 = vpop.f32.mrb[0].mxu0
    %8671 = vdwg.mxu0
    %8672 = vmatprep.subr.bf16.mxu0 %v3837
    %8673 = vmatpush1.bf16.msra.mxu0 %v3836
    %8674 = vmatprep.subr.bf16.mxu0 %v3853
    %8675 = vmatpush1.bf16.msra.mxu0 %v3852
    %8676 = vmatprep.subr.bf16.mxu0 %v3869
    %8677 = vmatpush1.bf16.msra.mxu0 %v3868
    %8678 = vmatprep.subr.bf16.mxu0 %v3885
    %8679 = vmatpush1.bf16.msra.mxu0 %v3884
    %8680 = vmatprep.subr.bf16.mxu0 %v3901
    %8681 = vmatpush1.bf16.msra.mxu0 %v3900
    %8682 = vmatprep.subr.bf16.mxu0 %v3917
    %8683 = vmatpush1.bf16.msra.mxu0 %v3916
    %8684 = vmatprep.subr.bf16.mxu0 %v3933
    %8685 = vmatpush1.bf16.msra.mxu0 %v3932
    %8686 = vmatprep.subr.bf16.mxu0 %v3949
    %8687 = vmatpush1.bf16.msra.mxu0 %v3948
    %8688 = vmatprep.subr.bf16.mxu0 %v3965
    %8689 = vmatpush1.bf16.msra.mxu0 %v3964
    %8690 = vmatprep.subr.bf16.mxu0 %v3981
    %8691 = vmatpush1.bf16.msra.mxu0 %v3980
    %8692 = vmatprep.subr.bf16.mxu0 %v3997
    %8693 = vmatpush1.bf16.msra.mxu0 %v3996
    %8694 = vmatprep.subr.bf16.mxu0 %v4013
    %8695 = vmatpush1.bf16.msra.mxu0 %v4012
    %8696 = vmatprep.subr.bf16.mxu0 %v4029
    %8697 = vmatpush1.bf16.msra.mxu0 %v4028
    %8698 = vmatprep.subr.bf16.mxu0 %v4045
    %8699 = vmatpush1.bf16.msra.mxu0 %v4044
    %8700 = vmatprep.subr.bf16.mxu0 %v4061
    %8701 = vmatpush1.bf16.msra.mxu0 %v4060
    %8702 = vmatprep.subr.bf16.mxu0 %v4077
    %8703 = vmatpush1.bf16.msra.mxu0 %v4076
    %8704 = vmatprep.mubr.bf16.mxu0 %v8309
    %8705 = vmatmul.mubr.bf16.gmra.mrb[0].mxu0 %v8308
    %v8706 = vpop.f32.mrb[0].mxu0
    %v8707 = vadd.f32 %v8320, %v8706
    %v8708 = vpop.f32.mrb[0].mxu0
    %v8709 = vadd.f32 %v8321, %v8708
    %v8710 = vpop.f32.mrb[0].mxu0
    %v8711 = vpop.f32.mrb[0].mxu0
    %8712 = vdwg.mxu0
    %8713 = vmatprep.subr.bf16.mxu0 %v4093
    %8714 = vmatpush1.bf16.msra.mxu0 %v4092
    %8715 = vmatprep.subr.bf16.mxu0 %v4109
    %8716 = vmatpush1.bf16.msra.mxu0 %v4108
    %8717 = vmatprep.subr.bf16.mxu0 %v4125
    %8718 = vmatpush1.bf16.msra.mxu0 %v4124
    %8719 = vmatprep.subr.bf16.mxu0 %v4141
    %8720 = vmatpush1.bf16.msra.mxu0 %v4140
    %8721 = vmatprep.subr.bf16.mxu0 %v4157
    %8722 = vmatpush1.bf16.msra.mxu0 %v4156
    %8723 = vmatprep.subr.bf16.mxu0 %v4173
    %8724 = vmatpush1.bf16.msra.mxu0 %v4172
    %8725 = vmatprep.subr.bf16.mxu0 %v4189
    %8726 = vmatpush1.bf16.msra.mxu0 %v4188
    %8727 = vmatprep.subr.bf16.mxu0 %v4205
    %8728 = vmatpush1.bf16.msra.mxu0 %v4204
    %8729 = vmatprep.subr.bf16.mxu0 %v4221
    %8730 = vmatpush1.bf16.msra.mxu0 %v4220
    %8731 = vmatprep.subr.bf16.mxu0 %v4237
    %8732 = vmatpush1.bf16.msra.mxu0 %v4236
    %8733 = vmatprep.subr.bf16.mxu0 %v4253
    %8734 = vmatpush1.bf16.msra.mxu0 %v4252
    %8735 = vmatprep.subr.bf16.mxu0 %v4269
    %8736 = vmatpush1.bf16.msra.mxu0 %v4268
    %8737 = vmatprep.subr.bf16.mxu0 %v4285
    %8738 = vmatpush1.bf16.msra.mxu0 %v4284
    %8739 = vmatprep.subr.bf16.mxu0 %v4301
    %8740 = vmatpush1.bf16.msra.mxu0 %v4300
    %8741 = vmatprep.subr.bf16.mxu0 %v4317
    %8742 = vmatpush1.bf16.msra.mxu0 %v4316
    %8743 = vmatprep.subr.bf16.mxu0 %v4333
    %8744 = vmatpush1.bf16.msra.mxu0 %v4332
    %8745 = vmatprep.mubr.bf16.mxu0 %v8311
    %8746 = vmatmul.mubr.bf16.gmra.mrb[0].mxu0 %v8310
    %v8747 = vpop.f32.mrb[0].mxu0
    %v8748 = vadd.f32 %v8707, %v8747
    %v8749 = vpop.f32.mrb[0].mxu0
    %v8750 = vadd.f32 %v8709, %v8749
    %v8751 = vpop.f32.mrb[0].mxu0
    %v8752 = vpop.f32.mrb[0].mxu0
    %8753 = vdwg.mxu0
    %8754 = vmatprep.subr.bf16.mxu0 %v3839
    %8755 = vmatpush1.bf16.msra.mxu0 %v3838
    %8756 = vmatprep.subr.bf16.mxu0 %v3855
    %8757 = vmatpush1.bf16.msra.mxu0 %v3854
    %8758 = vmatprep.subr.bf16.mxu0 %v3871
    %8759 = vmatpush1.bf16.msra.mxu0 %v3870
    %8760 = vmatprep.subr.bf16.mxu0 %v3887
    %8761 = vmatpush1.bf16.msra.mxu0 %v3886
    %8762 = vmatprep.subr.bf16.mxu0 %v3903
    %8763 = vmatpush1.bf16.msra.mxu0 %v3902
    %8764 = vmatprep.subr.bf16.mxu0 %v3919
    %8765 = vmatpush1.bf16.msra.mxu0 %v3918
    %8766 = vmatprep.subr.bf16.mxu0 %v3935
    %8767 = vmatpush1.bf16.msra.mxu0 %v3934
    %8768 = vmatprep.subr.bf16.mxu0 %v3951
    %8769 = vmatpush1.bf16.msra.mxu0 %v3950
    %8770 = vmatprep.subr.bf16.mxu0 %v3967
    %8771 = vmatpush1.bf16.msra.mxu0 %v3966
    %8772 = vmatprep.subr.bf16.mxu0 %v3983
    %8773 = vmatpush1.bf16.msra.mxu0 %v3982
    %8774 = vmatprep.subr.bf16.mxu0 %v3999
    %8775 = vmatpush1.bf16.msra.mxu0 %v3998
    %8776 = vmatprep.subr.bf16.mxu0 %v4015
    %8777 = vmatpush1.bf16.msra.mxu0 %v4014
    %8778 = vmatprep.subr.bf16.mxu0 %v4031
    %8779 = vmatpush1.bf16.msra.mxu0 %v4030
    %8780 = vmatprep.subr.bf16.mxu0 %v4047
    %8781 = vmatpush1.bf16.msra.mxu0 %v4046
    %8782 = vmatprep.subr.bf16.mxu0 %v4063
    %8783 = vmatpush1.bf16.msra.mxu0 %v4062
    %8784 = vmatprep.subr.bf16.mxu0 %v4079
    %8785 = vmatpush1.bf16.msra.mxu0 %v4078
    %8786 = vmatprep.mubr.bf16.mxu0 %v8309
    %8787 = vmatmul.mubr.bf16.gmra.mrb[0].mxu0 %v8308
    %v8788 = vpop.f32.mrb[0].mxu0
    %v8789 = vadd.f32 %v8322, %v8788
    %v8790 = vpop.f32.mrb[0].mxu0
    %v8791 = vadd.f32 %v8323, %v8790
    %v8792 = vpop.f32.mrb[0].mxu0
    %v8793 = vpop.f32.mrb[0].mxu0
    %8794 = vdwg.mxu0
    %8795 = vmatprep.subr.bf16.mxu0 %v4095
    %8796 = vmatpush1.bf16.msra.mxu0 %v4094
    %8797 = vmatprep.subr.bf16.mxu0 %v4111
    %8798 = vmatpush1.bf16.msra.mxu0 %v4110
    %8799 = vmatprep.subr.bf16.mxu0 %v4127
    %8800 = vmatpush1.bf16.msra.mxu0 %v4126
    %8801 = vmatprep.subr.bf16.mxu0 %v4143
    %8802 = vmatpush1.bf16.msra.mxu0 %v4142
    %8803 = vmatprep.subr.bf16.mxu0 %v4159
    %8804 = vmatpush1.bf16.msra.mxu0 %v4158
    %8805 = vmatprep.subr.bf16.mxu0 %v4175
    %8806 = vmatpush1.bf16.msra.mxu0 %v4174
    %8807 = vmatprep.subr.bf16.mxu0 %v4191
    %8808 = vmatpush1.bf16.msra.mxu0 %v4190
    %8809 = vmatprep.subr.bf16.mxu0 %v4207
    %8810 = vmatpush1.bf16.msra.mxu0 %v4206
    %8811 = vmatprep.subr.bf16.mxu0 %v4223
    %8812 = vmatpush1.bf16.msra.mxu0 %v4222
    %8813 = vmatprep.subr.bf16.mxu0 %v4239
    %8814 = vmatpush1.bf16.msra.mxu0 %v4238
    %8815 = vmatprep.subr.bf16.mxu0 %v4255
    %8816 = vmatpush1.bf16.msra.mxu0 %v4254
    %8817 = vmatprep.subr.bf16.mxu0 %v4271
    %8818 = vmatpush1.bf16.msra.mxu0 %v4270
    %8819 = vmatprep.subr.bf16.mxu0 %v4287
    %8820 = vmatpush1.bf16.msra.mxu0 %v4286
    %8821 = vmatprep.subr.bf16.mxu0 %v4303
    %8822 = vmatpush1.bf16.msra.mxu0 %v4302
    %8823 = vmatprep.subr.bf16.mxu0 %v4319
    %8824 = vmatpush1.bf16.msra.mxu0 %v4318
    %8825 = vmatprep.subr.bf16.mxu0 %v4335
    %8826 = vmatpush1.bf16.msra.mxu0 %v4334
    %8827 = vmatprep.mubr.bf16.mxu0 %v8311
    %8828 = vmatmul.mubr.bf16.gmra.mrb[0].mxu0 %v8310
    %v8829 = vpop.f32.mrb[0].mxu0
    %v8830 = vadd.f32 %v8789, %v8829
    %v8831 = vpop.f32.mrb[0].mxu0
    %v8832 = vadd.f32 %v8791, %v8831
    %v8833 = vpop.f32.mrb[0].mxu0
    %v8834 = vpop.f32.mrb[0].mxu0
    %8835 = vdwg.mxu0
    %8836 = vmatprep.subr.bf16.mxu0 %v3841
    %8837 = vmatpush1.bf16.msra.mxu0 %v3840
    %8838 = vmatprep.subr.bf16.mxu0 %v3857
    %8839 = vmatpush1.bf16.msra.mxu0 %v3856
    %8840 = vmatprep.subr.bf16.mxu0 %v3873
    %8841 = vmatpush1.bf16.msra.mxu0 %v3872
    %8842 = vmatprep.subr.bf16.mxu0 %v3889
    %8843 = vmatpush1.bf16.msra.mxu0 %v3888
    %8844 = vmatprep.subr.bf16.mxu0 %v3905
    %8845 = vmatpush1.bf16.msra.mxu0 %v3904
    %8846 = vmatprep.subr.bf16.mxu0 %v3921
    %8847 = vmatpush1.bf16.msra.mxu0 %v3920
    %8848 = vmatprep.subr.bf16.mxu0 %v3937
    %8849 = vmatpush1.bf16.msra.mxu0 %v3936
    %8850 = vmatprep.subr.bf16.mxu0 %v3953
    %8851 = vmatpush1.bf16.msra.mxu0 %v3952
    %8852 = vmatprep.subr.bf16.mxu0 %v3969
    %8853 = vmatpush1.bf16.msra.mxu0 %v3968
    %8854 = vmatprep.subr.bf16.mxu0 %v3985
    %8855 = vmatpush1.bf16.msra.mxu0 %v3984
    %8856 = vmatprep.subr.bf16.mxu0 %v4001
    %8857 = vmatpush1.bf16.msra.mxu0 %v4000
    %8858 = vmatprep.subr.bf16.mxu0 %v4017
    %8859 = vmatpush1.bf16.msra.mxu0 %v4016
    %8860 = vmatprep.subr.bf16.mxu0 %v4033
    %8861 = vmatpush1.bf16.msra.mxu0 %v4032
    %8862 = vmatprep.subr.bf16.mxu0 %v4049
    %8863 = vmatpush1.bf16.msra.mxu0 %v4048
    %8864 = vmatprep.subr.bf16.mxu0 %v4065
    %8865 = vmatpush1.bf16.msra.mxu0 %v4064
    %8866 = vmatprep.subr.bf16.mxu0 %v4081
    %8867 = vmatpush1.bf16.msra.mxu0 %v4080
    %8868 = vmatprep.mubr.bf16.mxu0 %v8309
    %8869 = vmatmul.mubr.bf16.gmra.mrb[0].mxu0 %v8308
    %v8870 = vpop.f32.mrb[0].mxu0
    %v8871 = vadd.f32 %v8324, %v8870
    %v8872 = vpop.f32.mrb[0].mxu0
    %v8873 = vadd.f32 %v8325, %v8872
    %v8874 = vpop.f32.mrb[0].mxu0
    %v8875 = vpop.f32.mrb[0].mxu0
    %8876 = vdwg.mxu0
    %8877 = vmatprep.subr.bf16.mxu0 %v4097
    %8878 = vmatpush1.bf16.msra.mxu0 %v4096
    %8879 = vmatprep.subr.bf16.mxu0 %v4113
    %8880 = vmatpush1.bf16.msra.mxu0 %v4112
    %8881 = vmatprep.subr.bf16.mxu0 %v4129
    %8882 = vmatpush1.bf16.msra.mxu0 %v4128
    %8883 = vmatprep.subr.bf16.mxu0 %v4145
    %8884 = vmatpush1.bf16.msra.mxu0 %v4144
    %8885 = vmatprep.subr.bf16.mxu0 %v4161
    %8886 = vmatpush1.bf16.msra.mxu0 %v4160
    %8887 = vmatprep.subr.bf16.mxu0 %v4177
    %8888 = vmatpush1.bf16.msra.mxu0 %v4176
    %8889 = vmatprep.subr.bf16.mxu0 %v4193
    %8890 = vmatpush1.bf16.msra.mxu0 %v4192
    %8891 = vmatprep.subr.bf16.mxu0 %v4209
    %8892 = vmatpush1.bf16.msra.mxu0 %v4208
    %8893 = vmatprep.subr.bf16.mxu0 %v4225
    %8894 = vmatpush1.bf16.msra.mxu0 %v4224
    %8895 = vmatprep.subr.bf16.mxu0 %v4241
    %8896 = vmatpush1.bf16.msra.mxu0 %v4240
    %8897 = vmatprep.subr.bf16.mxu0 %v4257
    %8898 = vmatpush1.bf16.msra.mxu0 %v4256
    %8899 = vmatprep.subr.bf16.mxu0 %v4273
    %8900 = vmatpush1.bf16.msra.mxu0 %v4272
    %8901 = vmatprep.subr.bf16.mxu0 %v4289
    %8902 = vmatpush1.bf16.msra.mxu0 %v4288
    %8903 = vmatprep.subr.bf16.mxu0 %v4305
    %8904 = vmatpush1.bf16.msra.mxu0 %v4304
    %8905 = vmatprep.subr.bf16.mxu0 %v4321
    %8906 = vmatpush1.bf16.msra.mxu0 %v4320
    %8907 = vmatprep.subr.bf16.mxu0 %v4337
    %8908 = vmatpush1.bf16.msra.mxu0 %v4336
    %8909 = vmatprep.mubr.bf16.mxu0 %v8311
    %8910 = vmatmul.mubr.bf16.gmra.mrb[0].mxu0 %v8310
    %v8911 = vpop.f32.mrb[0].mxu0
    %v8912 = vadd.f32 %v8871, %v8911
    %v8913 = vpop.f32.mrb[0].mxu0
    %v8914 = vadd.f32 %v8873, %v8913
    %v8915 = vpop.f32.mrb[0].mxu0
    %v8916 = vpop.f32.mrb[0].mxu0
    %8917 = vdwg.mxu0
    %8918 = vmatprep.subr.bf16.mxu0 %v3843
    %8919 = vmatpush1.bf16.msra.mxu0 %v3842
    %8920 = vmatprep.subr.bf16.mxu0 %v3859
    %8921 = vmatpush1.bf16.msra.mxu0 %v3858
    %8922 = vmatprep.subr.bf16.mxu0 %v3875
    %8923 = vmatpush1.bf16.msra.mxu0 %v3874
    %8924 = vmatprep.subr.bf16.mxu0 %v3891
    %8925 = vmatpush1.bf16.msra.mxu0 %v3890
    %8926 = vmatprep.subr.bf16.mxu0 %v3907
    %8927 = vmatpush1.bf16.msra.mxu0 %v3906
    %8928 = vmatprep.subr.bf16.mxu0 %v3923
    %8929 = vmatpush1.bf16.msra.mxu0 %v3922
    %8930 = vmatprep.subr.bf16.mxu0 %v3939
    %8931 = vmatpush1.bf16.msra.mxu0 %v3938
    %8932 = vmatprep.subr.bf16.mxu0 %v3955
    %8933 = vmatpush1.bf16.msra.mxu0 %v3954
    %8934 = vmatprep.subr.bf16.mxu0 %v3971
    %8935 = vmatpush1.bf16.msra.mxu0 %v3970
    %8936 = vmatprep.subr.bf16.mxu0 %v3987
    %8937 = vmatpush1.bf16.msra.mxu0 %v3986
    %8938 = vmatprep.subr.bf16.mxu0 %v4003
    %8939 = vmatpush1.bf16.msra.mxu0 %v4002
    %8940 = vmatprep.subr.bf16.mxu0 %v4019
    %8941 = vmatpush1.bf16.msra.mxu0 %v4018
    %8942 = vmatprep.subr.bf16.mxu0 %v4035
    %8943 = vmatpush1.bf16.msra.mxu0 %v4034
    %8944 = vmatprep.subr.bf16.mxu0 %v4051
    %8945 = vmatpush1.bf16.msra.mxu0 %v4050
    %8946 = vmatprep.subr.bf16.mxu0 %v4067
    %8947 = vmatpush1.bf16.msra.mxu0 %v4066
    %8948 = vmatprep.subr.bf16.mxu0 %v4083
    %8949 = vmatpush1.bf16.msra.mxu0 %v4082
    %8950 = vmatprep.mubr.bf16.mxu0 %v8309
    %8951 = vmatmul.mubr.bf16.gmra.mrb[0].mxu0 %v8308
    %v8952 = vpop.f32.mrb[0].mxu0
    %v8953 = vadd.f32 %v8326, %v8952
    %v8954 = vpop.f32.mrb[0].mxu0
    %v8955 = vadd.f32 %v8327, %v8954
    %v8956 = vpop.f32.mrb[0].mxu0
    %v8957 = vpop.f32.mrb[0].mxu0
    %8958 = vdwg.mxu0
    %8959 = vmatprep.subr.bf16.mxu0 %v4099
    %8960 = vmatpush1.bf16.msra.mxu0 %v4098
    %8961 = vmatprep.subr.bf16.mxu0 %v4115
    %8962 = vmatpush1.bf16.msra.mxu0 %v4114
    %8963 = vmatprep.subr.bf16.mxu0 %v4131
    %8964 = vmatpush1.bf16.msra.mxu0 %v4130
    %8965 = vmatprep.subr.bf16.mxu0 %v4147
    %8966 = vmatpush1.bf16.msra.mxu0 %v4146
    %8967 = vmatprep.subr.bf16.mxu0 %v4163
    %8968 = vmatpush1.bf16.msra.mxu0 %v4162
    %8969 = vmatprep.subr.bf16.mxu0 %v4179
    %8970 = vmatpush1.bf16.msra.mxu0 %v4178
    %8971 = vmatprep.subr.bf16.mxu0 %v4195
    %8972 = vmatpush1.bf16.msra.mxu0 %v4194
    %8973 = vmatprep.subr.bf16.mxu0 %v4211
    %8974 = vmatpush1.bf16.msra.mxu0 %v4210
    %8975 = vmatprep.subr.bf16.mxu0 %v4227
    %8976 = vmatpush1.bf16.msra.mxu0 %v4226
    %8977 = vmatprep.subr.bf16.mxu0 %v4243
    %8978 = vmatpush1.bf16.msra.mxu0 %v4242
    %8979 = vmatprep.subr.bf16.mxu0 %v4259
    %8980 = vmatpush1.bf16.msra.mxu0 %v4258
    %8981 = vmatprep.subr.bf16.mxu0 %v4275
    %8982 = vmatpush1.bf16.msra.mxu0 %v4274
    %8983 = vmatprep.subr.bf16.mxu0 %v4291
    %8984 = vmatpush1.bf16.msra.mxu0 %v4290
    %8985 = vmatprep.subr.bf16.mxu0 %v4307
    %8986 = vmatpush1.bf16.msra.mxu0 %v4306
    %8987 = vmatprep.subr.bf16.mxu0 %v4323
    %8988 = vmatpush1.bf16.msra.mxu0 %v4322
    %8989 = vmatprep.subr.bf16.mxu0 %v4339
    %8990 = vmatpush1.bf16.msra.mxu0 %v4338
    %8991 = vmatprep.mubr.bf16.mxu0 %v8311
    %8992 = vmatmul.mubr.bf16.gmra.mrb[0].mxu0 %v8310
    %v8993 = vpop.f32.mrb[0].mxu0
    %v8994 = vadd.f32 %v8953, %v8993
    %v8995 = vpop.f32.mrb[0].mxu0
    %v8996 = vadd.f32 %v8955, %v8995
    %v8997 = vpop.f32.mrb[0].mxu0
    %v8998 = vpop.f32.mrb[0].mxu0
    %8999 = vdwg.mxu0
    %v9000 = vmul.f32 %v8420, 0.5
    %v9001 = vmul.f32 %v8422, 0.5
    %v9002 = vmul.f32 %v8502, 0.5
    %v9003 = vmul.f32 %v8504, 0.5
    %v9004 = vtanh.pop %v9000
    %v9005 = vtanh.pop %v9001
    %v9006 = vtanh.pop %v9002
    %v9007 = vtanh.pop %v9003
    %v9008 = vmul.f32 %v9004, 0.5
    %v9009 = vmul.f32 %v9005, 0.5
    %v9010 = vmul.f32 %v9006, 0.5
    %v9011 = vmul.f32 %v9007, 0.5
    %v9012 = vadd.f32 %v9008, 0.5
    %v9013 = vadd.f32 %v9009, 0.5
    %v9014 = vadd.f32 %v9010, 0.5
    %v9015 = vadd.f32 %v9011, 0.5
    %v9016 = vmul.f32 %v8584, 0.5
    %v9017 = vmul.f32 %v8586, 0.5
    %v9018 = vmul.f32 %v8666, 0.5
    %v9019 = vmul.f32 %v8668, 0.5
    %v9020 = vtanh.pop %v9016
    %v9021 = vtanh.pop %v9017
    %v9022 = vtanh.pop %v9018
    %v9023 = vtanh.pop %v9019
    %v9024 = vmul.f32 %v9020, 0.5
    %v9025 = vmul.f32 %v9021, 0.5
    %v9026 = vmul.f32 %v9022, 0.5
    %v9027 = vmul.f32 %v9023, 0.5
    %v9028 = vadd.f32 %v9024, 0.5
    %v9029 = vadd.f32 %v9025, 0.5
    %v9030 = vadd.f32 %v9026, 0.5
    %v9031 = vadd.f32 %v9027, 0.5
    %v9032 = vtanh.pop %v8748
    %v9033 = vtanh.pop %v8750
    %v9034 = vtanh.pop %v8830
    %v9035 = vtanh.pop %v8832
    %v9036 = vmul.f32 %v8912, 0.5
    %v9037 = vmul.f32 %v8914, 0.5
    %v9038 = vmul.f32 %v8994, 0.5
    %v9039 = vmul.f32 %v8996, 0.5
    %v9040 = vtanh.pop %v9036
    %v9041 = vtanh.pop %v9037
    %v9042 = vtanh.pop %v9038
    %v9043 = vtanh.pop %v9039
    %v9044 = vmul.f32 %v9040, 0.5
    %v9045 = vmul.f32 %v9041, 0.5
    %v9046 = vmul.f32 %v9042, 0.5
    %v9047 = vmul.f32 %v9043, 0.5
    %v9048 = vadd.f32 %v9044, 0.5
    %v9049 = vadd.f32 %v9045, 0.5
    %v9050 = vadd.f32 %v9046, 0.5
    %v9051 = vadd.f32 %v9047, 0.5
    %v9052 = vmul.f32 %v9028, %v8296
    %v9053 = vmul.f32 %v9029, %v8297
    %v9054 = vmul.f32 %v9030, %v8298
    %v9055 = vmul.f32 %v9031, %v8299
    %v9056 = vmul.f32 %v9012, %v9032
    %v9057 = vmul.f32 %v9013, %v9033
    %v9058 = vmul.f32 %v9014, %v9034
    %v9059 = vmul.f32 %v9015, %v9035
    %v9060 = vadd.f32 %v9052, %v9056
    %v9061 = vadd.f32 %v9053, %v9057
    %v9062 = vadd.f32 %v9054, %v9058
    %v9063 = vadd.f32 %v9055, %v9059
    %v9064 = vtanh.pop %v9060
    %v9065 = vtanh.pop %v9061
    %v9066 = vtanh.pop %v9062
    %v9067 = vtanh.pop %v9063
    %v9068 = vmul.f32 %v9048, %v9064
    %v9069 = vmul.f32 %v9049, %v9065
    %v9070 = vmul.f32 %v9050, %v9066
    %v9071 = vmul.f32 %v9051, %v9067
    %v9072 = vpack.c.bf16 %v9068, %v9068
    %v9073 = vpack.c.bf16 %v9069, %v9069
    %v9074 = vpack.c.bf16 %v9070, %v9070
    %v9075 = vpack.c.bf16 %v9071, %v9071
    %v9076 = vrot.slane %v5220, 6
    %v9077 = vrot.slane %v5221, 6
    %v9078 = vrot.slane %v5222, 6
    %v9079 = vrot.slane %v5223, 6
    %v9080 = vrot.slane %v5224, 6
    %v9081 = vrot.slane %v5225, 6
    %v9082 = vrot.slane %v5226, 6
    %v9083 = vrot.slane %v5227, 6
    %v9084 = vrot.slane %v5228, 6
    %v9085 = vrot.slane %v5229, 6
    %v9086 = vrot.slane %v5230, 6
    %v9087 = vrot.slane %v5231, 6
    %v9088 = vrot.slane %v5232, 6
    %v9089 = vrot.slane %v5233, 6
    %v9090 = vrot.slane %v5234, 6
    %v9091 = vrot.slane %v5235, 6
    %9108 = vmatprep.subr.bf16.mxu0 %v3829
    %9109 = vmatpush1.bf16.msra.mxu0 %v3828
    %9110 = vmatprep.subr.bf16.mxu0 %v3845
    %9111 = vmatpush1.bf16.msra.mxu0 %v3844
    %9112 = vmatprep.subr.bf16.mxu0 %v3861
    %9113 = vmatpush1.bf16.msra.mxu0 %v3860
    %9114 = vmatprep.subr.bf16.mxu0 %v3877
    %9115 = vmatpush1.bf16.msra.mxu0 %v3876
    %9116 = vmatprep.subr.bf16.mxu0 %v3893
    %9117 = vmatpush1.bf16.msra.mxu0 %v3892
    %9118 = vmatprep.subr.bf16.mxu0 %v3909
    %9119 = vmatpush1.bf16.msra.mxu0 %v3908
    %9120 = vmatprep.subr.bf16.mxu0 %v3925
    %9121 = vmatpush1.bf16.msra.mxu0 %v3924
    %9122 = vmatprep.subr.bf16.mxu0 %v3941
    %9123 = vmatpush1.bf16.msra.mxu0 %v3940
    %9124 = vmatprep.subr.bf16.mxu0 %v3957
    %9125 = vmatpush1.bf16.msra.mxu0 %v3956
    %9126 = vmatprep.subr.bf16.mxu0 %v3973
    %9127 = vmatpush1.bf16.msra.mxu0 %v3972
    %9128 = vmatprep.subr.bf16.mxu0 %v3989
    %9129 = vmatpush1.bf16.msra.mxu0 %v3988
    %9130 = vmatprep.subr.bf16.mxu0 %v4005
    %9131 = vmatpush1.bf16.msra.mxu0 %v4004
    %9132 = vmatprep.subr.bf16.mxu0 %v4021
    %9133 = vmatpush1.bf16.msra.mxu0 %v4020
    %9134 = vmatprep.subr.bf16.mxu0 %v4037
    %9135 = vmatpush1.bf16.msra.mxu0 %v4036
    %9136 = vmatprep.subr.bf16.mxu0 %v4053
    %9137 = vmatpush1.bf16.msra.mxu0 %v4052
    %9138 = vmatprep.subr.bf16.mxu0 %v4069
    %9139 = vmatpush1.bf16.msra.mxu0 %v4068
    %9140 = vmatprep.mubr.bf16.mxu0 %v9073
    %9141 = vmatmul.mubr.bf16.gmra.mrb[0].mxu0 %v9072
    %v9142 = vpop.f32.mrb[0].mxu0
    %v9143 = vadd.f32 %v9076, %v9142
    %v9144 = vpop.f32.mrb[0].mxu0
    %v9145 = vadd.f32 %v9077, %v9144
    %v9146 = vpop.f32.mrb[0].mxu0
    %v9147 = vpop.f32.mrb[0].mxu0
    %9148 = vdwg.mxu0
    %9149 = vmatprep.subr.bf16.mxu0 %v4085
    %9150 = vmatpush1.bf16.msra.mxu0 %v4084
    %9151 = vmatprep.subr.bf16.mxu0 %v4101
    %9152 = vmatpush1.bf16.msra.mxu0 %v4100
    %9153 = vmatprep.subr.bf16.mxu0 %v4117
    %9154 = vmatpush1.bf16.msra.mxu0 %v4116
    %9155 = vmatprep.subr.bf16.mxu0 %v4133
    %9156 = vmatpush1.bf16.msra.mxu0 %v4132
    %9157 = vmatprep.subr.bf16.mxu0 %v4149
    %9158 = vmatpush1.bf16.msra.mxu0 %v4148
    %9159 = vmatprep.subr.bf16.mxu0 %v4165
    %9160 = vmatpush1.bf16.msra.mxu0 %v4164
    %9161 = vmatprep.subr.bf16.mxu0 %v4181
    %9162 = vmatpush1.bf16.msra.mxu0 %v4180
    %9163 = vmatprep.subr.bf16.mxu0 %v4197
    %9164 = vmatpush1.bf16.msra.mxu0 %v4196
    %9165 = vmatprep.subr.bf16.mxu0 %v4213
    %9166 = vmatpush1.bf16.msra.mxu0 %v4212
    %9167 = vmatprep.subr.bf16.mxu0 %v4229
    %9168 = vmatpush1.bf16.msra.mxu0 %v4228
    %9169 = vmatprep.subr.bf16.mxu0 %v4245
    %9170 = vmatpush1.bf16.msra.mxu0 %v4244
    %9171 = vmatprep.subr.bf16.mxu0 %v4261
    %9172 = vmatpush1.bf16.msra.mxu0 %v4260
    %9173 = vmatprep.subr.bf16.mxu0 %v4277
    %9174 = vmatpush1.bf16.msra.mxu0 %v4276
    %9175 = vmatprep.subr.bf16.mxu0 %v4293
    %9176 = vmatpush1.bf16.msra.mxu0 %v4292
    %9177 = vmatprep.subr.bf16.mxu0 %v4309
    %9178 = vmatpush1.bf16.msra.mxu0 %v4308
    %9179 = vmatprep.subr.bf16.mxu0 %v4325
    %9180 = vmatpush1.bf16.msra.mxu0 %v4324
    %9181 = vmatprep.mubr.bf16.mxu0 %v9075
    %9182 = vmatmul.mubr.bf16.gmra.mrb[0].mxu0 %v9074
    %v9183 = vpop.f32.mrb[0].mxu0
    %v9184 = vadd.f32 %v9143, %v9183
    %v9185 = vpop.f32.mrb[0].mxu0
    %v9186 = vadd.f32 %v9145, %v9185
    %v9187 = vpop.f32.mrb[0].mxu0
    %v9188 = vpop.f32.mrb[0].mxu0
    %9189 = vdwg.mxu0
    %9190 = vmatprep.subr.bf16.mxu0 %v3831
    %9191 = vmatpush1.bf16.msra.mxu0 %v3830
    %9192 = vmatprep.subr.bf16.mxu0 %v3847
    %9193 = vmatpush1.bf16.msra.mxu0 %v3846
    %9194 = vmatprep.subr.bf16.mxu0 %v3863
    %9195 = vmatpush1.bf16.msra.mxu0 %v3862
    %9196 = vmatprep.subr.bf16.mxu0 %v3879
    %9197 = vmatpush1.bf16.msra.mxu0 %v3878
    %9198 = vmatprep.subr.bf16.mxu0 %v3895
    %9199 = vmatpush1.bf16.msra.mxu0 %v3894
    %9200 = vmatprep.subr.bf16.mxu0 %v3911
    %9201 = vmatpush1.bf16.msra.mxu0 %v3910
    %9202 = vmatprep.subr.bf16.mxu0 %v3927
    %9203 = vmatpush1.bf16.msra.mxu0 %v3926
    %9204 = vmatprep.subr.bf16.mxu0 %v3943
    %9205 = vmatpush1.bf16.msra.mxu0 %v3942
    %9206 = vmatprep.subr.bf16.mxu0 %v3959
    %9207 = vmatpush1.bf16.msra.mxu0 %v3958
    %9208 = vmatprep.subr.bf16.mxu0 %v3975
    %9209 = vmatpush1.bf16.msra.mxu0 %v3974
    %9210 = vmatprep.subr.bf16.mxu0 %v3991
    %9211 = vmatpush1.bf16.msra.mxu0 %v3990
    %9212 = vmatprep.subr.bf16.mxu0 %v4007
    %9213 = vmatpush1.bf16.msra.mxu0 %v4006
    %9214 = vmatprep.subr.bf16.mxu0 %v4023
    %9215 = vmatpush1.bf16.msra.mxu0 %v4022
    %9216 = vmatprep.subr.bf16.mxu0 %v4039
    %9217 = vmatpush1.bf16.msra.mxu0 %v4038
    %9218 = vmatprep.subr.bf16.mxu0 %v4055
    %9219 = vmatpush1.bf16.msra.mxu0 %v4054
    %9220 = vmatprep.subr.bf16.mxu0 %v4071
    %9221 = vmatpush1.bf16.msra.mxu0 %v4070
    %9222 = vmatprep.mubr.bf16.mxu0 %v9073
    %9223 = vmatmul.mubr.bf16.gmra.mrb[0].mxu0 %v9072
    %v9224 = vpop.f32.mrb[0].mxu0
    %v9225 = vadd.f32 %v9078, %v9224
    %v9226 = vpop.f32.mrb[0].mxu0
    %v9227 = vadd.f32 %v9079, %v9226
    %v9228 = vpop.f32.mrb[0].mxu0
    %v9229 = vpop.f32.mrb[0].mxu0
    %9230 = vdwg.mxu0
    %9231 = vmatprep.subr.bf16.mxu0 %v4087
    %9232 = vmatpush1.bf16.msra.mxu0 %v4086
    %9233 = vmatprep.subr.bf16.mxu0 %v4103
    %9234 = vmatpush1.bf16.msra.mxu0 %v4102
    %9235 = vmatprep.subr.bf16.mxu0 %v4119
    %9236 = vmatpush1.bf16.msra.mxu0 %v4118
    %9237 = vmatprep.subr.bf16.mxu0 %v4135
    %9238 = vmatpush1.bf16.msra.mxu0 %v4134
    %9239 = vmatprep.subr.bf16.mxu0 %v4151
    %9240 = vmatpush1.bf16.msra.mxu0 %v4150
    %9241 = vmatprep.subr.bf16.mxu0 %v4167
    %9242 = vmatpush1.bf16.msra.mxu0 %v4166
    %9243 = vmatprep.subr.bf16.mxu0 %v4183
    %9244 = vmatpush1.bf16.msra.mxu0 %v4182
    %9245 = vmatprep.subr.bf16.mxu0 %v4199
    %9246 = vmatpush1.bf16.msra.mxu0 %v4198
    %9247 = vmatprep.subr.bf16.mxu0 %v4215
    %9248 = vmatpush1.bf16.msra.mxu0 %v4214
    %9249 = vmatprep.subr.bf16.mxu0 %v4231
    %9250 = vmatpush1.bf16.msra.mxu0 %v4230
    %9251 = vmatprep.subr.bf16.mxu0 %v4247
    %9252 = vmatpush1.bf16.msra.mxu0 %v4246
    %9253 = vmatprep.subr.bf16.mxu0 %v4263
    %9254 = vmatpush1.bf16.msra.mxu0 %v4262
    %9255 = vmatprep.subr.bf16.mxu0 %v4279
    %9256 = vmatpush1.bf16.msra.mxu0 %v4278
    %9257 = vmatprep.subr.bf16.mxu0 %v4295
    %9258 = vmatpush1.bf16.msra.mxu0 %v4294
    %9259 = vmatprep.subr.bf16.mxu0 %v4311
    %9260 = vmatpush1.bf16.msra.mxu0 %v4310
    %9261 = vmatprep.subr.bf16.mxu0 %v4327
    %9262 = vmatpush1.bf16.msra.mxu0 %v4326
    %9263 = vmatprep.mubr.bf16.mxu0 %v9075
    %9264 = vmatmul.mubr.bf16.gmra.mrb[0].mxu0 %v9074
    %v9265 = vpop.f32.mrb[0].mxu0
    %v9266 = vadd.f32 %v9225, %v9265
    %v9267 = vpop.f32.mrb[0].mxu0
    %v9268 = vadd.f32 %v9227, %v9267
    %v9269 = vpop.f32.mrb[0].mxu0
    %v9270 = vpop.f32.mrb[0].mxu0
    %9271 = vdwg.mxu0
    %9272 = vmatprep.subr.bf16.mxu0 %v3833
    %9273 = vmatpush1.bf16.msra.mxu0 %v3832
    %9274 = vmatprep.subr.bf16.mxu0 %v3849
    %9275 = vmatpush1.bf16.msra.mxu0 %v3848
    %9276 = vmatprep.subr.bf16.mxu0 %v3865
    %9277 = vmatpush1.bf16.msra.mxu0 %v3864
    %9278 = vmatprep.subr.bf16.mxu0 %v3881
    %9279 = vmatpush1.bf16.msra.mxu0 %v3880
    %9280 = vmatprep.subr.bf16.mxu0 %v3897
    %9281 = vmatpush1.bf16.msra.mxu0 %v3896
    %9282 = vmatprep.subr.bf16.mxu0 %v3913
    %9283 = vmatpush1.bf16.msra.mxu0 %v3912
    %9284 = vmatprep.subr.bf16.mxu0 %v3929
    %9285 = vmatpush1.bf16.msra.mxu0 %v3928
    %9286 = vmatprep.subr.bf16.mxu0 %v3945
    %9287 = vmatpush1.bf16.msra.mxu0 %v3944
    %9288 = vmatprep.subr.bf16.mxu0 %v3961
    %9289 = vmatpush1.bf16.msra.mxu0 %v3960
    %9290 = vmatprep.subr.bf16.mxu0 %v3977
    %9291 = vmatpush1.bf16.msra.mxu0 %v3976
    %9292 = vmatprep.subr.bf16.mxu0 %v3993
    %9293 = vmatpush1.bf16.msra.mxu0 %v3992
    %9294 = vmatprep.subr.bf16.mxu0 %v4009
    %9295 = vmatpush1.bf16.msra.mxu0 %v4008
    %9296 = vmatprep.subr.bf16.mxu0 %v4025
    %9297 = vmatpush1.bf16.msra.mxu0 %v4024
    %9298 = vmatprep.subr.bf16.mxu0 %v4041
    %9299 = vmatpush1.bf16.msra.mxu0 %v4040
    %9300 = vmatprep.subr.bf16.mxu0 %v4057
    %9301 = vmatpush1.bf16.msra.mxu0 %v4056
    %9302 = vmatprep.subr.bf16.mxu0 %v4073
    %9303 = vmatpush1.bf16.msra.mxu0 %v4072
    %9304 = vmatprep.mubr.bf16.mxu0 %v9073
    %9305 = vmatmul.mubr.bf16.gmra.mrb[0].mxu0 %v9072
    %v9306 = vpop.f32.mrb[0].mxu0
    %v9307 = vadd.f32 %v9080, %v9306
    %v9308 = vpop.f32.mrb[0].mxu0
    %v9309 = vadd.f32 %v9081, %v9308
    %v9310 = vpop.f32.mrb[0].mxu0
    %v9311 = vpop.f32.mrb[0].mxu0
    %9312 = vdwg.mxu0
    %9313 = vmatprep.subr.bf16.mxu0 %v4089
    %9314 = vmatpush1.bf16.msra.mxu0 %v4088
    %9315 = vmatprep.subr.bf16.mxu0 %v4105
    %9316 = vmatpush1.bf16.msra.mxu0 %v4104
    %9317 = vmatprep.subr.bf16.mxu0 %v4121
    %9318 = vmatpush1.bf16.msra.mxu0 %v4120
    %9319 = vmatprep.subr.bf16.mxu0 %v4137
    %9320 = vmatpush1.bf16.msra.mxu0 %v4136
    %9321 = vmatprep.subr.bf16.mxu0 %v4153
    %9322 = vmatpush1.bf16.msra.mxu0 %v4152
    %9323 = vmatprep.subr.bf16.mxu0 %v4169
    %9324 = vmatpush1.bf16.msra.mxu0 %v4168
    %9325 = vmatprep.subr.bf16.mxu0 %v4185
    %9326 = vmatpush1.bf16.msra.mxu0 %v4184
    %9327 = vmatprep.subr.bf16.mxu0 %v4201
    %9328 = vmatpush1.bf16.msra.mxu0 %v4200
    %9329 = vmatprep.subr.bf16.mxu0 %v4217
    %9330 = vmatpush1.bf16.msra.mxu0 %v4216
    %9331 = vmatprep.subr.bf16.mxu0 %v4233
    %9332 = vmatpush1.bf16.msra.mxu0 %v4232
    %9333 = vmatprep.subr.bf16.mxu0 %v4249
    %9334 = vmatpush1.bf16.msra.mxu0 %v4248
    %9335 = vmatprep.subr.bf16.mxu0 %v4265
    %9336 = vmatpush1.bf16.msra.mxu0 %v4264
    %9337 = vmatprep.subr.bf16.mxu0 %v4281
    %9338 = vmatpush1.bf16.msra.mxu0 %v4280
    %9339 = vmatprep.subr.bf16.mxu0 %v4297
    %9340 = vmatpush1.bf16.msra.mxu0 %v4296
    %9341 = vmatprep.subr.bf16.mxu0 %v4313
    %9342 = vmatpush1.bf16.msra.mxu0 %v4312
    %9343 = vmatprep.subr.bf16.mxu0 %v4329
    %9344 = vmatpush1.bf16.msra.mxu0 %v4328
    %9345 = vmatprep.mubr.bf16.mxu0 %v9075
    %9346 = vmatmul.mubr.bf16.gmra.mrb[0].mxu0 %v9074
    %v9347 = vpop.f32.mrb[0].mxu0
    %v9348 = vadd.f32 %v9307, %v9347
    %v9349 = vpop.f32.mrb[0].mxu0
    %v9350 = vadd.f32 %v9309, %v9349
    %v9351 = vpop.f32.mrb[0].mxu0
    %v9352 = vpop.f32.mrb[0].mxu0
    %9353 = vdwg.mxu0
    %9354 = vmatprep.subr.bf16.mxu0 %v3835
    %9355 = vmatpush1.bf16.msra.mxu0 %v3834
    %9356 = vmatprep.subr.bf16.mxu0 %v3851
    %9357 = vmatpush1.bf16.msra.mxu0 %v3850
    %9358 = vmatprep.subr.bf16.mxu0 %v3867
    %9359 = vmatpush1.bf16.msra.mxu0 %v3866
    %9360 = vmatprep.subr.bf16.mxu0 %v3883
    %9361 = vmatpush1.bf16.msra.mxu0 %v3882
    %9362 = vmatprep.subr.bf16.mxu0 %v3899
    %9363 = vmatpush1.bf16.msra.mxu0 %v3898
    %9364 = vmatprep.subr.bf16.mxu0 %v3915
    %9365 = vmatpush1.bf16.msra.mxu0 %v3914
    %9366 = vmatprep.subr.bf16.mxu0 %v3931
    %9367 = vmatpush1.bf16.msra.mxu0 %v3930
    %9368 = vmatprep.subr.bf16.mxu0 %v3947
    %9369 = vmatpush1.bf16.msra.mxu0 %v3946
    %9370 = vmatprep.subr.bf16.mxu0 %v3963
    %9371 = vmatpush1.bf16.msra.mxu0 %v3962
    %9372 = vmatprep.subr.bf16.mxu0 %v3979
    %9373 = vmatpush1.bf16.msra.mxu0 %v3978
    %9374 = vmatprep.subr.bf16.mxu0 %v3995
    %9375 = vmatpush1.bf16.msra.mxu0 %v3994
    %9376 = vmatprep.subr.bf16.mxu0 %v4011
    %9377 = vmatpush1.bf16.msra.mxu0 %v4010
    %9378 = vmatprep.subr.bf16.mxu0 %v4027
    %9379 = vmatpush1.bf16.msra.mxu0 %v4026
    %9380 = vmatprep.subr.bf16.mxu0 %v4043
    %9381 = vmatpush1.bf16.msra.mxu0 %v4042
    %9382 = vmatprep.subr.bf16.mxu0 %v4059
    %9383 = vmatpush1.bf16.msra.mxu0 %v4058
    %9384 = vmatprep.subr.bf16.mxu0 %v4075
    %9385 = vmatpush1.bf16.msra.mxu0 %v4074
    %9386 = vmatprep.mubr.bf16.mxu0 %v9073
    %9387 = vmatmul.mubr.bf16.gmra.mrb[0].mxu0 %v9072
    %v9388 = vpop.f32.mrb[0].mxu0
    %v9389 = vadd.f32 %v9082, %v9388
    %v9390 = vpop.f32.mrb[0].mxu0
    %v9391 = vadd.f32 %v9083, %v9390
    %v9392 = vpop.f32.mrb[0].mxu0
    %v9393 = vpop.f32.mrb[0].mxu0
    %9394 = vdwg.mxu0
    %9395 = vmatprep.subr.bf16.mxu0 %v4091
    %9396 = vmatpush1.bf16.msra.mxu0 %v4090
    %9397 = vmatprep.subr.bf16.mxu0 %v4107
    %9398 = vmatpush1.bf16.msra.mxu0 %v4106
    %9399 = vmatprep.subr.bf16.mxu0 %v4123
    %9400 = vmatpush1.bf16.msra.mxu0 %v4122
    %9401 = vmatprep.subr.bf16.mxu0 %v4139
    %9402 = vmatpush1.bf16.msra.mxu0 %v4138
    %9403 = vmatprep.subr.bf16.mxu0 %v4155
    %9404 = vmatpush1.bf16.msra.mxu0 %v4154
    %9405 = vmatprep.subr.bf16.mxu0 %v4171
    %9406 = vmatpush1.bf16.msra.mxu0 %v4170
    %9407 = vmatprep.subr.bf16.mxu0 %v4187
    %9408 = vmatpush1.bf16.msra.mxu0 %v4186
    %9409 = vmatprep.subr.bf16.mxu0 %v4203
    %9410 = vmatpush1.bf16.msra.mxu0 %v4202
    %9411 = vmatprep.subr.bf16.mxu0 %v4219
    %9412 = vmatpush1.bf16.msra.mxu0 %v4218
    %9413 = vmatprep.subr.bf16.mxu0 %v4235
    %9414 = vmatpush1.bf16.msra.mxu0 %v4234
    %9415 = vmatprep.subr.bf16.mxu0 %v4251
    %9416 = vmatpush1.bf16.msra.mxu0 %v4250
    %9417 = vmatprep.subr.bf16.mxu0 %v4267
    %9418 = vmatpush1.bf16.msra.mxu0 %v4266
    %9419 = vmatprep.subr.bf16.mxu0 %v4283
    %9420 = vmatpush1.bf16.msra.mxu0 %v4282
    %9421 = vmatprep.subr.bf16.mxu0 %v4299
    %9422 = vmatpush1.bf16.msra.mxu0 %v4298
    %9423 = vmatprep.subr.bf16.mxu0 %v4315
    %9424 = vmatpush1.bf16.msra.mxu0 %v4314
    %9425 = vmatprep.subr.bf16.mxu0 %v4331
    %9426 = vmatpush1.bf16.msra.mxu0 %v4330
    %9427 = vmatprep.mubr.bf16.mxu0 %v9075
    %9428 = vmatmul.mubr.bf16.gmra.mrb[0].mxu0 %v9074
    %v9429 = vpop.f32.mrb[0].mxu0
    %v9430 = vadd.f32 %v9389, %v9429
    %v9431 = vpop.f32.mrb[0].mxu0
    %v9432 = vadd.f32 %v9391, %v9431
    %v9433 = vpop.f32.mrb[0].mxu0
    %v9434 = vpop.f32.mrb[0].mxu0
    %9435 = vdwg.mxu0
    %9436 = vmatprep.subr.bf16.mxu0 %v3837
    %9437 = vmatpush1.bf16.msra.mxu0 %v3836
    %9438 = vmatprep.subr.bf16.mxu0 %v3853
    %9439 = vmatpush1.bf16.msra.mxu0 %v3852
    %9440 = vmatprep.subr.bf16.mxu0 %v3869
    %9441 = vmatpush1.bf16.msra.mxu0 %v3868
    %9442 = vmatprep.subr.bf16.mxu0 %v3885
    %9443 = vmatpush1.bf16.msra.mxu0 %v3884
    %9444 = vmatprep.subr.bf16.mxu0 %v3901
    %9445 = vmatpush1.bf16.msra.mxu0 %v3900
    %9446 = vmatprep.subr.bf16.mxu0 %v3917
    %9447 = vmatpush1.bf16.msra.mxu0 %v3916
    %9448 = vmatprep.subr.bf16.mxu0 %v3933
    %9449 = vmatpush1.bf16.msra.mxu0 %v3932
    %9450 = vmatprep.subr.bf16.mxu0 %v3949
    %9451 = vmatpush1.bf16.msra.mxu0 %v3948
    %9452 = vmatprep.subr.bf16.mxu0 %v3965
    %9453 = vmatpush1.bf16.msra.mxu0 %v3964
    %9454 = vmatprep.subr.bf16.mxu0 %v3981
    %9455 = vmatpush1.bf16.msra.mxu0 %v3980
    %9456 = vmatprep.subr.bf16.mxu0 %v3997
    %9457 = vmatpush1.bf16.msra.mxu0 %v3996
    %9458 = vmatprep.subr.bf16.mxu0 %v4013
    %9459 = vmatpush1.bf16.msra.mxu0 %v4012
    %9460 = vmatprep.subr.bf16.mxu0 %v4029
    %9461 = vmatpush1.bf16.msra.mxu0 %v4028
    %9462 = vmatprep.subr.bf16.mxu0 %v4045
    %9463 = vmatpush1.bf16.msra.mxu0 %v4044
    %9464 = vmatprep.subr.bf16.mxu0 %v4061
    %9465 = vmatpush1.bf16.msra.mxu0 %v4060
    %9466 = vmatprep.subr.bf16.mxu0 %v4077
    %9467 = vmatpush1.bf16.msra.mxu0 %v4076
    %9468 = vmatprep.mubr.bf16.mxu0 %v9073
    %9469 = vmatmul.mubr.bf16.gmra.mrb[0].mxu0 %v9072
    %v9470 = vpop.f32.mrb[0].mxu0
    %v9471 = vadd.f32 %v9084, %v9470
    %v9472 = vpop.f32.mrb[0].mxu0
    %v9473 = vadd.f32 %v9085, %v9472
    %v9474 = vpop.f32.mrb[0].mxu0
    %v9475 = vpop.f32.mrb[0].mxu0
    %9476 = vdwg.mxu0
    %9477 = vmatprep.subr.bf16.mxu0 %v4093
    %9478 = vmatpush1.bf16.msra.mxu0 %v4092
    %9479 = vmatprep.subr.bf16.mxu0 %v4109
    %9480 = vmatpush1.bf16.msra.mxu0 %v4108
    %9481 = vmatprep.subr.bf16.mxu0 %v4125
    %9482 = vmatpush1.bf16.msra.mxu0 %v4124
    %9483 = vmatprep.subr.bf16.mxu0 %v4141
    %9484 = vmatpush1.bf16.msra.mxu0 %v4140
    %9485 = vmatprep.subr.bf16.mxu0 %v4157
    %9486 = vmatpush1.bf16.msra.mxu0 %v4156
    %9487 = vmatprep.subr.bf16.mxu0 %v4173
    %9488 = vmatpush1.bf16.msra.mxu0 %v4172
    %9489 = vmatprep.subr.bf16.mxu0 %v4189
    %9490 = vmatpush1.bf16.msra.mxu0 %v4188
    %9491 = vmatprep.subr.bf16.mxu0 %v4205
    %9492 = vmatpush1.bf16.msra.mxu0 %v4204
    %9493 = vmatprep.subr.bf16.mxu0 %v4221
    %9494 = vmatpush1.bf16.msra.mxu0 %v4220
    %9495 = vmatprep.subr.bf16.mxu0 %v4237
    %9496 = vmatpush1.bf16.msra.mxu0 %v4236
    %9497 = vmatprep.subr.bf16.mxu0 %v4253
    %9498 = vmatpush1.bf16.msra.mxu0 %v4252
    %9499 = vmatprep.subr.bf16.mxu0 %v4269
    %9500 = vmatpush1.bf16.msra.mxu0 %v4268
    %9501 = vmatprep.subr.bf16.mxu0 %v4285
    %9502 = vmatpush1.bf16.msra.mxu0 %v4284
    %9503 = vmatprep.subr.bf16.mxu0 %v4301
    %9504 = vmatpush1.bf16.msra.mxu0 %v4300
    %9505 = vmatprep.subr.bf16.mxu0 %v4317
    %9506 = vmatpush1.bf16.msra.mxu0 %v4316
    %9507 = vmatprep.subr.bf16.mxu0 %v4333
    %9508 = vmatpush1.bf16.msra.mxu0 %v4332
    %9509 = vmatprep.mubr.bf16.mxu0 %v9075
    %9510 = vmatmul.mubr.bf16.gmra.mrb[0].mxu0 %v9074
    %v9511 = vpop.f32.mrb[0].mxu0
    %v9512 = vadd.f32 %v9471, %v9511
    %v9513 = vpop.f32.mrb[0].mxu0
    %v9514 = vadd.f32 %v9473, %v9513
    %v9515 = vpop.f32.mrb[0].mxu0
    %v9516 = vpop.f32.mrb[0].mxu0
    %9517 = vdwg.mxu0
    %9518 = vmatprep.subr.bf16.mxu0 %v3839
    %9519 = vmatpush1.bf16.msra.mxu0 %v3838
    %9520 = vmatprep.subr.bf16.mxu0 %v3855
    %9521 = vmatpush1.bf16.msra.mxu0 %v3854
    %9522 = vmatprep.subr.bf16.mxu0 %v3871
    %9523 = vmatpush1.bf16.msra.mxu0 %v3870
    %9524 = vmatprep.subr.bf16.mxu0 %v3887
    %9525 = vmatpush1.bf16.msra.mxu0 %v3886
    %9526 = vmatprep.subr.bf16.mxu0 %v3903
    %9527 = vmatpush1.bf16.msra.mxu0 %v3902
    %9528 = vmatprep.subr.bf16.mxu0 %v3919
    %9529 = vmatpush1.bf16.msra.mxu0 %v3918
    %9530 = vmatprep.subr.bf16.mxu0 %v3935
    %9531 = vmatpush1.bf16.msra.mxu0 %v3934
    %9532 = vmatprep.subr.bf16.mxu0 %v3951
    %9533 = vmatpush1.bf16.msra.mxu0 %v3950
    %9534 = vmatprep.subr.bf16.mxu0 %v3967
    %9535 = vmatpush1.bf16.msra.mxu0 %v3966
    %9536 = vmatprep.subr.bf16.mxu0 %v3983
    %9537 = vmatpush1.bf16.msra.mxu0 %v3982
    %9538 = vmatprep.subr.bf16.mxu0 %v3999
    %9539 = vmatpush1.bf16.msra.mxu0 %v3998
    %9540 = vmatprep.subr.bf16.mxu0 %v4015
    %9541 = vmatpush1.bf16.msra.mxu0 %v4014
    %9542 = vmatprep.subr.bf16.mxu0 %v4031
    %9543 = vmatpush1.bf16.msra.mxu0 %v4030
    %9544 = vmatprep.subr.bf16.mxu0 %v4047
    %9545 = vmatpush1.bf16.msra.mxu0 %v4046
    %9546 = vmatprep.subr.bf16.mxu0 %v4063
    %9547 = vmatpush1.bf16.msra.mxu0 %v4062
    %9548 = vmatprep.subr.bf16.mxu0 %v4079
    %9549 = vmatpush1.bf16.msra.mxu0 %v4078
    %9550 = vmatprep.mubr.bf16.mxu0 %v9073
    %9551 = vmatmul.mubr.bf16.gmra.mrb[0].mxu0 %v9072
    %v9552 = vpop.f32.mrb[0].mxu0
    %v9553 = vadd.f32 %v9086, %v9552
    %v9554 = vpop.f32.mrb[0].mxu0
    %v9555 = vadd.f32 %v9087, %v9554
    %v9556 = vpop.f32.mrb[0].mxu0
    %v9557 = vpop.f32.mrb[0].mxu0
    %9558 = vdwg.mxu0
    %9559 = vmatprep.subr.bf16.mxu0 %v4095
    %9560 = vmatpush1.bf16.msra.mxu0 %v4094
    %9561 = vmatprep.subr.bf16.mxu0 %v4111
    %9562 = vmatpush1.bf16.msra.mxu0 %v4110
    %9563 = vmatprep.subr.bf16.mxu0 %v4127
    %9564 = vmatpush1.bf16.msra.mxu0 %v4126
    %9565 = vmatprep.subr.bf16.mxu0 %v4143
    %9566 = vmatpush1.bf16.msra.mxu0 %v4142
    %9567 = vmatprep.subr.bf16.mxu0 %v4159
    %9568 = vmatpush1.bf16.msra.mxu0 %v4158
    %9569 = vmatprep.subr.bf16.mxu0 %v4175
    %9570 = vmatpush1.bf16.msra.mxu0 %v4174
    %9571 = vmatprep.subr.bf16.mxu0 %v4191
    %9572 = vmatpush1.bf16.msra.mxu0 %v4190
    %9573 = vmatprep.subr.bf16.mxu0 %v4207
    %9574 = vmatpush1.bf16.msra.mxu0 %v4206
    %9575 = vmatprep.subr.bf16.mxu0 %v4223
    %9576 = vmatpush1.bf16.msra.mxu0 %v4222
    %9577 = vmatprep.subr.bf16.mxu0 %v4239
    %9578 = vmatpush1.bf16.msra.mxu0 %v4238
    %9579 = vmatprep.subr.bf16.mxu0 %v4255
    %9580 = vmatpush1.bf16.msra.mxu0 %v4254
    %9581 = vmatprep.subr.bf16.mxu0 %v4271
    %9582 = vmatpush1.bf16.msra.mxu0 %v4270
    %9583 = vmatprep.subr.bf16.mxu0 %v4287
    %9584 = vmatpush1.bf16.msra.mxu0 %v4286
    %9585 = vmatprep.subr.bf16.mxu0 %v4303
    %9586 = vmatpush1.bf16.msra.mxu0 %v4302
    %9587 = vmatprep.subr.bf16.mxu0 %v4319
    %9588 = vmatpush1.bf16.msra.mxu0 %v4318
    %9589 = vmatprep.subr.bf16.mxu0 %v4335
    %9590 = vmatpush1.bf16.msra.mxu0 %v4334
    %9591 = vmatprep.mubr.bf16.mxu0 %v9075
    %9592 = vmatmul.mubr.bf16.gmra.mrb[0].mxu0 %v9074
    %v9593 = vpop.f32.mrb[0].mxu0
    %v9594 = vadd.f32 %v9553, %v9593
    %v9595 = vpop.f32.mrb[0].mxu0
    %v9596 = vadd.f32 %v9555, %v9595
    %v9597 = vpop.f32.mrb[0].mxu0
    %v9598 = vpop.f32.mrb[0].mxu0
    %9599 = vdwg.mxu0
    %9600 = vmatprep.subr.bf16.mxu0 %v3841
    %9601 = vmatpush1.bf16.msra.mxu0 %v3840
    %9602 = vmatprep.subr.bf16.mxu0 %v3857
    %9603 = vmatpush1.bf16.msra.mxu0 %v3856
    %9604 = vmatprep.subr.bf16.mxu0 %v3873
    %9605 = vmatpush1.bf16.msra.mxu0 %v3872
    %9606 = vmatprep.subr.bf16.mxu0 %v3889
    %9607 = vmatpush1.bf16.msra.mxu0 %v3888
    %9608 = vmatprep.subr.bf16.mxu0 %v3905
    %9609 = vmatpush1.bf16.msra.mxu0 %v3904
    %9610 = vmatprep.subr.bf16.mxu0 %v3921
    %9611 = vmatpush1.bf16.msra.mxu0 %v3920
    %9612 = vmatprep.subr.bf16.mxu0 %v3937
    %9613 = vmatpush1.bf16.msra.mxu0 %v3936
    %9614 = vmatprep.subr.bf16.mxu0 %v3953
    %9615 = vmatpush1.bf16.msra.mxu0 %v3952
    %9616 = vmatprep.subr.bf16.mxu0 %v3969
    %9617 = vmatpush1.bf16.msra.mxu0 %v3968
    %9618 = vmatprep.subr.bf16.mxu0 %v3985
    %9619 = vmatpush1.bf16.msra.mxu0 %v3984
    %9620 = vmatprep.subr.bf16.mxu0 %v4001
    %9621 = vmatpush1.bf16.msra.mxu0 %v4000
    %9622 = vmatprep.subr.bf16.mxu0 %v4017
    %9623 = vmatpush1.bf16.msra.mxu0 %v4016
    %9624 = vmatprep.subr.bf16.mxu0 %v4033
    %9625 = vmatpush1.bf16.msra.mxu0 %v4032
    %9626 = vmatprep.subr.bf16.mxu0 %v4049
    %9627 = vmatpush1.bf16.msra.mxu0 %v4048
    %9628 = vmatprep.subr.bf16.mxu0 %v4065
    %9629 = vmatpush1.bf16.msra.mxu0 %v4064
    %9630 = vmatprep.subr.bf16.mxu0 %v4081
    %9631 = vmatpush1.bf16.msra.mxu0 %v4080
    %9632 = vmatprep.mubr.bf16.mxu0 %v9073
    %9633 = vmatmul.mubr.bf16.gmra.mrb[0].mxu0 %v9072
    %v9634 = vpop.f32.mrb[0].mxu0
    %v9635 = vadd.f32 %v9088, %v9634
    %v9636 = vpop.f32.mrb[0].mxu0
    %v9637 = vadd.f32 %v9089, %v9636
    %v9638 = vpop.f32.mrb[0].mxu0
    %v9639 = vpop.f32.mrb[0].mxu0
    %9640 = vdwg.mxu0
    %9641 = vmatprep.subr.bf16.mxu0 %v4097
    %9642 = vmatpush1.bf16.msra.mxu0 %v4096
    %9643 = vmatprep.subr.bf16.mxu0 %v4113
    %9644 = vmatpush1.bf16.msra.mxu0 %v4112
    %9645 = vmatprep.subr.bf16.mxu0 %v4129
    %9646 = vmatpush1.bf16.msra.mxu0 %v4128
    %9647 = vmatprep.subr.bf16.mxu0 %v4145
    %9648 = vmatpush1.bf16.msra.mxu0 %v4144
    %9649 = vmatprep.subr.bf16.mxu0 %v4161
    %9650 = vmatpush1.bf16.msra.mxu0 %v4160
    %9651 = vmatprep.subr.bf16.mxu0 %v4177
    %9652 = vmatpush1.bf16.msra.mxu0 %v4176
    %9653 = vmatprep.subr.bf16.mxu0 %v4193
    %9654 = vmatpush1.bf16.msra.mxu0 %v4192
    %9655 = vmatprep.subr.bf16.mxu0 %v4209
    %9656 = vmatpush1.bf16.msra.mxu0 %v4208
    %9657 = vmatprep.subr.bf16.mxu0 %v4225
    %9658 = vmatpush1.bf16.msra.mxu0 %v4224
    %9659 = vmatprep.subr.bf16.mxu0 %v4241
    %9660 = vmatpush1.bf16.msra.mxu0 %v4240
    %9661 = vmatprep.subr.bf16.mxu0 %v4257
    %9662 = vmatpush1.bf16.msra.mxu0 %v4256
    %9663 = vmatprep.subr.bf16.mxu0 %v4273
    %9664 = vmatpush1.bf16.msra.mxu0 %v4272
    %9665 = vmatprep.subr.bf16.mxu0 %v4289
    %9666 = vmatpush1.bf16.msra.mxu0 %v4288
    %9667 = vmatprep.subr.bf16.mxu0 %v4305
    %9668 = vmatpush1.bf16.msra.mxu0 %v4304
    %9669 = vmatprep.subr.bf16.mxu0 %v4321
    %9670 = vmatpush1.bf16.msra.mxu0 %v4320
    %9671 = vmatprep.subr.bf16.mxu0 %v4337
    %9672 = vmatpush1.bf16.msra.mxu0 %v4336
    %9673 = vmatprep.mubr.bf16.mxu0 %v9075
    %9674 = vmatmul.mubr.bf16.gmra.mrb[0].mxu0 %v9074
    %v9675 = vpop.f32.mrb[0].mxu0
    %v9676 = vadd.f32 %v9635, %v9675
    %v9677 = vpop.f32.mrb[0].mxu0
    %v9678 = vadd.f32 %v9637, %v9677
    %v9679 = vpop.f32.mrb[0].mxu0
    %v9680 = vpop.f32.mrb[0].mxu0
    %9681 = vdwg.mxu0
    %9682 = vmatprep.subr.bf16.mxu0 %v3843
    %9683 = vmatpush1.bf16.msra.mxu0 %v3842
    %9684 = vmatprep.subr.bf16.mxu0 %v3859
    %9685 = vmatpush1.bf16.msra.mxu0 %v3858
    %9686 = vmatprep.subr.bf16.mxu0 %v3875
    %9687 = vmatpush1.bf16.msra.mxu0 %v3874
    %9688 = vmatprep.subr.bf16.mxu0 %v3891
    %9689 = vmatpush1.bf16.msra.mxu0 %v3890
    %9690 = vmatprep.subr.bf16.mxu0 %v3907
    %9691 = vmatpush1.bf16.msra.mxu0 %v3906
    %9692 = vmatprep.subr.bf16.mxu0 %v3923
    %9693 = vmatpush1.bf16.msra.mxu0 %v3922
    %9694 = vmatprep.subr.bf16.mxu0 %v3939
    %9695 = vmatpush1.bf16.msra.mxu0 %v3938
    %9696 = vmatprep.subr.bf16.mxu0 %v3955
    %9697 = vmatpush1.bf16.msra.mxu0 %v3954
    %9698 = vmatprep.subr.bf16.mxu0 %v3971
    %9699 = vmatpush1.bf16.msra.mxu0 %v3970
    %9700 = vmatprep.subr.bf16.mxu0 %v3987
    %9701 = vmatpush1.bf16.msra.mxu0 %v3986
    %9702 = vmatprep.subr.bf16.mxu0 %v4003
    %9703 = vmatpush1.bf16.msra.mxu0 %v4002
    %9704 = vmatprep.subr.bf16.mxu0 %v4019
    %9705 = vmatpush1.bf16.msra.mxu0 %v4018
    %9706 = vmatprep.subr.bf16.mxu0 %v4035
    %9707 = vmatpush1.bf16.msra.mxu0 %v4034
    %9708 = vmatprep.subr.bf16.mxu0 %v4051
    %9709 = vmatpush1.bf16.msra.mxu0 %v4050
    %9710 = vmatprep.subr.bf16.mxu0 %v4067
    %9711 = vmatpush1.bf16.msra.mxu0 %v4066
    %9712 = vmatprep.subr.bf16.mxu0 %v4083
    %9713 = vmatpush1.bf16.msra.mxu0 %v4082
    %9714 = vmatprep.mubr.bf16.mxu0 %v9073
    %9715 = vmatmul.mubr.bf16.gmra.mrb[0].mxu0 %v9072
    %v9716 = vpop.f32.mrb[0].mxu0
    %v9717 = vadd.f32 %v9090, %v9716
    %v9718 = vpop.f32.mrb[0].mxu0
    %v9719 = vadd.f32 %v9091, %v9718
    %v9720 = vpop.f32.mrb[0].mxu0
    %v9721 = vpop.f32.mrb[0].mxu0
    %9722 = vdwg.mxu0
    %9723 = vmatprep.subr.bf16.mxu0 %v4099
    %9724 = vmatpush1.bf16.msra.mxu0 %v4098
    %9725 = vmatprep.subr.bf16.mxu0 %v4115
    %9726 = vmatpush1.bf16.msra.mxu0 %v4114
    %9727 = vmatprep.subr.bf16.mxu0 %v4131
    %9728 = vmatpush1.bf16.msra.mxu0 %v4130
    %9729 = vmatprep.subr.bf16.mxu0 %v4147
    %9730 = vmatpush1.bf16.msra.mxu0 %v4146
    %9731 = vmatprep.subr.bf16.mxu0 %v4163
    %9732 = vmatpush1.bf16.msra.mxu0 %v4162
    %9733 = vmatprep.subr.bf16.mxu0 %v4179
    %9734 = vmatpush1.bf16.msra.mxu0 %v4178
    %9735 = vmatprep.subr.bf16.mxu0 %v4195
    %9736 = vmatpush1.bf16.msra.mxu0 %v4194
    %9737 = vmatprep.subr.bf16.mxu0 %v4211
    %9738 = vmatpush1.bf16.msra.mxu0 %v4210
    %9739 = vmatprep.subr.bf16.mxu0 %v4227
    %9740 = vmatpush1.bf16.msra.mxu0 %v4226
    %9741 = vmatprep.subr.bf16.mxu0 %v4243
    %9742 = vmatpush1.bf16.msra.mxu0 %v4242
    %9743 = vmatprep.subr.bf16.mxu0 %v4259
    %9744 = vmatpush1.bf16.msra.mxu0 %v4258
    %9745 = vmatprep.subr.bf16.mxu0 %v4275
    %9746 = vmatpush1.bf16.msra.mxu0 %v4274
    %9747 = vmatprep.subr.bf16.mxu0 %v4291
    %9748 = vmatpush1.bf16.msra.mxu0 %v4290
    %9749 = vmatprep.subr.bf16.mxu0 %v4307
    %9750 = vmatpush1.bf16.msra.mxu0 %v4306
    %9751 = vmatprep.subr.bf16.mxu0 %v4323
    %9752 = vmatpush1.bf16.msra.mxu0 %v4322
    %9753 = vmatprep.subr.bf16.mxu0 %v4339
    %9754 = vmatpush1.bf16.msra.mxu0 %v4338
    %9755 = vmatprep.mubr.bf16.mxu0 %v9075
    %9756 = vmatmul.mubr.bf16.gmra.mrb[0].mxu0 %v9074
    %v9757 = vpop.f32.mrb[0].mxu0
    %v9758 = vadd.f32 %v9717, %v9757
    %v9759 = vpop.f32.mrb[0].mxu0
    %v9760 = vadd.f32 %v9719, %v9759
    %v9761 = vpop.f32.mrb[0].mxu0
    %v9762 = vpop.f32.mrb[0].mxu0
    %9763 = vdwg.mxu0
    %v9764 = vmul.f32 %v9184, 0.5
    %v9765 = vmul.f32 %v9186, 0.5
    %v9766 = vmul.f32 %v9266, 0.5
    %v9767 = vmul.f32 %v9268, 0.5
    %v9768 = vtanh.pop %v9764
    %v9769 = vtanh.pop %v9765
    %v9770 = vtanh.pop %v9766
    %v9771 = vtanh.pop %v9767
    %v9772 = vmul.f32 %v9768, 0.5
    %v9773 = vmul.f32 %v9769, 0.5
    %v9774 = vmul.f32 %v9770, 0.5
    %v9775 = vmul.f32 %v9771, 0.5
    %v9776 = vadd.f32 %v9772, 0.5
    %v9777 = vadd.f32 %v9773, 0.5
    %v9778 = vadd.f32 %v9774, 0.5
    %v9779 = vadd.f32 %v9775, 0.5
    %v9780 = vmul.f32 %v9348, 0.5
    %v9781 = vmul.f32 %v9350, 0.5
    %v9782 = vmul.f32 %v9430, 0.5
    %v9783 = vmul.f32 %v9432, 0.5
    %v9784 = vtanh.pop %v9780
    %v9785 = vtanh.pop %v9781
    %v9786 = vtanh.pop %v9782
    %v9787 = vtanh.pop %v9783
    %v9788 = vmul.f32 %v9784, 0.5
    %v9789 = vmul.f32 %v9785, 0.5
    %v9790 = vmul.f32 %v9786, 0.5
    %v9791 = vmul.f32 %v9787, 0.5
    %v9792 = vadd.f32 %v9788, 0.5
    %v9793 = vadd.f32 %v9789, 0.5
    %v9794 = vadd.f32 %v9790, 0.5
    %v9795 = vadd.f32 %v9791, 0.5
    %v9796 = vtanh.pop %v9512
    %v9797 = vtanh.pop %v9514
    %v9798 = vtanh.pop %v9594
    %v9799 = vtanh.pop %v9596
    %v9800 = vmul.f32 %v9676, 0.5
    %v9801 = vmul.f32 %v9678, 0.5
    %v9802 = vmul.f32 %v9758, 0.5
    %v9803 = vmul.f32 %v9760, 0.5
    %v9804 = vtanh.pop %v9800
    %v9805 = vtanh.pop %v9801
    %v9806 = vtanh.pop %v9802
    %v9807 = vtanh.pop %v9803
    %v9808 = vmul.f32 %v9804, 0.5
    %v9809 = vmul.f32 %v9805, 0.5
    %v9810 = vmul.f32 %v9806, 0.5
    %v9811 = vmul.f32 %v9807, 0.5
    %v9812 = vadd.f32 %v9808, 0.5
    %v9813 = vadd.f32 %v9809, 0.5
    %v9814 = vadd.f32 %v9810, 0.5
    %v9815 = vadd.f32 %v9811, 0.5
    %v9816 = vmul.f32 %v9792, %v9060
    %v9817 = vmul.f32 %v9793, %v9061
    %v9818 = vmul.f32 %v9794, %v9062
    %v9819 = vmul.f32 %v9795, %v9063
    %v9820 = vmul.f32 %v9776, %v9796
    %v9821 = vmul.f32 %v9777, %v9797
    %v9822 = vmul.f32 %v9778, %v9798
    %v9823 = vmul.f32 %v9779, %v9799
    %v9824 = vadd.f32 %v9816, %v9820
    %v9825 = vadd.f32 %v9817, %v9821
    %v9826 = vadd.f32 %v9818, %v9822
    %v9827 = vadd.f32 %v9819, %v9823
    %v9828 = vtanh.pop %v9824
    %v9829 = vtanh.pop %v9825
    %v9830 = vtanh.pop %v9826
    %v9831 = vtanh.pop %v9827
    %v9832 = vmul.f32 %v9812, %v9828
    %v9833 = vmul.f32 %v9813, %v9829
    %v9834 = vmul.f32 %v9814, %v9830
    %v9835 = vmul.f32 %v9815, %v9831
    %v9836 = vpack.c.bf16 %v9832, %v9832
    %v9837 = vpack.c.bf16 %v9833, %v9833
    %v9838 = vpack.c.bf16 %v9834, %v9834
    %v9839 = vpack.c.bf16 %v9835, %v9835
    %v9840 = vrot.slane %v5220, 7
    %v9841 = vrot.slane %v5221, 7
    %v9842 = vrot.slane %v5222, 7
    %v9843 = vrot.slane %v5223, 7
    %v9844 = vrot.slane %v5224, 7
    %v9845 = vrot.slane %v5225, 7
    %v9846 = vrot.slane %v5226, 7
    %v9847 = vrot.slane %v5227, 7
    %v9848 = vrot.slane %v5228, 7
    %v9849 = vrot.slane %v5229, 7
    %v9850 = vrot.slane %v5230, 7
    %v9851 = vrot.slane %v5231, 7
    %v9852 = vrot.slane %v5232, 7
    %v9853 = vrot.slane %v5233, 7
    %v9854 = vrot.slane %v5234, 7
    %v9855 = vrot.slane %v5235, 7
    %9872 = vmatprep.subr.bf16.mxu0 %v3829
    %9873 = vmatpush1.bf16.msra.mxu0 %v3828
    %9874 = vmatprep.subr.bf16.mxu0 %v3845
    %9875 = vmatpush1.bf16.msra.mxu0 %v3844
    %9876 = vmatprep.subr.bf16.mxu0 %v3861
    %9877 = vmatpush1.bf16.msra.mxu0 %v3860
    %9878 = vmatprep.subr.bf16.mxu0 %v3877
    %9879 = vmatpush1.bf16.msra.mxu0 %v3876
    %9880 = vmatprep.subr.bf16.mxu0 %v3893
    %9881 = vmatpush1.bf16.msra.mxu0 %v3892
    %9882 = vmatprep.subr.bf16.mxu0 %v3909
    %9883 = vmatpush1.bf16.msra.mxu0 %v3908
    %9884 = vmatprep.subr.bf16.mxu0 %v3925
    %9885 = vmatpush1.bf16.msra.mxu0 %v3924
    %9886 = vmatprep.subr.bf16.mxu0 %v3941
    %9887 = vmatpush1.bf16.msra.mxu0 %v3940
    %9888 = vmatprep.subr.bf16.mxu0 %v3957
    %9889 = vmatpush1.bf16.msra.mxu0 %v3956
    %9890 = vmatprep.subr.bf16.mxu0 %v3973
    %9891 = vmatpush1.bf16.msra.mxu0 %v3972
    %9892 = vmatprep.subr.bf16.mxu0 %v3989
    %9893 = vmatpush1.bf16.msra.mxu0 %v3988
    %9894 = vmatprep.subr.bf16.mxu0 %v4005
    %9895 = vmatpush1.bf16.msra.mxu0 %v4004
    %9896 = vmatprep.subr.bf16.mxu0 %v4021
    %9897 = vmatpush1.bf16.msra.mxu0 %v4020
    %9898 = vmatprep.subr.bf16.mxu0 %v4037
    %9899 = vmatpush1.bf16.msra.mxu0 %v4036
    %9900 = vmatprep.subr.bf16.mxu0 %v4053
    %9901 = vmatpush1.bf16.msra.mxu0 %v4052
    %9902 = vmatprep.subr.bf16.mxu0 %v4069
    %9903 = vmatpush1.bf16.msra.mxu0 %v4068
    %9904 = vmatprep.mubr.bf16.mxu0 %v9837
    %9905 = vmatmul.mubr.bf16.gmra.mrb[0].mxu0 %v9836
    %v9906 = vpop.f32.mrb[0].mxu0
    %v9907 = vadd.f32 %v9840, %v9906
    %v9908 = vpop.f32.mrb[0].mxu0
    %v9909 = vadd.f32 %v9841, %v9908
    %v9910 = vpop.f32.mrb[0].mxu0
    %v9911 = vpop.f32.mrb[0].mxu0
    %9912 = vdwg.mxu0
    %9913 = vmatprep.subr.bf16.mxu0 %v4085
    %9914 = vmatpush1.bf16.msra.mxu0 %v4084
    %9915 = vmatprep.subr.bf16.mxu0 %v4101
    %9916 = vmatpush1.bf16.msra.mxu0 %v4100
    %9917 = vmatprep.subr.bf16.mxu0 %v4117
    %9918 = vmatpush1.bf16.msra.mxu0 %v4116
    %9919 = vmatprep.subr.bf16.mxu0 %v4133
    %9920 = vmatpush1.bf16.msra.mxu0 %v4132
    %9921 = vmatprep.subr.bf16.mxu0 %v4149
    %9922 = vmatpush1.bf16.msra.mxu0 %v4148
    %9923 = vmatprep.subr.bf16.mxu0 %v4165
    %9924 = vmatpush1.bf16.msra.mxu0 %v4164
    %9925 = vmatprep.subr.bf16.mxu0 %v4181
    %9926 = vmatpush1.bf16.msra.mxu0 %v4180
    %9927 = vmatprep.subr.bf16.mxu0 %v4197
    %9928 = vmatpush1.bf16.msra.mxu0 %v4196
    %9929 = vmatprep.subr.bf16.mxu0 %v4213
    %9930 = vmatpush1.bf16.msra.mxu0 %v4212
    %9931 = vmatprep.subr.bf16.mxu0 %v4229
    %9932 = vmatpush1.bf16.msra.mxu0 %v4228
    %9933 = vmatprep.subr.bf16.mxu0 %v4245
    %9934 = vmatpush1.bf16.msra.mxu0 %v4244
    %9935 = vmatprep.subr.bf16.mxu0 %v4261
    %9936 = vmatpush1.bf16.msra.mxu0 %v4260
    %9937 = vmatprep.subr.bf16.mxu0 %v4277
    %9938 = vmatpush1.bf16.msra.mxu0 %v4276
    %9939 = vmatprep.subr.bf16.mxu0 %v4293
    %9940 = vmatpush1.bf16.msra.mxu0 %v4292
    %9941 = vmatprep.subr.bf16.mxu0 %v4309
    %9942 = vmatpush1.bf16.msra.mxu0 %v4308
    %9943 = vmatprep.subr.bf16.mxu0 %v4325
    %9944 = vmatpush1.bf16.msra.mxu0 %v4324
    %9945 = vmatprep.mubr.bf16.mxu0 %v9839
    %9946 = vmatmul.mubr.bf16.gmra.mrb[0].mxu0 %v9838
    %v9947 = vpop.f32.mrb[0].mxu0
    %v9948 = vadd.f32 %v9907, %v9947
    %v9949 = vpop.f32.mrb[0].mxu0
    %v9950 = vadd.f32 %v9909, %v9949
    %v9951 = vpop.f32.mrb[0].mxu0
    %v9952 = vpop.f32.mrb[0].mxu0
    %9953 = vdwg.mxu0
    %9954 = vmatprep.subr.bf16.mxu0 %v3831
    %9955 = vmatpush1.bf16.msra.mxu0 %v3830
    %9956 = vmatprep.subr.bf16.mxu0 %v3847
    %9957 = vmatpush1.bf16.msra.mxu0 %v3846
    %9958 = vmatprep.subr.bf16.mxu0 %v3863
    %9959 = vmatpush1.bf16.msra.mxu0 %v3862
    %9960 = vmatprep.subr.bf16.mxu0 %v3879
    %9961 = vmatpush1.bf16.msra.mxu0 %v3878
    %9962 = vmatprep.subr.bf16.mxu0 %v3895
    %9963 = vmatpush1.bf16.msra.mxu0 %v3894
    %9964 = vmatprep.subr.bf16.mxu0 %v3911
    %9965 = vmatpush1.bf16.msra.mxu0 %v3910
    %9966 = vmatprep.subr.bf16.mxu0 %v3927
    %9967 = vmatpush1.bf16.msra.mxu0 %v3926
    %9968 = vmatprep.subr.bf16.mxu0 %v3943
    %9969 = vmatpush1.bf16.msra.mxu0 %v3942
    %9970 = vmatprep.subr.bf16.mxu0 %v3959
    %9971 = vmatpush1.bf16.msra.mxu0 %v3958
    %9972 = vmatprep.subr.bf16.mxu0 %v3975
    %9973 = vmatpush1.bf16.msra.mxu0 %v3974
    %9974 = vmatprep.subr.bf16.mxu0 %v3991
    %9975 = vmatpush1.bf16.msra.mxu0 %v3990
    %9976 = vmatprep.subr.bf16.mxu0 %v4007
    %9977 = vmatpush1.bf16.msra.mxu0 %v4006
    %9978 = vmatprep.subr.bf16.mxu0 %v4023
    %9979 = vmatpush1.bf16.msra.mxu0 %v4022
    %9980 = vmatprep.subr.bf16.mxu0 %v4039
    %9981 = vmatpush1.bf16.msra.mxu0 %v4038
    %9982 = vmatprep.subr.bf16.mxu0 %v4055
    %9983 = vmatpush1.bf16.msra.mxu0 %v4054
    %9984 = vmatprep.subr.bf16.mxu0 %v4071
    %9985 = vmatpush1.bf16.msra.mxu0 %v4070
    %9986 = vmatprep.mubr.bf16.mxu0 %v9837
    %9987 = vmatmul.mubr.bf16.gmra.mrb[0].mxu0 %v9836
    %v9988 = vpop.f32.mrb[0].mxu0
    %v9989 = vadd.f32 %v9842, %v9988
    %v9990 = vpop.f32.mrb[0].mxu0
    %v9991 = vadd.f32 %v9843, %v9990
    %v9992 = vpop.f32.mrb[0].mxu0
    %v9993 = vpop.f32.mrb[0].mxu0
    %9994 = vdwg.mxu0
    %9995 = vmatprep.subr.bf16.mxu0 %v4087
    %9996 = vmatpush1.bf16.msra.mxu0 %v4086
    %9997 = vmatprep.subr.bf16.mxu0 %v4103
    %9998 = vmatpush1.bf16.msra.mxu0 %v4102
    %9999 = vmatprep.subr.bf16.mxu0 %v4119
    %10000 = vmatpush1.bf16.msra.mxu0 %v4118
    %10001 = vmatprep.subr.bf16.mxu0 %v4135
    %10002 = vmatpush1.bf16.msra.mxu0 %v4134
    %10003 = vmatprep.subr.bf16.mxu0 %v4151
    %10004 = vmatpush1.bf16.msra.mxu0 %v4150
    %10005 = vmatprep.subr.bf16.mxu0 %v4167
    %10006 = vmatpush1.bf16.msra.mxu0 %v4166
    %10007 = vmatprep.subr.bf16.mxu0 %v4183
    %10008 = vmatpush1.bf16.msra.mxu0 %v4182
    %10009 = vmatprep.subr.bf16.mxu0 %v4199
    %10010 = vmatpush1.bf16.msra.mxu0 %v4198
    %10011 = vmatprep.subr.bf16.mxu0 %v4215
    %10012 = vmatpush1.bf16.msra.mxu0 %v4214
    %10013 = vmatprep.subr.bf16.mxu0 %v4231
    %10014 = vmatpush1.bf16.msra.mxu0 %v4230
    %10015 = vmatprep.subr.bf16.mxu0 %v4247
    %10016 = vmatpush1.bf16.msra.mxu0 %v4246
    %10017 = vmatprep.subr.bf16.mxu0 %v4263
    %10018 = vmatpush1.bf16.msra.mxu0 %v4262
    %10019 = vmatprep.subr.bf16.mxu0 %v4279
    %10020 = vmatpush1.bf16.msra.mxu0 %v4278
    %10021 = vmatprep.subr.bf16.mxu0 %v4295
    %10022 = vmatpush1.bf16.msra.mxu0 %v4294
    %10023 = vmatprep.subr.bf16.mxu0 %v4311
    %10024 = vmatpush1.bf16.msra.mxu0 %v4310
    %10025 = vmatprep.subr.bf16.mxu0 %v4327
    %10026 = vmatpush1.bf16.msra.mxu0 %v4326
    %10027 = vmatprep.mubr.bf16.mxu0 %v9839
    %10028 = vmatmul.mubr.bf16.gmra.mrb[0].mxu0 %v9838
    %v10029 = vpop.f32.mrb[0].mxu0
    %v10030 = vadd.f32 %v9989, %v10029
    %v10031 = vpop.f32.mrb[0].mxu0
    %v10032 = vadd.f32 %v9991, %v10031
    %v10033 = vpop.f32.mrb[0].mxu0
    %v10034 = vpop.f32.mrb[0].mxu0
    %10035 = vdwg.mxu0
    %10036 = vmatprep.subr.bf16.mxu0 %v3833
    %10037 = vmatpush1.bf16.msra.mxu0 %v3832
    %10038 = vmatprep.subr.bf16.mxu0 %v3849
    %10039 = vmatpush1.bf16.msra.mxu0 %v3848
    %10040 = vmatprep.subr.bf16.mxu0 %v3865
    %10041 = vmatpush1.bf16.msra.mxu0 %v3864
    %10042 = vmatprep.subr.bf16.mxu0 %v3881
    %10043 = vmatpush1.bf16.msra.mxu0 %v3880
    %10044 = vmatprep.subr.bf16.mxu0 %v3897
    %10045 = vmatpush1.bf16.msra.mxu0 %v3896
    %10046 = vmatprep.subr.bf16.mxu0 %v3913
    %10047 = vmatpush1.bf16.msra.mxu0 %v3912
    %10048 = vmatprep.subr.bf16.mxu0 %v3929
    %10049 = vmatpush1.bf16.msra.mxu0 %v3928
    %10050 = vmatprep.subr.bf16.mxu0 %v3945
    %10051 = vmatpush1.bf16.msra.mxu0 %v3944
    %10052 = vmatprep.subr.bf16.mxu0 %v3961
    %10053 = vmatpush1.bf16.msra.mxu0 %v3960
    %10054 = vmatprep.subr.bf16.mxu0 %v3977
    %10055 = vmatpush1.bf16.msra.mxu0 %v3976
    %10056 = vmatprep.subr.bf16.mxu0 %v3993
    %10057 = vmatpush1.bf16.msra.mxu0 %v3992
    %10058 = vmatprep.subr.bf16.mxu0 %v4009
    %10059 = vmatpush1.bf16.msra.mxu0 %v4008
    %10060 = vmatprep.subr.bf16.mxu0 %v4025
    %10061 = vmatpush1.bf16.msra.mxu0 %v4024
    %10062 = vmatprep.subr.bf16.mxu0 %v4041
    %10063 = vmatpush1.bf16.msra.mxu0 %v4040
    %10064 = vmatprep.subr.bf16.mxu0 %v4057
    %10065 = vmatpush1.bf16.msra.mxu0 %v4056
    %10066 = vmatprep.subr.bf16.mxu0 %v4073
    %10067 = vmatpush1.bf16.msra.mxu0 %v4072
    %10068 = vmatprep.mubr.bf16.mxu0 %v9837
    %10069 = vmatmul.mubr.bf16.gmra.mrb[0].mxu0 %v9836
    %v10070 = vpop.f32.mrb[0].mxu0
    %v10071 = vadd.f32 %v9844, %v10070
    %v10072 = vpop.f32.mrb[0].mxu0
    %v10073 = vadd.f32 %v9845, %v10072
    %v10074 = vpop.f32.mrb[0].mxu0
    %v10075 = vpop.f32.mrb[0].mxu0
    %10076 = vdwg.mxu0
    %10077 = vmatprep.subr.bf16.mxu0 %v4089
    %10078 = vmatpush1.bf16.msra.mxu0 %v4088
    %10079 = vmatprep.subr.bf16.mxu0 %v4105
    %10080 = vmatpush1.bf16.msra.mxu0 %v4104
    %10081 = vmatprep.subr.bf16.mxu0 %v4121
    %10082 = vmatpush1.bf16.msra.mxu0 %v4120
    %10083 = vmatprep.subr.bf16.mxu0 %v4137
    %10084 = vmatpush1.bf16.msra.mxu0 %v4136
    %10085 = vmatprep.subr.bf16.mxu0 %v4153
    %10086 = vmatpush1.bf16.msra.mxu0 %v4152
    %10087 = vmatprep.subr.bf16.mxu0 %v4169
    %10088 = vmatpush1.bf16.msra.mxu0 %v4168
    %10089 = vmatprep.subr.bf16.mxu0 %v4185
    %10090 = vmatpush1.bf16.msra.mxu0 %v4184
    %10091 = vmatprep.subr.bf16.mxu0 %v4201
    %10092 = vmatpush1.bf16.msra.mxu0 %v4200
    %10093 = vmatprep.subr.bf16.mxu0 %v4217
    %10094 = vmatpush1.bf16.msra.mxu0 %v4216
    %10095 = vmatprep.subr.bf16.mxu0 %v4233
    %10096 = vmatpush1.bf16.msra.mxu0 %v4232
    %10097 = vmatprep.subr.bf16.mxu0 %v4249
    %10098 = vmatpush1.bf16.msra.mxu0 %v4248
    %10099 = vmatprep.subr.bf16.mxu0 %v4265
    %10100 = vmatpush1.bf16.msra.mxu0 %v4264
    %10101 = vmatprep.subr.bf16.mxu0 %v4281
    %10102 = vmatpush1.bf16.msra.mxu0 %v4280
    %10103 = vmatprep.subr.bf16.mxu0 %v4297
    %10104 = vmatpush1.bf16.msra.mxu0 %v4296
    %10105 = vmatprep.subr.bf16.mxu0 %v4313
    %10106 = vmatpush1.bf16.msra.mxu0 %v4312
    %10107 = vmatprep.subr.bf16.mxu0 %v4329
    %10108 = vmatpush1.bf16.msra.mxu0 %v4328
    %10109 = vmatprep.mubr.bf16.mxu0 %v9839
    %10110 = vmatmul.mubr.bf16.gmra.mrb[0].mxu0 %v9838
    %v10111 = vpop.f32.mrb[0].mxu0
    %v10112 = vadd.f32 %v10071, %v10111
    %v10113 = vpop.f32.mrb[0].mxu0
    %v10114 = vadd.f32 %v10073, %v10113
    %v10115 = vpop.f32.mrb[0].mxu0
    %v10116 = vpop.f32.mrb[0].mxu0
    %10117 = vdwg.mxu0
    %10118 = vmatprep.subr.bf16.mxu0 %v3835
    %10119 = vmatpush1.bf16.msra.mxu0 %v3834
    %10120 = vmatprep.subr.bf16.mxu0 %v3851
    %10121 = vmatpush1.bf16.msra.mxu0 %v3850
    %10122 = vmatprep.subr.bf16.mxu0 %v3867
    %10123 = vmatpush1.bf16.msra.mxu0 %v3866
    %10124 = vmatprep.subr.bf16.mxu0 %v3883
    %10125 = vmatpush1.bf16.msra.mxu0 %v3882
    %10126 = vmatprep.subr.bf16.mxu0 %v3899
    %10127 = vmatpush1.bf16.msra.mxu0 %v3898
    %10128 = vmatprep.subr.bf16.mxu0 %v3915
    %10129 = vmatpush1.bf16.msra.mxu0 %v3914
    %10130 = vmatprep.subr.bf16.mxu0 %v3931
    %10131 = vmatpush1.bf16.msra.mxu0 %v3930
    %10132 = vmatprep.subr.bf16.mxu0 %v3947
    %10133 = vmatpush1.bf16.msra.mxu0 %v3946
    %10134 = vmatprep.subr.bf16.mxu0 %v3963
    %10135 = vmatpush1.bf16.msra.mxu0 %v3962
    %10136 = vmatprep.subr.bf16.mxu0 %v3979
    %10137 = vmatpush1.bf16.msra.mxu0 %v3978
    %10138 = vmatprep.subr.bf16.mxu0 %v3995
    %10139 = vmatpush1.bf16.msra.mxu0 %v3994
    %10140 = vmatprep.subr.bf16.mxu0 %v4011
    %10141 = vmatpush1.bf16.msra.mxu0 %v4010
    %10142 = vmatprep.subr.bf16.mxu0 %v4027
    %10143 = vmatpush1.bf16.msra.mxu0 %v4026
    %10144 = vmatprep.subr.bf16.mxu0 %v4043
    %10145 = vmatpush1.bf16.msra.mxu0 %v4042
    %10146 = vmatprep.subr.bf16.mxu0 %v4059
    %10147 = vmatpush1.bf16.msra.mxu0 %v4058
    %10148 = vmatprep.subr.bf16.mxu0 %v4075
    %10149 = vmatpush1.bf16.msra.mxu0 %v4074
    %10150 = vmatprep.mubr.bf16.mxu0 %v9837
    %10151 = vmatmul.mubr.bf16.gmra.mrb[0].mxu0 %v9836
    %v10152 = vpop.f32.mrb[0].mxu0
    %v10153 = vadd.f32 %v9846, %v10152
    %v10154 = vpop.f32.mrb[0].mxu0
    %v10155 = vadd.f32 %v9847, %v10154
    %v10156 = vpop.f32.mrb[0].mxu0
    %v10157 = vpop.f32.mrb[0].mxu0
    %10158 = vdwg.mxu0
    %10159 = vmatprep.subr.bf16.mxu0 %v4091
    %10160 = vmatpush1.bf16.msra.mxu0 %v4090
    %10161 = vmatprep.subr.bf16.mxu0 %v4107
    %10162 = vmatpush1.bf16.msra.mxu0 %v4106
    %10163 = vmatprep.subr.bf16.mxu0 %v4123
    %10164 = vmatpush1.bf16.msra.mxu0 %v4122
    %10165 = vmatprep.subr.bf16.mxu0 %v4139
    %10166 = vmatpush1.bf16.msra.mxu0 %v4138
    %10167 = vmatprep.subr.bf16.mxu0 %v4155
    %10168 = vmatpush1.bf16.msra.mxu0 %v4154
    %10169 = vmatprep.subr.bf16.mxu0 %v4171
    %10170 = vmatpush1.bf16.msra.mxu0 %v4170
    %10171 = vmatprep.subr.bf16.mxu0 %v4187
    %10172 = vmatpush1.bf16.msra.mxu0 %v4186
    %10173 = vmatprep.subr.bf16.mxu0 %v4203
    %10174 = vmatpush1.bf16.msra.mxu0 %v4202
    %10175 = vmatprep.subr.bf16.mxu0 %v4219
    %10176 = vmatpush1.bf16.msra.mxu0 %v4218
    %10177 = vmatprep.subr.bf16.mxu0 %v4235
    %10178 = vmatpush1.bf16.msra.mxu0 %v4234
    %10179 = vmatprep.subr.bf16.mxu0 %v4251
    %10180 = vmatpush1.bf16.msra.mxu0 %v4250
    %10181 = vmatprep.subr.bf16.mxu0 %v4267
    %10182 = vmatpush1.bf16.msra.mxu0 %v4266
    %10183 = vmatprep.subr.bf16.mxu0 %v4283
    %10184 = vmatpush1.bf16.msra.mxu0 %v4282
    %10185 = vmatprep.subr.bf16.mxu0 %v4299
    %10186 = vmatpush1.bf16.msra.mxu0 %v4298
    %10187 = vmatprep.subr.bf16.mxu0 %v4315
    %10188 = vmatpush1.bf16.msra.mxu0 %v4314
    %10189 = vmatprep.subr.bf16.mxu0 %v4331
    %10190 = vmatpush1.bf16.msra.mxu0 %v4330
    %10191 = vmatprep.mubr.bf16.mxu0 %v9839
    %10192 = vmatmul.mubr.bf16.gmra.mrb[0].mxu0 %v9838
    %v10193 = vpop.f32.mrb[0].mxu0
    %v10194 = vadd.f32 %v10153, %v10193
    %v10195 = vpop.f32.mrb[0].mxu0
    %v10196 = vadd.f32 %v10155, %v10195
    %v10197 = vpop.f32.mrb[0].mxu0
    %v10198 = vpop.f32.mrb[0].mxu0
    %10199 = vdwg.mxu0
    %10200 = vmatprep.subr.bf16.mxu0 %v3837
    %10201 = vmatpush1.bf16.msra.mxu0 %v3836
    %10202 = vmatprep.subr.bf16.mxu0 %v3853
    %10203 = vmatpush1.bf16.msra.mxu0 %v3852
    %10204 = vmatprep.subr.bf16.mxu0 %v3869
    %10205 = vmatpush1.bf16.msra.mxu0 %v3868
    %10206 = vmatprep.subr.bf16.mxu0 %v3885
    %10207 = vmatpush1.bf16.msra.mxu0 %v3884
    %10208 = vmatprep.subr.bf16.mxu0 %v3901
    %10209 = vmatpush1.bf16.msra.mxu0 %v3900
    %10210 = vmatprep.subr.bf16.mxu0 %v3917
    %10211 = vmatpush1.bf16.msra.mxu0 %v3916
    %10212 = vmatprep.subr.bf16.mxu0 %v3933
    %10213 = vmatpush1.bf16.msra.mxu0 %v3932
    %10214 = vmatprep.subr.bf16.mxu0 %v3949
    %10215 = vmatpush1.bf16.msra.mxu0 %v3948
    %10216 = vmatprep.subr.bf16.mxu0 %v3965
    %10217 = vmatpush1.bf16.msra.mxu0 %v3964
    %10218 = vmatprep.subr.bf16.mxu0 %v3981
    %10219 = vmatpush1.bf16.msra.mxu0 %v3980
    %10220 = vmatprep.subr.bf16.mxu0 %v3997
    %10221 = vmatpush1.bf16.msra.mxu0 %v3996
    %10222 = vmatprep.subr.bf16.mxu0 %v4013
    %10223 = vmatpush1.bf16.msra.mxu0 %v4012
    %10224 = vmatprep.subr.bf16.mxu0 %v4029
    %10225 = vmatpush1.bf16.msra.mxu0 %v4028
    %10226 = vmatprep.subr.bf16.mxu0 %v4045
    %10227 = vmatpush1.bf16.msra.mxu0 %v4044
    %10228 = vmatprep.subr.bf16.mxu0 %v4061
    %10229 = vmatpush1.bf16.msra.mxu0 %v4060
    %10230 = vmatprep.subr.bf16.mxu0 %v4077
    %10231 = vmatpush1.bf16.msra.mxu0 %v4076
    %10232 = vmatprep.mubr.bf16.mxu0 %v9837
    %10233 = vmatmul.mubr.bf16.gmra.mrb[0].mxu0 %v9836
    %v10234 = vpop.f32.mrb[0].mxu0
    %v10235 = vadd.f32 %v9848, %v10234
    %v10236 = vpop.f32.mrb[0].mxu0
    %v10237 = vadd.f32 %v9849, %v10236
    %v10238 = vpop.f32.mrb[0].mxu0
    %v10239 = vpop.f32.mrb[0].mxu0
    %10240 = vdwg.mxu0
    %10241 = vmatprep.subr.bf16.mxu0 %v4093
    %10242 = vmatpush1.bf16.msra.mxu0 %v4092
    %10243 = vmatprep.subr.bf16.mxu0 %v4109
    %10244 = vmatpush1.bf16.msra.mxu0 %v4108
    %10245 = vmatprep.subr.bf16.mxu0 %v4125
    %10246 = vmatpush1.bf16.msra.mxu0 %v4124
    %10247 = vmatprep.subr.bf16.mxu0 %v4141
    %10248 = vmatpush1.bf16.msra.mxu0 %v4140
    %10249 = vmatprep.subr.bf16.mxu0 %v4157
    %10250 = vmatpush1.bf16.msra.mxu0 %v4156
    %10251 = vmatprep.subr.bf16.mxu0 %v4173
    %10252 = vmatpush1.bf16.msra.mxu0 %v4172
    %10253 = vmatprep.subr.bf16.mxu0 %v4189
    %10254 = vmatpush1.bf16.msra.mxu0 %v4188
    %10255 = vmatprep.subr.bf16.mxu0 %v4205
    %10256 = vmatpush1.bf16.msra.mxu0 %v4204
    %10257 = vmatprep.subr.bf16.mxu0 %v4221
    %10258 = vmatpush1.bf16.msra.mxu0 %v4220
    %10259 = vmatprep.subr.bf16.mxu0 %v4237
    %10260 = vmatpush1.bf16.msra.mxu0 %v4236
    %10261 = vmatprep.subr.bf16.mxu0 %v4253
    %10262 = vmatpush1.bf16.msra.mxu0 %v4252
    %10263 = vmatprep.subr.bf16.mxu0 %v4269
    %10264 = vmatpush1.bf16.msra.mxu0 %v4268
    %10265 = vmatprep.subr.bf16.mxu0 %v4285
    %10266 = vmatpush1.bf16.msra.mxu0 %v4284
    %10267 = vmatprep.subr.bf16.mxu0 %v4301
    %10268 = vmatpush1.bf16.msra.mxu0 %v4300
    %10269 = vmatprep.subr.bf16.mxu0 %v4317
    %10270 = vmatpush1.bf16.msra.mxu0 %v4316
    %10271 = vmatprep.subr.bf16.mxu0 %v4333
    %10272 = vmatpush1.bf16.msra.mxu0 %v4332
    %10273 = vmatprep.mubr.bf16.mxu0 %v9839
    %10274 = vmatmul.mubr.bf16.gmra.mrb[0].mxu0 %v9838
    %v10275 = vpop.f32.mrb[0].mxu0
    %v10276 = vadd.f32 %v10235, %v10275
    %v10277 = vpop.f32.mrb[0].mxu0
    %v10278 = vadd.f32 %v10237, %v10277
    %v10279 = vpop.f32.mrb[0].mxu0
    %v10280 = vpop.f32.mrb[0].mxu0
    %10281 = vdwg.mxu0
    %10282 = vmatprep.subr.bf16.mxu0 %v3839
    %10283 = vmatpush1.bf16.msra.mxu0 %v3838
    %10284 = vmatprep.subr.bf16.mxu0 %v3855
    %10285 = vmatpush1.bf16.msra.mxu0 %v3854
    %10286 = vmatprep.subr.bf16.mxu0 %v3871
    %10287 = vmatpush1.bf16.msra.mxu0 %v3870
    %10288 = vmatprep.subr.bf16.mxu0 %v3887
    %10289 = vmatpush1.bf16.msra.mxu0 %v3886
    %10290 = vmatprep.subr.bf16.mxu0 %v3903
    %10291 = vmatpush1.bf16.msra.mxu0 %v3902
    %10292 = vmatprep.subr.bf16.mxu0 %v3919
    %10293 = vmatpush1.bf16.msra.mxu0 %v3918
    %10294 = vmatprep.subr.bf16.mxu0 %v3935
    %10295 = vmatpush1.bf16.msra.mxu0 %v3934
    %10296 = vmatprep.subr.bf16.mxu0 %v3951
    %10297 = vmatpush1.bf16.msra.mxu0 %v3950
    %10298 = vmatprep.subr.bf16.mxu0 %v3967
    %10299 = vmatpush1.bf16.msra.mxu0 %v3966
    %10300 = vmatprep.subr.bf16.mxu0 %v3983
    %10301 = vmatpush1.bf16.msra.mxu0 %v3982
    %10302 = vmatprep.subr.bf16.mxu0 %v3999
    %10303 = vmatpush1.bf16.msra.mxu0 %v3998
    %10304 = vmatprep.subr.bf16.mxu0 %v4015
    %10305 = vmatpush1.bf16.msra.mxu0 %v4014
    %10306 = vmatprep.subr.bf16.mxu0 %v4031
    %10307 = vmatpush1.bf16.msra.mxu0 %v4030
    %10308 = vmatprep.subr.bf16.mxu0 %v4047
    %10309 = vmatpush1.bf16.msra.mxu0 %v4046
    %10310 = vmatprep.subr.bf16.mxu0 %v4063
    %10311 = vmatpush1.bf16.msra.mxu0 %v4062
    %10312 = vmatprep.subr.bf16.mxu0 %v4079
    %10313 = vmatpush1.bf16.msra.mxu0 %v4078
    %10314 = vmatprep.mubr.bf16.mxu0 %v9837
    %10315 = vmatmul.mubr.bf16.gmra.mrb[0].mxu0 %v9836
    %v10316 = vpop.f32.mrb[0].mxu0
    %v10317 = vadd.f32 %v9850, %v10316
    %v10318 = vpop.f32.mrb[0].mxu0
    %v10319 = vadd.f32 %v9851, %v10318
    %v10320 = vpop.f32.mrb[0].mxu0
    %v10321 = vpop.f32.mrb[0].mxu0
    %10322 = vdwg.mxu0
    %10323 = vmatprep.subr.bf16.mxu0 %v4095
    %10324 = vmatpush1.bf16.msra.mxu0 %v4094
    %10325 = vmatprep.subr.bf16.mxu0 %v4111
    %10326 = vmatpush1.bf16.msra.mxu0 %v4110
    %10327 = vmatprep.subr.bf16.mxu0 %v4127
    %10328 = vmatpush1.bf16.msra.mxu0 %v4126
    %10329 = vmatprep.subr.bf16.mxu0 %v4143
    %10330 = vmatpush1.bf16.msra.mxu0 %v4142
    %10331 = vmatprep.subr.bf16.mxu0 %v4159
    %10332 = vmatpush1.bf16.msra.mxu0 %v4158
    %10333 = vmatprep.subr.bf16.mxu0 %v4175
    %10334 = vmatpush1.bf16.msra.mxu0 %v4174
    %10335 = vmatprep.subr.bf16.mxu0 %v4191
    %10336 = vmatpush1.bf16.msra.mxu0 %v4190
    %10337 = vmatprep.subr.bf16.mxu0 %v4207
    %10338 = vmatpush1.bf16.msra.mxu0 %v4206
    %10339 = vmatprep.subr.bf16.mxu0 %v4223
    %10340 = vmatpush1.bf16.msra.mxu0 %v4222
    %10341 = vmatprep.subr.bf16.mxu0 %v4239
    %10342 = vmatpush1.bf16.msra.mxu0 %v4238
    %10343 = vmatprep.subr.bf16.mxu0 %v4255
    %10344 = vmatpush1.bf16.msra.mxu0 %v4254
    %10345 = vmatprep.subr.bf16.mxu0 %v4271
    %10346 = vmatpush1.bf16.msra.mxu0 %v4270
    %10347 = vmatprep.subr.bf16.mxu0 %v4287
    %10348 = vmatpush1.bf16.msra.mxu0 %v4286
    %10349 = vmatprep.subr.bf16.mxu0 %v4303
    %10350 = vmatpush1.bf16.msra.mxu0 %v4302
    %10351 = vmatprep.subr.bf16.mxu0 %v4319
    %10352 = vmatpush1.bf16.msra.mxu0 %v4318
    %10353 = vmatprep.subr.bf16.mxu0 %v4335
    %10354 = vmatpush1.bf16.msra.mxu0 %v4334
    %10355 = vmatprep.mubr.bf16.mxu0 %v9839
    %10356 = vmatmul.mubr.bf16.gmra.mrb[0].mxu0 %v9838
    %v10357 = vpop.f32.mrb[0].mxu0
    %v10358 = vadd.f32 %v10317, %v10357
    %v10359 = vpop.f32.mrb[0].mxu0
    %v10360 = vadd.f32 %v10319, %v10359
    %v10361 = vpop.f32.mrb[0].mxu0
    %v10362 = vpop.f32.mrb[0].mxu0
    %10363 = vdwg.mxu0
    %10364 = vmatprep.subr.bf16.mxu0 %v3841
    %10365 = vmatpush1.bf16.msra.mxu0 %v3840
    %10366 = vmatprep.subr.bf16.mxu0 %v3857
    %10367 = vmatpush1.bf16.msra.mxu0 %v3856
    %10368 = vmatprep.subr.bf16.mxu0 %v3873
    %10369 = vmatpush1.bf16.msra.mxu0 %v3872
    %10370 = vmatprep.subr.bf16.mxu0 %v3889
    %10371 = vmatpush1.bf16.msra.mxu0 %v3888
    %10372 = vmatprep.subr.bf16.mxu0 %v3905
    %10373 = vmatpush1.bf16.msra.mxu0 %v3904
    %10374 = vmatprep.subr.bf16.mxu0 %v3921
    %10375 = vmatpush1.bf16.msra.mxu0 %v3920
    %10376 = vmatprep.subr.bf16.mxu0 %v3937
    %10377 = vmatpush1.bf16.msra.mxu0 %v3936
    %10378 = vmatprep.subr.bf16.mxu0 %v3953
    %10379 = vmatpush1.bf16.msra.mxu0 %v3952
    %10380 = vmatprep.subr.bf16.mxu0 %v3969
    %10381 = vmatpush1.bf16.msra.mxu0 %v3968
    %10382 = vmatprep.subr.bf16.mxu0 %v3985
    %10383 = vmatpush1.bf16.msra.mxu0 %v3984
    %10384 = vmatprep.subr.bf16.mxu0 %v4001
    %10385 = vmatpush1.bf16.msra.mxu0 %v4000
    %10386 = vmatprep.subr.bf16.mxu0 %v4017
    %10387 = vmatpush1.bf16.msra.mxu0 %v4016
    %10388 = vmatprep.subr.bf16.mxu0 %v4033
    %10389 = vmatpush1.bf16.msra.mxu0 %v4032
    %10390 = vmatprep.subr.bf16.mxu0 %v4049
    %10391 = vmatpush1.bf16.msra.mxu0 %v4048
    %10392 = vmatprep.subr.bf16.mxu0 %v4065
    %10393 = vmatpush1.bf16.msra.mxu0 %v4064
    %10394 = vmatprep.subr.bf16.mxu0 %v4081
    %10395 = vmatpush1.bf16.msra.mxu0 %v4080
    %10396 = vmatprep.mubr.bf16.mxu0 %v9837
    %10397 = vmatmul.mubr.bf16.gmra.mrb[0].mxu0 %v9836
    %v10398 = vpop.f32.mrb[0].mxu0
    %v10399 = vadd.f32 %v9852, %v10398
    %v10400 = vpop.f32.mrb[0].mxu0
    %v10401 = vadd.f32 %v9853, %v10400
    %v10402 = vpop.f32.mrb[0].mxu0
    %v10403 = vpop.f32.mrb[0].mxu0
    %10404 = vdwg.mxu0
    %10405 = vmatprep.subr.bf16.mxu0 %v4097
    %10406 = vmatpush1.bf16.msra.mxu0 %v4096
    %10407 = vmatprep.subr.bf16.mxu0 %v4113
    %10408 = vmatpush1.bf16.msra.mxu0 %v4112
    %10409 = vmatprep.subr.bf16.mxu0 %v4129
    %10410 = vmatpush1.bf16.msra.mxu0 %v4128
    %10411 = vmatprep.subr.bf16.mxu0 %v4145
    %10412 = vmatpush1.bf16.msra.mxu0 %v4144
    %10413 = vmatprep.subr.bf16.mxu0 %v4161
    %10414 = vmatpush1.bf16.msra.mxu0 %v4160
    %10415 = vmatprep.subr.bf16.mxu0 %v4177
    %10416 = vmatpush1.bf16.msra.mxu0 %v4176
    %10417 = vmatprep.subr.bf16.mxu0 %v4193
    %10418 = vmatpush1.bf16.msra.mxu0 %v4192
    %10419 = vmatprep.subr.bf16.mxu0 %v4209
    %10420 = vmatpush1.bf16.msra.mxu0 %v4208
    %10421 = vmatprep.subr.bf16.mxu0 %v4225
    %10422 = vmatpush1.bf16.msra.mxu0 %v4224
    %10423 = vmatprep.subr.bf16.mxu0 %v4241
    %10424 = vmatpush1.bf16.msra.mxu0 %v4240
    %10425 = vmatprep.subr.bf16.mxu0 %v4257
    %10426 = vmatpush1.bf16.msra.mxu0 %v4256
    %10427 = vmatprep.subr.bf16.mxu0 %v4273
    %10428 = vmatpush1.bf16.msra.mxu0 %v4272
    %10429 = vmatprep.subr.bf16.mxu0 %v4289
    %10430 = vmatpush1.bf16.msra.mxu0 %v4288
    %10431 = vmatprep.subr.bf16.mxu0 %v4305
    %10432 = vmatpush1.bf16.msra.mxu0 %v4304
    %10433 = vmatprep.subr.bf16.mxu0 %v4321
    %10434 = vmatpush1.bf16.msra.mxu0 %v4320
    %10435 = vmatprep.subr.bf16.mxu0 %v4337
    %10436 = vmatpush1.bf16.msra.mxu0 %v4336
    %10437 = vmatprep.mubr.bf16.mxu0 %v9839
    %10438 = vmatmul.mubr.bf16.gmra.mrb[0].mxu0 %v9838
    %v10439 = vpop.f32.mrb[0].mxu0
    %v10440 = vadd.f32 %v10399, %v10439
    %v10441 = vpop.f32.mrb[0].mxu0
    %v10442 = vadd.f32 %v10401, %v10441
    %v10443 = vpop.f32.mrb[0].mxu0
    %v10444 = vpop.f32.mrb[0].mxu0
    %10445 = vdwg.mxu0
    %10446 = vmatprep.subr.bf16.mxu0 %v3843
    %10447 = vmatpush1.bf16.msra.mxu0 %v3842
    %10448 = vmatprep.subr.bf16.mxu0 %v3859
    %10449 = vmatpush1.bf16.msra.mxu0 %v3858
    %10450 = vmatprep.subr.bf16.mxu0 %v3875
    %10451 = vmatpush1.bf16.msra.mxu0 %v3874
    %10452 = vmatprep.subr.bf16.mxu0 %v3891
    %10453 = vmatpush1.bf16.msra.mxu0 %v3890
    %10454 = vmatprep.subr.bf16.mxu0 %v3907
    %10455 = vmatpush1.bf16.msra.mxu0 %v3906
    %10456 = vmatprep.subr.bf16.mxu0 %v3923
    %10457 = vmatpush1.bf16.msra.mxu0 %v3922
    %10458 = vmatprep.subr.bf16.mxu0 %v3939
    %10459 = vmatpush1.bf16.msra.mxu0 %v3938
    %10460 = vmatprep.subr.bf16.mxu0 %v3955
    %10461 = vmatpush1.bf16.msra.mxu0 %v3954
    %10462 = vmatprep.subr.bf16.mxu0 %v3971
    %10463 = vmatpush1.bf16.msra.mxu0 %v3970
    %10464 = vmatprep.subr.bf16.mxu0 %v3987
    %10465 = vmatpush1.bf16.msra.mxu0 %v3986
    %10466 = vmatprep.subr.bf16.mxu0 %v4003
    %10467 = vmatpush1.bf16.msra.mxu0 %v4002
    %10468 = vmatprep.subr.bf16.mxu0 %v4019
    %10469 = vmatpush1.bf16.msra.mxu0 %v4018
    %10470 = vmatprep.subr.bf16.mxu0 %v4035
    %10471 = vmatpush1.bf16.msra.mxu0 %v4034
    %10472 = vmatprep.subr.bf16.mxu0 %v4051
    %10473 = vmatpush1.bf16.msra.mxu0 %v4050
    %10474 = vmatprep.subr.bf16.mxu0 %v4067
    %10475 = vmatpush1.bf16.msra.mxu0 %v4066
    %10476 = vmatprep.subr.bf16.mxu0 %v4083
    %10477 = vmatpush1.bf16.msra.mxu0 %v4082
    %10478 = vmatprep.mubr.bf16.mxu0 %v9837
    %10479 = vmatmul.mubr.bf16.gmra.mrb[0].mxu0 %v9836
    %v10480 = vpop.f32.mrb[0].mxu0
    %v10481 = vadd.f32 %v9854, %v10480
    %v10482 = vpop.f32.mrb[0].mxu0
    %v10483 = vadd.f32 %v9855, %v10482
    %v10484 = vpop.f32.mrb[0].mxu0
    %v10485 = vpop.f32.mrb[0].mxu0
    %10486 = vdwg.mxu0
    %10487 = vmatprep.subr.bf16.mxu0 %v4099
    %10488 = vmatpush1.bf16.msra.mxu0 %v4098
    %10489 = vmatprep.subr.bf16.mxu0 %v4115
    %10490 = vmatpush1.bf16.msra.mxu0 %v4114
    %10491 = vmatprep.subr.bf16.mxu0 %v4131
    %10492 = vmatpush1.bf16.msra.mxu0 %v4130
    %10493 = vmatprep.subr.bf16.mxu0 %v4147
    %10494 = vmatpush1.bf16.msra.mxu0 %v4146
    %10495 = vmatprep.subr.bf16.mxu0 %v4163
    %10496 = vmatpush1.bf16.msra.mxu0 %v4162
    %10497 = vmatprep.subr.bf16.mxu0 %v4179
    %10498 = vmatpush1.bf16.msra.mxu0 %v4178
    %10499 = vmatprep.subr.bf16.mxu0 %v4195
    %10500 = vmatpush1.bf16.msra.mxu0 %v4194
    %10501 = vmatprep.subr.bf16.mxu0 %v4211
    %10502 = vmatpush1.bf16.msra.mxu0 %v4210
    %10503 = vmatprep.subr.bf16.mxu0 %v4227
    %10504 = vmatpush1.bf16.msra.mxu0 %v4226
    %10505 = vmatprep.subr.bf16.mxu0 %v4243
    %10506 = vmatpush1.bf16.msra.mxu0 %v4242
    %10507 = vmatprep.subr.bf16.mxu0 %v4259
    %10508 = vmatpush1.bf16.msra.mxu0 %v4258
    %10509 = vmatprep.subr.bf16.mxu0 %v4275
    %10510 = vmatpush1.bf16.msra.mxu0 %v4274
    %10511 = vmatprep.subr.bf16.mxu0 %v4291
    %10512 = vmatpush1.bf16.msra.mxu0 %v4290
    %10513 = vmatprep.subr.bf16.mxu0 %v4307
    %10514 = vmatpush1.bf16.msra.mxu0 %v4306
    %10515 = vmatprep.subr.bf16.mxu0 %v4323
    %10516 = vmatpush1.bf16.msra.mxu0 %v4322
    %10517 = vmatprep.subr.bf16.mxu0 %v4339
    %10518 = vmatpush1.bf16.msra.mxu0 %v4338
    %10519 = vmatprep.mubr.bf16.mxu0 %v9839
    %10520 = vmatmul.mubr.bf16.gmra.mrb[0].mxu0 %v9838
    %v10521 = vpop.f32.mrb[0].mxu0
    %v10522 = vadd.f32 %v10481, %v10521
    %v10523 = vpop.f32.mrb[0].mxu0
    %v10524 = vadd.f32 %v10483, %v10523
    %v10525 = vpop.f32.mrb[0].mxu0
    %v10526 = vpop.f32.mrb[0].mxu0
    %10527 = vdwg.mxu0
    %v10528 = vmul.f32 %v9948, 0.5
    %v10529 = vmul.f32 %v9950, 0.5
    %v10530 = vmul.f32 %v10030, 0.5
    %v10531 = vmul.f32 %v10032, 0.5
    %v10532 = vtanh.pop %v10528
    %v10533 = vtanh.pop %v10529
    %v10534 = vtanh.pop %v10530
    %v10535 = vtanh.pop %v10531
    %v10536 = vmul.f32 %v10532, 0.5
    %v10537 = vmul.f32 %v10533, 0.5
    %v10538 = vmul.f32 %v10534, 0.5
    %v10539 = vmul.f32 %v10535, 0.5
    %v10540 = vadd.f32 %v10536, 0.5
    %v10541 = vadd.f32 %v10537, 0.5
    %v10542 = vadd.f32 %v10538, 0.5
    %v10543 = vadd.f32 %v10539, 0.5
    %v10544 = vmul.f32 %v10112, 0.5
    %v10545 = vmul.f32 %v10114, 0.5
    %v10546 = vmul.f32 %v10194, 0.5
    %v10547 = vmul.f32 %v10196, 0.5
    %v10548 = vtanh.pop %v10544
    %v10549 = vtanh.pop %v10545
    %v10550 = vtanh.pop %v10546
    %v10551 = vtanh.pop %v10547
    %v10552 = vmul.f32 %v10548, 0.5
    %v10553 = vmul.f32 %v10549, 0.5
    %v10554 = vmul.f32 %v10550, 0.5
    %v10555 = vmul.f32 %v10551, 0.5
    %v10556 = vadd.f32 %v10552, 0.5
    %v10557 = vadd.f32 %v10553, 0.5
    %v10558 = vadd.f32 %v10554, 0.5
    %v10559 = vadd.f32 %v10555, 0.5
    %v10560 = vtanh.pop %v10276
    %v10561 = vtanh.pop %v10278
    %v10562 = vtanh.pop %v10358
    %v10563 = vtanh.pop %v10360
    %v10564 = vmul.f32 %v10440, 0.5
    %v10565 = vmul.f32 %v10442, 0.5
    %v10566 = vmul.f32 %v10522, 0.5
    %v10567 = vmul.f32 %v10524, 0.5
    %v10568 = vtanh.pop %v10564
    %v10569 = vtanh.pop %v10565
    %v10570 = vtanh.pop %v10566
    %v10571 = vtanh.pop %v10567
    %v10572 = vmul.f32 %v10568, 0.5
    %v10573 = vmul.f32 %v10569, 0.5
    %v10574 = vmul.f32 %v10570, 0.5
    %v10575 = vmul.f32 %v10571, 0.5
    %v10576 = vadd.f32 %v10572, 0.5
    %v10577 = vadd.f32 %v10573, 0.5
    %v10578 = vadd.f32 %v10574, 0.5
    %v10579 = vadd.f32 %v10575, 0.5
    %v10580 = vmul.f32 %v10556, %v9824
    %v10581 = vmul.f32 %v10557, %v9825
    %v10582 = vmul.f32 %v10558, %v9826
    %v10583 = vmul.f32 %v10559, %v9827
    %v10584 = vmul.f32 %v10540, %v10560
    %v10585 = vmul.f32 %v10541, %v10561
    %v10586 = vmul.f32 %v10542, %v10562
    %v10587 = vmul.f32 %v10543, %v10563
    %v10588 = vadd.f32 %v10580, %v10584
    %v10589 = vadd.f32 %v10581, %v10585
    %v10590 = vadd.f32 %v10582, %v10586
    %v10591 = vadd.f32 %v10583, %v10587
    %v10592 = vtanh.pop %v10588
    %v10593 = vtanh.pop %v10589
    %v10594 = vtanh.pop %v10590
    %v10595 = vtanh.pop %v10591
    %v10596 = vmul.f32 %v10576, %v10592
    %v10597 = vmul.f32 %v10577, %v10593
    %v10598 = vmul.f32 %v10578, %v10594
    %v10599 = vmul.f32 %v10579, %v10595
    %v10604 = vcombine.low %v10596, %v10597
    %v10605 = vcombine.low %v10598, %v10599
    %v10607 = vunpack.c.l.s4 1966171168
    %v10608 = vunpack.c.0.s8 %v10607
    %v10609 = vlaneseq
    %v10610 = vshrl.u32 %v10609, 7
    %v10611 = vsub.s32 %v10608, %v10610
    %v10612 = vrot.slane %v10604, %v10611
    %v10614 = vunpack.c.l.s4 1966171168
    %v10615 = vunpack.c.0.s8 %v10614
    %v10616 = vlaneseq
    %v10617 = vshrl.u32 %v10616, 7
    %v10618 = vsub.s32 %v10615, %v10617
    %v10619 = vrot.slane %v10605, %v10618
    %v10620 = vcombine.low %v10612, %v10619
    %v10622 = vunpack.c.l.s4 1966171168
    %v10623 = vunpack.c.0.s8 %v10622
    %v10624 = vlaneseq
    %v10625 = vshrl.u32 %v10624, 7
    %v10626 = vsub.s32 %v10623, %v10625
    %v10627 = vrot.slane %v10620, %v10626
    %v10629 = vlaneseq
    %vm10630 = vcmp.ge.s32.totalorder %v10629, 0
    %vm10631 = vcmp.lt.s32.totalorder %v10629, 512
    %vm10632 = vmand %vm10630, %vm10631
    %10633 = vst.msk [vmem:[#allocation9] sm:$0xf] %vm10632, %v10627
    // Predicated region
    $region26: #{lstm_predictor_forward.1} parent=1 // pred_check
      _
    $region27: #{lstm_predictor_forward.1} parent=1 // pred_check_branch
      %10635 = sbr.rel (0) target = $region29
    $region28: #{lstm_predictor_forward.1} parent=1 // pred_region
      %s10637 = ssub.s32 64, 64
      %10638 = vsyncadd [#allocation6], %s10637
      %s10640 = sshll.u32 [#allocation9], 4
      %s10641 = int_to_ptr.vmem [resolvable:$true] %s10640
      %10643 = dma.vmem_to_hbm [thread:$0]  %s10641, 64, %s5, [#allocation6]
    $region29: #{lstm_predictor_forward.1} parent=1 // pred_fallthru
      _
    // Predicated region
    $region30: #{lstm_predictor_forward.1} parent=1 // pred_check
      _
    $region31: #{lstm_predictor_forward.1} parent=1 // pred_check_branch
      %10645 = sbr.rel (0) target = $region33
    $region32: #{lstm_predictor_forward.1} parent=1 // pred_region
      %10646 = dma.done [#allocation6], 64
    $region33: #{lstm_predictor_forward.1} parent=1 // pred_fallthru
      _
    %10647 = vsyncpa [#allocation5], 1
    %10648 = vsyncpa [#allocation8], 1
    %10649 = vsyncpa [#allocation6], 1
  %10650 = vsyncmov [#allocation3]
  %s10651 = vpop.sfrf %10650
  %p10652 = scmp.eq.s32.totalorder %s10651, 0
  %p10653 = pneg %p10652
  %10655 = shalt.err (%p10653)

</llo_original>
